<compile_context>
chip_gen: v7x
topology: tpu7x:2x2x1
jax: 0.10.0
libtpu: 0.0.40
codegen_flags: <defaults>
</compile_context>

<pallas_src>
import functools
import math

import numpy as np
import jax
import jax.numpy as jnp
from jax import lax
from jax.experimental import pallas as pl
from jax.experimental.pallas import tpu as pltpu

WINDOW = (2, 6, 12)        # (wz, wh, ww) fixed by EarthSpecificBlock.__init__
LN_EPS = 1e-5


# ----------------------------------------------------------------------------
# Earth-specific bias position index (mirrors EarthAttention3D._construct_index)
# ----------------------------------------------------------------------------
def _construct_position_index(window_size):
    wz, wh, ww = window_size
    coords_zi = np.arange(wz)
    coords_zj = -np.arange(wz) * wz
    coords_hi = np.arange(wh)
    coords_hj = -np.arange(wh) * wh
    coords_w = np.arange(ww)
    c1 = np.stack(np.meshgrid(coords_zi, coords_hi, coords_w, indexing="ij"))
    c2 = np.stack(np.meshgrid(coords_zj, coords_hj, coords_w, indexing="ij"))
    f1 = c1.reshape(3, -1)
    f2 = c2.reshape(3, -1)
    coords = f1[:, :, None] - f2[:, None, :]           # (3, L, L)
    coords = coords.transpose(1, 2, 0).astype(np.int64)
    coords[:, :, 2] += ww - 1
    coords[:, :, 1] *= 2 * ww - 1
    coords[:, :, 0] *= (2 * ww - 1) * wh * wh
    return coords.sum(-1).reshape(-1)                  # (L*L,)


def _earth_bias(bias_table, position_index, window_size, n_types, heads):
    wz, wh, ww = window_size
    L = wz * wh * ww
    b = bias_table[position_index]                     # (L*L, T, heads)
    b = b.reshape(L, L, n_types, heads)
    b = jnp.transpose(b, (2, 3, 0, 1))                 # (T, heads, L, L)
    return b


# ----------------------------------------------------------------------------
# Kernel 1: windowed 3-D attention with earth-specific bias.
# One grid step = one (batch, window-type) pair = all nW longitude windows.
# ----------------------------------------------------------------------------
def _attention_kernel(x_ref, wqkv_ref, bqkv_ref, wproj_ref, bproj_ref, bias_ref,
                      o_ref, *, heads, nW, L):
    C = x_ref.shape[-1]
    M = nW * L
    hd = C // heads

    # QKV projection: one bf16 matmul over the whole slab, f32 accumulation.
    x = x_ref[0, 0].astype(jnp.bfloat16)                       # (M, C)
    qkv = jnp.dot(x, wqkv_ref[...],                            # wqkv is bf16
                  preferred_element_type=jnp.float32)
    qkv = qkv + bqkv_ref[...]                                  # (M, 3C), f32
    # NOTE: the qk scale was folded into the Q columns of W_qkv / b_qkv.

    q = qkv[:, :C]
    k = qkv[:, C:2 * C]
    v = qkv[:, 2 * C:]

    bias = bias_ref[0]                                         # (heads, L, L) f32
    wproj = wproj_ref[...]                                     # (C, C) f32

    acc = jnp.zeros((M, C), jnp.float32)
    for h in range(heads):                 # short unrolled loop over heads
        sl = slice(h * hd, (h + 1) * hd)
        qh = q[:, sl].reshape(nW, L, hd).astype(jnp.bfloat16)
        kh = k[:, sl].reshape(nW, L, hd).astype(jnp.bfloat16)
        vh = v[:, sl].reshape(nW, L, hd).astype(jnp.bfloat16)

        # Scores for all nW windows of this head at once.
        s = jnp.einsum('wld,wmd->wlm', qh, kh,
                       preferred_element_type=jnp.float32)     # (nW, L, L)
        s = s + bias[h]
        # TODO(synk): reference gen_mask()/mask_attention() are undefined/broken
        # (gen_mask returns x); the shifted-window attention mask is omitted.
        s = s - jnp.max(s, axis=-1, keepdims=True)
        e = jnp.exp(s)
        p = e * pl.reciprocal(jnp.sum(e, axis=-1, keepdims=True), approx=True)

        oh = jnp.einsum('wlm,wmd->wld', p.astype(jnp.bfloat16), vh,
                        preferred_element_type=jnp.float32)    # (nW, L, hd)
        # Fused output projection for this head (removes the per-head concat):
        acc = acc + jnp.dot(oh.reshape(M, hd).astype(jnp.bfloat16),
                            wproj[sl, :].astype(jnp.bfloat16),
                            preferred_element_type=jnp.float32)

    out = acc + bproj_ref[...]                                 # (M, C)
    # NOTE: C (32 demo / 192 real) is not a multiple of 128 -> partially masked
    # stores; unavoidable without changing the model channel dimension.
    o_ref[0, 0] = out.astype(o_ref.dtype)


def window_attention(x_win, wqkv, bqkv, wproj, bproj, bias, *, heads, nW, L):
    B, T, M, C = x_win.shape                                   # M = nW * L
    kern = functools.partial(_attention_kernel, heads=heads, nW=nW, L=L)
    return pl.pallas_call(
        kern,
        out_shape=jax.ShapeDtypeStruct((B, T, M, C), x_win.dtype),
        grid=(B, T),
        in_specs=[
            pl.BlockSpec((1, 1, M, C), lambda b, t: (b, t, 0, 0)),     # x slab
            pl.BlockSpec((C, 3 * C), lambda b, t: (0, 0)),             # W_qkv (bf16)
            pl.BlockSpec((1, 3 * C), lambda b, t: (0, 0)),             # b_qkv
            pl.BlockSpec((C, C), lambda b, t: (0, 0)),                 # W_proj
            pl.BlockSpec((1, C), lambda b, t: (0, 0)),                 # b_proj
            pl.BlockSpec((1, heads, L, L), lambda b, t: (t, 0, 0, 0)), # bias
        ],
        out_specs=pl.BlockSpec((1, 1, M, C), lambda b, t: (b, t, 0, 0)),
        compiler_params=pltpu.CompilerParams(
            dimension_semantics=("parallel", "parallel")),
    )(x_win, wqkv, bqkv, wproj, bproj, bias)


# ----------------------------------------------------------------------------
# Kernel 2: fused residual + LayerNorm1, MLP(GELU), LayerNorm2 + residual
#   x1  = shortcut + LN1(attn_out)
#   out = x1 + LN2( GELU(x1 @ W1 + b1) @ W2 + b2 )
# (drop_path / dropout rates are 0 -> identity)
# ----------------------------------------------------------------------------
def _tail_kernel(attn_ref, sc_ref, g1_ref, be1_ref, g2_ref, be2_ref,
                 w1_ref, b1_ref, w2_ref, b2_ref, o_ref):
    def layer_norm(v, g, b):
        mu = jnp.mean(v, axis=-1, keepdims=True)
        var = jnp.mean(jnp.square(v - mu), axis=-1, keepdims=True)
        return (v - mu) * lax.rsqrt(var + LN_EPS) * g + b

    def gelu_exact(v):   # matches torch.nn.GELU (erf form)
        return 0.5 * v * (1.0 + lax.erf(v * (1.0 / math.sqrt(2.0))))

    attn = attn_ref[...].astype(jnp.float32)
    sc = sc_ref[...].astype(jnp.float32)

    x1 = sc + layer_norm(attn, g1_ref[...], be1_ref[...])
    h = jnp.dot(x1.astype(jnp.bfloat16), w1_ref[...],          # w1 is bf16
                preferred_element_type=jnp.float32) + b1_ref[...]
    h = gelu_exact(h)
    m = jnp.dot(h.astype(jnp.bfloat16), w2_ref[...],           # w2 is bf16
                preferred_element_type=jnp.float32) + b2_ref[...]
    o_ref[...] = (x1 + layer_norm(m, g2_ref[...], be2_ref[...])).astype(o_ref.dtype)


def block_tail(attn_flat, sc_flat, params, tile=512):
    Nt, C = attn_flat.shape
    # 512-row tiles (mem-bound sweet spot); pad token count to a tile multiple
    # instead of falling back to a single whole-array block.
    tile = min(tile, ((Nt + 7) // 8) * 8)
    Npad = ((Nt + tile - 1) // tile) * tile
    if Npad != Nt:
        attn_flat = jnp.pad(attn_flat, ((0, Npad - Nt), (0, 0)))
        sc_flat = jnp.pad(sc_flat, ((0, Npad - Nt), (0, 0)))

    w1 = params["w_mlp1"].astype(jnp.bfloat16)
    w2 = params["w_mlp2"].astype(jnp.bfloat16)

    out = pl.pallas_call(
        _tail_kernel,
        out_shape=jax.ShapeDtypeStruct((Npad, C), attn_flat.dtype),
        grid=(Npad // tile,),
        in_specs=[
            pl.BlockSpec((tile, C), lambda i: (i, 0)),
            pl.BlockSpec((tile, C), lambda i: (i, 0)),
            pl.BlockSpec((1, C), lambda i: (0, 0)),        # gamma1
            pl.BlockSpec((1, C), lambda i: (0, 0)),        # beta1
            pl.BlockSpec((1, C), lambda i: (0, 0)),        # gamma2
            pl.BlockSpec((1, C), lambda i: (0, 0)),        # beta2
            pl.BlockSpec((C, 4 * C), lambda i: (0, 0)),    # mlp W1 (bf16)
            pl.BlockSpec((1, 4 * C), lambda i: (0, 0)),    # mlp b1
            pl.BlockSpec((4 * C, C), lambda i: (0, 0)),    # mlp W2 (bf16)
            pl.BlockSpec((1, C), lambda i: (0, 0)),        # mlp b2
        ],
        out_specs=pl.BlockSpec((tile, C), lambda i: (i, 0)),
        compiler_params=pltpu.CompilerParams(dimension_semantics=("parallel",)),
    )(attn_flat, sc_flat, params["gamma1"], params["beta1"], params["gamma2"],
      params["beta2"], w1, params["b_mlp1"], w2, params["b_mlp2"])
    return out[:Nt]


# ----------------------------------------------------------------------------
# EarthSpecificBlock forward (glue)
# ----------------------------------------------------------------------------
def earth_specific_block(x, params, Z, H, W, roll, heads):
    B, N, C = x.shape
    wz, wh, ww = WINDOW

    shortcut = x
    x3 = x.reshape(B, Z, H, W, C)

    # pad3D: pad each spatial dim up to a multiple of the window size
    pz, ph, pw = (-Z) % wz, (-H) % wh, (-W) % ww
    x3 = jnp.pad(x3, ((0, 0), (0, pz), (0, ph), (0, pw), (0, 0)))
    Zp, Hp, Wp = Z + pz, H + ph, W + pw

    if roll:
        x3 = jnp.roll(x3, shift=(wz // 2, wh // 2, ww // 2), axis=(1, 2, 3))
        # TODO(synk): reference gen_mask() just returns x (broken); the
        # shifted-window attention mask is omitted.

    nZ, nH, nW = Zp // wz, Hp // wh, Wp // ww
    T = nZ * nH                         # type_of_windows
    L = wz * wh * ww

    # Window partition -> (B, T, nW*L, C): all nW longitude windows that share
    # the same earth-specific bias type are packed into one slab so the kernel
    # batches them per grid step.
    xw = x3.reshape(B, nZ, wz, nH, wh, nW, ww, C)
    xw = jnp.transpose(xw, (0, 1, 3, 5, 2, 4, 6, 7))    # (B,nZ,nH,nW,wz,wh,ww,C)
    xw = xw.reshape(B, T, nW * L, C)

    bias = _earth_bias(params["bias_table"], params["pos_idx"], WINDOW, T, heads)

    # Fold the qk scale into the Q columns of the QKV projection (one-time
    # constant transform -> no per-token multiply inside the kernel).
    scale = (C // heads) ** (-0.5)
    w_qkv = params["w_qkv"].at[:, :C].multiply(scale).astype(jnp.bfloat16)
    b_qkv = params["b_qkv"].at[:, :C].multiply(scale)

    attn = window_attention(xw, w_qkv, b_qkv, params["w_proj"], params["b_proj"],
                            bias, heads=heads, nW=nW, L=L)

    # Window merge back to the padded 3-D field.
    x3 = attn.reshape(B, nZ, nH, nW, wz, wh, ww, C)
    x3 = jnp.transpose(x3, (0, 1, 4, 2, 5, 3, 6, 7))
    x3 = x3.reshape(B, Zp, Hp, Wp, C)

    if roll:
        x3 = jnp.roll(x3, shift=(-(wz // 2), -(wh // 2), -(ww // 2)), axis=(1, 2, 3))

    # Crop3D back to original extent
    x3 = x3[:, :Z, :H, :W, :]
    attn_flat = x3.reshape(B * Z * H * W, C)
    sc_flat = shortcut.reshape(B * Z * H * W, C)

    out = block_tail(attn_flat, sc_flat, params)
    return out.reshape(B, N, C)


# ----------------------------------------------------------------------------
# Deterministic parameter initialization (synthetic; shapes follow __init__)
# ----------------------------------------------------------------------------
def init_params(key, dim, heads, n_types):
    wz, wh, ww = WINDOW
    ks = jax.random.split(key, 6)
    std = 0.02
    table_rows = (2 * ww - 1) * wh * wh * wz * wz
    return {
        # EarthAttention3D
        "w_qkv": jax.random.normal(ks[0], (dim, 3 * dim), jnp.float32) * std,
        "b_qkv": jnp.zeros((1, 3 * dim), jnp.float32),
        "w_proj": jax.random.normal(ks[1], (dim, dim), jnp.float32) * std,
        "b_proj": jnp.zeros((1, dim), jnp.float32),
        "bias_table": jax.random.normal(ks[2], (table_rows, n_types, heads),
                                        jnp.float32) * std,
        "pos_idx": jnp.asarray(_construct_position_index(WINDOW), jnp.int32),
        # LayerNorms
        "gamma1": jnp.ones((1, dim), jnp.float32),
        "beta1": jnp.zeros((1, dim), jnp.float32),
        "gamma2": jnp.ones((1, dim), jnp.float32),
        "beta2": jnp.zeros((1, dim), jnp.float32),
        # Mlp
        "w_mlp1": jax.random.normal(ks[3], (dim, 4 * dim), jnp.float32) * std,
        "b_mlp1": jnp.zeros((1, 4 * dim), jnp.float32),
        "w_mlp2": jax.random.normal(ks[4], (4 * dim, dim), jnp.float32) * std,
        "b_mlp2": jnp.zeros((1, dim), jnp.float32),
    }


if __name__ == "__main__":
    # Small shapes consistent with window_size (2, 6, 12): Z=4, H=12, W=24.
    B, Z, H, W = 2, 4, 12, 24
    dim, heads = 32, 4
    wz, wh, ww = WINDOW
    Zp, Hp = Z + (-Z) % wz, H + (-H) % wh
    n_types = (Zp // wz) * (Hp // wh)   # type_of_windows

    key = jax.random.PRNGKey(0)
    pkey, xkey = jax.random.split(key)
    params = init_params(pkey, dim, heads, n_types)
    x = jax.random.normal(xkey, (B, Z * H * W, dim), jnp.float32)

    fwd = jax.jit(functools.partial(earth_specific_block,
                                    Z=Z, H=H, W=W, roll=False, heads=heads))
    out = fwd(x, params)
    out = jax.block_until_ready(out)

    assert out.shape == (B, Z * H * W, dim)
    assert bool(jnp.all(jnp.isfinite(out)))
    print("KERNEL_OK")
</pallas_src>

<mosaic_0001>
module attributes {stable_mosaic.version = 11 : i64} {
  func.func @_attention_kernel(%arg0: i32, %arg1: i32, %arg2: memref<1x1x288x32xf32, #tpu.memory_space<vmem>>, %arg3: memref<32x96xbf16, #tpu.memory_space<vmem>>, %arg4: memref<1x96xf32, #tpu.memory_space<vmem>>, %arg5: memref<32x32xf32, #tpu.memory_space<vmem>>, %arg6: memref<1x32xf32, #tpu.memory_space<vmem>>, %arg7: memref<1x4x144x144xf32, #tpu.memory_space<vmem>>, %arg8: memref<1x1x288x32xf32, #tpu.memory_space<vmem>>) attributes {dimension_semantics = [#tpu.dimension_semantics<parallel>, #tpu.dimension_semantics<parallel>], iteration_bounds = array<i64: 2, 4>, scalar_prefetch = 0 : i64, scratch_operands = 0 : i64, tpu.core_type = #tpu.core_type<tc>, window_params = [{transform_indices = @transform_0, window_bounds = array<i64: 1, 1, 288, 32>}, {pipeline_mode = #tpu.pipeline_mode<synchronous>, transform_indices = @transform_1, window_bounds = array<i64: 32, 96>}, {pipeline_mode = #tpu.pipeline_mode<synchronous>, transform_indices = @transform_2, window_bounds = array<i64: 1, 96>}, {pipeline_mode = #tpu.pipeline_mode<synchronous>, transform_indices = @transform_3, window_bounds = array<i64: 32, 32>}, {pipeline_mode = #tpu.pipeline_mode<synchronous>, transform_indices = @transform_4, window_bounds = array<i64: 1, 32>}, {transform_indices = @transform_5, window_bounds = array<i64: 1, 4, 144, 144>}, {transform_indices = @transform_6, window_bounds = array<i64: 1, 1, 288, 32>}]} {
    %c0 = arith.constant 0 : index
    %c0_0 = arith.constant 0 : index
    %c0_1 = arith.constant 0 : index
    %c0_2 = arith.constant 0 : index
    %0 = vector.load %arg2[%c0, %c0_0, %c0_1, %c0_2] : memref<1x1x288x32xf32, #tpu.memory_space<vmem>>, vector<1x1x288x32xf32>
    %1 = vector.shape_cast %0 : vector<1x1x288x32xf32> to vector<288x32xf32>
    %2 = arith.truncf %1 : vector<288x32xf32> to vector<288x32xbf16>
    %c0_3 = arith.constant 0 : index
    %c0_4 = arith.constant 0 : index
    %3 = vector.load %arg3[%c0_3, %c0_4] : memref<32x96xbf16, #tpu.memory_space<vmem>>, vector<32x96xbf16>
    %cst = arith.constant dense<0.000000e+00> : vector<288x96xf32>
    %4 = tpu.matmul %2, %3, %cst {dimension_numbers = #tpu.dot_dimension_numbers<[1], [0], [0], [1], [0, 0, 1, 1], [], []>} : vector<288x32xbf16>, vector<32x96xbf16>, vector<288x96xf32> -> vector<288x96xf32>
    %c0_5 = arith.constant 0 : index
    %c0_6 = arith.constant 0 : index
    %5 = vector.load %arg4[%c0_5, %c0_6] : memref<1x96xf32, #tpu.memory_space<vmem>>, vector<1x96xf32>
    %6 = vector.broadcast %5 : vector<1x96xf32> to vector<288x96xf32>
    %7 = arith.addf %4, %6 : vector<288x96xf32>
    %8 = vector.extract_strided_slice %7 {offsets = [0, 0], sizes = [288, 32], strides = [1, 1]} : vector<288x96xf32> to vector<288x32xf32>
    %9 = vector.extract_strided_slice %7 {offsets = [0, 32], sizes = [288, 32], strides = [1, 1]} : vector<288x96xf32> to vector<288x32xf32>
    %10 = vector.extract_strided_slice %7 {offsets = [0, 64], sizes = [288, 32], strides = [1, 1]} : vector<288x96xf32> to vector<288x32xf32>
    %c0_7 = arith.constant 0 : index
    %c0_8 = arith.constant 0 : index
    %c0_9 = arith.constant 0 : index
    %c0_10 = arith.constant 0 : index
    %11 = vector.load %arg7[%c0_7, %c0_8, %c0_9, %c0_10] : memref<1x4x144x144xf32, #tpu.memory_space<vmem>>, vector<1x4x144x144xf32>
    %12 = vector.shape_cast %11 : vector<1x4x144x144xf32> to vector<4x144x144xf32>
    %c0_11 = arith.constant 0 : index
    %c0_12 = arith.constant 0 : index
    %13 = vector.load %arg5[%c0_11, %c0_12] : memref<32x32xf32, #tpu.memory_space<vmem>>, vector<32x32xf32>
    %cst_13 = arith.constant 0.000000e+00 : f32
    %14 = vector.broadcast %cst_13 : f32 to vector<288x32xf32>
    %15 = vector.extract_strided_slice %8 {offsets = [0, 0], sizes = [288, 8], strides = [1, 1]} : vector<288x32xf32> to vector<288x8xf32>
    %16 = vector.shape_cast %15 : vector<288x8xf32> to vector<2x144x8xf32>
    %17 = arith.truncf %16 : vector<2x144x8xf32> to vector<2x144x8xbf16>
    %18 = vector.extract_strided_slice %9 {offsets = [0, 0], sizes = [288, 8], strides = [1, 1]} : vector<288x32xf32> to vector<288x8xf32>
    %19 = vector.shape_cast %18 : vector<288x8xf32> to vector<2x144x8xf32>
    %20 = arith.truncf %19 : vector<2x144x8xf32> to vector<2x144x8xbf16>
    %21 = vector.extract_strided_slice %10 {offsets = [0, 0], sizes = [288, 8], strides = [1, 1]} : vector<288x32xf32> to vector<288x8xf32>
    %22 = vector.shape_cast %21 : vector<288x8xf32> to vector<2x144x8xf32>
    %23 = arith.truncf %22 : vector<2x144x8xf32> to vector<2x144x8xbf16>
    "tpu.trace_start"() <{level = 10 : i32, message = "wld,wmd->wlm"}> : () -> ()
    %cst_14 = arith.constant dense<0.000000e+00> : vector<2x144x144xf32>
    %24 = tpu.matmul %17, %20, %cst_14 {dimension_numbers = #tpu.dot_dimension_numbers<[2], [2], [1], [1], [0, 0, 0, 1, 1, 1], [0], [0]>} : vector<2x144x8xbf16>, vector<2x144x8xbf16>, vector<2x144x144xf32> -> vector<2x144x144xf32>
    "tpu.trace_stop"() : () -> ()
    %25 = vector.extract_strided_slice %12 {offsets = [0, 0, 0], sizes = [1, 144, 144], strides = [1, 1, 1]} : vector<4x144x144xf32> to vector<1x144x144xf32>
    %26 = vector.shape_cast %25 : vector<1x144x144xf32> to vector<144x144xf32>
    %27 = vector.shape_cast %26 : vector<144x144xf32> to vector<1x144x144xf32>
    %28 = vector.broadcast %27 : vector<1x144x144xf32> to vector<2x144x144xf32>
    %29 = arith.addf %24, %28 : vector<2x144x144xf32>
    %cst_15 = arith.constant dense<0xFF800000> : vector<2x144xf32>
    %30 = vector.multi_reduction <maximumf>, %29, %cst_15 [2] : vector<2x144x144xf32> to vector<2x144xf32>
    %31 = vector.shape_cast %30 : vector<2x144xf32> to vector<2x144x1xf32>
    %32 = vector.broadcast %31 : vector<2x144x1xf32> to vector<2x144x144xf32>
    %33 = arith.subf %29, %32 : vector<2x144x144xf32>
    %34 = math.exp %33 : vector<2x144x144xf32>
    %cst_16 = arith.constant dense<0.000000e+00> : vector<2x144xf32>
    %35 = vector.multi_reduction <add>, %34, %cst_16 [2] : vector<2x144x144xf32> to vector<2x144xf32>
    %36 = vector.shape_cast %35 : vector<2x144xf32> to vector<2x144x1xf32>
    %37 = tpu.reciprocal %36 {approx = true} : vector<2x144x1xf32> -> vector<2x144x1xf32>
    %38 = vector.broadcast %37 : vector<2x144x1xf32> to vector<2x144x144xf32>
    %39 = arith.mulf %34, %38 : vector<2x144x144xf32>
    %40 = arith.truncf %39 : vector<2x144x144xf32> to vector<2x144x144xbf16>
    "tpu.trace_start"() <{level = 10 : i32, message = "wlm,wmd->wld"}> : () -> ()
    %cst_17 = arith.constant dense<0.000000e+00> : vector<2x144x8xf32>
    %41 = tpu.matmul %40, %23, %cst_17 {dimension_numbers = #tpu.dot_dimension_numbers<[2], [1], [1], [2], [0, 0, 0, 1, 1, 2], [0], [0]>} : vector<2x144x144xbf16>, vector<2x144x8xbf16>, vector<2x144x8xf32> -> vector<2x144x8xf32>
    "tpu.trace_stop"() : () -> ()
    %42 = vector.shape_cast %41 : vector<2x144x8xf32> to vector<288x8xf32>
    %43 = arith.truncf %42 : vector<288x8xf32> to vector<288x8xbf16>
    %44 = vector.extract_strided_slice %13 {offsets = [0, 0], sizes = [8, 32], strides = [1, 1]} : vector<32x32xf32> to vector<8x32xf32>
    %45 = arith.truncf %44 : vector<8x32xf32> to vector<8x32xbf16>
    %cst_18 = arith.constant dense<0.000000e+00> : vector<288x32xf32>
    %46 = tpu.matmul %43, %45, %cst_18 {dimension_numbers = #tpu.dot_dimension_numbers<[1], [0], [0], [1], [0, 0, 1, 1], [], []>} : vector<288x8xbf16>, vector<8x32xbf16>, vector<288x32xf32> -> vector<288x32xf32>
    %47 = arith.addf %14, %46 : vector<288x32xf32>
    %48 = vector.extract_strided_slice %8 {offsets = [0, 8], sizes = [288, 8], strides = [1, 1]} : vector<288x32xf32> to vector<288x8xf32>
    %49 = vector.shape_cast %48 : vector<288x8xf32> to vector<2x144x8xf32>
    %50 = arith.truncf %49 : vector<2x144x8xf32> to vector<2x144x8xbf16>
    %51 = vector.extract_strided_slice %9 {offsets = [0, 8], sizes = [288, 8], strides = [1, 1]} : vector<288x32xf32> to vector<288x8xf32>
    %52 = vector.shape_cast %51 : vector<288x8xf32> to vector<2x144x8xf32>
    %53 = arith.truncf %52 : vector<2x144x8xf32> to vector<2x144x8xbf16>
    %54 = vector.extract_strided_slice %10 {offsets = [0, 8], sizes = [288, 8], strides = [1, 1]} : vector<288x32xf32> to vector<288x8xf32>
    %55 = vector.shape_cast %54 : vector<288x8xf32> to vector<2x144x8xf32>
    %56 = arith.truncf %55 : vector<2x144x8xf32> to vector<2x144x8xbf16>
    "tpu.trace_start"() <{level = 10 : i32, message = "wld,wmd->wlm"}> : () -> ()
    %cst_19 = arith.constant dense<0.000000e+00> : vector<2x144x144xf32>
    %57 = tpu.matmul %50, %53, %cst_19 {dimension_numbers = #tpu.dot_dimension_numbers<[2], [2], [1], [1], [0, 0, 0, 1, 1, 1], [0], [0]>} : vector<2x144x8xbf16>, vector<2x144x8xbf16>, vector<2x144x144xf32> -> vector<2x144x144xf32>
    "tpu.trace_stop"() : () -> ()
    %58 = vector.extract_strided_slice %12 {offsets = [1, 0, 0], sizes = [1, 144, 144], strides = [1, 1, 1]} : vector<4x144x144xf32> to vector<1x144x144xf32>
    %59 = vector.shape_cast %58 : vector<1x144x144xf32> to vector<144x144xf32>
    %60 = vector.shape_cast %59 : vector<144x144xf32> to vector<1x144x144xf32>
    %61 = vector.broadcast %60 : vector<1x144x144xf32> to vector<2x144x144xf32>
    %62 = arith.addf %57, %61 : vector<2x144x144xf32>
    %cst_20 = arith.constant dense<0xFF800000> : vector<2x144xf32>
    %63 = vector.multi_reduction <maximumf>, %62, %cst_20 [2] : vector<2x144x144xf32> to vector<2x144xf32>
    %64 = vector.shape_cast %63 : vector<2x144xf32> to vector<2x144x1xf32>
    %65 = vector.broadcast %64 : vector<2x144x1xf32> to vector<2x144x144xf32>
    %66 = arith.subf %62, %65 : vector<2x144x144xf32>
    %67 = math.exp %66 : vector<2x144x144xf32>
    %cst_21 = arith.constant dense<0.000000e+00> : vector<2x144xf32>
    %68 = vector.multi_reduction <add>, %67, %cst_21 [2] : vector<2x144x144xf32> to vector<2x144xf32>
    %69 = vector.shape_cast %68 : vector<2x144xf32> to vector<2x144x1xf32>
    %70 = tpu.reciprocal %69 {approx = true} : vector<2x144x1xf32> -> vector<2x144x1xf32>
    %71 = vector.broadcast %70 : vector<2x144x1xf32> to vector<2x144x144xf32>
    %72 = arith.mulf %67, %71 : vector<2x144x144xf32>
    %73 = arith.truncf %72 : vector<2x144x144xf32> to vector<2x144x144xbf16>
    "tpu.trace_start"() <{level = 10 : i32, message = "wlm,wmd->wld"}> : () -> ()
    %cst_22 = arith.constant dense<0.000000e+00> : vector<2x144x8xf32>
    %74 = tpu.matmul %73, %56, %cst_22 {dimension_numbers = #tpu.dot_dimension_numbers<[2], [1], [1], [2], [0, 0, 0, 1, 1, 2], [0], [0]>} : vector<2x144x144xbf16>, vector<2x144x8xbf16>, vector<2x144x8xf32> -> vector<2x144x8xf32>
    "tpu.trace_stop"() : () -> ()
    %75 = vector.shape_cast %74 : vector<2x144x8xf32> to vector<288x8xf32>
    %76 = arith.truncf %75 : vector<288x8xf32> to vector<288x8xbf16>
    %77 = vector.extract_strided_slice %13 {offsets = [8, 0], sizes = [8, 32], strides = [1, 1]} : vector<32x32xf32> to vector<8x32xf32>
    %78 = arith.truncf %77 : vector<8x32xf32> to vector<8x32xbf16>
    %cst_23 = arith.constant dense<0.000000e+00> : vector<288x32xf32>
    %79 = tpu.matmul %76, %78, %cst_23 {dimension_numbers = #tpu.dot_dimension_numbers<[1], [0], [0], [1], [0, 0, 1, 1], [], []>} : vector<288x8xbf16>, vector<8x32xbf16>, vector<288x32xf32> -> vector<288x32xf32>
    %80 = arith.addf %47, %79 : vector<288x32xf32>
    %81 = vector.extract_strided_slice %8 {offsets = [0, 16], sizes = [288, 8], strides = [1, 1]} : vector<288x32xf32> to vector<288x8xf32>
    %82 = vector.shape_cast %81 : vector<288x8xf32> to vector<2x144x8xf32>
    %83 = arith.truncf %82 : vector<2x144x8xf32> to vector<2x144x8xbf16>
    %84 = vector.extract_strided_slice %9 {offsets = [0, 16], sizes = [288, 8], strides = [1, 1]} : vector<288x32xf32> to vector<288x8xf32>
    %85 = vector.shape_cast %84 : vector<288x8xf32> to vector<2x144x8xf32>
    %86 = arith.truncf %85 : vector<2x144x8xf32> to vector<2x144x8xbf16>
    %87 = vector.extract_strided_slice %10 {offsets = [0, 16], sizes = [288, 8], strides = [1, 1]} : vector<288x32xf32> to vector<288x8xf32>
    %88 = vector.shape_cast %87 : vector<288x8xf32> to vector<2x144x8xf32>
    %89 = arith.truncf %88 : vector<2x144x8xf32> to vector<2x144x8xbf16>
    "tpu.trace_start"() <{level = 10 : i32, message = "wld,wmd->wlm"}> : () -> ()
    %cst_24 = arith.constant dense<0.000000e+00> : vector<2x144x144xf32>
    %90 = tpu.matmul %83, %86, %cst_24 {dimension_numbers = #tpu.dot_dimension_numbers<[2], [2], [1], [1], [0, 0, 0, 1, 1, 1], [0], [0]>} : vector<2x144x8xbf16>, vector<2x144x8xbf16>, vector<2x144x144xf32> -> vector<2x144x144xf32>
    "tpu.trace_stop"() : () -> ()
    %91 = vector.extract_strided_slice %12 {offsets = [2, 0, 0], sizes = [1, 144, 144], strides = [1, 1, 1]} : vector<4x144x144xf32> to vector<1x144x144xf32>
    %92 = vector.shape_cast %91 : vector<1x144x144xf32> to vector<144x144xf32>
    %93 = vector.shape_cast %92 : vector<144x144xf32> to vector<1x144x144xf32>
    %94 = vector.broadcast %93 : vector<1x144x144xf32> to vector<2x144x144xf32>
    %95 = arith.addf %90, %94 : vector<2x144x144xf32>
    %cst_25 = arith.constant dense<0xFF800000> : vector<2x144xf32>
    %96 = vector.multi_reduction <maximumf>, %95, %cst_25 [2] : vector<2x144x144xf32> to vector<2x144xf32>
    %97 = vector.shape_cast %96 : vector<2x144xf32> to vector<2x144x1xf32>
    %98 = vector.broadcast %97 : vector<2x144x1xf32> to vector<2x144x144xf32>
    %99 = arith.subf %95, %98 : vector<2x144x144xf32>
    %100 = math.exp %99 : vector<2x144x144xf32>
    %cst_26 = arith.constant dense<0.000000e+00> : vector<2x144xf32>
    %101 = vector.multi_reduction <add>, %100, %cst_26 [2] : vector<2x144x144xf32> to vector<2x144xf32>
    %102 = vector.shape_cast %101 : vector<2x144xf32> to vector<2x144x1xf32>
    %103 = tpu.reciprocal %102 {approx = true} : vector<2x144x1xf32> -> vector<2x144x1xf32>
    %104 = vector.broadcast %103 : vector<2x144x1xf32> to vector<2x144x144xf32>
    %105 = arith.mulf %100, %104 : vector<2x144x144xf32>
    %106 = arith.truncf %105 : vector<2x144x144xf32> to vector<2x144x144xbf16>
    "tpu.trace_start"() <{level = 10 : i32, message = "wlm,wmd->wld"}> : () -> ()
    %cst_27 = arith.constant dense<0.000000e+00> : vector<2x144x8xf32>
    %107 = tpu.matmul %106, %89, %cst_27 {dimension_numbers = #tpu.dot_dimension_numbers<[2], [1], [1], [2], [0, 0, 0, 1, 1, 2], [0], [0]>} : vector<2x144x144xbf16>, vector<2x144x8xbf16>, vector<2x144x8xf32> -> vector<2x144x8xf32>
    "tpu.trace_stop"() : () -> ()
    %108 = vector.shape_cast %107 : vector<2x144x8xf32> to vector<288x8xf32>
    %109 = arith.truncf %108 : vector<288x8xf32> to vector<288x8xbf16>
    %110 = vector.extract_strided_slice %13 {offsets = [16, 0], sizes = [8, 32], strides = [1, 1]} : vector<32x32xf32> to vector<8x32xf32>
    %111 = arith.truncf %110 : vector<8x32xf32> to vector<8x32xbf16>
    %cst_28 = arith.constant dense<0.000000e+00> : vector<288x32xf32>
    %112 = tpu.matmul %109, %111, %cst_28 {dimension_numbers = #tpu.dot_dimension_numbers<[1], [0], [0], [1], [0, 0, 1, 1], [], []>} : vector<288x8xbf16>, vector<8x32xbf16>, vector<288x32xf32> -> vector<288x32xf32>
    %113 = arith.addf %80, %112 : vector<288x32xf32>
    %114 = vector.extract_strided_slice %8 {offsets = [0, 24], sizes = [288, 8], strides = [1, 1]} : vector<288x32xf32> to vector<288x8xf32>
    %115 = vector.shape_cast %114 : vector<288x8xf32> to vector<2x144x8xf32>
    %116 = arith.truncf %115 : vector<2x144x8xf32> to vector<2x144x8xbf16>
    %117 = vector.extract_strided_slice %9 {offsets = [0, 24], sizes = [288, 8], strides = [1, 1]} : vector<288x32xf32> to vector<288x8xf32>
    %118 = vector.shape_cast %117 : vector<288x8xf32> to vector<2x144x8xf32>
    %119 = arith.truncf %118 : vector<2x144x8xf32> to vector<2x144x8xbf16>
    %120 = vector.extract_strided_slice %10 {offsets = [0, 24], sizes = [288, 8], strides = [1, 1]} : vector<288x32xf32> to vector<288x8xf32>
    %121 = vector.shape_cast %120 : vector<288x8xf32> to vector<2x144x8xf32>
    %122 = arith.truncf %121 : vector<2x144x8xf32> to vector<2x144x8xbf16>
    "tpu.trace_start"() <{level = 10 : i32, message = "wld,wmd->wlm"}> : () -> ()
    %cst_29 = arith.constant dense<0.000000e+00> : vector<2x144x144xf32>
    %123 = tpu.matmul %116, %119, %cst_29 {dimension_numbers = #tpu.dot_dimension_numbers<[2], [2], [1], [1], [0, 0, 0, 1, 1, 1], [0], [0]>} : vector<2x144x8xbf16>, vector<2x144x8xbf16>, vector<2x144x144xf32> -> vector<2x144x144xf32>
    "tpu.trace_stop"() : () -> ()
    %124 = vector.extract_strided_slice %12 {offsets = [3, 0, 0], sizes = [1, 144, 144], strides = [1, 1, 1]} : vector<4x144x144xf32> to vector<1x144x144xf32>
    %125 = vector.shape_cast %124 : vector<1x144x144xf32> to vector<144x144xf32>
    %126 = vector.shape_cast %125 : vector<144x144xf32> to vector<1x144x144xf32>
    %127 = vector.broadcast %126 : vector<1x144x144xf32> to vector<2x144x144xf32>
    %128 = arith.addf %123, %127 : vector<2x144x144xf32>
    %cst_30 = arith.constant dense<0xFF800000> : vector<2x144xf32>
    %129 = vector.multi_reduction <maximumf>, %128, %cst_30 [2] : vector<2x144x144xf32> to vector<2x144xf32>
    %130 = vector.shape_cast %129 : vector<2x144xf32> to vector<2x144x1xf32>
    %131 = vector.broadcast %130 : vector<2x144x1xf32> to vector<2x144x144xf32>
    %132 = arith.subf %128, %131 : vector<2x144x144xf32>
    %133 = math.exp %132 : vector<2x144x144xf32>
    %cst_31 = arith.constant dense<0.000000e+00> : vector<2x144xf32>
    %134 = vector.multi_reduction <add>, %133, %cst_31 [2] : vector<2x144x144xf32> to vector<2x144xf32>
    %135 = vector.shape_cast %134 : vector<2x144xf32> to vector<2x144x1xf32>
    %136 = tpu.reciprocal %135 {approx = true} : vector<2x144x1xf32> -> vector<2x144x1xf32>
    %137 = vector.broadcast %136 : vector<2x144x1xf32> to vector<2x144x144xf32>
    %138 = arith.mulf %133, %137 : vector<2x144x144xf32>
    %139 = arith.truncf %138 : vector<2x144x144xf32> to vector<2x144x144xbf16>
    "tpu.trace_start"() <{level = 10 : i32, message = "wlm,wmd->wld"}> : () -> ()
    %cst_32 = arith.constant dense<0.000000e+00> : vector<2x144x8xf32>
    %140 = tpu.matmul %139, %122, %cst_32 {dimension_numbers = #tpu.dot_dimension_numbers<[2], [1], [1], [2], [0, 0, 0, 1, 1, 2], [0], [0]>} : vector<2x144x144xbf16>, vector<2x144x8xbf16>, vector<2x144x8xf32> -> vector<2x144x8xf32>
    "tpu.trace_stop"() : () -> ()
    %141 = vector.shape_cast %140 : vector<2x144x8xf32> to vector<288x8xf32>
    %142 = arith.truncf %141 : vector<288x8xf32> to vector<288x8xbf16>
    %143 = vector.extract_strided_slice %13 {offsets = [24, 0], sizes = [8, 32], strides = [1, 1]} : vector<32x32xf32> to vector<8x32xf32>
    %144 = arith.truncf %143 : vector<8x32xf32> to vector<8x32xbf16>
    %cst_33 = arith.constant dense<0.000000e+00> : vector<288x32xf32>
    %145 = tpu.matmul %142, %144, %cst_33 {dimension_numbers = #tpu.dot_dimension_numbers<[1], [0], [0], [1], [0, 0, 1, 1], [], []>} : vector<288x8xbf16>, vector<8x32xbf16>, vector<288x32xf32> -> vector<288x32xf32>
    %146 = arith.addf %113, %145 : vector<288x32xf32>
    %c0_34 = arith.constant 0 : index
    %c0_35 = arith.constant 0 : index
    %147 = vector.load %arg6[%c0_34, %c0_35] : memref<1x32xf32, #tpu.memory_space<vmem>>, vector<1x32xf32>
    %148 = vector.broadcast %147 : vector<1x32xf32> to vector<288x32xf32>
    %149 = arith.addf %146, %148 : vector<288x32xf32>
    %c0_36 = arith.constant 0 : index
    %c0_37 = arith.constant 0 : index
    %c0_38 = arith.constant 0 : index
    %c0_39 = arith.constant 0 : index
    %150 = vector.load %arg8[%c0_36, %c0_37, %c0_38, %c0_39] : memref<1x1x288x32xf32, #tpu.memory_space<vmem>>, vector<1x1x288x32xf32>
    %151 = vector.shape_cast %150 : vector<1x1x288x32xf32> to vector<288x32xf32>
    %152 = vector.shape_cast %149 : vector<288x32xf32> to vector<1x1x288x32xf32>
    tpu.vector_store %arg8[%c0_36, %c0_37, %c0_38, %c0_39], %152 {strides = array<i32>} : memref<1x1x288x32xf32, #tpu.memory_space<vmem>>, vector<1x1x288x32xf32>,
    return
  }
  func.func @transform_0(%arg0: i32, %arg1: i32) -> (i32, i32, i32, i32) {
    %c0_i32 = arith.constant 0 : i32
    %c0_i32_0 = arith.constant 0 : i32
    %c0_i32_1 = arith.constant 0 : i32
    return %arg0, %arg1, %c0_i32, %c0_i32_0 : i32, i32, i32, i32
  }
  func.func @transform_1(%arg0: i32, %arg1: i32) -> (i32, i32) {
    %c0_i32 = arith.constant 0 : i32
    %c0_i32_0 = arith.constant 0 : i32
    %c0_i32_1 = arith.constant 0 : i32
    return %c0_i32, %c0_i32_0 : i32, i32
  }
  func.func @transform_2(%arg0: i32, %arg1: i32) -> (i32, i32) {
    %c0_i32 = arith.constant 0 : i32
    %c0_i32_0 = arith.constant 0 : i32
    %c0_i32_1 = arith.constant 0 : i32
    return %c0_i32, %c0_i32_0 : i32, i32
  }
  func.func @transform_3(%arg0: i32, %arg1: i32) -> (i32, i32) {
    %c0_i32 = arith.constant 0 : i32
    %c0_i32_0 = arith.constant 0 : i32
    %c0_i32_1 = arith.constant 0 : i32
    return %c0_i32, %c0_i32_0 : i32, i32
  }
  func.func @transform_4(%arg0: i32, %arg1: i32) -> (i32, i32) {
    %c0_i32 = arith.constant 0 : i32
    %c0_i32_0 = arith.constant 0 : i32
    %c0_i32_1 = arith.constant 0 : i32
    return %c0_i32, %c0_i32_0 : i32, i32
  }
  func.func @transform_5(%arg0: i32, %arg1: i32) -> (i32, i32, i32, i32) {
    %c0_i32 = arith.constant 0 : i32
    %c0_i32_0 = arith.constant 0 : i32
    %c0_i32_1 = arith.constant 0 : i32
    %c0_i32_2 = arith.constant 0 : i32
    return %arg1, %c0_i32, %c0_i32_0, %c0_i32_1 : i32, i32, i32, i32
  }
  func.func @transform_6(%arg0: i32, %arg1: i32) -> (i32, i32, i32, i32) {
    %c0_i32 = arith.constant 0 : i32
    %c0_i32_0 = arith.constant 0 : i32
    %c0_i32_1 = arith.constant 0 : i32
    return %arg0, %arg1, %c0_i32, %c0_i32_0 : i32, i32, i32, i32
  }
}

module attributes {stable_mosaic.version = 11 : i64} {
  func.func @_tail_kernel(%arg0: i32, %arg1: memref<512x32xf32, #tpu.memory_space<vmem>>, %arg2: memref<512x32xf32, #tpu.memory_space<vmem>>, %arg3: memref<1x32xf32, #tpu.memory_space<vmem>>, %arg4: memref<1x32xf32, #tpu.memory_space<vmem>>, %arg5: memref<1x32xf32, #tpu.memory_space<vmem>>, %arg6: memref<1x32xf32, #tpu.memory_space<vmem>>, %arg7: memref<32x128xbf16, #tpu.memory_space<vmem>>, %arg8: memref<1x128xf32, #tpu.memory_space<vmem>>, %arg9: memref<128x32xbf16, #tpu.memory_space<vmem>>, %arg10: memref<1x32xf32, #tpu.memory_space<vmem>>, %arg11: memref<512x32xf32, #tpu.memory_space<vmem>>) attributes {dimension_semantics = [#tpu.dimension_semantics<parallel>], iteration_bounds = array<i64: 5>, scalar_prefetch = 0 : i64, scratch_operands = 0 : i64, tpu.core_type = #tpu.core_type<tc>, window_params = [{transform_indices = @transform_0, window_bounds = array<i64: 512, 32>}, {transform_indices = @transform_1, window_bounds = array<i64: 512, 32>}, {pipeline_mode = #tpu.pipeline_mode<synchronous>, transform_indices = @transform_2, window_bounds = array<i64: 1, 32>}, {pipeline_mode = #tpu.pipeline_mode<synchronous>, transform_indices = @transform_3, window_bounds = array<i64: 1, 32>}, {pipeline_mode = #tpu.pipeline_mode<synchronous>, transform_indices = @transform_4, window_bounds = array<i64: 1, 32>}, {pipeline_mode = #tpu.pipeline_mode<synchronous>, transform_indices = @transform_5, window_bounds = array<i64: 1, 32>}, {pipeline_mode = #tpu.pipeline_mode<synchronous>, transform_indices = @transform_6, window_bounds = array<i64: 32, 128>}, {pipeline_mode = #tpu.pipeline_mode<synchronous>, transform_indices = @transform_7, window_bounds = array<i64: 1, 128>}, {pipeline_mode = #tpu.pipeline_mode<synchronous>, transform_indices = @transform_8, window_bounds = array<i64: 128, 32>}, {pipeline_mode = #tpu.pipeline_mode<synchronous>, transform_indices = @transform_9, window_bounds = array<i64: 1, 32>}, {transform_indices = @transform_10, window_bounds = array<i64: 512, 32>}]} {
    %c0 = arith.constant 0 : index
    %c0_0 = arith.constant 0 : index
    %0 = vector.load %arg1[%c0, %c0_0] : memref<512x32xf32, #tpu.memory_space<vmem>>, vector<512x32xf32>
    %c0_1 = arith.constant 0 : index
    %c0_2 = arith.constant 0 : index
    %1 = vector.load %arg2[%c0_1, %c0_2] : memref<512x32xf32, #tpu.memory_space<vmem>>, vector<512x32xf32>
    %c0_3 = arith.constant 0 : index
    %c0_4 = arith.constant 0 : index
    %2 = vector.load %arg3[%c0_3, %c0_4] : memref<1x32xf32, #tpu.memory_space<vmem>>, vector<1x32xf32>
    %c0_5 = arith.constant 0 : index
    %c0_6 = arith.constant 0 : index
    %3 = vector.load %arg4[%c0_5, %c0_6] : memref<1x32xf32, #tpu.memory_space<vmem>>, vector<1x32xf32>
    %cst = arith.constant dense<0.000000e+00> : vector<512xf32>
    %4 = vector.multi_reduction <add>, %0, %cst [1] : vector<512x32xf32> to vector<512xf32>
    %5 = vector.shape_cast %4 : vector<512xf32> to vector<512x1xf32>
    %cst_7 = arith.constant 3.200000e+01 : f32
    %6 = vector.broadcast %cst_7 : f32 to vector<512x1xf32>
    %7 = arith.divf %5, %6 : vector<512x1xf32>
    %8 = vector.broadcast %7 : vector<512x1xf32> to vector<512x32xf32>
    %9 = arith.subf %0, %8 : vector<512x32xf32>
    %10 = arith.mulf %9, %9 : vector<512x32xf32>
    %cst_8 = arith.constant dense<0.000000e+00> : vector<512xf32>
    %11 = vector.multi_reduction <add>, %10, %cst_8 [1] : vector<512x32xf32> to vector<512xf32>
    %12 = vector.shape_cast %11 : vector<512xf32> to vector<512x1xf32>
    %cst_9 = arith.constant 3.200000e+01 : f32
    %13 = vector.broadcast %cst_9 : f32 to vector<512x1xf32>
    %14 = arith.divf %12, %13 : vector<512x1xf32>
    %15 = vector.broadcast %7 : vector<512x1xf32> to vector<512x32xf32>
    %16 = arith.subf %0, %15 : vector<512x32xf32>
    %cst_10 = arith.constant 9.99999974E-6 : f32
    %17 = vector.broadcast %cst_10 : f32 to vector<512x1xf32>
    %18 = arith.addf %14, %17 : vector<512x1xf32>
    %19 = math.rsqrt %18 : vector<512x1xf32>
    %20 = vector.broadcast %19 : vector<512x1xf32> to vector<512x32xf32>
    %21 = arith.mulf %16, %20 : vector<512x32xf32>
    %22 = vector.broadcast %2 : vector<1x32xf32> to vector<512x32xf32>
    %23 = arith.mulf %21, %22 : vector<512x32xf32>
    %24 = vector.broadcast %3 : vector<1x32xf32> to vector<512x32xf32>
    %25 = arith.addf %23, %24 : vector<512x32xf32>
    %26 = arith.addf %1, %25 : vector<512x32xf32>
    %27 = arith.truncf %26 : vector<512x32xf32> to vector<512x32xbf16>
    %c0_11 = arith.constant 0 : index
    %c0_12 = arith.constant 0 : index
    %28 = vector.load %arg7[%c0_11, %c0_12] : memref<32x128xbf16, #tpu.memory_space<vmem>>, vector<32x128xbf16>
    %cst_13 = arith.constant dense<0.000000e+00> : vector<512x128xf32>
    %29 = tpu.matmul %27, %28, %cst_13 {dimension_numbers = #tpu.dot_dimension_numbers<[1], [0], [0], [1], [0, 0, 1, 1], [], []>} : vector<512x32xbf16>, vector<32x128xbf16>, vector<512x128xf32> -> vector<512x128xf32>
    %c0_14 = arith.constant 0 : index
    %c0_15 = arith.constant 0 : index
    %30 = vector.load %arg8[%c0_14, %c0_15] : memref<1x128xf32, #tpu.memory_space<vmem>>, vector<1x128xf32>
    %31 = vector.broadcast %30 : vector<1x128xf32> to vector<512x128xf32>
    %32 = arith.addf %29, %31 : vector<512x128xf32>
    %cst_16 = arith.constant 5.000000e-01 : f32
    %33 = vector.broadcast %cst_16 : f32 to vector<512x128xf32>
    %34 = arith.mulf %33, %32 : vector<512x128xf32>
    %cst_17 = arith.constant 0.707106769 : f32
    %35 = vector.broadcast %cst_17 : f32 to vector<512x128xf32>
    %36 = arith.mulf %32, %35 : vector<512x128xf32>
    %37 = math.erf %36 : vector<512x128xf32>
    %cst_18 = arith.constant 1.000000e+00 : f32
    %38 = vector.broadcast %cst_18 : f32 to vector<512x128xf32>
    %39 = arith.addf %38, %37 : vector<512x128xf32>
    %40 = arith.mulf %34, %39 : vector<512x128xf32>
    %41 = arith.truncf %40 : vector<512x128xf32> to vector<512x128xbf16>
    %c0_19 = arith.constant 0 : index
    %c0_20 = arith.constant 0 : index
    %42 = vector.load %arg9[%c0_19, %c0_20] : memref<128x32xbf16, #tpu.memory_space<vmem>>, vector<128x32xbf16>
    %cst_21 = arith.constant dense<0.000000e+00> : vector<512x32xf32>
    %43 = tpu.matmul %41, %42, %cst_21 {dimension_numbers = #tpu.dot_dimension_numbers<[1], [0], [0], [1], [0, 0, 1, 1], [], []>} : vector<512x128xbf16>, vector<128x32xbf16>, vector<512x32xf32> -> vector<512x32xf32>
    %c0_22 = arith.constant 0 : index
    %c0_23 = arith.constant 0 : index
    %44 = vector.load %arg10[%c0_22, %c0_23] : memref<1x32xf32, #tpu.memory_space<vmem>>, vector<1x32xf32>
    %45 = vector.broadcast %44 : vector<1x32xf32> to vector<512x32xf32>
    %46 = arith.addf %43, %45 : vector<512x32xf32>
    %c0_24 = arith.constant 0 : index
    %c0_25 = arith.constant 0 : index
    %47 = vector.load %arg5[%c0_24, %c0_25] : memref<1x32xf32, #tpu.memory_space<vmem>>, vector<1x32xf32>
    %c0_26 = arith.constant 0 : index
    %c0_27 = arith.constant 0 : index
    %48 = vector.load %arg6[%c0_26, %c0_27] : memref<1x32xf32, #tpu.memory_space<vmem>>, vector<1x32xf32>
    %cst_28 = arith.constant dense<0.000000e+00> : vector<512xf32>
    %49 = vector.multi_reduction <add>, %46, %cst_28 [1] : vector<512x32xf32> to vector<512xf32>
    %50 = vector.shape_cast %49 : vector<512xf32> to vector<512x1xf32>
    %cst_29 = arith.constant 3.200000e+01 : f32
    %51 = vector.broadcast %cst_29 : f32 to vector<512x1xf32>
    %52 = arith.divf %50, %51 : vector<512x1xf32>
    %53 = vector.broadcast %52 : vector<512x1xf32> to vector<512x32xf32>
    %54 = arith.subf %46, %53 : vector<512x32xf32>
    %55 = arith.mulf %54, %54 : vector<512x32xf32>
    %cst_30 = arith.constant dense<0.000000e+00> : vector<512xf32>
    %56 = vector.multi_reduction <add>, %55, %cst_30 [1] : vector<512x32xf32> to vector<512xf32>
    %57 = vector.shape_cast %56 : vector<512xf32> to vector<512x1xf32>
    %cst_31 = arith.constant 3.200000e+01 : f32
    %58 = vector.broadcast %cst_31 : f32 to vector<512x1xf32>
    %59 = arith.divf %57, %58 : vector<512x1xf32>
    %60 = vector.broadcast %52 : vector<512x1xf32> to vector<512x32xf32>
    %61 = arith.subf %46, %60 : vector<512x32xf32>
    %cst_32 = arith.constant 9.99999974E-6 : f32
    %62 = vector.broadcast %cst_32 : f32 to vector<512x1xf32>
    %63 = arith.addf %59, %62 : vector<512x1xf32>
    %64 = math.rsqrt %63 : vector<512x1xf32>
    %65 = vector.broadcast %64 : vector<512x1xf32> to vector<512x32xf32>
    %66 = arith.mulf %61, %65 : vector<512x32xf32>
    %67 = vector.broadcast %47 : vector<1x32xf32> to vector<512x32xf32>
    %68 = arith.mulf %66, %67 : vector<512x32xf32>
    %69 = vector.broadcast %48 : vector<1x32xf32> to vector<512x32xf32>
    %70 = arith.addf %68, %69 : vector<512x32xf32>
    %71 = arith.addf %26, %70 : vector<512x32xf32>
    %c0_33 = arith.constant 0 : index
    %c0_34 = arith.constant 0 : index
    %72 = vector.load %arg11[%c0_33, %c0_34] : memref<512x32xf32, #tpu.memory_space<vmem>>, vector<512x32xf32>
    tpu.vector_store %arg11[%c0_33, %c0_34], %71 {strides = array<i32>} : memref<512x32xf32, #tpu.memory_space<vmem>>, vector<512x32xf32>,
    return
  }
  func.func @transform_0(%arg0: i32) -> (i32, i32) {
    %c0_i32 = arith.constant 0 : i32
    %c0_i32_0 = arith.constant 0 : i32
    return %arg0, %c0_i32 : i32, i32
  }
  func.func @transform_1(%arg0: i32) -> (i32, i32) {
    %c0_i32 = arith.constant 0 : i32
    %c0_i32_0 = arith.constant 0 : i32
    return %arg0, %c0_i32 : i32, i32
  }
  func.func @transform_2(%arg0: i32) -> (i32, i32) {
    %c0_i32 = arith.constant 0 : i32
    %c0_i32_0 = arith.constant 0 : i32
    %c0_i32_1 = arith.constant 0 : i32
    return %c0_i32, %c0_i32_0 : i32, i32
  }
  func.func @transform_3(%arg0: i32) -> (i32, i32) {
    %c0_i32 = arith.constant 0 : i32
    %c0_i32_0 = arith.constant 0 : i32
    %c0_i32_1 = arith.constant 0 : i32
    return %c0_i32, %c0_i32_0 : i32, i32
  }
  func.func @transform_4(%arg0: i32) -> (i32, i32) {
    %c0_i32 = arith.constant 0 : i32
    %c0_i32_0 = arith.constant 0 : i32
    %c0_i32_1 = arith.constant 0 : i32
    return %c0_i32, %c0_i32_0 : i32, i32
  }
  func.func @transform_5(%arg0: i32) -> (i32, i32) {
    %c0_i32 = arith.constant 0 : i32
    %c0_i32_0 = arith.constant 0 : i32
    %c0_i32_1 = arith.constant 0 : i32
    return %c0_i32, %c0_i32_0 : i32, i32
  }
  func.func @transform_6(%arg0: i32) -> (i32, i32) {
    %c0_i32 = arith.constant 0 : i32
    %c0_i32_0 = arith.constant 0 : i32
    %c0_i32_1 = arith.constant 0 : i32
    return %c0_i32, %c0_i32_0 : i32, i32
  }
  func.func @transform_7(%arg0: i32) -> (i32, i32) {
    %c0_i32 = arith.constant 0 : i32
    %c0_i32_0 = arith.constant 0 : i32
    %c0_i32_1 = arith.constant 0 : i32
    return %c0_i32, %c0_i32_0 : i32, i32
  }
  func.func @transform_8(%arg0: i32) -> (i32, i32) {
    %c0_i32 = arith.constant 0 : i32
    %c0_i32_0 = arith.constant 0 : i32
    %c0_i32_1 = arith.constant 0 : i32
    return %c0_i32, %c0_i32_0 : i32, i32
  }
  func.func @transform_9(%arg0: i32) -> (i32, i32) {
    %c0_i32 = arith.constant 0 : i32
    %c0_i32_0 = arith.constant 0 : i32
    %c0_i32_1 = arith.constant 0 : i32
    return %c0_i32, %c0_i32_0 : i32, i32
  }
  func.func @transform_10(%arg0: i32) -> (i32, i32) {
    %c0_i32 = arith.constant 0 : i32
    %c0_i32_0 = arith.constant 0 : i32
    return %arg0, %c0_i32 : i32, i32
  }
}

</mosaic_0001>

<llo_original>
// kernel: earth_specific_block.2
$region0: #{earth_specific_block.2}
  #allocation0 [shape = 'u32[]', space=smem, size = 0x4, offset = 0x4, fixed_abs, tag = 'smem constant byte address 0x4 - core index']
  #allocation1 [shape = 'u32[144,128]{1,0:T(1,128)}', space=vmem, size = 0x12000, scoped, tag = 'internal scratch']
  %s0 = inlined_call_operand.vmem [shape: f32[2,4,288,32], index: 0, kind: input, shape index: {}]
  %s1 = inlined_call_operand.vmem [shape: bf16[32,96], index: 1, kind: input, shape index: {}]
  %s2 = inlined_call_operand.vmem [shape: f32[1,96], index: 2, kind: input, shape index: {}]
  %s3 = inlined_call_operand.vmem [shape: f32[32,32], index: 3, kind: input, shape index: {}]
  %s4 = inlined_call_operand.vmem [shape: f32[1,32], index: 4, kind: input, shape index: {}]
  %s5 = inlined_call_operand.vmem [shape: f32[4,4,144,144], index: 5, kind: input, shape index: {}]
  %s6 = inlined_call_operand.vmem [shape: f32[2,4,288,32], index: 6, kind: output, shape index: {}]
  %s7 = sld [smem:[#allocation0]]
  $region57: #{earth_specific_block.2} parent=0
    _
  %s9 = ssub.s32 1, %s7
  %s10 = scalar_select 0, %s9, %s7
  loop: start=0, step=1, limit=10
  $region2: #{earth_specific_block.2} parent=0 // loop_pre_header
    _
  $region3: #{earth_specific_block.2} parent=0 // loop_header
    %s12 = sphi 0, %s16
    %p13 = scmp.ge.s32.totalorder %s12, 10
    %s19 = sphi 0, %s31
    %s20 = sphi 0, %s27
    %s21 = sphi 0, %s19
    %s22 = sphi 0, %s20
    %s23 = sphi 0, %s21
    %s24 = sphi 0, %s22
    %s36 = sphi 0, %s38
    %s39 = sphi 0, %s36
    %s40 = sphi 0, %s39
    %s56 = sphi 0, %s40
    %s60 = sphi 0, %s60
    %s62 = sphi 0, %s60
    %s63 = sphi 0, %s62
    %s77 = sphi 0, %s63
    %s81 = sphi 0, %s81
    %s83 = sphi 0, %s81
    %s84 = sphi 0, %s83
    %s98 = sphi 0, %s84
    %s102 = sphi 0, %s102
    %s104 = sphi 0, %s102
    %s105 = sphi 0, %s104
    %s119 = sphi 0, %s105
    %s123 = sphi 0, %s123
    %s125 = sphi 0, %s123
    %s126 = sphi 0, %s125
    %s140 = sphi 0, %s126
    %s146 = sphi 0, %s148
    %s149 = sphi 0, %s146
    %s150 = sphi 0, %s149
    %s166 = sphi 0, %s150
    %s174 = sphi 0, %s176
    %s177 = sphi 0, %s174
    %s178 = sphi 0, %s177
    %s194 = sphi 0, %s178
  $region4: #{earth_specific_block.2} parent=0 // loop_header_branch
    %15 = sbr.rel (%p13) target = $region8
  $region5: #{earth_specific_block.2} parent=0 // loop_body
    %s17 = ssub.s32 %s12, 1
    %s18 = ssub.s32 %s12, 2
    %s25 = sadd.s32 1, %s20
    %p26 = scmp.ge.s32.totalorder %s25, 4
    %s27 = scalar_select %p26, 0, %s25
    %s28 = sadd.s32 1, %s19
    %s29 = scalar_select %p26, %s28, %s19
    %p30 = scmp.ge.s32.totalorder %s29, 2
    %s31 = scalar_select %p30, 0, %s29
    %s32 = ssub.s32 %s19, %s31
    %s33 = ssub.s32 %s20, %s27
    %s34 = sor.u32 %s32, %s33
    %p35 = scmp.eq.s32.totalorder %s34, 0
    %s37 = sadd.s32 %s36, 1
    %s38 = scalar_select %p35, %s36, %s37
    %p41 = pneg %p35
    %p42 = scmp.eq.s32.totalorder %s12, 7
    %p43 = por %p41, %p42
    %p44 = scmp.ne.s32.totalorder %s36, %s39
    %p45 = scmp.eq.s32.totalorder %s12, 0
    %p46 = por %p44, %p45
    %p47 = scmp.ne.s32.totalorder %s36, %s39
    %p48 = scmp.eq.s32.totalorder %s17, 7
    %p49 = por %p47, %p48
    %p50 = scmp.ne.s32.totalorder %s39, %s40
    %p51 = scmp.eq.s32.totalorder %s17, 0
    %p52 = por %p50, %p51
    %p53 = scmp.ne.s32.totalorder %s39, %s40
    %p54 = scmp.eq.s32.totalorder %s18, 7
    %p55 = por %p53, %p54
    %p57 = scmp.ne.s32.totalorder %s40, %s56
    %p58 = scmp.eq.s32.totalorder %s18, 0
    %p59 = por %p57, %p58
    %s61 = sadd.s32 %s60, 1
    %p64 = scmp.eq.s32.totalorder %s12, 7
    %p65 = scmp.ne.s32.totalorder %s60, %s62
    %p66 = scmp.eq.s32.totalorder %s12, 0
    %p67 = por %p65, %p66
    %p68 = scmp.ne.s32.totalorder %s60, %s62
    %p69 = scmp.eq.s32.totalorder %s17, 7
    %p70 = por %p68, %p69
    %p71 = scmp.ne.s32.totalorder %s62, %s63
    %p72 = scmp.eq.s32.totalorder %s17, 0
    %p73 = por %p71, %p72
    %p74 = scmp.ne.s32.totalorder %s62, %s63
    %p75 = scmp.eq.s32.totalorder %s18, 7
    %p76 = por %p74, %p75
    %p78 = scmp.ne.s32.totalorder %s63, %s77
    %p79 = scmp.eq.s32.totalorder %s18, 0
    %p80 = por %p78, %p79
    %s82 = sadd.s32 %s81, 1
    %p85 = scmp.eq.s32.totalorder %s12, 7
    %p86 = scmp.ne.s32.totalorder %s81, %s83
    %p87 = scmp.eq.s32.totalorder %s12, 0
    %p88 = por %p86, %p87
    %p89 = scmp.ne.s32.totalorder %s81, %s83
    %p90 = scmp.eq.s32.totalorder %s17, 7
    %p91 = por %p89, %p90
    %p92 = scmp.ne.s32.totalorder %s83, %s84
    %p93 = scmp.eq.s32.totalorder %s17, 0
    %p94 = por %p92, %p93
    %p95 = scmp.ne.s32.totalorder %s83, %s84
    %p96 = scmp.eq.s32.totalorder %s18, 7
    %p97 = por %p95, %p96
    %p99 = scmp.ne.s32.totalorder %s84, %s98
    %p100 = scmp.eq.s32.totalorder %s18, 0
    %p101 = por %p99, %p100
    %s103 = sadd.s32 %s102, 1
    %p106 = scmp.eq.s32.totalorder %s12, 7
    %p107 = scmp.ne.s32.totalorder %s102, %s104
    %p108 = scmp.eq.s32.totalorder %s12, 0
    %p109 = por %p107, %p108
    %p110 = scmp.ne.s32.totalorder %s102, %s104
    %p111 = scmp.eq.s32.totalorder %s17, 7
    %p112 = por %p110, %p111
    %p113 = scmp.ne.s32.totalorder %s104, %s105
    %p114 = scmp.eq.s32.totalorder %s17, 0
    %p115 = por %p113, %p114
    %p116 = scmp.ne.s32.totalorder %s104, %s105
    %p117 = scmp.eq.s32.totalorder %s18, 7
    %p118 = por %p116, %p117
    %p120 = scmp.ne.s32.totalorder %s105, %s119
    %p121 = scmp.eq.s32.totalorder %s18, 0
    %p122 = por %p120, %p121
    %s124 = sadd.s32 %s123, 1
    %p127 = scmp.eq.s32.totalorder %s12, 7
    %p128 = scmp.ne.s32.totalorder %s123, %s125
    %p129 = scmp.eq.s32.totalorder %s12, 0
    %p130 = por %p128, %p129
    %p131 = scmp.ne.s32.totalorder %s123, %s125
    %p132 = scmp.eq.s32.totalorder %s17, 7
    %p133 = por %p131, %p132
    %p134 = scmp.ne.s32.totalorder %s125, %s126
    %p135 = scmp.eq.s32.totalorder %s17, 0
    %p136 = por %p134, %p135
    %p137 = scmp.ne.s32.totalorder %s125, %s126
    %p138 = scmp.eq.s32.totalorder %s18, 7
    %p139 = por %p137, %p138
    %p141 = scmp.ne.s32.totalorder %s126, %s140
    %p142 = scmp.eq.s32.totalorder %s18, 0
    %p143 = por %p141, %p142
    %s144 = ssub.s32 %s20, %s27
    %p145 = scmp.eq.s32.totalorder %s144, 0
    %s147 = sadd.s32 %s146, 1
    %s148 = scalar_select %p145, %s146, %s147
    %p151 = pneg %p145
    %p152 = scmp.eq.s32.totalorder %s12, 7
    %p153 = por %p151, %p152
    %p154 = scmp.ne.s32.totalorder %s146, %s149
    %p155 = scmp.eq.s32.totalorder %s12, 0
    %p156 = por %p154, %p155
    %p157 = scmp.ne.s32.totalorder %s146, %s149
    %p158 = scmp.eq.s32.totalorder %s17, 7
    %p159 = por %p157, %p158
    %p160 = scmp.ne.s32.totalorder %s149, %s150
    %p161 = scmp.eq.s32.totalorder %s17, 0
    %p162 = por %p160, %p161
    %p163 = scmp.ne.s32.totalorder %s149, %s150
    %p164 = scmp.eq.s32.totalorder %s18, 7
    %p165 = por %p163, %p164
    %p167 = scmp.ne.s32.totalorder %s150, %s166
    %p168 = scmp.eq.s32.totalorder %s18, 0
    %p169 = por %p167, %p168
    %s170 = ssub.s32 %s19, %s31
    %s171 = ssub.s32 %s20, %s27
    %s172 = sor.u32 %s170, %s171
    %p173 = scmp.eq.s32.totalorder %s172, 0
    %s175 = sadd.s32 %s174, 1
    %s176 = scalar_select %p173, %s174, %s175
    %p179 = pneg %p173
    %p180 = scmp.eq.s32.totalorder %s12, 7
    %p181 = por %p179, %p180
    %p182 = scmp.ne.s32.totalorder %s174, %s177
    %p183 = scmp.eq.s32.totalorder %s12, 0
    %p184 = por %p182, %p183
    %p185 = scmp.ne.s32.totalorder %s174, %s177
    %p186 = scmp.eq.s32.totalorder %s17, 7
    %p187 = por %p185, %p186
    %p188 = scmp.ne.s32.totalorder %s177, %s178
    %p189 = scmp.eq.s32.totalorder %s17, 0
    %p190 = por %p188, %p189
    %p191 = scmp.ne.s32.totalorder %s177, %s178
    %p192 = scmp.eq.s32.totalorder %s18, 7
    %p193 = por %p191, %p192
    %p195 = scmp.ne.s32.totalorder %s178, %s194
    %p196 = scmp.eq.s32.totalorder %s18, 0
    %p197 = por %p195, %p196
    %p198 = scmp.le.s32.totalorder 1, %s12
    %p199 = scmp.lt.s32.totalorder %s12, 9
    %p200 = pnand %p198, %p199
    %p201 = pneg %p200
    // Predicated region
    $region9: #{earth_specific_block.2} parent=5 // pred_check
      _
    $region10: #{earth_specific_block.2} parent=5 // pred_check_branch
      %203 = sbr.rel (%p200) target = $region12
    $region11: #{earth_specific_block.2} parent=5 // pred_region
      %s204 = ssub.s32 %s12, 1
      // Predicated region
      $region13: #{earth_specific_block.2} parent=11 // pred_check
        %p205 = pneg %p73
      $region14: #{earth_specific_block.2} parent=11 // pred_check_branch
        %207 = sbr.rel (%p205) target = $region16
      $region15: #{earth_specific_block.2} parent=11 // pred_region
        _
      $region16: #{earth_specific_block.2} parent=11 // pred_fallthru
        _
      // Predicated region
      $region17: #{earth_specific_block.2} parent=11 // pred_check
        %p208 = pneg %p94
      $region18: #{earth_specific_block.2} parent=11 // pred_check_branch
        %210 = sbr.rel (%p208) target = $region20
      $region19: #{earth_specific_block.2} parent=11 // pred_region
        _
      $region20: #{earth_specific_block.2} parent=11 // pred_fallthru
        _
      // Predicated region
      $region21: #{earth_specific_block.2} parent=11 // pred_check
        %p211 = pneg %p115
      $region22: #{earth_specific_block.2} parent=11 // pred_check_branch
        %213 = sbr.rel (%p211) target = $region24
      $region23: #{earth_specific_block.2} parent=11 // pred_region
        _
      $region24: #{earth_specific_block.2} parent=11 // pred_fallthru
        _
      // Predicated region
      $region25: #{earth_specific_block.2} parent=11 // pred_check
        %p214 = pneg %p136
      $region26: #{earth_specific_block.2} parent=11 // pred_check_branch
        %216 = sbr.rel (%p214) target = $region28
      $region27: #{earth_specific_block.2} parent=11 // pred_region
        _
      $region28: #{earth_specific_block.2} parent=11 // pred_fallthru
        _
    $region12: #{earth_specific_block.2} parent=5 // pred_fallthru
      _
    %p217 = scmp.lt.s32.totalorder %s12, 8
    // Predicated region
    $region29: #{earth_specific_block.2} parent=5 // pred_check
      %p218 = pneg %p217
    $region30: #{earth_specific_block.2} parent=5 // pred_check_branch
      %220 = sbr.rel (%p218) target = $region32
    $region31: #{earth_specific_block.2} parent=5 // pred_region
      // Predicated region
      $region33: #{earth_specific_block.2} parent=31 // pred_check
        %p221 = pneg %p46
      $region34: #{earth_specific_block.2} parent=31 // pred_check_branch
        %223 = sbr.rel (%p221) target = $region36
      $region35: #{earth_specific_block.2} parent=31 // pred_region
        %p224 = scmp.lt.s32.totalorder %s19, 1
        %s225 = scalar_select %p224, %s19, 1
        %p226 = scmp.lt.s32.totalorder %s20, 3
        %s227 = scalar_select %p226, %s20, 3
        %s228 = smul.addr %s227, 36
        %s229 = smul.addr %s225, 144
        %s230 = sadd.s32 %s228, %s229
        %s231 = smul.addr %s230, 8
        %s232 = scalar_lea.vmem %s0, %s231
      $region36: #{earth_specific_block.2} parent=31 // pred_fallthru
        _
      // Predicated region
      $region37: #{earth_specific_block.2} parent=31 // pred_check
        %p233 = pneg %p156
      $region38: #{earth_specific_block.2} parent=31 // pred_check_branch
        %235 = sbr.rel (%p233) target = $region40
      $region39: #{earth_specific_block.2} parent=31 // pred_region
        %p236 = scmp.lt.s32.totalorder %s20, 3
        %s237 = scalar_select %p236, %s20, 3
        %s238 = smul.addr %s237, 144
        %s239 = smul.addr %s238, 8
        %s240 = scalar_lea.vmem %s5, %s239
      $region40: #{earth_specific_block.2} parent=31 // pred_fallthru
        _
    $region32: #{earth_specific_block.2} parent=5 // pred_fallthru
      _
    %p241 = scmp.le.s32.totalorder 1, %s12
    %p242 = scmp.lt.s32.totalorder %s12, 9
    %p243 = pnand %p241, %p242
    %p244 = pneg %p243
    // Predicated region
    $region41: #{earth_specific_block.2} parent=5 // pred_check
      _
    $region42: #{earth_specific_block.2} parent=5 // pred_check_branch
      %246 = sbr.rel (%p243) target = $region44
    $region43: #{earth_specific_block.2} parent=5 // pred_region
      %s247 = ssub.s32 %s12, 1
      %p248 = scmp.lt.s32.totalorder %s21, 1
      %s249 = scalar_select %p248, %s21, 1
      %p250 = scmp.lt.s32.totalorder %s22, 3
      %s251 = scalar_select %p250, %s22, 3
      %s252 = smul.addr %s251, 36
      %s253 = smul.addr %s249, 144
      %s254 = sadd.s32 %s252, %s253
      %s255 = smul.addr %s254, 8
      %s256 = scalar_lea.vmem %s0, %s255
      %p257 = pneg %p52
      %p258 = pneg %p49
      %p259 = pneg %p73
      %p260 = pneg %p70
      %p261 = pneg %p94
      %p262 = pneg %p91
      %p263 = pneg %p115
      %p264 = pneg %p112
      %p265 = pneg %p136
      %p266 = pneg %p133
      %p267 = scmp.lt.s32.totalorder %s22, 3
      %s268 = scalar_select %p267, %s22, 3
      %s269 = smul.addr %s268, 144
      %s270 = smul.addr %s269, 8
      %s271 = scalar_lea.vmem %s5, %s270
      %p272 = pneg %p162
      %p273 = pneg %p159
      %p274 = pneg %p190
      %p275 = pneg %p187
      %p276 = scmp.lt.s32.totalorder %s21, 1
      %s277 = scalar_select %p276, %s21, 1
      %p278 = scmp.lt.s32.totalorder %s22, 3
      %s279 = scalar_select %p278, %s22, 3
      %s280 = smul.addr %s279, 36
      %s281 = smul.addr %s277, 144
      %s282 = sadd.s32 %s280, %s281
      %s283 = smul.addr %s282, 8
      %s284 = scalar_lea.vmem %s6, %s283
      %p285 = scmp.lt.s32.totalorder %s21, 1
      %s286 = scalar_select %p285, %s21, 1
      %p287 = scmp.lt.s32.totalorder %s22, 3
      %s288 = scalar_select %p287, %s22, 3
      %s289 = smul.addr %s288, 36
      %s290 = smul.addr %s286, 144
      %s291 = sadd.s32 %s289, %s290
      %s292 = smul.addr %s291, 8
      %s293 = scalar_lea.vmem %s0, %s292
      %p294 = scmp.lt.s32.totalorder %s22, 3
      %s295 = scalar_select %p294, %s22, 3
      %s296 = smul.addr %s295, 144
      %s297 = smul.addr %s296, 8
      %s298 = scalar_lea.vmem %s5, %s297
      %p299 = scmp.lt.s32.totalorder %s21, 1
      %s300 = scalar_select %p299, %s21, 1
      %p301 = scmp.lt.s32.totalorder %s22, 3
      %s302 = scalar_select %p301, %s22, 3
      %s303 = smul.addr %s302, 36
      %s304 = smul.addr %s300, 144
      %s305 = sadd.s32 %s303, %s304
      %s306 = smul.addr %s305, 8
      %s307 = scalar_lea.vmem %s6, %s306
      %v309 = vld [vmem:[%s293] sm:$0xff]
      %v310 = vld [vmem:[%s293 + $0x8] sm:$0xff]
      %v311 = vld [vmem:[%s293 + $0x10] sm:$0xff]
      %v312 = vld [vmem:[%s293 + $0x18] sm:$0xff]
      %v313 = vld [vmem:[%s293 + $0x20] sm:$0xff]
      %v314 = vld [vmem:[%s293 + $0x28] sm:$0xff]
      %v315 = vld [vmem:[%s293 + $0x30] sm:$0xff]
      %v316 = vld [vmem:[%s293 + $0x38] sm:$0xff]
      %v317 = vld [vmem:[%s293 + $0x40] sm:$0xff]
      %v318 = vld [vmem:[%s293 + $0x48] sm:$0xff]
      %v319 = vld [vmem:[%s293 + $0x50] sm:$0xff]
      %v320 = vld [vmem:[%s293 + $0x58] sm:$0xff]
      %v321 = vld [vmem:[%s293 + $0x60] sm:$0xff]
      %v322 = vld [vmem:[%s293 + $0x68] sm:$0xff]
      %v323 = vld [vmem:[%s293 + $0x70] sm:$0xff]
      %v324 = vld [vmem:[%s293 + $0x78] sm:$0xff]
      %v325 = vld [vmem:[%s293 + $0x80] sm:$0xff]
      %v326 = vld [vmem:[%s293 + $0x88] sm:$0xff]
      %v327 = vld [vmem:[%s293 + $0x90] sm:$0xff]
      %v328 = vld [vmem:[%s293 + $0x98] sm:$0xff]
      %v329 = vld [vmem:[%s293 + $0xa0] sm:$0xff]
      %v330 = vld [vmem:[%s293 + $0xa8] sm:$0xff]
      %v331 = vld [vmem:[%s293 + $0xb0] sm:$0xff]
      %v332 = vld [vmem:[%s293 + $0xb8] sm:$0xff]
      %v333 = vld [vmem:[%s293 + $0xc0] sm:$0xff]
      %v334 = vld [vmem:[%s293 + $0xc8] sm:$0xff]
      %v335 = vld [vmem:[%s293 + $0xd0] sm:$0xff]
      %v336 = vld [vmem:[%s293 + $0xd8] sm:$0xff]
      %v337 = vld [vmem:[%s293 + $0xe0] sm:$0xff]
      %v338 = vld [vmem:[%s293 + $0xe8] sm:$0xff]
      %v339 = vld [vmem:[%s293 + $0xf0] sm:$0xff]
      %v340 = vld [vmem:[%s293 + $0xf8] sm:$0xff]
      %v341 = vld [vmem:[%s293 + $0x100] sm:$0xff]
      %v342 = vld [vmem:[%s293 + $0x108] sm:$0xff]
      %v343 = vld [vmem:[%s293 + $0x110] sm:$0xff]
      %v344 = vld [vmem:[%s293 + $0x118] sm:$0xff]
      %v345 = vpack.c.bf16 %v310, %v309
      %v346 = vpack.c.bf16 %v312, %v311
      %v347 = vpack.c.bf16 %v314, %v313
      %v348 = vpack.c.bf16 %v316, %v315
      %v349 = vpack.c.bf16 %v318, %v317
      %v350 = vpack.c.bf16 %v320, %v319
      %v351 = vpack.c.bf16 %v322, %v321
      %v352 = vpack.c.bf16 %v324, %v323
      %v353 = vpack.c.bf16 %v326, %v325
      %v354 = vpack.c.bf16 %v328, %v327
      %v355 = vpack.c.bf16 %v330, %v329
      %v356 = vpack.c.bf16 %v332, %v331
      %v357 = vpack.c.bf16 %v334, %v333
      %v358 = vpack.c.bf16 %v336, %v335
      %v359 = vpack.c.bf16 %v338, %v337
      %v360 = vpack.c.bf16 %v340, %v339
      %v361 = vpack.c.bf16 %v342, %v341
      %v362 = vpack.c.bf16 %v344, %v343
      %v363 = vld [vmem:[%s1] sm:$0xf]
      %v364 = vld [vmem:[%s1 + $0x4] sm:$0xf]
      %v365 = vld [vmem:[%s1 + $0x8] sm:$0xf]
      %v366 = vld [vmem:[%s1 + $0xc] sm:$0xf]
      %v367 = vld [vmem:[%s2] sm:$0x1]
      %v369 = vlaneseq
      %v370 = vshrl.u32 %v369, 7
      %v371 = vsub.s32 0, %v370
      %v372 = vrot.slane %v367, %v371
      %v378 = vunpack.c.l.b16 %v363
      %v379 = vunpack.c.l.b16 %v364
      %v380 = vunpack.c.l.b16 %v365
      %v381 = vunpack.c.l.b16 %v366
      %v382 = vpack.c.b16 %v379, %v378
      %v383 = vpack.c.b16 %v381, %v380
      %vm386 = vcmask 261120
      %v388 = vsel %vm386, %v345, 0
      %v391 = vsel %vm386, %v346, 0
      %v394 = vsel %vm386, %v347, 0
      %v397 = vsel %vm386, %v348, 0
      %v400 = vsel %vm386, %v349, 0
      %v403 = vsel %vm386, %v350, 0
      %v406 = vsel %vm386, %v351, 0
      %v409 = vsel %vm386, %v352, 0
      %v412 = vsel %vm386, %v353, 0
      %v415 = vsel %vm386, %v354, 0
      %v418 = vsel %vm386, %v355, 0
      %v421 = vsel %vm386, %v356, 0
      %v424 = vsel %vm386, %v357, 0
      %v427 = vsel %vm386, %v358, 0
      %v430 = vsel %vm386, %v359, 0
      %v433 = vsel %vm386, %v360, 0
      %v436 = vsel %vm386, %v361, 0
      %v439 = vsel %vm386, %v362, 0
      %441 = vmatprep.subr.bf16.mxu0 0
      %442 = vmatpush1.bf16.msra.mxu0 %v382
      %443 = vmatprep.subr.bf16.mxu0 0
      %444 = vmatpush1.bf16.msra.mxu0 %v383
      %445 = vmatprep.subr.bf16.mxu0 0
      %446 = vmatpush1.bf16.msra.mxu0 0
      %447 = vmatprep.subr.bf16.mxu0 0
      %448 = vmatpush1.bf16.msra.mxu0 0
      %449 = vmatprep.subr.bf16.mxu0 0
      %450 = vmatpush1.bf16.msra.mxu0 0
      %451 = vmatprep.subr.bf16.mxu0 0
      %452 = vmatpush1.bf16.msra.mxu0 0
      %453 = vmatprep.subr.bf16.mxu0 0
      %454 = vmatpush1.bf16.msra.mxu0 0
      %455 = vmatprep.subr.bf16.mxu0 0
      %456 = vmatpush1.bf16.msra.mxu0 0
      %457 = vmatprep.subr.bf16.mxu0 0
      %458 = vmatpush1.bf16.msra.mxu0 0
      %459 = vmatprep.subr.bf16.mxu0 0
      %460 = vmatpush1.bf16.msra.mxu0 0
      %461 = vmatprep.subr.bf16.mxu0 0
      %462 = vmatpush1.bf16.msra.mxu0 0
      %463 = vmatprep.subr.bf16.mxu0 0
      %464 = vmatpush1.bf16.msra.mxu0 0
      %465 = vmatprep.subr.bf16.mxu0 0
      %466 = vmatpush1.bf16.msra.mxu0 0
      %467 = vmatprep.subr.bf16.mxu0 0
      %468 = vmatpush1.bf16.msra.mxu0 0
      %469 = vmatprep.subr.bf16.mxu0 0
      %470 = vmatpush1.bf16.msra.mxu0 0
      %471 = vmatprep.subr.bf16.mxu0 0
      %472 = vmatpush1.bf16.msra.mxu0 0
      %473 = vmatprep.mubr.bf16.mxu0 0
      %474 = vmatmul.mubr.bf16.gmra.mrb[0].mxu0 %v388
      %v475 = vpop.f32.mrb[0].mxu0
      %v476 = vadd.f32 %v372, %v475
      %v477 = vpop.f32.mrb[0].mxu0
      %v478 = vpop.f32.mrb[0].mxu0
      %v479 = vadd.f32 %v372, %v478
      %v480 = vpop.f32.mrb[0].mxu0
      %481 = vmatprep.mubr.bf16.mxu0 0
      %482 = vmatmul.mubr.bf16.gmra.mrb[0].mxu0 %v391
      %v483 = vpop.f32.mrb[0].mxu0
      %v484 = vadd.f32 %v372, %v483
      %v485 = vpop.f32.mrb[0].mxu0
      %v486 = vpop.f32.mrb[0].mxu0
      %v487 = vadd.f32 %v372, %v486
      %v488 = vpop.f32.mrb[0].mxu0
      %489 = vmatprep.mubr.bf16.mxu0 0
      %490 = vmatmul.mubr.bf16.gmra.mrb[0].mxu0 %v394
      %v491 = vpop.f32.mrb[0].mxu0
      %v492 = vadd.f32 %v372, %v491
      %v493 = vpop.f32.mrb[0].mxu0
      %v494 = vpop.f32.mrb[0].mxu0
      %v495 = vadd.f32 %v372, %v494
      %v496 = vpop.f32.mrb[0].mxu0
      %497 = vmatprep.mubr.bf16.mxu0 0
      %498 = vmatmul.mubr.bf16.gmra.mrb[0].mxu0 %v397
      %v499 = vpop.f32.mrb[0].mxu0
      %v500 = vadd.f32 %v372, %v499
      %v501 = vpop.f32.mrb[0].mxu0
      %v502 = vpop.f32.mrb[0].mxu0
      %v503 = vadd.f32 %v372, %v502
      %v504 = vpop.f32.mrb[0].mxu0
      %505 = vmatprep.mubr.bf16.mxu0 0
      %506 = vmatmul.mubr.bf16.gmra.mrb[0].mxu0 %v400
      %v507 = vpop.f32.mrb[0].mxu0
      %v508 = vadd.f32 %v372, %v507
      %v509 = vpop.f32.mrb[0].mxu0
      %v510 = vpop.f32.mrb[0].mxu0
      %v511 = vadd.f32 %v372, %v510
      %v512 = vpop.f32.mrb[0].mxu0
      %513 = vmatprep.mubr.bf16.mxu0 0
      %514 = vmatmul.mubr.bf16.gmra.mrb[0].mxu0 %v403
      %v515 = vpop.f32.mrb[0].mxu0
      %v516 = vadd.f32 %v372, %v515
      %v517 = vpop.f32.mrb[0].mxu0
      %v518 = vpop.f32.mrb[0].mxu0
      %v519 = vadd.f32 %v372, %v518
      %v520 = vpop.f32.mrb[0].mxu0
      %521 = vmatprep.mubr.bf16.mxu0 0
      %522 = vmatmul.mubr.bf16.gmra.mrb[0].mxu0 %v406
      %v523 = vpop.f32.mrb[0].mxu0
      %v524 = vadd.f32 %v372, %v523
      %v525 = vpop.f32.mrb[0].mxu0
      %v526 = vpop.f32.mrb[0].mxu0
      %v527 = vadd.f32 %v372, %v526
      %v528 = vpop.f32.mrb[0].mxu0
      %529 = vmatprep.mubr.bf16.mxu0 0
      %530 = vmatmul.mubr.bf16.gmra.mrb[0].mxu0 %v409
      %v531 = vpop.f32.mrb[0].mxu0
      %v532 = vadd.f32 %v372, %v531
      %v533 = vpop.f32.mrb[0].mxu0
      %v534 = vpop.f32.mrb[0].mxu0
      %v535 = vadd.f32 %v372, %v534
      %v536 = vpop.f32.mrb[0].mxu0
      %537 = vmatprep.mubr.bf16.mxu0 0
      %538 = vmatmul.mubr.bf16.gmra.mrb[0].mxu0 %v412
      %v539 = vpop.f32.mrb[0].mxu0
      %v540 = vadd.f32 %v372, %v539
      %v541 = vpop.f32.mrb[0].mxu0
      %v542 = vpop.f32.mrb[0].mxu0
      %v543 = vadd.f32 %v372, %v542
      %v544 = vpop.f32.mrb[0].mxu0
      %545 = vmatprep.mubr.bf16.mxu0 0
      %546 = vmatmul.mubr.bf16.gmra.mrb[0].mxu0 %v415
      %v547 = vpop.f32.mrb[0].mxu0
      %v548 = vadd.f32 %v372, %v547
      %v549 = vpop.f32.mrb[0].mxu0
      %v550 = vpop.f32.mrb[0].mxu0
      %v551 = vadd.f32 %v372, %v550
      %v552 = vpop.f32.mrb[0].mxu0
      %553 = vmatprep.mubr.bf16.mxu0 0
      %554 = vmatmul.mubr.bf16.gmra.mrb[0].mxu0 %v418
      %v555 = vpop.f32.mrb[0].mxu0
      %v556 = vadd.f32 %v372, %v555
      %v557 = vpop.f32.mrb[0].mxu0
      %v558 = vpop.f32.mrb[0].mxu0
      %v559 = vadd.f32 %v372, %v558
      %v560 = vpop.f32.mrb[0].mxu0
      %561 = vmatprep.mubr.bf16.mxu0 0
      %562 = vmatmul.mubr.bf16.gmra.mrb[0].mxu0 %v421
      %v563 = vpop.f32.mrb[0].mxu0
      %v564 = vadd.f32 %v372, %v563
      %v565 = vpop.f32.mrb[0].mxu0
      %v566 = vpop.f32.mrb[0].mxu0
      %v567 = vadd.f32 %v372, %v566
      %v568 = vpop.f32.mrb[0].mxu0
      %569 = vmatprep.mubr.bf16.mxu0 0
      %570 = vmatmul.mubr.bf16.gmra.mrb[0].mxu0 %v424
      %v571 = vpop.f32.mrb[0].mxu0
      %v572 = vadd.f32 %v372, %v571
      %v573 = vpop.f32.mrb[0].mxu0
      %v574 = vpop.f32.mrb[0].mxu0
      %v575 = vadd.f32 %v372, %v574
      %v576 = vpop.f32.mrb[0].mxu0
      %577 = vmatprep.mubr.bf16.mxu0 0
      %578 = vmatmul.mubr.bf16.gmra.mrb[0].mxu0 %v427
      %v579 = vpop.f32.mrb[0].mxu0
      %v580 = vadd.f32 %v372, %v579
      %v581 = vpop.f32.mrb[0].mxu0
      %v582 = vpop.f32.mrb[0].mxu0
      %v583 = vadd.f32 %v372, %v582
      %v584 = vpop.f32.mrb[0].mxu0
      %585 = vmatprep.mubr.bf16.mxu0 0
      %586 = vmatmul.mubr.bf16.gmra.mrb[0].mxu0 %v430
      %v587 = vpop.f32.mrb[0].mxu0
      %v588 = vadd.f32 %v372, %v587
      %v589 = vpop.f32.mrb[0].mxu0
      %v590 = vpop.f32.mrb[0].mxu0
      %v591 = vadd.f32 %v372, %v590
      %v592 = vpop.f32.mrb[0].mxu0
      %593 = vmatprep.mubr.bf16.mxu0 0
      %594 = vmatmul.mubr.bf16.gmra.mrb[0].mxu0 %v433
      %v595 = vpop.f32.mrb[0].mxu0
      %v596 = vadd.f32 %v372, %v595
      %v597 = vpop.f32.mrb[0].mxu0
      %v598 = vpop.f32.mrb[0].mxu0
      %v599 = vadd.f32 %v372, %v598
      %v600 = vpop.f32.mrb[0].mxu0
      %601 = vmatprep.mubr.bf16.mxu0 0
      %602 = vmatmul.mubr.bf16.gmra.mrb[0].mxu0 %v436
      %v603 = vpop.f32.mrb[0].mxu0
      %v604 = vadd.f32 %v372, %v603
      %v605 = vpop.f32.mrb[0].mxu0
      %v606 = vpop.f32.mrb[0].mxu0
      %v607 = vadd.f32 %v372, %v606
      %v608 = vpop.f32.mrb[0].mxu0
      %609 = vmatprep.mubr.bf16.mxu0 0
      %610 = vmatmul.mubr.bf16.gmra.mrb[0].mxu0 %v439
      %v611 = vpop.f32.mrb[0].mxu0
      %v612 = vadd.f32 %v372, %v611
      %v613 = vpop.f32.mrb[0].mxu0
      %v614 = vpop.f32.mrb[0].mxu0
      %v615 = vadd.f32 %v372, %v614
      %v616 = vpop.f32.mrb[0].mxu0
      %617 = vdwg.mxu0
      %v618 = vld [vmem:[%s298] sm:$0xff]
      %v619 = vld [vmem:[%s298 + $0x8] sm:$0xff]
      %v620 = vld [vmem:[%s298 + $0x10] sm:$0xff]
      %v621 = vld [vmem:[%s298 + $0x18] sm:$0xff]
      %v622 = vld [vmem:[%s298 + $0x20] sm:$0xff]
      %v623 = vld [vmem:[%s298 + $0x28] sm:$0xff]
      %v624 = vld [vmem:[%s298 + $0x30] sm:$0xff]
      %v625 = vld [vmem:[%s298 + $0x38] sm:$0xff]
      %v626 = vld [vmem:[%s298 + $0x40] sm:$0xff]
      %v627 = vld [vmem:[%s298 + $0x48] sm:$0xff]
      %v628 = vld [vmem:[%s298 + $0x50] sm:$0xff]
      %v629 = vld [vmem:[%s298 + $0x58] sm:$0xff]
      %v630 = vld [vmem:[%s298 + $0x60] sm:$0xff]
      %v631 = vld [vmem:[%s298 + $0x68] sm:$0xff]
      %v632 = vld [vmem:[%s298 + $0x70] sm:$0xff]
      %v633 = vld [vmem:[%s298 + $0x78] sm:$0xff]
      %v634 = vld [vmem:[%s298 + $0x80] sm:$0xff]
      %v635 = vld [vmem:[%s298 + $0x88] sm:$0xff]
      %v636 = vld [vmem:[%s298 + $0x90] sm:$0xff]
      %v637 = vld [vmem:[%s298 + $0x98] sm:$0xff]
      %v638 = vld [vmem:[%s298 + $0xa0] sm:$0xff]
      %v639 = vld [vmem:[%s298 + $0xa8] sm:$0xff]
      %v640 = vld [vmem:[%s298 + $0xb0] sm:$0xff]
      %v641 = vld [vmem:[%s298 + $0xb8] sm:$0xff]
      %v642 = vld [vmem:[%s298 + $0xc0] sm:$0xff]
      %v643 = vld [vmem:[%s298 + $0xc8] sm:$0xff]
      %v644 = vld [vmem:[%s298 + $0xd0] sm:$0xff]
      %v645 = vld [vmem:[%s298 + $0xd8] sm:$0xff]
      %v646 = vld [vmem:[%s298 + $0xe0] sm:$0xff]
      %v647 = vld [vmem:[%s298 + $0xe8] sm:$0xff]
      %v648 = vld [vmem:[%s298 + $0xf0] sm:$0xff]
      %v649 = vld [vmem:[%s298 + $0xf8] sm:$0xff]
      %v650 = vld [vmem:[%s298 + $0x100] sm:$0xff]
      %v651 = vld [vmem:[%s298 + $0x108] sm:$0xff]
      %v652 = vld [vmem:[%s298 + $0x110] sm:$0xff]
      %v653 = vld [vmem:[%s298 + $0x118] sm:$0xff]
      %v654 = vld [vmem:[%s298 + $0x120] sm:$0xff]
      %v655 = vld [vmem:[%s298 + $0x128] sm:$0xff]
      %v656 = vld [vmem:[%s298 + $0x130] sm:$0xff]
      %v657 = vld [vmem:[%s298 + $0x138] sm:$0xff]
      %v658 = vld [vmem:[%s298 + $0x140] sm:$0xff]
      %v659 = vld [vmem:[%s298 + $0x148] sm:$0xff]
      %v660 = vld [vmem:[%s298 + $0x150] sm:$0xff]
      %v661 = vld [vmem:[%s298 + $0x158] sm:$0xff]
      %v662 = vld [vmem:[%s298 + $0x160] sm:$0xff]
      %v663 = vld [vmem:[%s298 + $0x168] sm:$0xff]
      %v664 = vld [vmem:[%s298 + $0x170] sm:$0xff]
      %v665 = vld [vmem:[%s298 + $0x178] sm:$0xff]
      %v666 = vld [vmem:[%s298 + $0x180] sm:$0xff]
      %v667 = vld [vmem:[%s298 + $0x188] sm:$0xff]
      %v668 = vld [vmem:[%s298 + $0x190] sm:$0xff]
      %v669 = vld [vmem:[%s298 + $0x198] sm:$0xff]
      %v670 = vld [vmem:[%s298 + $0x1a0] sm:$0xff]
      %v671 = vld [vmem:[%s298 + $0x1a8] sm:$0xff]
      %v672 = vld [vmem:[%s298 + $0x1b0] sm:$0xff]
      %v673 = vld [vmem:[%s298 + $0x1b8] sm:$0xff]
      %v674 = vld [vmem:[%s298 + $0x1c0] sm:$0xff]
      %v675 = vld [vmem:[%s298 + $0x1c8] sm:$0xff]
      %v676 = vld [vmem:[%s298 + $0x1d0] sm:$0xff]
      %v677 = vld [vmem:[%s298 + $0x1d8] sm:$0xff]
      %v678 = vld [vmem:[%s298 + $0x1e0] sm:$0xff]
      %v679 = vld [vmem:[%s298 + $0x1e8] sm:$0xff]
      %v680 = vld [vmem:[%s298 + $0x1f0] sm:$0xff]
      %v681 = vld [vmem:[%s298 + $0x1f8] sm:$0xff]
      %v682 = vld [vmem:[%s298 + $0x200] sm:$0xff]
      %v683 = vld [vmem:[%s298 + $0x208] sm:$0xff]
      %v684 = vld [vmem:[%s298 + $0x210] sm:$0xff]
      %v685 = vld [vmem:[%s298 + $0x218] sm:$0xff]
      %v686 = vld [vmem:[%s298 + $0x220] sm:$0xff]
      %v687 = vld [vmem:[%s298 + $0x228] sm:$0xff]
      %v688 = vld [vmem:[%s298 + $0x230] sm:$0xff]
      %v689 = vld [vmem:[%s298 + $0x238] sm:$0xff]
      %v690 = vld [vmem:[%s298 + $0x240] sm:$0xff]
      %v691 = vld [vmem:[%s298 + $0x248] sm:$0xff]
      %v692 = vld [vmem:[%s298 + $0x250] sm:$0xff]
      %v693 = vld [vmem:[%s298 + $0x258] sm:$0xff]
      %v694 = vld [vmem:[%s298 + $0x260] sm:$0xff]
      %v695 = vld [vmem:[%s298 + $0x268] sm:$0xff]
      %v696 = vld [vmem:[%s298 + $0x270] sm:$0xff]
      %v697 = vld [vmem:[%s298 + $0x278] sm:$0xff]
      %v698 = vld [vmem:[%s298 + $0x280] sm:$0xff]
      %v699 = vld [vmem:[%s298 + $0x288] sm:$0xff]
      %v700 = vld [vmem:[%s298 + $0x290] sm:$0xff]
      %v701 = vld [vmem:[%s298 + $0x298] sm:$0xff]
      %v702 = vld [vmem:[%s298 + $0x2a0] sm:$0xff]
      %v703 = vld [vmem:[%s298 + $0x2a8] sm:$0xff]
      %v704 = vld [vmem:[%s298 + $0x2b0] sm:$0xff]
      %v705 = vld [vmem:[%s298 + $0x2b8] sm:$0xff]
      %v706 = vld [vmem:[%s298 + $0x2c0] sm:$0xff]
      %v707 = vld [vmem:[%s298 + $0x2c8] sm:$0xff]
      %v708 = vld [vmem:[%s298 + $0x2d0] sm:$0xff]
      %v709 = vld [vmem:[%s298 + $0x2d8] sm:$0xff]
      %v710 = vld [vmem:[%s298 + $0x2e0] sm:$0xff]
      %v711 = vld [vmem:[%s298 + $0x2e8] sm:$0xff]
      %v712 = vld [vmem:[%s298 + $0x2f0] sm:$0xff]
      %v713 = vld [vmem:[%s298 + $0x2f8] sm:$0xff]
      %v714 = vld [vmem:[%s298 + $0x300] sm:$0xff]
      %v715 = vld [vmem:[%s298 + $0x308] sm:$0xff]
      %v716 = vld [vmem:[%s298 + $0x310] sm:$0xff]
      %v717 = vld [vmem:[%s298 + $0x318] sm:$0xff]
      %v718 = vld [vmem:[%s298 + $0x320] sm:$0xff]
      %v719 = vld [vmem:[%s298 + $0x328] sm:$0xff]
      %v720 = vld [vmem:[%s298 + $0x330] sm:$0xff]
      %v721 = vld [vmem:[%s298 + $0x338] sm:$0xff]
      %v722 = vld [vmem:[%s298 + $0x340] sm:$0xff]
      %v723 = vld [vmem:[%s298 + $0x348] sm:$0xff]
      %v724 = vld [vmem:[%s298 + $0x350] sm:$0xff]
      %v725 = vld [vmem:[%s298 + $0x358] sm:$0xff]
      %v726 = vld [vmem:[%s298 + $0x360] sm:$0xff]
      %v727 = vld [vmem:[%s298 + $0x368] sm:$0xff]
      %v728 = vld [vmem:[%s298 + $0x370] sm:$0xff]
      %v729 = vld [vmem:[%s298 + $0x378] sm:$0xff]
      %v730 = vld [vmem:[%s298 + $0x380] sm:$0xff]
      %v731 = vld [vmem:[%s298 + $0x388] sm:$0xff]
      %v732 = vld [vmem:[%s298 + $0x390] sm:$0xff]
      %v733 = vld [vmem:[%s298 + $0x398] sm:$0xff]
      %v734 = vld [vmem:[%s298 + $0x3a0] sm:$0xff]
      %v735 = vld [vmem:[%s298 + $0x3a8] sm:$0xff]
      %v736 = vld [vmem:[%s298 + $0x3b0] sm:$0xff]
      %v737 = vld [vmem:[%s298 + $0x3b8] sm:$0xff]
      %v738 = vld [vmem:[%s298 + $0x3c0] sm:$0xff]
      %v739 = vld [vmem:[%s298 + $0x3c8] sm:$0xff]
      %v740 = vld [vmem:[%s298 + $0x3d0] sm:$0xff]
      %v741 = vld [vmem:[%s298 + $0x3d8] sm:$0xff]
      %v742 = vld [vmem:[%s298 + $0x3e0] sm:$0xff]
      %v743 = vld [vmem:[%s298 + $0x3e8] sm:$0xff]
      %v744 = vld [vmem:[%s298 + $0x3f0] sm:$0xff]
      %v745 = vld [vmem:[%s298 + $0x3f8] sm:$0xff]
      %v746 = vld [vmem:[%s298 + $0x400] sm:$0xff]
      %v747 = vld [vmem:[%s298 + $0x408] sm:$0xff]
      %v748 = vld [vmem:[%s298 + $0x410] sm:$0xff]
      %v749 = vld [vmem:[%s298 + $0x418] sm:$0xff]
      %v750 = vld [vmem:[%s298 + $0x420] sm:$0xff]
      %v751 = vld [vmem:[%s298 + $0x428] sm:$0xff]
      %v752 = vld [vmem:[%s298 + $0x430] sm:$0xff]
      %v753 = vld [vmem:[%s298 + $0x438] sm:$0xff]
      %v754 = vld [vmem:[%s298 + $0x440] sm:$0xff]
      %v755 = vld [vmem:[%s298 + $0x448] sm:$0xff]
      %v756 = vld [vmem:[%s298 + $0x450] sm:$0xff]
      %v757 = vld [vmem:[%s298 + $0x458] sm:$0xff]
      %v758 = vld [vmem:[%s298 + $0x460] sm:$0xff]
      %v759 = vld [vmem:[%s298 + $0x468] sm:$0xff]
      %v760 = vld [vmem:[%s298 + $0x470] sm:$0xff]
      %v761 = vld [vmem:[%s298 + $0x478] sm:$0xff]
      %v762 = vld [vmem:[%s3] sm:$0xff]
      %v763 = vld [vmem:[%s3 + $0x8] sm:$0xff]
      %v764 = vld [vmem:[%s3 + $0x10] sm:$0xff]
      %v765 = vld [vmem:[%s3 + $0x18] sm:$0xff]
      %v766 = vpack.c.bf16 %v479, %v476
      %v767 = vpack.c.bf16 %v487, %v484
      %v768 = vpack.c.bf16 %v495, %v492
      %v769 = vpack.c.bf16 %v503, %v500
      %v770 = vpack.c.bf16 %v511, %v508
      %v771 = vpack.c.bf16 %v519, %v516
      %v772 = vpack.c.bf16 %v527, %v524
      %v773 = vpack.c.bf16 %v535, %v532
      %v774 = vpack.c.bf16 %v543, %v540
      %v775 = vpack.c.bf16 %v551, %v548
      %v776 = vpack.c.bf16 %v559, %v556
      %v777 = vpack.c.bf16 %v567, %v564
      %v778 = vpack.c.bf16 %v575, %v572
      %v779 = vpack.c.bf16 %v583, %v580
      %v780 = vpack.c.bf16 %v591, %v588
      %v781 = vpack.c.bf16 %v599, %v596
      %v782 = vpack.c.bf16 %v607, %v604
      %v783 = vpack.c.bf16 %v615, %v612
      %793 = vrot.lane.b32.xlu0 %v766, 96
      %v794 = vpop.permute.xlu0 %793
      %795 = vrot.lane.b32.xlu0 %v767, 96
      %v796 = vpop.permute.xlu0 %795
      %797 = vrot.lane.b32.xlu0 %v768, 96
      %v798 = vpop.permute.xlu0 %797
      %799 = vrot.lane.b32.xlu0 %v769, 96
      %v800 = vpop.permute.xlu0 %799
      %801 = vrot.lane.b32.xlu0 %v770, 96
      %v802 = vpop.permute.xlu0 %801
      %803 = vrot.lane.b32.xlu0 %v771, 96
      %v804 = vpop.permute.xlu0 %803
      %805 = vrot.lane.b32.xlu0 %v772, 96
      %v806 = vpop.permute.xlu0 %805
      %807 = vrot.lane.b32.xlu0 %v773, 96
      %v808 = vpop.permute.xlu0 %807
      %809 = vrot.lane.b32.xlu0 %v774, 96
      %v810 = vpop.permute.xlu0 %809
      %vm811 = vcmask 64512
      %v813 = vsel %vm811, %v766, 0
      %v816 = vsel %vm811, %v767, 0
      %v819 = vsel %vm811, %v768, 0
      %v822 = vsel %vm811, %v769, 0
      %v825 = vsel %vm811, %v770, 0
      %v828 = vsel %vm811, %v771, 0
      %v831 = vsel %vm811, %v772, 0
      %v834 = vsel %vm811, %v773, 0
      %v837 = vsel %vm811, %v774, 0
      %v840 = vsel %vm811, %v794, 0
      %v843 = vsel %vm811, %v796, 0
      %v846 = vsel %vm811, %v798, 0
      %v849 = vsel %vm811, %v800, 0
      %v852 = vsel %vm811, %v802, 0
      %v855 = vsel %vm811, %v804, 0
      %v858 = vsel %vm811, %v806, 0
      %v861 = vsel %vm811, %v808, 0
      %v864 = vsel %vm811, %v810, 0
      %866 = vmatprep.subr.bf16.mxu0 0
      %867 = vmatpush1.bf16.xpose.msra.mxu0 %v840
      %868 = vmatprep.subr.bf16.mxu0 0
      %869 = vmatpush1.bf16.xpose.msra.mxu0 %v843
      %870 = vmatprep.subr.bf16.mxu0 0
      %871 = vmatpush1.bf16.xpose.msra.mxu0 %v846
      %872 = vmatprep.subr.bf16.mxu0 0
      %873 = vmatpush1.bf16.xpose.msra.mxu0 %v849
      %874 = vmatprep.subr.bf16.mxu0 0
      %875 = vmatpush1.bf16.xpose.msra.mxu0 %v852
      %876 = vmatprep.subr.bf16.mxu0 0
      %877 = vmatpush1.bf16.xpose.msra.mxu0 %v855
      %878 = vmatprep.subr.bf16.mxu0 0
      %879 = vmatpush1.bf16.xpose.msra.mxu0 %v858
      %880 = vmatprep.subr.bf16.mxu0 0
      %881 = vmatpush1.bf16.xpose.msra.mxu0 %v861
      %882 = vmatprep.subr.bf16.mxu0 0
      %883 = vmatpush1.bf16.xpose.msra.mxu0 %v864
      %884 = vmatprep.subr.bf16.mxu0 0
      %885 = vmatpush1.bf16.xpose.msra.mxu0 0
      %886 = vmatprep.subr.bf16.mxu0 0
      %887 = vmatpush1.bf16.xpose.msra.mxu0 0
      %888 = vmatprep.subr.bf16.mxu0 0
      %889 = vmatpush1.bf16.xpose.msra.mxu0 0
      %890 = vmatprep.subr.bf16.mxu0 0
      %891 = vmatpush1.bf16.xpose.msra.mxu0 0
      %892 = vmatprep.subr.bf16.mxu0 0
      %893 = vmatpush1.bf16.xpose.msra.mxu0 0
      %894 = vmatprep.subr.bf16.mxu0 0
      %895 = vmatpush1.bf16.xpose.msra.mxu0 0
      %896 = vmatprep.subr.bf16.mxu0 0
      %897 = vmatpush1.bf16.xpose.msra.mxu0 0
      %898 = vmatprep.mubr.bf16.mxu0 0
      %899 = vmatmul.mubr.bf16.gmra.mrb[0].mxu0 %v813
      %v900 = vpop.f32.mrb[0].mxu0
      %v901 = vadd.f32 %v618, %v900
      %v902 = vpop.f32.mrb[0].mxu0
      %v903 = vadd.f32 %v619, %v902
      %v904 = vpop.f32.mrb[0].mxu0
      %v905 = vadd.f32 %v620, %v904
      %v906 = vpop.f32.mrb[0].mxu0
      %v907 = vadd.f32 %v621, %v906
      %908 = vmatprep.mubr.bf16.mxu0 0
      %909 = vmatmul.mubr.bf16.gmra.mrb[0].mxu0 %v816
      %v910 = vpop.f32.mrb[0].mxu0
      %v911 = vadd.f32 %v622, %v910
      %v912 = vpop.f32.mrb[0].mxu0
      %v913 = vadd.f32 %v623, %v912
      %v914 = vpop.f32.mrb[0].mxu0
      %v915 = vadd.f32 %v624, %v914
      %v916 = vpop.f32.mrb[0].mxu0
      %v917 = vadd.f32 %v625, %v916
      %918 = vmatprep.mubr.bf16.mxu0 0
      %919 = vmatmul.mubr.bf16.gmra.mrb[0].mxu0 %v819
      %v920 = vpop.f32.mrb[0].mxu0
      %v921 = vadd.f32 %v626, %v920
      %v922 = vpop.f32.mrb[0].mxu0
      %v923 = vadd.f32 %v627, %v922
      %v924 = vpop.f32.mrb[0].mxu0
      %v925 = vadd.f32 %v628, %v924
      %v926 = vpop.f32.mrb[0].mxu0
      %v927 = vadd.f32 %v629, %v926
      %928 = vmatprep.mubr.bf16.mxu0 0
      %929 = vmatmul.mubr.bf16.gmra.mrb[0].mxu0 %v822
      %v930 = vpop.f32.mrb[0].mxu0
      %v931 = vadd.f32 %v630, %v930
      %v932 = vpop.f32.mrb[0].mxu0
      %v933 = vadd.f32 %v631, %v932
      %v934 = vpop.f32.mrb[0].mxu0
      %v935 = vadd.f32 %v632, %v934
      %v936 = vpop.f32.mrb[0].mxu0
      %v937 = vadd.f32 %v633, %v936
      %938 = vmatprep.mubr.bf16.mxu0 0
      %939 = vmatmul.mubr.bf16.gmra.mrb[0].mxu0 %v825
      %v940 = vpop.f32.mrb[0].mxu0
      %v941 = vadd.f32 %v634, %v940
      %v942 = vpop.f32.mrb[0].mxu0
      %v943 = vadd.f32 %v635, %v942
      %v944 = vpop.f32.mrb[0].mxu0
      %v945 = vadd.f32 %v636, %v944
      %v946 = vpop.f32.mrb[0].mxu0
      %v947 = vadd.f32 %v637, %v946
      %948 = vmatprep.mubr.bf16.mxu0 0
      %949 = vmatmul.mubr.bf16.gmra.mrb[0].mxu0 %v828
      %v950 = vpop.f32.mrb[0].mxu0
      %v951 = vadd.f32 %v638, %v950
      %v952 = vpop.f32.mrb[0].mxu0
      %v953 = vadd.f32 %v639, %v952
      %v954 = vpop.f32.mrb[0].mxu0
      %v955 = vadd.f32 %v640, %v954
      %v956 = vpop.f32.mrb[0].mxu0
      %v957 = vadd.f32 %v641, %v956
      %958 = vmatprep.mubr.bf16.mxu0 0
      %959 = vmatmul.mubr.bf16.gmra.mrb[0].mxu0 %v831
      %v960 = vpop.f32.mrb[0].mxu0
      %v961 = vadd.f32 %v642, %v960
      %v962 = vpop.f32.mrb[0].mxu0
      %v963 = vadd.f32 %v643, %v962
      %v964 = vpop.f32.mrb[0].mxu0
      %v965 = vadd.f32 %v644, %v964
      %v966 = vpop.f32.mrb[0].mxu0
      %v967 = vadd.f32 %v645, %v966
      %968 = vmatprep.mubr.bf16.mxu0 0
      %969 = vmatmul.mubr.bf16.gmra.mrb[0].mxu0 %v834
      %v970 = vpop.f32.mrb[0].mxu0
      %v971 = vadd.f32 %v646, %v970
      %v972 = vpop.f32.mrb[0].mxu0
      %v973 = vadd.f32 %v647, %v972
      %v974 = vpop.f32.mrb[0].mxu0
      %v975 = vadd.f32 %v648, %v974
      %v976 = vpop.f32.mrb[0].mxu0
      %v977 = vadd.f32 %v649, %v976
      %978 = vmatprep.mubr.bf16.mxu0 0
      %979 = vmatmul.mubr.bf16.gmra.mrb[0].mxu0 %v837
      %v980 = vpop.f32.mrb[0].mxu0
      %v981 = vadd.f32 %v650, %v980
      %v982 = vpop.f32.mrb[0].mxu0
      %v983 = vadd.f32 %v651, %v982
      %v984 = vpop.f32.mrb[0].mxu0
      %v985 = vadd.f32 %v652, %v984
      %v986 = vpop.f32.mrb[0].mxu0
      %v987 = vadd.f32 %v653, %v986
      %988 = vdwg.mxu0
      %998 = vrot.lane.b32.xlu0 %v775, 96
      %v999 = vpop.permute.xlu0 %998
      %1000 = vrot.lane.b32.xlu0 %v776, 96
      %v1001 = vpop.permute.xlu0 %1000
      %1002 = vrot.lane.b32.xlu0 %v777, 96
      %v1003 = vpop.permute.xlu0 %1002
      %1004 = vrot.lane.b32.xlu0 %v778, 96
      %v1005 = vpop.permute.xlu0 %1004
      %1006 = vrot.lane.b32.xlu0 %v779, 96
      %v1007 = vpop.permute.xlu0 %1006
      %1008 = vrot.lane.b32.xlu0 %v780, 96
      %v1009 = vpop.permute.xlu0 %1008
      %1010 = vrot.lane.b32.xlu0 %v781, 96
      %v1011 = vpop.permute.xlu0 %1010
      %1012 = vrot.lane.b32.xlu0 %v782, 96
      %v1013 = vpop.permute.xlu0 %1012
      %1014 = vrot.lane.b32.xlu0 %v783, 96
      %v1015 = vpop.permute.xlu0 %1014
      %v1017 = vsel %vm811, %v775, 0
      %v1020 = vsel %vm811, %v776, 0
      %v1023 = vsel %vm811, %v777, 0
      %v1026 = vsel %vm811, %v778, 0
      %v1029 = vsel %vm811, %v779, 0
      %v1032 = vsel %vm811, %v780, 0
      %v1035 = vsel %vm811, %v781, 0
      %v1038 = vsel %vm811, %v782, 0
      %v1041 = vsel %vm811, %v783, 0
      %v1044 = vsel %vm811, %v999, 0
      %v1047 = vsel %vm811, %v1001, 0
      %v1050 = vsel %vm811, %v1003, 0
      %v1053 = vsel %vm811, %v1005, 0
      %v1056 = vsel %vm811, %v1007, 0
      %v1059 = vsel %vm811, %v1009, 0
      %v1062 = vsel %vm811, %v1011, 0
      %v1065 = vsel %vm811, %v1013, 0
      %v1068 = vsel %vm811, %v1015, 0
      %1070 = vmatprep.subr.bf16.mxu0 0
      %1071 = vmatpush1.bf16.xpose.msra.mxu0 %v1044
      %1072 = vmatprep.subr.bf16.mxu0 0
      %1073 = vmatpush1.bf16.xpose.msra.mxu0 %v1047
      %1074 = vmatprep.subr.bf16.mxu0 0
      %1075 = vmatpush1.bf16.xpose.msra.mxu0 %v1050
      %1076 = vmatprep.subr.bf16.mxu0 0
      %1077 = vmatpush1.bf16.xpose.msra.mxu0 %v1053
      %1078 = vmatprep.subr.bf16.mxu0 0
      %1079 = vmatpush1.bf16.xpose.msra.mxu0 %v1056
      %1080 = vmatprep.subr.bf16.mxu0 0
      %1081 = vmatpush1.bf16.xpose.msra.mxu0 %v1059
      %1082 = vmatprep.subr.bf16.mxu0 0
      %1083 = vmatpush1.bf16.xpose.msra.mxu0 %v1062
      %1084 = vmatprep.subr.bf16.mxu0 0
      %1085 = vmatpush1.bf16.xpose.msra.mxu0 %v1065
      %1086 = vmatprep.subr.bf16.mxu0 0
      %1087 = vmatpush1.bf16.xpose.msra.mxu0 %v1068
      %1088 = vmatprep.subr.bf16.mxu0 0
      %1089 = vmatpush1.bf16.xpose.msra.mxu0 0
      %1090 = vmatprep.subr.bf16.mxu0 0
      %1091 = vmatpush1.bf16.xpose.msra.mxu0 0
      %1092 = vmatprep.subr.bf16.mxu0 0
      %1093 = vmatpush1.bf16.xpose.msra.mxu0 0
      %1094 = vmatprep.subr.bf16.mxu0 0
      %1095 = vmatpush1.bf16.xpose.msra.mxu0 0
      %1096 = vmatprep.subr.bf16.mxu0 0
      %1097 = vmatpush1.bf16.xpose.msra.mxu0 0
      %1098 = vmatprep.subr.bf16.mxu0 0
      %1099 = vmatpush1.bf16.xpose.msra.mxu0 0
      %1100 = vmatprep.subr.bf16.mxu0 0
      %1101 = vmatpush1.bf16.xpose.msra.mxu0 0
      %1102 = vmatprep.mubr.bf16.mxu0 0
      %1103 = vmatmul.mubr.bf16.gmra.mrb[0].mxu0 %v1017
      %v1104 = vpop.f32.mrb[0].mxu0
      %v1105 = vadd.f32 %v618, %v1104
      %v1106 = vpop.f32.mrb[0].mxu0
      %v1107 = vadd.f32 %v619, %v1106
      %v1108 = vpop.f32.mrb[0].mxu0
      %v1109 = vadd.f32 %v620, %v1108
      %v1110 = vpop.f32.mrb[0].mxu0
      %v1111 = vadd.f32 %v621, %v1110
      %1112 = vmatprep.mubr.bf16.mxu0 0
      %1113 = vmatmul.mubr.bf16.gmra.mrb[0].mxu0 %v1020
      %v1114 = vpop.f32.mrb[0].mxu0
      %v1115 = vadd.f32 %v622, %v1114
      %v1116 = vpop.f32.mrb[0].mxu0
      %v1117 = vadd.f32 %v623, %v1116
      %v1118 = vpop.f32.mrb[0].mxu0
      %v1119 = vadd.f32 %v624, %v1118
      %v1120 = vpop.f32.mrb[0].mxu0
      %v1121 = vadd.f32 %v625, %v1120
      %1122 = vmatprep.mubr.bf16.mxu0 0
      %1123 = vmatmul.mubr.bf16.gmra.mrb[0].mxu0 %v1023
      %v1124 = vpop.f32.mrb[0].mxu0
      %v1125 = vadd.f32 %v626, %v1124
      %v1126 = vpop.f32.mrb[0].mxu0
      %v1127 = vadd.f32 %v627, %v1126
      %v1128 = vpop.f32.mrb[0].mxu0
      %v1129 = vadd.f32 %v628, %v1128
      %v1130 = vpop.f32.mrb[0].mxu0
      %v1131 = vadd.f32 %v629, %v1130
      %1132 = vmatprep.mubr.bf16.mxu0 0
      %1133 = vmatmul.mubr.bf16.gmra.mrb[0].mxu0 %v1026
      %v1134 = vpop.f32.mrb[0].mxu0
      %v1135 = vadd.f32 %v630, %v1134
      %v1136 = vpop.f32.mrb[0].mxu0
      %v1137 = vadd.f32 %v631, %v1136
      %v1138 = vpop.f32.mrb[0].mxu0
      %v1139 = vadd.f32 %v632, %v1138
      %v1140 = vpop.f32.mrb[0].mxu0
      %v1141 = vadd.f32 %v633, %v1140
      %1142 = vmatprep.mubr.bf16.mxu0 0
      %1143 = vmatmul.mubr.bf16.gmra.mrb[0].mxu0 %v1029
      %v1144 = vpop.f32.mrb[0].mxu0
      %v1145 = vadd.f32 %v634, %v1144
      %v1146 = vpop.f32.mrb[0].mxu0
      %v1147 = vadd.f32 %v635, %v1146
      %v1148 = vpop.f32.mrb[0].mxu0
      %v1149 = vadd.f32 %v636, %v1148
      %v1150 = vpop.f32.mrb[0].mxu0
      %v1151 = vadd.f32 %v637, %v1150
      %1152 = vmatprep.mubr.bf16.mxu0 0
      %1153 = vmatmul.mubr.bf16.gmra.mrb[0].mxu0 %v1032
      %v1154 = vpop.f32.mrb[0].mxu0
      %v1155 = vadd.f32 %v638, %v1154
      %v1156 = vpop.f32.mrb[0].mxu0
      %v1157 = vadd.f32 %v639, %v1156
      %v1158 = vpop.f32.mrb[0].mxu0
      %v1159 = vadd.f32 %v640, %v1158
      %v1160 = vpop.f32.mrb[0].mxu0
      %v1161 = vadd.f32 %v641, %v1160
      %1162 = vmatprep.mubr.bf16.mxu0 0
      %1163 = vmatmul.mubr.bf16.gmra.mrb[0].mxu0 %v1035
      %v1164 = vpop.f32.mrb[0].mxu0
      %v1165 = vadd.f32 %v642, %v1164
      %v1166 = vpop.f32.mrb[0].mxu0
      %v1167 = vadd.f32 %v643, %v1166
      %v1168 = vpop.f32.mrb[0].mxu0
      %v1169 = vadd.f32 %v644, %v1168
      %v1170 = vpop.f32.mrb[0].mxu0
      %v1171 = vadd.f32 %v645, %v1170
      %1172 = vmatprep.mubr.bf16.mxu0 0
      %1173 = vmatmul.mubr.bf16.gmra.mrb[0].mxu0 %v1038
      %v1174 = vpop.f32.mrb[0].mxu0
      %v1175 = vadd.f32 %v646, %v1174
      %v1176 = vpop.f32.mrb[0].mxu0
      %v1177 = vadd.f32 %v647, %v1176
      %v1178 = vpop.f32.mrb[0].mxu0
      %v1179 = vadd.f32 %v648, %v1178
      %v1180 = vpop.f32.mrb[0].mxu0
      %v1181 = vadd.f32 %v649, %v1180
      %1182 = vmatprep.mubr.bf16.mxu0 0
      %1183 = vmatmul.mubr.bf16.gmra.mrb[0].mxu0 %v1041
      %v1184 = vpop.f32.mrb[0].mxu0
      %v1185 = vadd.f32 %v650, %v1184
      %v1186 = vpop.f32.mrb[0].mxu0
      %v1187 = vadd.f32 %v651, %v1186
      %v1188 = vpop.f32.mrb[0].mxu0
      %v1189 = vadd.f32 %v652, %v1188
      %v1190 = vpop.f32.mrb[0].mxu0
      %v1191 = vadd.f32 %v653, %v1190
      %1192 = vdwg.mxu0
      %vm1193 = vcmask 130048
      %v1194 = vsel %vm1193, %v903, -inf
      %v1195 = vmax.f32 %v901, %v1194
      %1196 = vmax.xlane.f32.xlu0 %v1195
      %v1197 = vpop.xlane.xlu0 %1196
      %v1198 = vsel %vm1193, %v907, -inf
      %v1199 = vmax.f32 %v905, %v1198
      %1200 = vmax.xlane.f32.xlu0 %v1199
      %v1201 = vpop.xlane.xlu0 %1200
      %v1202 = vsel %vm1193, %v913, -inf
      %v1203 = vmax.f32 %v911, %v1202
      %1204 = vmax.xlane.f32.xlu0 %v1203
      %v1205 = vpop.xlane.xlu0 %1204
      %v1206 = vsel %vm1193, %v917, -inf
      %v1207 = vmax.f32 %v915, %v1206
      %1208 = vmax.xlane.f32.xlu0 %v1207
      %v1209 = vpop.xlane.xlu0 %1208
      %v1210 = vsel %vm1193, %v923, -inf
      %v1211 = vmax.f32 %v921, %v1210
      %1212 = vmax.xlane.f32.xlu0 %v1211
      %v1213 = vpop.xlane.xlu0 %1212
      %v1214 = vsel %vm1193, %v927, -inf
      %v1215 = vmax.f32 %v925, %v1214
      %1216 = vmax.xlane.f32.xlu0 %v1215
      %v1217 = vpop.xlane.xlu0 %1216
      %v1218 = vsel %vm1193, %v933, -inf
      %v1219 = vmax.f32 %v931, %v1218
      %1220 = vmax.xlane.f32.xlu0 %v1219
      %v1221 = vpop.xlane.xlu0 %1220
      %v1222 = vsel %vm1193, %v937, -inf
      %v1223 = vmax.f32 %v935, %v1222
      %1224 = vmax.xlane.f32.xlu0 %v1223
      %v1225 = vpop.xlane.xlu0 %1224
      %v1226 = vsel %vm1193, %v943, -inf
      %v1227 = vmax.f32 %v941, %v1226
      %1228 = vmax.xlane.f32.xlu0 %v1227
      %v1229 = vpop.xlane.xlu0 %1228
      %v1230 = vsel %vm1193, %v947, -inf
      %v1231 = vmax.f32 %v945, %v1230
      %1232 = vmax.xlane.f32.xlu0 %v1231
      %v1233 = vpop.xlane.xlu0 %1232
      %v1234 = vsel %vm1193, %v953, -inf
      %v1235 = vmax.f32 %v951, %v1234
      %1236 = vmax.xlane.f32.xlu0 %v1235
      %v1237 = vpop.xlane.xlu0 %1236
      %v1238 = vsel %vm1193, %v957, -inf
      %v1239 = vmax.f32 %v955, %v1238
      %1240 = vmax.xlane.f32.xlu0 %v1239
      %v1241 = vpop.xlane.xlu0 %1240
      %v1242 = vsel %vm1193, %v963, -inf
      %v1243 = vmax.f32 %v961, %v1242
      %1244 = vmax.xlane.f32.xlu0 %v1243
      %v1245 = vpop.xlane.xlu0 %1244
      %v1246 = vsel %vm1193, %v967, -inf
      %v1247 = vmax.f32 %v965, %v1246
      %1248 = vmax.xlane.f32.xlu0 %v1247
      %v1249 = vpop.xlane.xlu0 %1248
      %v1250 = vsel %vm1193, %v973, -inf
      %v1251 = vmax.f32 %v971, %v1250
      %1252 = vmax.xlane.f32.xlu0 %v1251
      %v1253 = vpop.xlane.xlu0 %1252
      %v1254 = vsel %vm1193, %v977, -inf
      %v1255 = vmax.f32 %v975, %v1254
      %1256 = vmax.xlane.f32.xlu0 %v1255
      %v1257 = vpop.xlane.xlu0 %1256
      %v1258 = vsel %vm1193, %v983, -inf
      %v1259 = vmax.f32 %v981, %v1258
      %1260 = vmax.xlane.f32.xlu0 %v1259
      %v1261 = vpop.xlane.xlu0 %1260
      %v1262 = vsel %vm1193, %v987, -inf
      %v1263 = vmax.f32 %v985, %v1262
      %1264 = vmax.xlane.f32.xlu0 %v1263
      %v1265 = vpop.xlane.xlu0 %1264
      %v1266 = vsel %vm1193, %v1107, -inf
      %v1267 = vmax.f32 %v1105, %v1266
      %1268 = vmax.xlane.f32.xlu0 %v1267
      %v1269 = vpop.xlane.xlu0 %1268
      %v1270 = vsel %vm1193, %v1111, -inf
      %v1271 = vmax.f32 %v1109, %v1270
      %1272 = vmax.xlane.f32.xlu0 %v1271
      %v1273 = vpop.xlane.xlu0 %1272
      %v1274 = vsel %vm1193, %v1117, -inf
      %v1275 = vmax.f32 %v1115, %v1274
      %1276 = vmax.xlane.f32.xlu0 %v1275
      %v1277 = vpop.xlane.xlu0 %1276
      %v1278 = vsel %vm1193, %v1121, -inf
      %v1279 = vmax.f32 %v1119, %v1278
      %1280 = vmax.xlane.f32.xlu0 %v1279
      %v1281 = vpop.xlane.xlu0 %1280
      %v1282 = vsel %vm1193, %v1127, -inf
      %v1283 = vmax.f32 %v1125, %v1282
      %1284 = vmax.xlane.f32.xlu0 %v1283
      %v1285 = vpop.xlane.xlu0 %1284
      %v1286 = vsel %vm1193, %v1131, -inf
      %v1287 = vmax.f32 %v1129, %v1286
      %1288 = vmax.xlane.f32.xlu0 %v1287
      %v1289 = vpop.xlane.xlu0 %1288
      %v1290 = vsel %vm1193, %v1137, -inf
      %v1291 = vmax.f32 %v1135, %v1290
      %1292 = vmax.xlane.f32.xlu0 %v1291
      %v1293 = vpop.xlane.xlu0 %1292
      %v1294 = vsel %vm1193, %v1141, -inf
      %v1295 = vmax.f32 %v1139, %v1294
      %1296 = vmax.xlane.f32.xlu0 %v1295
      %v1297 = vpop.xlane.xlu0 %1296
      %v1298 = vsel %vm1193, %v1147, -inf
      %v1299 = vmax.f32 %v1145, %v1298
      %1300 = vmax.xlane.f32.xlu0 %v1299
      %v1301 = vpop.xlane.xlu0 %1300
      %v1302 = vsel %vm1193, %v1151, -inf
      %v1303 = vmax.f32 %v1149, %v1302
      %1304 = vmax.xlane.f32.xlu0 %v1303
      %v1305 = vpop.xlane.xlu0 %1304
      %v1306 = vsel %vm1193, %v1157, -inf
      %v1307 = vmax.f32 %v1155, %v1306
      %1308 = vmax.xlane.f32.xlu0 %v1307
      %v1309 = vpop.xlane.xlu0 %1308
      %v1310 = vsel %vm1193, %v1161, -inf
      %v1311 = vmax.f32 %v1159, %v1310
      %1312 = vmax.xlane.f32.xlu0 %v1311
      %v1313 = vpop.xlane.xlu0 %1312
      %v1314 = vsel %vm1193, %v1167, -inf
      %v1315 = vmax.f32 %v1165, %v1314
      %1316 = vmax.xlane.f32.xlu0 %v1315
      %v1317 = vpop.xlane.xlu0 %1316
      %v1318 = vsel %vm1193, %v1171, -inf
      %v1319 = vmax.f32 %v1169, %v1318
      %1320 = vmax.xlane.f32.xlu0 %v1319
      %v1321 = vpop.xlane.xlu0 %1320
      %v1322 = vsel %vm1193, %v1177, -inf
      %v1323 = vmax.f32 %v1175, %v1322
      %1324 = vmax.xlane.f32.xlu0 %v1323
      %v1325 = vpop.xlane.xlu0 %1324
      %v1326 = vsel %vm1193, %v1181, -inf
      %v1327 = vmax.f32 %v1179, %v1326
      %1328 = vmax.xlane.f32.xlu0 %v1327
      %v1329 = vpop.xlane.xlu0 %1328
      %v1330 = vsel %vm1193, %v1187, -inf
      %v1331 = vmax.f32 %v1185, %v1330
      %1332 = vmax.xlane.f32.xlu0 %v1331
      %v1333 = vpop.xlane.xlu0 %1332
      %v1334 = vsel %vm1193, %v1191, -inf
      %v1335 = vmax.f32 %v1189, %v1334
      %1336 = vmax.xlane.f32.xlu0 %v1335
      %v1337 = vpop.xlane.xlu0 %1336
      %v1338 = vsub.f32 %v901, %v1197
      %v1339 = vsub.f32 %v903, %v1197
      %v1340 = vsub.f32 %v905, %v1201
      %v1341 = vsub.f32 %v907, %v1201
      %v1342 = vsub.f32 %v911, %v1205
      %v1343 = vsub.f32 %v913, %v1205
      %v1344 = vsub.f32 %v915, %v1209
      %v1345 = vsub.f32 %v917, %v1209
      %v1346 = vsub.f32 %v921, %v1213
      %v1347 = vsub.f32 %v923, %v1213
      %v1348 = vsub.f32 %v925, %v1217
      %v1349 = vsub.f32 %v927, %v1217
      %v1350 = vsub.f32 %v931, %v1221
      %v1351 = vsub.f32 %v933, %v1221
      %v1352 = vsub.f32 %v935, %v1225
      %v1353 = vsub.f32 %v937, %v1225
      %v1354 = vsub.f32 %v941, %v1229
      %v1355 = vsub.f32 %v943, %v1229
      %v1356 = vsub.f32 %v945, %v1233
      %v1357 = vsub.f32 %v947, %v1233
      %v1358 = vsub.f32 %v951, %v1237
      %v1359 = vsub.f32 %v953, %v1237
      %v1360 = vsub.f32 %v955, %v1241
      %v1361 = vsub.f32 %v957, %v1241
      %v1362 = vsub.f32 %v961, %v1245
      %v1363 = vsub.f32 %v963, %v1245
      %v1364 = vsub.f32 %v965, %v1249
      %v1365 = vsub.f32 %v967, %v1249
      %v1366 = vsub.f32 %v971, %v1253
      %v1367 = vsub.f32 %v973, %v1253
      %v1368 = vsub.f32 %v975, %v1257
      %v1369 = vsub.f32 %v977, %v1257
      %v1370 = vsub.f32 %v981, %v1261
      %v1371 = vsub.f32 %v983, %v1261
      %v1372 = vsub.f32 %v985, %v1265
      %v1373 = vsub.f32 %v987, %v1265
      %v1374 = vsub.f32 %v1105, %v1269
      %v1375 = vsub.f32 %v1107, %v1269
      %v1376 = vsub.f32 %v1109, %v1273
      %v1377 = vsub.f32 %v1111, %v1273
      %v1378 = vsub.f32 %v1115, %v1277
      %v1379 = vsub.f32 %v1117, %v1277
      %v1380 = vsub.f32 %v1119, %v1281
      %v1381 = vsub.f32 %v1121, %v1281
      %v1382 = vsub.f32 %v1125, %v1285
      %v1383 = vsub.f32 %v1127, %v1285
      %v1384 = vsub.f32 %v1129, %v1289
      %v1385 = vsub.f32 %v1131, %v1289
      %v1386 = vsub.f32 %v1135, %v1293
      %v1387 = vsub.f32 %v1137, %v1293
      %v1388 = vsub.f32 %v1139, %v1297
      %v1389 = vsub.f32 %v1141, %v1297
      %v1390 = vsub.f32 %v1145, %v1301
      %v1391 = vsub.f32 %v1147, %v1301
      %v1392 = vsub.f32 %v1149, %v1305
      %v1393 = vsub.f32 %v1151, %v1305
      %v1394 = vsub.f32 %v1155, %v1309
      %v1395 = vsub.f32 %v1157, %v1309
      %v1396 = vsub.f32 %v1159, %v1313
      %v1397 = vsub.f32 %v1161, %v1313
      %v1398 = vsub.f32 %v1165, %v1317
      %v1399 = vsub.f32 %v1167, %v1317
      %v1400 = vsub.f32 %v1169, %v1321
      %v1401 = vsub.f32 %v1171, %v1321
      %v1402 = vsub.f32 %v1175, %v1325
      %v1403 = vsub.f32 %v1177, %v1325
      %v1404 = vsub.f32 %v1179, %v1329
      %v1405 = vsub.f32 %v1181, %v1329
      %v1406 = vsub.f32 %v1185, %v1333
      %v1407 = vsub.f32 %v1187, %v1333
      %v1408 = vsub.f32 %v1189, %v1337
      %v1409 = vsub.f32 %v1191, %v1337
      %v1410 = vmul.f32 %v1338, 1.442695
      %v1411 = vpow.pop %v1410
      %v1412 = vmul.f32 %v1339, 1.442695
      %v1413 = vpow.pop %v1412
      %v1414 = vmul.f32 %v1340, 1.442695
      %v1415 = vpow.pop %v1414
      %v1416 = vmul.f32 %v1341, 1.442695
      %v1417 = vpow.pop %v1416
      %v1418 = vmul.f32 %v1342, 1.442695
      %v1419 = vpow.pop %v1418
      %v1420 = vmul.f32 %v1343, 1.442695
      %v1421 = vpow.pop %v1420
      %v1422 = vmul.f32 %v1344, 1.442695
      %v1423 = vpow.pop %v1422
      %v1424 = vmul.f32 %v1345, 1.442695
      %v1425 = vpow.pop %v1424
      %v1426 = vmul.f32 %v1346, 1.442695
      %v1427 = vpow.pop %v1426
      %v1428 = vmul.f32 %v1347, 1.442695
      %v1429 = vpow.pop %v1428
      %v1430 = vmul.f32 %v1348, 1.442695
      %v1431 = vpow.pop %v1430
      %v1432 = vmul.f32 %v1349, 1.442695
      %v1433 = vpow.pop %v1432
      %v1434 = vmul.f32 %v1350, 1.442695
      %v1435 = vpow.pop %v1434
      %v1436 = vmul.f32 %v1351, 1.442695
      %v1437 = vpow.pop %v1436
      %v1438 = vmul.f32 %v1352, 1.442695
      %v1439 = vpow.pop %v1438
      %v1440 = vmul.f32 %v1353, 1.442695
      %v1441 = vpow.pop %v1440
      %v1442 = vmul.f32 %v1354, 1.442695
      %v1443 = vpow.pop %v1442
      %v1444 = vmul.f32 %v1355, 1.442695
      %v1445 = vpow.pop %v1444
      %v1446 = vmul.f32 %v1356, 1.442695
      %v1447 = vpow.pop %v1446
      %v1448 = vmul.f32 %v1357, 1.442695
      %v1449 = vpow.pop %v1448
      %v1450 = vmul.f32 %v1358, 1.442695
      %v1451 = vpow.pop %v1450
      %v1452 = vmul.f32 %v1359, 1.442695
      %v1453 = vpow.pop %v1452
      %v1454 = vmul.f32 %v1360, 1.442695
      %v1455 = vpow.pop %v1454
      %v1456 = vmul.f32 %v1361, 1.442695
      %v1457 = vpow.pop %v1456
      %v1458 = vmul.f32 %v1362, 1.442695
      %v1459 = vpow.pop %v1458
      %v1460 = vmul.f32 %v1363, 1.442695
      %v1461 = vpow.pop %v1460
      %v1462 = vmul.f32 %v1364, 1.442695
      %v1463 = vpow.pop %v1462
      %v1464 = vmul.f32 %v1365, 1.442695
      %v1465 = vpow.pop %v1464
      %v1466 = vmul.f32 %v1366, 1.442695
      %v1467 = vpow.pop %v1466
      %v1468 = vmul.f32 %v1367, 1.442695
      %v1469 = vpow.pop %v1468
      %v1470 = vmul.f32 %v1368, 1.442695
      %v1471 = vpow.pop %v1470
      %v1472 = vmul.f32 %v1369, 1.442695
      %v1473 = vpow.pop %v1472
      %v1474 = vmul.f32 %v1370, 1.442695
      %v1475 = vpow.pop %v1474
      %v1476 = vmul.f32 %v1371, 1.442695
      %v1477 = vpow.pop %v1476
      %v1478 = vmul.f32 %v1372, 1.442695
      %v1479 = vpow.pop %v1478
      %v1480 = vmul.f32 %v1373, 1.442695
      %v1481 = vpow.pop %v1480
      %v1482 = vmul.f32 %v1374, 1.442695
      %v1483 = vpow.pop %v1482
      %v1484 = vmul.f32 %v1375, 1.442695
      %v1485 = vpow.pop %v1484
      %v1486 = vmul.f32 %v1376, 1.442695
      %v1487 = vpow.pop %v1486
      %v1488 = vmul.f32 %v1377, 1.442695
      %v1489 = vpow.pop %v1488
      %v1490 = vmul.f32 %v1378, 1.442695
      %v1491 = vpow.pop %v1490
      %v1492 = vmul.f32 %v1379, 1.442695
      %v1493 = vpow.pop %v1492
      %v1494 = vmul.f32 %v1380, 1.442695
      %v1495 = vpow.pop %v1494
      %v1496 = vmul.f32 %v1381, 1.442695
      %v1497 = vpow.pop %v1496
      %v1498 = vmul.f32 %v1382, 1.442695
      %v1499 = vpow.pop %v1498
      %v1500 = vmul.f32 %v1383, 1.442695
      %v1501 = vpow.pop %v1500
      %v1502 = vmul.f32 %v1384, 1.442695
      %v1503 = vpow.pop %v1502
      %v1504 = vmul.f32 %v1385, 1.442695
      %v1505 = vpow.pop %v1504
      %v1506 = vmul.f32 %v1386, 1.442695
      %v1507 = vpow.pop %v1506
      %v1508 = vmul.f32 %v1387, 1.442695
      %v1509 = vpow.pop %v1508
      %v1510 = vmul.f32 %v1388, 1.442695
      %v1511 = vpow.pop %v1510
      %v1512 = vmul.f32 %v1389, 1.442695
      %v1513 = vpow.pop %v1512
      %v1514 = vmul.f32 %v1390, 1.442695
      %v1515 = vpow.pop %v1514
      %v1516 = vmul.f32 %v1391, 1.442695
      %v1517 = vpow.pop %v1516
      %v1518 = vmul.f32 %v1392, 1.442695
      %v1519 = vpow.pop %v1518
      %v1520 = vmul.f32 %v1393, 1.442695
      %v1521 = vpow.pop %v1520
      %v1522 = vmul.f32 %v1394, 1.442695
      %v1523 = vpow.pop %v1522
      %v1524 = vmul.f32 %v1395, 1.442695
      %v1525 = vpow.pop %v1524
      %v1526 = vmul.f32 %v1396, 1.442695
      %v1527 = vpow.pop %v1526
      %v1528 = vmul.f32 %v1397, 1.442695
      %v1529 = vpow.pop %v1528
      %v1530 = vmul.f32 %v1398, 1.442695
      %v1531 = vpow.pop %v1530
      %v1532 = vmul.f32 %v1399, 1.442695
      %v1533 = vpow.pop %v1532
      %v1534 = vmul.f32 %v1400, 1.442695
      %v1535 = vpow.pop %v1534
      %v1536 = vmul.f32 %v1401, 1.442695
      %v1537 = vpow.pop %v1536
      %v1538 = vmul.f32 %v1402, 1.442695
      %v1539 = vpow.pop %v1538
      %v1540 = vmul.f32 %v1403, 1.442695
      %v1541 = vpow.pop %v1540
      %v1542 = vmul.f32 %v1404, 1.442695
      %v1543 = vpow.pop %v1542
      %v1544 = vmul.f32 %v1405, 1.442695
      %v1545 = vpow.pop %v1544
      %v1546 = vmul.f32 %v1406, 1.442695
      %v1547 = vpow.pop %v1546
      %v1548 = vmul.f32 %v1407, 1.442695
      %v1549 = vpow.pop %v1548
      %v1550 = vmul.f32 %v1408, 1.442695
      %v1551 = vpow.pop %v1550
      %v1552 = vmul.f32 %v1409, 1.442695
      %v1553 = vpow.pop %v1552
      %v1554 = vsel %vm1193, %v1413, 0.0
      %v1555 = vadd.f32 %v1411, %v1554
      %1556 = vadd.xlane.f32.xlu0 %v1555
      %v1557 = vpop.xlane.xlu0 %1556
      %v1558 = vsel %vm1193, %v1417, 0.0
      %v1559 = vadd.f32 %v1415, %v1558
      %1560 = vadd.xlane.f32.xlu0 %v1559
      %v1561 = vpop.xlane.xlu0 %1560
      %v1562 = vsel %vm1193, %v1421, 0.0
      %v1563 = vadd.f32 %v1419, %v1562
      %1564 = vadd.xlane.f32.xlu0 %v1563
      %v1565 = vpop.xlane.xlu0 %1564
      %v1566 = vsel %vm1193, %v1425, 0.0
      %v1567 = vadd.f32 %v1423, %v1566
      %1568 = vadd.xlane.f32.xlu0 %v1567
      %v1569 = vpop.xlane.xlu0 %1568
      %v1570 = vsel %vm1193, %v1429, 0.0
      %v1571 = vadd.f32 %v1427, %v1570
      %1572 = vadd.xlane.f32.xlu0 %v1571
      %v1573 = vpop.xlane.xlu0 %1572
      %v1574 = vsel %vm1193, %v1433, 0.0
      %v1575 = vadd.f32 %v1431, %v1574
      %1576 = vadd.xlane.f32.xlu0 %v1575
      %v1577 = vpop.xlane.xlu0 %1576
      %v1578 = vsel %vm1193, %v1437, 0.0
      %v1579 = vadd.f32 %v1435, %v1578
      %1580 = vadd.xlane.f32.xlu0 %v1579
      %v1581 = vpop.xlane.xlu0 %1580
      %v1582 = vsel %vm1193, %v1441, 0.0
      %v1583 = vadd.f32 %v1439, %v1582
      %1584 = vadd.xlane.f32.xlu0 %v1583
      %v1585 = vpop.xlane.xlu0 %1584
      %v1586 = vsel %vm1193, %v1445, 0.0
      %v1587 = vadd.f32 %v1443, %v1586
      %1588 = vadd.xlane.f32.xlu0 %v1587
      %v1589 = vpop.xlane.xlu0 %1588
      %v1590 = vsel %vm1193, %v1449, 0.0
      %v1591 = vadd.f32 %v1447, %v1590
      %1592 = vadd.xlane.f32.xlu0 %v1591
      %v1593 = vpop.xlane.xlu0 %1592
      %v1594 = vsel %vm1193, %v1453, 0.0
      %v1595 = vadd.f32 %v1451, %v1594
      %1596 = vadd.xlane.f32.xlu0 %v1595
      %v1597 = vpop.xlane.xlu0 %1596
      %v1598 = vsel %vm1193, %v1457, 0.0
      %v1599 = vadd.f32 %v1455, %v1598
      %1600 = vadd.xlane.f32.xlu0 %v1599
      %v1601 = vpop.xlane.xlu0 %1600
      %v1602 = vsel %vm1193, %v1461, 0.0
      %v1603 = vadd.f32 %v1459, %v1602
      %1604 = vadd.xlane.f32.xlu0 %v1603
      %v1605 = vpop.xlane.xlu0 %1604
      %v1606 = vsel %vm1193, %v1465, 0.0
      %v1607 = vadd.f32 %v1463, %v1606
      %1608 = vadd.xlane.f32.xlu0 %v1607
      %v1609 = vpop.xlane.xlu0 %1608
      %v1610 = vsel %vm1193, %v1469, 0.0
      %v1611 = vadd.f32 %v1467, %v1610
      %1612 = vadd.xlane.f32.xlu0 %v1611
      %v1613 = vpop.xlane.xlu0 %1612
      %v1614 = vsel %vm1193, %v1473, 0.0
      %v1615 = vadd.f32 %v1471, %v1614
      %1616 = vadd.xlane.f32.xlu0 %v1615
      %v1617 = vpop.xlane.xlu0 %1616
      %v1618 = vsel %vm1193, %v1477, 0.0
      %v1619 = vadd.f32 %v1475, %v1618
      %1620 = vadd.xlane.f32.xlu0 %v1619
      %v1621 = vpop.xlane.xlu0 %1620
      %v1622 = vsel %vm1193, %v1481, 0.0
      %v1623 = vadd.f32 %v1479, %v1622
      %1624 = vadd.xlane.f32.xlu0 %v1623
      %v1625 = vpop.xlane.xlu0 %1624
      %v1626 = vsel %vm1193, %v1485, 0.0
      %v1627 = vadd.f32 %v1483, %v1626
      %1628 = vadd.xlane.f32.xlu0 %v1627
      %v1629 = vpop.xlane.xlu0 %1628
      %v1630 = vsel %vm1193, %v1489, 0.0
      %v1631 = vadd.f32 %v1487, %v1630
      %1632 = vadd.xlane.f32.xlu0 %v1631
      %v1633 = vpop.xlane.xlu0 %1632
      %v1634 = vsel %vm1193, %v1493, 0.0
      %v1635 = vadd.f32 %v1491, %v1634
      %1636 = vadd.xlane.f32.xlu0 %v1635
      %v1637 = vpop.xlane.xlu0 %1636
      %v1638 = vsel %vm1193, %v1497, 0.0
      %v1639 = vadd.f32 %v1495, %v1638
      %1640 = vadd.xlane.f32.xlu0 %v1639
      %v1641 = vpop.xlane.xlu0 %1640
      %v1642 = vsel %vm1193, %v1501, 0.0
      %v1643 = vadd.f32 %v1499, %v1642
      %1644 = vadd.xlane.f32.xlu0 %v1643
      %v1645 = vpop.xlane.xlu0 %1644
      %v1646 = vsel %vm1193, %v1505, 0.0
      %v1647 = vadd.f32 %v1503, %v1646
      %1648 = vadd.xlane.f32.xlu0 %v1647
      %v1649 = vpop.xlane.xlu0 %1648
      %v1650 = vsel %vm1193, %v1509, 0.0
      %v1651 = vadd.f32 %v1507, %v1650
      %1652 = vadd.xlane.f32.xlu0 %v1651
      %v1653 = vpop.xlane.xlu0 %1652
      %v1654 = vsel %vm1193, %v1513, 0.0
      %v1655 = vadd.f32 %v1511, %v1654
      %1656 = vadd.xlane.f32.xlu0 %v1655
      %v1657 = vpop.xlane.xlu0 %1656
      %v1658 = vsel %vm1193, %v1517, 0.0
      %v1659 = vadd.f32 %v1515, %v1658
      %1660 = vadd.xlane.f32.xlu0 %v1659
      %v1661 = vpop.xlane.xlu0 %1660
      %v1662 = vsel %vm1193, %v1521, 0.0
      %v1663 = vadd.f32 %v1519, %v1662
      %1664 = vadd.xlane.f32.xlu0 %v1663
      %v1665 = vpop.xlane.xlu0 %1664
      %v1666 = vsel %vm1193, %v1525, 0.0
      %v1667 = vadd.f32 %v1523, %v1666
      %1668 = vadd.xlane.f32.xlu0 %v1667
      %v1669 = vpop.xlane.xlu0 %1668
      %v1670 = vsel %vm1193, %v1529, 0.0
      %v1671 = vadd.f32 %v1527, %v1670
      %1672 = vadd.xlane.f32.xlu0 %v1671
      %v1673 = vpop.xlane.xlu0 %1672
      %v1674 = vsel %vm1193, %v1533, 0.0
      %v1675 = vadd.f32 %v1531, %v1674
      %1676 = vadd.xlane.f32.xlu0 %v1675
      %v1677 = vpop.xlane.xlu0 %1676
      %v1678 = vsel %vm1193, %v1537, 0.0
      %v1679 = vadd.f32 %v1535, %v1678
      %1680 = vadd.xlane.f32.xlu0 %v1679
      %v1681 = vpop.xlane.xlu0 %1680
      %v1682 = vsel %vm1193, %v1541, 0.0
      %v1683 = vadd.f32 %v1539, %v1682
      %1684 = vadd.xlane.f32.xlu0 %v1683
      %v1685 = vpop.xlane.xlu0 %1684
      %v1686 = vsel %vm1193, %v1545, 0.0
      %v1687 = vadd.f32 %v1543, %v1686
      %1688 = vadd.xlane.f32.xlu0 %v1687
      %v1689 = vpop.xlane.xlu0 %1688
      %v1690 = vsel %vm1193, %v1549, 0.0
      %v1691 = vadd.f32 %v1547, %v1690
      %1692 = vadd.xlane.f32.xlu0 %v1691
      %v1693 = vpop.xlane.xlu0 %1692
      %v1694 = vsel %vm1193, %v1553, 0.0
      %v1695 = vadd.f32 %v1551, %v1694
      %1696 = vadd.xlane.f32.xlu0 %v1695
      %v1697 = vpop.xlane.xlu0 %1696
      %v1698 = vrcp.pop %v1557
      %v1699 = vrcp.pop %v1561
      %v1700 = vrcp.pop %v1565
      %v1701 = vrcp.pop %v1569
      %v1702 = vrcp.pop %v1573
      %v1703 = vrcp.pop %v1577
      %v1704 = vrcp.pop %v1581
      %v1705 = vrcp.pop %v1585
      %v1706 = vrcp.pop %v1589
      %v1707 = vrcp.pop %v1593
      %v1708 = vrcp.pop %v1597
      %v1709 = vrcp.pop %v1601
      %v1710 = vrcp.pop %v1605
      %v1711 = vrcp.pop %v1609
      %v1712 = vrcp.pop %v1613
      %v1713 = vrcp.pop %v1617
      %v1714 = vrcp.pop %v1621
      %v1715 = vrcp.pop %v1625
      %v1716 = vrcp.pop %v1629
      %v1717 = vrcp.pop %v1633
      %v1718 = vrcp.pop %v1637
      %v1719 = vrcp.pop %v1641
      %v1720 = vrcp.pop %v1645
      %v1721 = vrcp.pop %v1649
      %v1722 = vrcp.pop %v1653
      %v1723 = vrcp.pop %v1657
      %v1724 = vrcp.pop %v1661
      %v1725 = vrcp.pop %v1665
      %v1726 = vrcp.pop %v1669
      %v1727 = vrcp.pop %v1673
      %v1728 = vrcp.pop %v1677
      %v1729 = vrcp.pop %v1681
      %v1730 = vrcp.pop %v1685
      %v1731 = vrcp.pop %v1689
      %v1732 = vrcp.pop %v1693
      %v1733 = vrcp.pop %v1697
      %v1734 = vmul.f32 %v1411, %v1698
      %v1735 = vmul.f32 %v1413, %v1698
      %v1736 = vmul.f32 %v1415, %v1699
      %v1737 = vmul.f32 %v1417, %v1699
      %v1738 = vmul.f32 %v1419, %v1700
      %v1739 = vmul.f32 %v1421, %v1700
      %v1740 = vmul.f32 %v1423, %v1701
      %v1741 = vmul.f32 %v1425, %v1701
      %v1742 = vmul.f32 %v1427, %v1702
      %v1743 = vmul.f32 %v1429, %v1702
      %v1744 = vmul.f32 %v1431, %v1703
      %v1745 = vmul.f32 %v1433, %v1703
      %v1746 = vmul.f32 %v1435, %v1704
      %v1747 = vmul.f32 %v1437, %v1704
      %v1748 = vmul.f32 %v1439, %v1705
      %v1749 = vmul.f32 %v1441, %v1705
      %v1750 = vmul.f32 %v1443, %v1706
      %v1751 = vmul.f32 %v1445, %v1706
      %v1752 = vmul.f32 %v1447, %v1707
      %v1753 = vmul.f32 %v1449, %v1707
      %v1754 = vmul.f32 %v1451, %v1708
      %v1755 = vmul.f32 %v1453, %v1708
      %v1756 = vmul.f32 %v1455, %v1709
      %v1757 = vmul.f32 %v1457, %v1709
      %v1758 = vmul.f32 %v1459, %v1710
      %v1759 = vmul.f32 %v1461, %v1710
      %v1760 = vmul.f32 %v1463, %v1711
      %v1761 = vmul.f32 %v1465, %v1711
      %v1762 = vmul.f32 %v1467, %v1712
      %v1763 = vmul.f32 %v1469, %v1712
      %v1764 = vmul.f32 %v1471, %v1713
      %v1765 = vmul.f32 %v1473, %v1713
      %v1766 = vmul.f32 %v1475, %v1714
      %v1767 = vmul.f32 %v1477, %v1714
      %v1768 = vmul.f32 %v1479, %v1715
      %v1769 = vmul.f32 %v1481, %v1715
      %v1770 = vmul.f32 %v1483, %v1716
      %v1771 = vmul.f32 %v1485, %v1716
      %v1772 = vmul.f32 %v1487, %v1717
      %v1773 = vmul.f32 %v1489, %v1717
      %v1774 = vmul.f32 %v1491, %v1718
      %v1775 = vmul.f32 %v1493, %v1718
      %v1776 = vmul.f32 %v1495, %v1719
      %v1777 = vmul.f32 %v1497, %v1719
      %v1778 = vmul.f32 %v1499, %v1720
      %v1779 = vmul.f32 %v1501, %v1720
      %v1780 = vmul.f32 %v1503, %v1721
      %v1781 = vmul.f32 %v1505, %v1721
      %v1782 = vmul.f32 %v1507, %v1722
      %v1783 = vmul.f32 %v1509, %v1722
      %v1784 = vmul.f32 %v1511, %v1723
      %v1785 = vmul.f32 %v1513, %v1723
      %v1786 = vmul.f32 %v1515, %v1724
      %v1787 = vmul.f32 %v1517, %v1724
      %v1788 = vmul.f32 %v1519, %v1725
      %v1789 = vmul.f32 %v1521, %v1725
      %v1790 = vmul.f32 %v1523, %v1726
      %v1791 = vmul.f32 %v1525, %v1726
      %v1792 = vmul.f32 %v1527, %v1727
      %v1793 = vmul.f32 %v1529, %v1727
      %v1794 = vmul.f32 %v1531, %v1728
      %v1795 = vmul.f32 %v1533, %v1728
      %v1796 = vmul.f32 %v1535, %v1729
      %v1797 = vmul.f32 %v1537, %v1729
      %v1798 = vmul.f32 %v1539, %v1730
      %v1799 = vmul.f32 %v1541, %v1730
      %v1800 = vmul.f32 %v1543, %v1731
      %v1801 = vmul.f32 %v1545, %v1731
      %v1802 = vmul.f32 %v1547, %v1732
      %v1803 = vmul.f32 %v1549, %v1732
      %v1804 = vmul.f32 %v1551, %v1733
      %v1805 = vmul.f32 %v1553, %v1733
      %v1806 = vpack.c.bf16 %v1736, %v1734
      %v1807 = vpack.c.bf16 %v1737, %v1735
      %v1808 = vpack.c.bf16 %v1740, %v1738
      %v1809 = vpack.c.bf16 %v1741, %v1739
      %v1810 = vpack.c.bf16 %v1744, %v1742
      %v1811 = vpack.c.bf16 %v1745, %v1743
      %v1812 = vpack.c.bf16 %v1748, %v1746
      %v1813 = vpack.c.bf16 %v1749, %v1747
      %v1814 = vpack.c.bf16 %v1752, %v1750
      %v1815 = vpack.c.bf16 %v1753, %v1751
      %v1816 = vpack.c.bf16 %v1756, %v1754
      %v1817 = vpack.c.bf16 %v1757, %v1755
      %v1818 = vpack.c.bf16 %v1760, %v1758
      %v1819 = vpack.c.bf16 %v1761, %v1759
      %v1820 = vpack.c.bf16 %v1764, %v1762
      %v1821 = vpack.c.bf16 %v1765, %v1763
      %v1822 = vpack.c.bf16 %v1768, %v1766
      %v1823 = vpack.c.bf16 %v1769, %v1767
      %v1824 = vpack.c.bf16 %v1772, %v1770
      %v1825 = vpack.c.bf16 %v1773, %v1771
      %v1826 = vpack.c.bf16 %v1776, %v1774
      %v1827 = vpack.c.bf16 %v1777, %v1775
      %v1828 = vpack.c.bf16 %v1780, %v1778
      %v1829 = vpack.c.bf16 %v1781, %v1779
      %v1830 = vpack.c.bf16 %v1784, %v1782
      %v1831 = vpack.c.bf16 %v1785, %v1783
      %v1832 = vpack.c.bf16 %v1788, %v1786
      %v1833 = vpack.c.bf16 %v1789, %v1787
      %v1834 = vpack.c.bf16 %v1792, %v1790
      %v1835 = vpack.c.bf16 %v1793, %v1791
      %v1836 = vpack.c.bf16 %v1796, %v1794
      %v1837 = vpack.c.bf16 %v1797, %v1795
      %v1838 = vpack.c.bf16 %v1800, %v1798
      %v1839 = vpack.c.bf16 %v1801, %v1799
      %v1840 = vpack.c.bf16 %v1804, %v1802
      %v1841 = vpack.c.bf16 %v1805, %v1803
      %1842 = vrot.lane.b32.xlu0 %v766, 64
      %v1843 = vpop.permute.xlu0 %1842
      %1844 = vrot.lane.b32.xlu0 %v767, 64
      %v1845 = vpop.permute.xlu0 %1844
      %1846 = vrot.lane.b32.xlu0 %v768, 64
      %v1847 = vpop.permute.xlu0 %1846
      %1848 = vrot.lane.b32.xlu0 %v769, 64
      %v1849 = vpop.permute.xlu0 %1848
      %1850 = vrot.lane.b32.xlu0 %v770, 64
      %v1851 = vpop.permute.xlu0 %1850
      %1852 = vrot.lane.b32.xlu0 %v771, 64
      %v1853 = vpop.permute.xlu0 %1852
      %1854 = vrot.lane.b32.xlu0 %v772, 64
      %v1855 = vpop.permute.xlu0 %1854
      %1856 = vrot.lane.b32.xlu0 %v773, 64
      %v1857 = vpop.permute.xlu0 %1856
      %1858 = vrot.lane.b32.xlu0 %v774, 64
      %v1859 = vpop.permute.xlu0 %1858
      %v1870 = vsel %vm1193, %v1807, 0
      %v1873 = vsel %vm1193, %v1809, 0
      %v1876 = vsel %vm1193, %v1811, 0
      %v1879 = vsel %vm1193, %v1813, 0
      %v1882 = vsel %vm1193, %v1815, 0
      %v1885 = vsel %vm1193, %v1817, 0
      %v1888 = vsel %vm1193, %v1819, 0
      %v1891 = vsel %vm1193, %v1821, 0
      %v1894 = vsel %vm1193, %v1823, 0
      %1896 = vmatprep.subr.bf16.mxu0 0
      %1897 = vmatpush1.bf16.msra.mxu0 %v1843
      %1898 = vmatprep.subr.bf16.mxu0 0
      %1899 = vmatpush1.bf16.msra.mxu0 %v1845
      %1900 = vmatprep.subr.bf16.mxu0 0
      %1901 = vmatpush1.bf16.msra.mxu0 %v1847
      %1902 = vmatprep.subr.bf16.mxu0 0
      %1903 = vmatpush1.bf16.msra.mxu0 %v1849
      %1904 = vmatprep.subr.bf16.mxu0 0
      %1905 = vmatpush1.bf16.msra.mxu0 %v1851
      %1906 = vmatprep.subr.bf16.mxu0 0
      %1907 = vmatpush1.bf16.msra.mxu0 %v1853
      %1908 = vmatprep.subr.bf16.mxu0 0
      %1909 = vmatpush1.bf16.msra.mxu0 %v1855
      %1910 = vmatprep.subr.bf16.mxu0 0
      %1911 = vmatpush1.bf16.msra.mxu0 %v1857
      %1912 = vmatprep.subr.bf16.mxu0 0
      %1913 = vmatpush1.bf16.msra.mxu0 %v1859
      %1914 = vmatprep.subr.bf16.mxu0 0
      %1915 = vmatpush1.bf16.msra.mxu0 0
      %1916 = vmatprep.subr.bf16.mxu0 0
      %1917 = vmatpush1.bf16.msra.mxu0 0
      %1918 = vmatprep.subr.bf16.mxu0 0
      %1919 = vmatpush1.bf16.msra.mxu0 0
      %1920 = vmatprep.subr.bf16.mxu0 0
      %1921 = vmatpush1.bf16.msra.mxu0 0
      %1922 = vmatprep.subr.bf16.mxu0 0
      %1923 = vmatpush1.bf16.msra.mxu0 0
      %1924 = vmatprep.subr.bf16.mxu0 0
      %1925 = vmatpush1.bf16.msra.mxu0 0
      %1926 = vmatprep.subr.bf16.mxu0 0
      %1927 = vmatpush1.bf16.msra.mxu0 0
      %1928 = vmatprep.mubr.bf16.mxu0 %v1870
      %1929 = vmatmul.mubr.bf16.gmra.mrb[0].mxu0 %v1806
      %v1930 = vpop.f32.mrb[0].mxu0
      %v1931 = vadd.f32 0.0, %v1930
      %v1932 = vpop.f32.mrb[0].mxu0
      %v1933 = vpop.f32.mrb[0].mxu0
      %v1934 = vadd.f32 0.0, %v1933
      %v1935 = vpop.f32.mrb[0].mxu0
      %1936 = vmatprep.mubr.bf16.mxu0 %v1873
      %1937 = vmatmul.mubr.bf16.gmra.mrb[0].mxu0 %v1808
      %v1938 = vpop.f32.mrb[0].mxu0
      %v1939 = vadd.f32 0.0, %v1938
      %v1940 = vpop.f32.mrb[0].mxu0
      %v1941 = vpop.f32.mrb[0].mxu0
      %v1942 = vadd.f32 0.0, %v1941
      %v1943 = vpop.f32.mrb[0].mxu0
      %1944 = vmatprep.mubr.bf16.mxu0 %v1876
      %1945 = vmatmul.mubr.bf16.gmra.mrb[0].mxu0 %v1810
      %v1946 = vpop.f32.mrb[0].mxu0
      %v1947 = vadd.f32 0.0, %v1946
      %v1948 = vpop.f32.mrb[0].mxu0
      %v1949 = vpop.f32.mrb[0].mxu0
      %v1950 = vadd.f32 0.0, %v1949
      %v1951 = vpop.f32.mrb[0].mxu0
      %1952 = vmatprep.mubr.bf16.mxu0 %v1879
      %1953 = vmatmul.mubr.bf16.gmra.mrb[0].mxu0 %v1812
      %v1954 = vpop.f32.mrb[0].mxu0
      %v1955 = vadd.f32 0.0, %v1954
      %v1956 = vpop.f32.mrb[0].mxu0
      %v1957 = vpop.f32.mrb[0].mxu0
      %v1958 = vadd.f32 0.0, %v1957
      %v1959 = vpop.f32.mrb[0].mxu0
      %1960 = vmatprep.mubr.bf16.mxu0 %v1882
      %1961 = vmatmul.mubr.bf16.gmra.mrb[0].mxu0 %v1814
      %v1962 = vpop.f32.mrb[0].mxu0
      %v1963 = vadd.f32 0.0, %v1962
      %v1964 = vpop.f32.mrb[0].mxu0
      %v1965 = vpop.f32.mrb[0].mxu0
      %v1966 = vadd.f32 0.0, %v1965
      %v1967 = vpop.f32.mrb[0].mxu0
      %1968 = vmatprep.mubr.bf16.mxu0 %v1885
      %1969 = vmatmul.mubr.bf16.gmra.mrb[0].mxu0 %v1816
      %v1970 = vpop.f32.mrb[0].mxu0
      %v1971 = vadd.f32 0.0, %v1970
      %v1972 = vpop.f32.mrb[0].mxu0
      %v1973 = vpop.f32.mrb[0].mxu0
      %v1974 = vadd.f32 0.0, %v1973
      %v1975 = vpop.f32.mrb[0].mxu0
      %1976 = vmatprep.mubr.bf16.mxu0 %v1888
      %1977 = vmatmul.mubr.bf16.gmra.mrb[0].mxu0 %v1818
      %v1978 = vpop.f32.mrb[0].mxu0
      %v1979 = vadd.f32 0.0, %v1978
      %v1980 = vpop.f32.mrb[0].mxu0
      %v1981 = vpop.f32.mrb[0].mxu0
      %v1982 = vadd.f32 0.0, %v1981
      %v1983 = vpop.f32.mrb[0].mxu0
      %1984 = vmatprep.mubr.bf16.mxu0 %v1891
      %1985 = vmatmul.mubr.bf16.gmra.mrb[0].mxu0 %v1820
      %v1986 = vpop.f32.mrb[0].mxu0
      %v1987 = vadd.f32 0.0, %v1986
      %v1988 = vpop.f32.mrb[0].mxu0
      %v1989 = vpop.f32.mrb[0].mxu0
      %v1990 = vadd.f32 0.0, %v1989
      %v1991 = vpop.f32.mrb[0].mxu0
      %1992 = vmatprep.mubr.bf16.mxu0 %v1894
      %1993 = vmatmul.mubr.bf16.gmra.mrb[0].mxu0 %v1822
      %v1994 = vpop.f32.mrb[0].mxu0
      %v1995 = vadd.f32 0.0, %v1994
      %v1996 = vpop.f32.mrb[0].mxu0
      %v1997 = vpop.f32.mrb[0].mxu0
      %v1998 = vadd.f32 0.0, %v1997
      %v1999 = vpop.f32.mrb[0].mxu0
      %2000 = vdwg.mxu0
      %2001 = vrot.lane.b32.xlu0 %v775, 64
      %v2002 = vpop.permute.xlu0 %2001
      %2003 = vrot.lane.b32.xlu0 %v776, 64
      %v2004 = vpop.permute.xlu0 %2003
      %2005 = vrot.lane.b32.xlu0 %v777, 64
      %v2006 = vpop.permute.xlu0 %2005
      %2007 = vrot.lane.b32.xlu0 %v778, 64
      %v2008 = vpop.permute.xlu0 %2007
      %2009 = vrot.lane.b32.xlu0 %v779, 64
      %v2010 = vpop.permute.xlu0 %2009
      %2011 = vrot.lane.b32.xlu0 %v780, 64
      %v2012 = vpop.permute.xlu0 %2011
      %2013 = vrot.lane.b32.xlu0 %v781, 64
      %v2014 = vpop.permute.xlu0 %2013
      %2015 = vrot.lane.b32.xlu0 %v782, 64
      %v2016 = vpop.permute.xlu0 %2015
      %2017 = vrot.lane.b32.xlu0 %v783, 64
      %v2018 = vpop.permute.xlu0 %2017
      %v2029 = vsel %vm1193, %v1825, 0
      %v2032 = vsel %vm1193, %v1827, 0
      %v2035 = vsel %vm1193, %v1829, 0
      %v2038 = vsel %vm1193, %v1831, 0
      %v2041 = vsel %vm1193, %v1833, 0
      %v2044 = vsel %vm1193, %v1835, 0
      %v2047 = vsel %vm1193, %v1837, 0
      %v2050 = vsel %vm1193, %v1839, 0
      %v2053 = vsel %vm1193, %v1841, 0
      %2055 = vmatprep.subr.bf16.mxu0 0
      %2056 = vmatpush1.bf16.msra.mxu0 %v2002
      %2057 = vmatprep.subr.bf16.mxu0 0
      %2058 = vmatpush1.bf16.msra.mxu0 %v2004
      %2059 = vmatprep.subr.bf16.mxu0 0
      %2060 = vmatpush1.bf16.msra.mxu0 %v2006
      %2061 = vmatprep.subr.bf16.mxu0 0
      %2062 = vmatpush1.bf16.msra.mxu0 %v2008
      %2063 = vmatprep.subr.bf16.mxu0 0
      %2064 = vmatpush1.bf16.msra.mxu0 %v2010
      %2065 = vmatprep.subr.bf16.mxu0 0
      %2066 = vmatpush1.bf16.msra.mxu0 %v2012
      %2067 = vmatprep.subr.bf16.mxu0 0
      %2068 = vmatpush1.bf16.msra.mxu0 %v2014
      %2069 = vmatprep.subr.bf16.mxu0 0
      %2070 = vmatpush1.bf16.msra.mxu0 %v2016
      %2071 = vmatprep.subr.bf16.mxu0 0
      %2072 = vmatpush1.bf16.msra.mxu0 %v2018
      %2073 = vmatprep.subr.bf16.mxu0 0
      %2074 = vmatpush1.bf16.msra.mxu0 0
      %2075 = vmatprep.subr.bf16.mxu0 0
      %2076 = vmatpush1.bf16.msra.mxu0 0
      %2077 = vmatprep.subr.bf16.mxu0 0
      %2078 = vmatpush1.bf16.msra.mxu0 0
      %2079 = vmatprep.subr.bf16.mxu0 0
      %2080 = vmatpush1.bf16.msra.mxu0 0
      %2081 = vmatprep.subr.bf16.mxu0 0
      %2082 = vmatpush1.bf16.msra.mxu0 0
      %2083 = vmatprep.subr.bf16.mxu0 0
      %2084 = vmatpush1.bf16.msra.mxu0 0
      %2085 = vmatprep.subr.bf16.mxu0 0
      %2086 = vmatpush1.bf16.msra.mxu0 0
      %2087 = vmatprep.mubr.bf16.mxu0 %v2029
      %2088 = vmatmul.mubr.bf16.gmra.mrb[0].mxu0 %v1824
      %v2089 = vpop.f32.mrb[0].mxu0
      %v2090 = vadd.f32 0.0, %v2089
      %v2091 = vpop.f32.mrb[0].mxu0
      %v2092 = vpop.f32.mrb[0].mxu0
      %v2093 = vadd.f32 0.0, %v2092
      %v2094 = vpop.f32.mrb[0].mxu0
      %2095 = vmatprep.mubr.bf16.mxu0 %v2032
      %2096 = vmatmul.mubr.bf16.gmra.mrb[0].mxu0 %v1826
      %v2097 = vpop.f32.mrb[0].mxu0
      %v2098 = vadd.f32 0.0, %v2097
      %v2099 = vpop.f32.mrb[0].mxu0
      %v2100 = vpop.f32.mrb[0].mxu0
      %v2101 = vadd.f32 0.0, %v2100
      %v2102 = vpop.f32.mrb[0].mxu0
      %2103 = vmatprep.mubr.bf16.mxu0 %v2035
      %2104 = vmatmul.mubr.bf16.gmra.mrb[0].mxu0 %v1828
      %v2105 = vpop.f32.mrb[0].mxu0
      %v2106 = vadd.f32 0.0, %v2105
      %v2107 = vpop.f32.mrb[0].mxu0
      %v2108 = vpop.f32.mrb[0].mxu0
      %v2109 = vadd.f32 0.0, %v2108
      %v2110 = vpop.f32.mrb[0].mxu0
      %2111 = vmatprep.mubr.bf16.mxu0 %v2038
      %2112 = vmatmul.mubr.bf16.gmra.mrb[0].mxu0 %v1830
      %v2113 = vpop.f32.mrb[0].mxu0
      %v2114 = vadd.f32 0.0, %v2113
      %v2115 = vpop.f32.mrb[0].mxu0
      %v2116 = vpop.f32.mrb[0].mxu0
      %v2117 = vadd.f32 0.0, %v2116
      %v2118 = vpop.f32.mrb[0].mxu0
      %2119 = vmatprep.mubr.bf16.mxu0 %v2041
      %2120 = vmatmul.mubr.bf16.gmra.mrb[0].mxu0 %v1832
      %v2121 = vpop.f32.mrb[0].mxu0
      %v2122 = vadd.f32 0.0, %v2121
      %v2123 = vpop.f32.mrb[0].mxu0
      %v2124 = vpop.f32.mrb[0].mxu0
      %v2125 = vadd.f32 0.0, %v2124
      %v2126 = vpop.f32.mrb[0].mxu0
      %2127 = vmatprep.mubr.bf16.mxu0 %v2044
      %2128 = vmatmul.mubr.bf16.gmra.mrb[0].mxu0 %v1834
      %v2129 = vpop.f32.mrb[0].mxu0
      %v2130 = vadd.f32 0.0, %v2129
      %v2131 = vpop.f32.mrb[0].mxu0
      %v2132 = vpop.f32.mrb[0].mxu0
      %v2133 = vadd.f32 0.0, %v2132
      %v2134 = vpop.f32.mrb[0].mxu0
      %2135 = vmatprep.mubr.bf16.mxu0 %v2047
      %2136 = vmatmul.mubr.bf16.gmra.mrb[0].mxu0 %v1836
      %v2137 = vpop.f32.mrb[0].mxu0
      %v2138 = vadd.f32 0.0, %v2137
      %v2139 = vpop.f32.mrb[0].mxu0
      %v2140 = vpop.f32.mrb[0].mxu0
      %v2141 = vadd.f32 0.0, %v2140
      %v2142 = vpop.f32.mrb[0].mxu0
      %2143 = vmatprep.mubr.bf16.mxu0 %v2050
      %2144 = vmatmul.mubr.bf16.gmra.mrb[0].mxu0 %v1838
      %v2145 = vpop.f32.mrb[0].mxu0
      %v2146 = vadd.f32 0.0, %v2145
      %v2147 = vpop.f32.mrb[0].mxu0
      %v2148 = vpop.f32.mrb[0].mxu0
      %v2149 = vadd.f32 0.0, %v2148
      %v2150 = vpop.f32.mrb[0].mxu0
      %2151 = vmatprep.mubr.bf16.mxu0 %v2053
      %2152 = vmatmul.mubr.bf16.gmra.mrb[0].mxu0 %v1840
      %v2153 = vpop.f32.mrb[0].mxu0
      %v2154 = vadd.f32 0.0, %v2153
      %v2155 = vpop.f32.mrb[0].mxu0
      %v2156 = vpop.f32.mrb[0].mxu0
      %v2157 = vadd.f32 0.0, %v2156
      %v2158 = vpop.f32.mrb[0].mxu0
      %2159 = vdwg.mxu0
      %v2160 = vpack.c.bf16 %v1934, %v1931
      %v2161 = vpack.c.bf16 %v1942, %v1939
      %v2162 = vpack.c.bf16 %v1950, %v1947
      %v2163 = vpack.c.bf16 %v1958, %v1955
      %v2164 = vpack.c.bf16 %v1966, %v1963
      %v2165 = vpack.c.bf16 %v1974, %v1971
      %v2166 = vpack.c.bf16 %v1982, %v1979
      %v2167 = vpack.c.bf16 %v1990, %v1987
      %v2168 = vpack.c.bf16 %v1998, %v1995
      %v2169 = vpack.c.bf16 %v2093, %v2090
      %v2170 = vpack.c.bf16 %v2101, %v2098
      %v2171 = vpack.c.bf16 %v2109, %v2106
      %v2172 = vpack.c.bf16 %v2117, %v2114
      %v2173 = vpack.c.bf16 %v2125, %v2122
      %v2174 = vpack.c.bf16 %v2133, %v2130
      %v2175 = vpack.c.bf16 %v2141, %v2138
      %v2176 = vpack.c.bf16 %v2149, %v2146
      %v2177 = vpack.c.bf16 %v2157, %v2154
      %v2178 = vpack.c.bf16 %v762, %v762
      %2179 = vrot.lane.b32.xlu0 %v766, 120
      %v2180 = vpop.permute.xlu0 %2179
      %2181 = vrot.lane.b32.xlu0 %v767, 120
      %v2182 = vpop.permute.xlu0 %2181
      %2183 = vrot.lane.b32.xlu0 %v768, 120
      %v2184 = vpop.permute.xlu0 %2183
      %2185 = vrot.lane.b32.xlu0 %v769, 120
      %v2186 = vpop.permute.xlu0 %2185
      %2187 = vrot.lane.b32.xlu0 %v770, 120
      %v2188 = vpop.permute.xlu0 %2187
      %2189 = vrot.lane.b32.xlu0 %v771, 120
      %v2190 = vpop.permute.xlu0 %2189
      %2191 = vrot.lane.b32.xlu0 %v772, 120
      %v2192 = vpop.permute.xlu0 %2191
      %2193 = vrot.lane.b32.xlu0 %v773, 120
      %v2194 = vpop.permute.xlu0 %2193
      %2195 = vrot.lane.b32.xlu0 %v774, 120
      %v2196 = vpop.permute.xlu0 %2195
      %2197 = vrot.lane.b32.xlu0 %v766, 88
      %v2198 = vpop.permute.xlu0 %2197
      %2199 = vrot.lane.b32.xlu0 %v767, 88
      %v2200 = vpop.permute.xlu0 %2199
      %2201 = vrot.lane.b32.xlu0 %v768, 88
      %v2202 = vpop.permute.xlu0 %2201
      %2203 = vrot.lane.b32.xlu0 %v769, 88
      %v2204 = vpop.permute.xlu0 %2203
      %2205 = vrot.lane.b32.xlu0 %v770, 88
      %v2206 = vpop.permute.xlu0 %2205
      %2207 = vrot.lane.b32.xlu0 %v771, 88
      %v2208 = vpop.permute.xlu0 %2207
      %2209 = vrot.lane.b32.xlu0 %v772, 88
      %v2210 = vpop.permute.xlu0 %2209
      %2211 = vrot.lane.b32.xlu0 %v773, 88
      %v2212 = vpop.permute.xlu0 %2211
      %2213 = vrot.lane.b32.xlu0 %v774, 88
      %v2214 = vpop.permute.xlu0 %2213
      %v2216 = vsel %vm811, %v2180, 0
      %v2219 = vsel %vm811, %v2182, 0
      %v2222 = vsel %vm811, %v2184, 0
      %v2225 = vsel %vm811, %v2186, 0
      %v2228 = vsel %vm811, %v2188, 0
      %v2231 = vsel %vm811, %v2190, 0
      %v2234 = vsel %vm811, %v2192, 0
      %v2237 = vsel %vm811, %v2194, 0
      %v2240 = vsel %vm811, %v2196, 0
      %v2243 = vsel %vm811, %v2198, 0
      %v2246 = vsel %vm811, %v2200, 0
      %v2249 = vsel %vm811, %v2202, 0
      %v2252 = vsel %vm811, %v2204, 0
      %v2255 = vsel %vm811, %v2206, 0
      %v2258 = vsel %vm811, %v2208, 0
      %v2261 = vsel %vm811, %v2210, 0
      %v2264 = vsel %vm811, %v2212, 0
      %v2267 = vsel %vm811, %v2214, 0
      %2269 = vmatprep.subr.bf16.mxu0 0
      %2270 = vmatpush1.bf16.xpose.msra.mxu0 %v2243
      %2271 = vmatprep.subr.bf16.mxu0 0
      %2272 = vmatpush1.bf16.xpose.msra.mxu0 %v2246
      %2273 = vmatprep.subr.bf16.mxu0 0
      %2274 = vmatpush1.bf16.xpose.msra.mxu0 %v2249
      %2275 = vmatprep.subr.bf16.mxu0 0
      %2276 = vmatpush1.bf16.xpose.msra.mxu0 %v2252
      %2277 = vmatprep.subr.bf16.mxu0 0
      %2278 = vmatpush1.bf16.xpose.msra.mxu0 %v2255
      %2279 = vmatprep.subr.bf16.mxu0 0
      %2280 = vmatpush1.bf16.xpose.msra.mxu0 %v2258
      %2281 = vmatprep.subr.bf16.mxu0 0
      %2282 = vmatpush1.bf16.xpose.msra.mxu0 %v2261
      %2283 = vmatprep.subr.bf16.mxu0 0
      %2284 = vmatpush1.bf16.xpose.msra.mxu0 %v2264
      %2285 = vmatprep.subr.bf16.mxu0 0
      %2286 = vmatpush1.bf16.xpose.msra.mxu0 %v2267
      %2287 = vmatprep.subr.bf16.mxu0 0
      %2288 = vmatpush1.bf16.xpose.msra.mxu0 0
      %2289 = vmatprep.subr.bf16.mxu0 0
      %2290 = vmatpush1.bf16.xpose.msra.mxu0 0
      %2291 = vmatprep.subr.bf16.mxu0 0
      %2292 = vmatpush1.bf16.xpose.msra.mxu0 0
      %2293 = vmatprep.subr.bf16.mxu0 0
      %2294 = vmatpush1.bf16.xpose.msra.mxu0 0
      %2295 = vmatprep.subr.bf16.mxu0 0
      %2296 = vmatpush1.bf16.xpose.msra.mxu0 0
      %2297 = vmatprep.subr.bf16.mxu0 0
      %2298 = vmatpush1.bf16.xpose.msra.mxu0 0
      %2299 = vmatprep.subr.bf16.mxu0 0
      %2300 = vmatpush1.bf16.xpose.msra.mxu0 0
      %2301 = vmatprep.mubr.bf16.mxu0 0
      %2302 = vmatmul.mubr.bf16.gmra.mrb[0].mxu0 %v2216
      %v2303 = vpop.f32.mrb[0].mxu0
      %v2304 = vadd.f32 %v654, %v2303
      %v2305 = vpop.f32.mrb[0].mxu0
      %v2306 = vadd.f32 %v655, %v2305
      %v2307 = vpop.f32.mrb[0].mxu0
      %v2308 = vadd.f32 %v656, %v2307
      %v2309 = vpop.f32.mrb[0].mxu0
      %v2310 = vadd.f32 %v657, %v2309
      %2311 = vmatprep.mubr.bf16.mxu0 0
      %2312 = vmatmul.mubr.bf16.gmra.mrb[0].mxu0 %v2219
      %v2313 = vpop.f32.mrb[0].mxu0
      %v2314 = vadd.f32 %v658, %v2313
      %v2315 = vpop.f32.mrb[0].mxu0
      %v2316 = vadd.f32 %v659, %v2315
      %v2317 = vpop.f32.mrb[0].mxu0
      %v2318 = vadd.f32 %v660, %v2317
      %v2319 = vpop.f32.mrb[0].mxu0
      %v2320 = vadd.f32 %v661, %v2319
      %2321 = vmatprep.mubr.bf16.mxu0 0
      %2322 = vmatmul.mubr.bf16.gmra.mrb[0].mxu0 %v2222
      %v2323 = vpop.f32.mrb[0].mxu0
      %v2324 = vadd.f32 %v662, %v2323
      %v2325 = vpop.f32.mrb[0].mxu0
      %v2326 = vadd.f32 %v663, %v2325
      %v2327 = vpop.f32.mrb[0].mxu0
      %v2328 = vadd.f32 %v664, %v2327
      %v2329 = vpop.f32.mrb[0].mxu0
      %v2330 = vadd.f32 %v665, %v2329
      %2331 = vmatprep.mubr.bf16.mxu0 0
      %2332 = vmatmul.mubr.bf16.gmra.mrb[0].mxu0 %v2225
      %v2333 = vpop.f32.mrb[0].mxu0
      %v2334 = vadd.f32 %v666, %v2333
      %v2335 = vpop.f32.mrb[0].mxu0
      %v2336 = vadd.f32 %v667, %v2335
      %v2337 = vpop.f32.mrb[0].mxu0
      %v2338 = vadd.f32 %v668, %v2337
      %v2339 = vpop.f32.mrb[0].mxu0
      %v2340 = vadd.f32 %v669, %v2339
      %2341 = vmatprep.mubr.bf16.mxu0 0
      %2342 = vmatmul.mubr.bf16.gmra.mrb[0].mxu0 %v2228
      %v2343 = vpop.f32.mrb[0].mxu0
      %v2344 = vadd.f32 %v670, %v2343
      %v2345 = vpop.f32.mrb[0].mxu0
      %v2346 = vadd.f32 %v671, %v2345
      %v2347 = vpop.f32.mrb[0].mxu0
      %v2348 = vadd.f32 %v672, %v2347
      %v2349 = vpop.f32.mrb[0].mxu0
      %v2350 = vadd.f32 %v673, %v2349
      %2351 = vmatprep.mubr.bf16.mxu0 0
      %2352 = vmatmul.mubr.bf16.gmra.mrb[0].mxu0 %v2231
      %v2353 = vpop.f32.mrb[0].mxu0
      %v2354 = vadd.f32 %v674, %v2353
      %v2355 = vpop.f32.mrb[0].mxu0
      %v2356 = vadd.f32 %v675, %v2355
      %v2357 = vpop.f32.mrb[0].mxu0
      %v2358 = vadd.f32 %v676, %v2357
      %v2359 = vpop.f32.mrb[0].mxu0
      %v2360 = vadd.f32 %v677, %v2359
      %2361 = vmatprep.mubr.bf16.mxu0 0
      %2362 = vmatmul.mubr.bf16.gmra.mrb[0].mxu0 %v2234
      %v2363 = vpop.f32.mrb[0].mxu0
      %v2364 = vadd.f32 %v678, %v2363
      %v2365 = vpop.f32.mrb[0].mxu0
      %v2366 = vadd.f32 %v679, %v2365
      %v2367 = vpop.f32.mrb[0].mxu0
      %v2368 = vadd.f32 %v680, %v2367
      %v2369 = vpop.f32.mrb[0].mxu0
      %v2370 = vadd.f32 %v681, %v2369
      %2371 = vmatprep.mubr.bf16.mxu0 0
      %2372 = vmatmul.mubr.bf16.gmra.mrb[0].mxu0 %v2237
      %v2373 = vpop.f32.mrb[0].mxu0
      %v2374 = vadd.f32 %v682, %v2373
      %v2375 = vpop.f32.mrb[0].mxu0
      %v2376 = vadd.f32 %v683, %v2375
      %v2377 = vpop.f32.mrb[0].mxu0
      %v2378 = vadd.f32 %v684, %v2377
      %v2379 = vpop.f32.mrb[0].mxu0
      %v2380 = vadd.f32 %v685, %v2379
      %2381 = vmatprep.mubr.bf16.mxu0 0
      %2382 = vmatmul.mubr.bf16.gmra.mrb[0].mxu0 %v2240
      %v2383 = vpop.f32.mrb[0].mxu0
      %v2384 = vadd.f32 %v686, %v2383
      %v2385 = vpop.f32.mrb[0].mxu0
      %v2386 = vadd.f32 %v687, %v2385
      %v2387 = vpop.f32.mrb[0].mxu0
      %v2388 = vadd.f32 %v688, %v2387
      %v2389 = vpop.f32.mrb[0].mxu0
      %v2390 = vadd.f32 %v689, %v2389
      %2391 = vdwg.mxu0
      %2392 = vrot.lane.b32.xlu0 %v775, 120
      %v2393 = vpop.permute.xlu0 %2392
      %2394 = vrot.lane.b32.xlu0 %v776, 120
      %v2395 = vpop.permute.xlu0 %2394
      %2396 = vrot.lane.b32.xlu0 %v777, 120
      %v2397 = vpop.permute.xlu0 %2396
      %2398 = vrot.lane.b32.xlu0 %v778, 120
      %v2399 = vpop.permute.xlu0 %2398
      %2400 = vrot.lane.b32.xlu0 %v779, 120
      %v2401 = vpop.permute.xlu0 %2400
      %2402 = vrot.lane.b32.xlu0 %v780, 120
      %v2403 = vpop.permute.xlu0 %2402
      %2404 = vrot.lane.b32.xlu0 %v781, 120
      %v2405 = vpop.permute.xlu0 %2404
      %2406 = vrot.lane.b32.xlu0 %v782, 120
      %v2407 = vpop.permute.xlu0 %2406
      %2408 = vrot.lane.b32.xlu0 %v783, 120
      %v2409 = vpop.permute.xlu0 %2408
      %2410 = vrot.lane.b32.xlu0 %v775, 88
      %v2411 = vpop.permute.xlu0 %2410
      %2412 = vrot.lane.b32.xlu0 %v776, 88
      %v2413 = vpop.permute.xlu0 %2412
      %2414 = vrot.lane.b32.xlu0 %v777, 88
      %v2415 = vpop.permute.xlu0 %2414
      %2416 = vrot.lane.b32.xlu0 %v778, 88
      %v2417 = vpop.permute.xlu0 %2416
      %2418 = vrot.lane.b32.xlu0 %v779, 88
      %v2419 = vpop.permute.xlu0 %2418
      %2420 = vrot.lane.b32.xlu0 %v780, 88
      %v2421 = vpop.permute.xlu0 %2420
      %2422 = vrot.lane.b32.xlu0 %v781, 88
      %v2423 = vpop.permute.xlu0 %2422
      %2424 = vrot.lane.b32.xlu0 %v782, 88
      %v2425 = vpop.permute.xlu0 %2424
      %2426 = vrot.lane.b32.xlu0 %v783, 88
      %v2427 = vpop.permute.xlu0 %2426
      %v2429 = vsel %vm811, %v2393, 0
      %v2432 = vsel %vm811, %v2395, 0
      %v2435 = vsel %vm811, %v2397, 0
      %v2438 = vsel %vm811, %v2399, 0
      %v2441 = vsel %vm811, %v2401, 0
      %v2444 = vsel %vm811, %v2403, 0
      %v2447 = vsel %vm811, %v2405, 0
      %v2450 = vsel %vm811, %v2407, 0
      %v2453 = vsel %vm811, %v2409, 0
      %v2456 = vsel %vm811, %v2411, 0
      %v2459 = vsel %vm811, %v2413, 0
      %v2462 = vsel %vm811, %v2415, 0
      %v2465 = vsel %vm811, %v2417, 0
      %v2468 = vsel %vm811, %v2419, 0
      %v2471 = vsel %vm811, %v2421, 0
      %v2474 = vsel %vm811, %v2423, 0
      %v2477 = vsel %vm811, %v2425, 0
      %v2480 = vsel %vm811, %v2427, 0
      %2482 = vmatprep.subr.bf16.mxu0 0
      %2483 = vmatpush1.bf16.xpose.msra.mxu0 %v2456
      %2484 = vmatprep.subr.bf16.mxu0 0
      %2485 = vmatpush1.bf16.xpose.msra.mxu0 %v2459
      %2486 = vmatprep.subr.bf16.mxu0 0
      %2487 = vmatpush1.bf16.xpose.msra.mxu0 %v2462
      %2488 = vmatprep.subr.bf16.mxu0 0
      %2489 = vmatpush1.bf16.xpose.msra.mxu0 %v2465
      %2490 = vmatprep.subr.bf16.mxu0 0
      %2491 = vmatpush1.bf16.xpose.msra.mxu0 %v2468
      %2492 = vmatprep.subr.bf16.mxu0 0
      %2493 = vmatpush1.bf16.xpose.msra.mxu0 %v2471
      %2494 = vmatprep.subr.bf16.mxu0 0
      %2495 = vmatpush1.bf16.xpose.msra.mxu0 %v2474
      %2496 = vmatprep.subr.bf16.mxu0 0
      %2497 = vmatpush1.bf16.xpose.msra.mxu0 %v2477
      %2498 = vmatprep.subr.bf16.mxu0 0
      %2499 = vmatpush1.bf16.xpose.msra.mxu0 %v2480
      %2500 = vmatprep.subr.bf16.mxu0 0
      %2501 = vmatpush1.bf16.xpose.msra.mxu0 0
      %2502 = vmatprep.subr.bf16.mxu0 0
      %2503 = vmatpush1.bf16.xpose.msra.mxu0 0
      %2504 = vmatprep.subr.bf16.mxu0 0
      %2505 = vmatpush1.bf16.xpose.msra.mxu0 0
      %2506 = vmatprep.subr.bf16.mxu0 0
      %2507 = vmatpush1.bf16.xpose.msra.mxu0 0
      %2508 = vmatprep.subr.bf16.mxu0 0
      %2509 = vmatpush1.bf16.xpose.msra.mxu0 0
      %2510 = vmatprep.subr.bf16.mxu0 0
      %2511 = vmatpush1.bf16.xpose.msra.mxu0 0
      %2512 = vmatprep.subr.bf16.mxu0 0
      %2513 = vmatpush1.bf16.xpose.msra.mxu0 0
      %2514 = vmatprep.mubr.bf16.mxu0 0
      %2515 = vmatmul.mubr.bf16.gmra.mrb[0].mxu0 %v2429
      %v2516 = vpop.f32.mrb[0].mxu0
      %v2517 = vadd.f32 %v654, %v2516
      %v2518 = vpop.f32.mrb[0].mxu0
      %v2519 = vadd.f32 %v655, %v2518
      %v2520 = vpop.f32.mrb[0].mxu0
      %v2521 = vadd.f32 %v656, %v2520
      %v2522 = vpop.f32.mrb[0].mxu0
      %v2523 = vadd.f32 %v657, %v2522
      %2524 = vmatprep.mubr.bf16.mxu0 0
      %2525 = vmatmul.mubr.bf16.gmra.mrb[0].mxu0 %v2432
      %v2526 = vpop.f32.mrb[0].mxu0
      %v2527 = vadd.f32 %v658, %v2526
      %v2528 = vpop.f32.mrb[0].mxu0
      %v2529 = vadd.f32 %v659, %v2528
      %v2530 = vpop.f32.mrb[0].mxu0
      %v2531 = vadd.f32 %v660, %v2530
      %v2532 = vpop.f32.mrb[0].mxu0
      %v2533 = vadd.f32 %v661, %v2532
      %2534 = vmatprep.mubr.bf16.mxu0 0
      %2535 = vmatmul.mubr.bf16.gmra.mrb[0].mxu0 %v2435
      %v2536 = vpop.f32.mrb[0].mxu0
      %v2537 = vadd.f32 %v662, %v2536
      %v2538 = vpop.f32.mrb[0].mxu0
      %v2539 = vadd.f32 %v663, %v2538
      %v2540 = vpop.f32.mrb[0].mxu0
      %v2541 = vadd.f32 %v664, %v2540
      %v2542 = vpop.f32.mrb[0].mxu0
      %v2543 = vadd.f32 %v665, %v2542
      %2544 = vmatprep.mubr.bf16.mxu0 0
      %2545 = vmatmul.mubr.bf16.gmra.mrb[0].mxu0 %v2438
      %v2546 = vpop.f32.mrb[0].mxu0
      %v2547 = vadd.f32 %v666, %v2546
      %v2548 = vpop.f32.mrb[0].mxu0
      %v2549 = vadd.f32 %v667, %v2548
      %v2550 = vpop.f32.mrb[0].mxu0
      %v2551 = vadd.f32 %v668, %v2550
      %v2552 = vpop.f32.mrb[0].mxu0
      %v2553 = vadd.f32 %v669, %v2552
      %2554 = vmatprep.mubr.bf16.mxu0 0
      %2555 = vmatmul.mubr.bf16.gmra.mrb[0].mxu0 %v2441
      %v2556 = vpop.f32.mrb[0].mxu0
      %v2557 = vadd.f32 %v670, %v2556
      %v2558 = vpop.f32.mrb[0].mxu0
      %v2559 = vadd.f32 %v671, %v2558
      %v2560 = vpop.f32.mrb[0].mxu0
      %v2561 = vadd.f32 %v672, %v2560
      %v2562 = vpop.f32.mrb[0].mxu0
      %v2563 = vadd.f32 %v673, %v2562
      %2564 = vmatprep.mubr.bf16.mxu0 0
      %2565 = vmatmul.mubr.bf16.gmra.mrb[0].mxu0 %v2444
      %v2566 = vpop.f32.mrb[0].mxu0
      %v2567 = vadd.f32 %v674, %v2566
      %v2568 = vpop.f32.mrb[0].mxu0
      %v2569 = vadd.f32 %v675, %v2568
      %v2570 = vpop.f32.mrb[0].mxu0
      %v2571 = vadd.f32 %v676, %v2570
      %v2572 = vpop.f32.mrb[0].mxu0
      %v2573 = vadd.f32 %v677, %v2572
      %2574 = vmatprep.mubr.bf16.mxu0 0
      %2575 = vmatmul.mubr.bf16.gmra.mrb[0].mxu0 %v2447
      %v2576 = vpop.f32.mrb[0].mxu0
      %v2577 = vadd.f32 %v678, %v2576
      %v2578 = vpop.f32.mrb[0].mxu0
      %v2579 = vadd.f32 %v679, %v2578
      %v2580 = vpop.f32.mrb[0].mxu0
      %v2581 = vadd.f32 %v680, %v2580
      %v2582 = vpop.f32.mrb[0].mxu0
      %v2583 = vadd.f32 %v681, %v2582
      %2584 = vmatprep.mubr.bf16.mxu0 0
      %2585 = vmatmul.mubr.bf16.gmra.mrb[0].mxu0 %v2450
      %v2586 = vpop.f32.mrb[0].mxu0
      %v2587 = vadd.f32 %v682, %v2586
      %v2588 = vpop.f32.mrb[0].mxu0
      %v2589 = vadd.f32 %v683, %v2588
      %v2590 = vpop.f32.mrb[0].mxu0
      %v2591 = vadd.f32 %v684, %v2590
      %v2592 = vpop.f32.mrb[0].mxu0
      %v2593 = vadd.f32 %v685, %v2592
      %2594 = vmatprep.mubr.bf16.mxu0 0
      %2595 = vmatmul.mubr.bf16.gmra.mrb[0].mxu0 %v2453
      %v2596 = vpop.f32.mrb[0].mxu0
      %v2597 = vadd.f32 %v686, %v2596
      %v2598 = vpop.f32.mrb[0].mxu0
      %v2599 = vadd.f32 %v687, %v2598
      %v2600 = vpop.f32.mrb[0].mxu0
      %v2601 = vadd.f32 %v688, %v2600
      %v2602 = vpop.f32.mrb[0].mxu0
      %v2603 = vadd.f32 %v689, %v2602
      %2604 = vdwg.mxu0
      %v2605 = vsel %vm1193, %v2306, -inf
      %v2606 = vmax.f32 %v2304, %v2605
      %2607 = vmax.xlane.f32.xlu0 %v2606
      %v2608 = vpop.xlane.xlu0 %2607
      %v2609 = vsel %vm1193, %v2310, -inf
      %v2610 = vmax.f32 %v2308, %v2609
      %2611 = vmax.xlane.f32.xlu0 %v2610
      %v2612 = vpop.xlane.xlu0 %2611
      %v2613 = vsel %vm1193, %v2316, -inf
      %v2614 = vmax.f32 %v2314, %v2613
      %2615 = vmax.xlane.f32.xlu0 %v2614
      %v2616 = vpop.xlane.xlu0 %2615
      %v2617 = vsel %vm1193, %v2320, -inf
      %v2618 = vmax.f32 %v2318, %v2617
      %2619 = vmax.xlane.f32.xlu0 %v2618
      %v2620 = vpop.xlane.xlu0 %2619
      %v2621 = vsel %vm1193, %v2326, -inf
      %v2622 = vmax.f32 %v2324, %v2621
      %2623 = vmax.xlane.f32.xlu0 %v2622
      %v2624 = vpop.xlane.xlu0 %2623
      %v2625 = vsel %vm1193, %v2330, -inf
      %v2626 = vmax.f32 %v2328, %v2625
      %2627 = vmax.xlane.f32.xlu0 %v2626
      %v2628 = vpop.xlane.xlu0 %2627
      %v2629 = vsel %vm1193, %v2336, -inf
      %v2630 = vmax.f32 %v2334, %v2629
      %2631 = vmax.xlane.f32.xlu0 %v2630
      %v2632 = vpop.xlane.xlu0 %2631
      %v2633 = vsel %vm1193, %v2340, -inf
      %v2634 = vmax.f32 %v2338, %v2633
      %2635 = vmax.xlane.f32.xlu0 %v2634
      %v2636 = vpop.xlane.xlu0 %2635
      %v2637 = vsel %vm1193, %v2346, -inf
      %v2638 = vmax.f32 %v2344, %v2637
      %2639 = vmax.xlane.f32.xlu0 %v2638
      %v2640 = vpop.xlane.xlu0 %2639
      %v2641 = vsel %vm1193, %v2350, -inf
      %v2642 = vmax.f32 %v2348, %v2641
      %2643 = vmax.xlane.f32.xlu0 %v2642
      %v2644 = vpop.xlane.xlu0 %2643
      %v2645 = vsel %vm1193, %v2356, -inf
      %v2646 = vmax.f32 %v2354, %v2645
      %2647 = vmax.xlane.f32.xlu0 %v2646
      %v2648 = vpop.xlane.xlu0 %2647
      %v2649 = vsel %vm1193, %v2360, -inf
      %v2650 = vmax.f32 %v2358, %v2649
      %2651 = vmax.xlane.f32.xlu0 %v2650
      %v2652 = vpop.xlane.xlu0 %2651
      %v2653 = vsel %vm1193, %v2366, -inf
      %v2654 = vmax.f32 %v2364, %v2653
      %2655 = vmax.xlane.f32.xlu0 %v2654
      %v2656 = vpop.xlane.xlu0 %2655
      %v2657 = vsel %vm1193, %v2370, -inf
      %v2658 = vmax.f32 %v2368, %v2657
      %2659 = vmax.xlane.f32.xlu0 %v2658
      %v2660 = vpop.xlane.xlu0 %2659
      %v2661 = vsel %vm1193, %v2376, -inf
      %v2662 = vmax.f32 %v2374, %v2661
      %2663 = vmax.xlane.f32.xlu0 %v2662
      %v2664 = vpop.xlane.xlu0 %2663
      %v2665 = vsel %vm1193, %v2380, -inf
      %v2666 = vmax.f32 %v2378, %v2665
      %2667 = vmax.xlane.f32.xlu0 %v2666
      %v2668 = vpop.xlane.xlu0 %2667
      %v2669 = vsel %vm1193, %v2386, -inf
      %v2670 = vmax.f32 %v2384, %v2669
      %2671 = vmax.xlane.f32.xlu0 %v2670
      %v2672 = vpop.xlane.xlu0 %2671
      %v2673 = vsel %vm1193, %v2390, -inf
      %v2674 = vmax.f32 %v2388, %v2673
      %2675 = vmax.xlane.f32.xlu0 %v2674
      %v2676 = vpop.xlane.xlu0 %2675
      %v2677 = vsel %vm1193, %v2519, -inf
      %v2678 = vmax.f32 %v2517, %v2677
      %2679 = vmax.xlane.f32.xlu0 %v2678
      %v2680 = vpop.xlane.xlu0 %2679
      %v2681 = vsel %vm1193, %v2523, -inf
      %v2682 = vmax.f32 %v2521, %v2681
      %2683 = vmax.xlane.f32.xlu0 %v2682
      %v2684 = vpop.xlane.xlu0 %2683
      %v2685 = vsel %vm1193, %v2529, -inf
      %v2686 = vmax.f32 %v2527, %v2685
      %2687 = vmax.xlane.f32.xlu0 %v2686
      %v2688 = vpop.xlane.xlu0 %2687
      %v2689 = vsel %vm1193, %v2533, -inf
      %v2690 = vmax.f32 %v2531, %v2689
      %2691 = vmax.xlane.f32.xlu0 %v2690
      %v2692 = vpop.xlane.xlu0 %2691
      %v2693 = vsel %vm1193, %v2539, -inf
      %v2694 = vmax.f32 %v2537, %v2693
      %2695 = vmax.xlane.f32.xlu0 %v2694
      %v2696 = vpop.xlane.xlu0 %2695
      %v2697 = vsel %vm1193, %v2543, -inf
      %v2698 = vmax.f32 %v2541, %v2697
      %2699 = vmax.xlane.f32.xlu0 %v2698
      %v2700 = vpop.xlane.xlu0 %2699
      %v2701 = vsel %vm1193, %v2549, -inf
      %v2702 = vmax.f32 %v2547, %v2701
      %2703 = vmax.xlane.f32.xlu0 %v2702
      %v2704 = vpop.xlane.xlu0 %2703
      %v2705 = vsel %vm1193, %v2553, -inf
      %v2706 = vmax.f32 %v2551, %v2705
      %2707 = vmax.xlane.f32.xlu0 %v2706
      %v2708 = vpop.xlane.xlu0 %2707
      %v2709 = vsel %vm1193, %v2559, -inf
      %v2710 = vmax.f32 %v2557, %v2709
      %2711 = vmax.xlane.f32.xlu0 %v2710
      %v2712 = vpop.xlane.xlu0 %2711
      %v2713 = vsel %vm1193, %v2563, -inf
      %v2714 = vmax.f32 %v2561, %v2713
      %2715 = vmax.xlane.f32.xlu0 %v2714
      %v2716 = vpop.xlane.xlu0 %2715
      %v2717 = vsel %vm1193, %v2569, -inf
      %v2718 = vmax.f32 %v2567, %v2717
      %2719 = vmax.xlane.f32.xlu0 %v2718
      %v2720 = vpop.xlane.xlu0 %2719
      %v2721 = vsel %vm1193, %v2573, -inf
      %v2722 = vmax.f32 %v2571, %v2721
      %2723 = vmax.xlane.f32.xlu0 %v2722
      %v2724 = vpop.xlane.xlu0 %2723
      %v2725 = vsel %vm1193, %v2579, -inf
      %v2726 = vmax.f32 %v2577, %v2725
      %2727 = vmax.xlane.f32.xlu0 %v2726
      %v2728 = vpop.xlane.xlu0 %2727
      %v2729 = vsel %vm1193, %v2583, -inf
      %v2730 = vmax.f32 %v2581, %v2729
      %2731 = vmax.xlane.f32.xlu0 %v2730
      %v2732 = vpop.xlane.xlu0 %2731
      %v2733 = vsel %vm1193, %v2589, -inf
      %v2734 = vmax.f32 %v2587, %v2733
      %2735 = vmax.xlane.f32.xlu0 %v2734
      %v2736 = vpop.xlane.xlu0 %2735
      %v2737 = vsel %vm1193, %v2593, -inf
      %v2738 = vmax.f32 %v2591, %v2737
      %2739 = vmax.xlane.f32.xlu0 %v2738
      %v2740 = vpop.xlane.xlu0 %2739
      %v2741 = vsel %vm1193, %v2599, -inf
      %v2742 = vmax.f32 %v2597, %v2741
      %2743 = vmax.xlane.f32.xlu0 %v2742
      %v2744 = vpop.xlane.xlu0 %2743
      %v2745 = vsel %vm1193, %v2603, -inf
      %v2746 = vmax.f32 %v2601, %v2745
      %2747 = vmax.xlane.f32.xlu0 %v2746
      %v2748 = vpop.xlane.xlu0 %2747
      %v2749 = vsub.f32 %v2304, %v2608
      %v2750 = vsub.f32 %v2306, %v2608
      %v2751 = vsub.f32 %v2308, %v2612
      %v2752 = vsub.f32 %v2310, %v2612
      %v2753 = vsub.f32 %v2314, %v2616
      %v2754 = vsub.f32 %v2316, %v2616
      %v2755 = vsub.f32 %v2318, %v2620
      %v2756 = vsub.f32 %v2320, %v2620
      %v2757 = vsub.f32 %v2324, %v2624
      %v2758 = vsub.f32 %v2326, %v2624
      %v2759 = vsub.f32 %v2328, %v2628
      %v2760 = vsub.f32 %v2330, %v2628
      %v2761 = vsub.f32 %v2334, %v2632
      %v2762 = vsub.f32 %v2336, %v2632
      %v2763 = vsub.f32 %v2338, %v2636
      %v2764 = vsub.f32 %v2340, %v2636
      %v2765 = vsub.f32 %v2344, %v2640
      %v2766 = vsub.f32 %v2346, %v2640
      %v2767 = vsub.f32 %v2348, %v2644
      %v2768 = vsub.f32 %v2350, %v2644
      %v2769 = vsub.f32 %v2354, %v2648
      %v2770 = vsub.f32 %v2356, %v2648
      %v2771 = vsub.f32 %v2358, %v2652
      %v2772 = vsub.f32 %v2360, %v2652
      %v2773 = vsub.f32 %v2364, %v2656
      %v2774 = vsub.f32 %v2366, %v2656
      %v2775 = vsub.f32 %v2368, %v2660
      %v2776 = vsub.f32 %v2370, %v2660
      %v2777 = vsub.f32 %v2374, %v2664
      %v2778 = vsub.f32 %v2376, %v2664
      %v2779 = vsub.f32 %v2378, %v2668
      %v2780 = vsub.f32 %v2380, %v2668
      %v2781 = vsub.f32 %v2384, %v2672
      %v2782 = vsub.f32 %v2386, %v2672
      %v2783 = vsub.f32 %v2388, %v2676
      %v2784 = vsub.f32 %v2390, %v2676
      %v2785 = vsub.f32 %v2517, %v2680
      %v2786 = vsub.f32 %v2519, %v2680
      %v2787 = vsub.f32 %v2521, %v2684
      %v2788 = vsub.f32 %v2523, %v2684
      %v2789 = vsub.f32 %v2527, %v2688
      %v2790 = vsub.f32 %v2529, %v2688
      %v2791 = vsub.f32 %v2531, %v2692
      %v2792 = vsub.f32 %v2533, %v2692
      %v2793 = vsub.f32 %v2537, %v2696
      %v2794 = vsub.f32 %v2539, %v2696
      %v2795 = vsub.f32 %v2541, %v2700
      %v2796 = vsub.f32 %v2543, %v2700
      %v2797 = vsub.f32 %v2547, %v2704
      %v2798 = vsub.f32 %v2549, %v2704
      %v2799 = vsub.f32 %v2551, %v2708
      %v2800 = vsub.f32 %v2553, %v2708
      %v2801 = vsub.f32 %v2557, %v2712
      %v2802 = vsub.f32 %v2559, %v2712
      %v2803 = vsub.f32 %v2561, %v2716
      %v2804 = vsub.f32 %v2563, %v2716
      %v2805 = vsub.f32 %v2567, %v2720
      %v2806 = vsub.f32 %v2569, %v2720
      %v2807 = vsub.f32 %v2571, %v2724
      %v2808 = vsub.f32 %v2573, %v2724
      %v2809 = vsub.f32 %v2577, %v2728
      %v2810 = vsub.f32 %v2579, %v2728
      %v2811 = vsub.f32 %v2581, %v2732
      %v2812 = vsub.f32 %v2583, %v2732
      %v2813 = vsub.f32 %v2587, %v2736
      %v2814 = vsub.f32 %v2589, %v2736
      %v2815 = vsub.f32 %v2591, %v2740
      %v2816 = vsub.f32 %v2593, %v2740
      %v2817 = vsub.f32 %v2597, %v2744
      %v2818 = vsub.f32 %v2599, %v2744
      %v2819 = vsub.f32 %v2601, %v2748
      %v2820 = vsub.f32 %v2603, %v2748
      %v2821 = vmul.f32 %v2749, 1.442695
      %v2822 = vpow.pop %v2821
      %v2823 = vmul.f32 %v2750, 1.442695
      %v2824 = vpow.pop %v2823
      %v2825 = vmul.f32 %v2751, 1.442695
      %v2826 = vpow.pop %v2825
      %v2827 = vmul.f32 %v2752, 1.442695
      %v2828 = vpow.pop %v2827
      %v2829 = vmul.f32 %v2753, 1.442695
      %v2830 = vpow.pop %v2829
      %v2831 = vmul.f32 %v2754, 1.442695
      %v2832 = vpow.pop %v2831
      %v2833 = vmul.f32 %v2755, 1.442695
      %v2834 = vpow.pop %v2833
      %v2835 = vmul.f32 %v2756, 1.442695
      %v2836 = vpow.pop %v2835
      %v2837 = vmul.f32 %v2757, 1.442695
      %v2838 = vpow.pop %v2837
      %v2839 = vmul.f32 %v2758, 1.442695
      %v2840 = vpow.pop %v2839
      %v2841 = vmul.f32 %v2759, 1.442695
      %v2842 = vpow.pop %v2841
      %v2843 = vmul.f32 %v2760, 1.442695
      %v2844 = vpow.pop %v2843
      %v2845 = vmul.f32 %v2761, 1.442695
      %v2846 = vpow.pop %v2845
      %v2847 = vmul.f32 %v2762, 1.442695
      %v2848 = vpow.pop %v2847
      %v2849 = vmul.f32 %v2763, 1.442695
      %v2850 = vpow.pop %v2849
      %v2851 = vmul.f32 %v2764, 1.442695
      %v2852 = vpow.pop %v2851
      %v2853 = vmul.f32 %v2765, 1.442695
      %v2854 = vpow.pop %v2853
      %v2855 = vmul.f32 %v2766, 1.442695
      %v2856 = vpow.pop %v2855
      %v2857 = vmul.f32 %v2767, 1.442695
      %v2858 = vpow.pop %v2857
      %v2859 = vmul.f32 %v2768, 1.442695
      %v2860 = vpow.pop %v2859
      %v2861 = vmul.f32 %v2769, 1.442695
      %v2862 = vpow.pop %v2861
      %v2863 = vmul.f32 %v2770, 1.442695
      %v2864 = vpow.pop %v2863
      %v2865 = vmul.f32 %v2771, 1.442695
      %v2866 = vpow.pop %v2865
      %v2867 = vmul.f32 %v2772, 1.442695
      %v2868 = vpow.pop %v2867
      %v2869 = vmul.f32 %v2773, 1.442695
      %v2870 = vpow.pop %v2869
      %v2871 = vmul.f32 %v2774, 1.442695
      %v2872 = vpow.pop %v2871
      %v2873 = vmul.f32 %v2775, 1.442695
      %v2874 = vpow.pop %v2873
      %v2875 = vmul.f32 %v2776, 1.442695
      %v2876 = vpow.pop %v2875
      %v2877 = vmul.f32 %v2777, 1.442695
      %v2878 = vpow.pop %v2877
      %v2879 = vmul.f32 %v2778, 1.442695
      %v2880 = vpow.pop %v2879
      %v2881 = vmul.f32 %v2779, 1.442695
      %v2882 = vpow.pop %v2881
      %v2883 = vmul.f32 %v2780, 1.442695
      %v2884 = vpow.pop %v2883
      %v2885 = vmul.f32 %v2781, 1.442695
      %v2886 = vpow.pop %v2885
      %v2887 = vmul.f32 %v2782, 1.442695
      %v2888 = vpow.pop %v2887
      %v2889 = vmul.f32 %v2783, 1.442695
      %v2890 = vpow.pop %v2889
      %v2891 = vmul.f32 %v2784, 1.442695
      %v2892 = vpow.pop %v2891
      %v2893 = vmul.f32 %v2785, 1.442695
      %v2894 = vpow.pop %v2893
      %v2895 = vmul.f32 %v2786, 1.442695
      %v2896 = vpow.pop %v2895
      %v2897 = vmul.f32 %v2787, 1.442695
      %v2898 = vpow.pop %v2897
      %v2899 = vmul.f32 %v2788, 1.442695
      %v2900 = vpow.pop %v2899
      %v2901 = vmul.f32 %v2789, 1.442695
      %v2902 = vpow.pop %v2901
      %v2903 = vmul.f32 %v2790, 1.442695
      %v2904 = vpow.pop %v2903
      %v2905 = vmul.f32 %v2791, 1.442695
      %v2906 = vpow.pop %v2905
      %v2907 = vmul.f32 %v2792, 1.442695
      %v2908 = vpow.pop %v2907
      %v2909 = vmul.f32 %v2793, 1.442695
      %v2910 = vpow.pop %v2909
      %v2911 = vmul.f32 %v2794, 1.442695
      %v2912 = vpow.pop %v2911
      %v2913 = vmul.f32 %v2795, 1.442695
      %v2914 = vpow.pop %v2913
      %v2915 = vmul.f32 %v2796, 1.442695
      %v2916 = vpow.pop %v2915
      %v2917 = vmul.f32 %v2797, 1.442695
      %v2918 = vpow.pop %v2917
      %v2919 = vmul.f32 %v2798, 1.442695
      %v2920 = vpow.pop %v2919
      %v2921 = vmul.f32 %v2799, 1.442695
      %v2922 = vpow.pop %v2921
      %v2923 = vmul.f32 %v2800, 1.442695
      %v2924 = vpow.pop %v2923
      %v2925 = vmul.f32 %v2801, 1.442695
      %v2926 = vpow.pop %v2925
      %v2927 = vmul.f32 %v2802, 1.442695
      %v2928 = vpow.pop %v2927
      %v2929 = vmul.f32 %v2803, 1.442695
      %v2930 = vpow.pop %v2929
      %v2931 = vmul.f32 %v2804, 1.442695
      %v2932 = vpow.pop %v2931
      %v2933 = vmul.f32 %v2805, 1.442695
      %v2934 = vpow.pop %v2933
      %v2935 = vmul.f32 %v2806, 1.442695
      %v2936 = vpow.pop %v2935
      %v2937 = vmul.f32 %v2807, 1.442695
      %v2938 = vpow.pop %v2937
      %v2939 = vmul.f32 %v2808, 1.442695
      %v2940 = vpow.pop %v2939
      %v2941 = vmul.f32 %v2809, 1.442695
      %v2942 = vpow.pop %v2941
      %v2943 = vmul.f32 %v2810, 1.442695
      %v2944 = vpow.pop %v2943
      %v2945 = vmul.f32 %v2811, 1.442695
      %v2946 = vpow.pop %v2945
      %v2947 = vmul.f32 %v2812, 1.442695
      %v2948 = vpow.pop %v2947
      %v2949 = vmul.f32 %v2813, 1.442695
      %v2950 = vpow.pop %v2949
      %v2951 = vmul.f32 %v2814, 1.442695
      %v2952 = vpow.pop %v2951
      %v2953 = vmul.f32 %v2815, 1.442695
      %v2954 = vpow.pop %v2953
      %v2955 = vmul.f32 %v2816, 1.442695
      %v2956 = vpow.pop %v2955
      %v2957 = vmul.f32 %v2817, 1.442695
      %v2958 = vpow.pop %v2957
      %v2959 = vmul.f32 %v2818, 1.442695
      %v2960 = vpow.pop %v2959
      %v2961 = vmul.f32 %v2819, 1.442695
      %v2962 = vpow.pop %v2961
      %v2963 = vmul.f32 %v2820, 1.442695
      %v2964 = vpow.pop %v2963
      %v2965 = vsel %vm1193, %v2824, 0.0
      %v2966 = vadd.f32 %v2822, %v2965
      %2967 = vadd.xlane.f32.xlu0 %v2966
      %v2968 = vpop.xlane.xlu0 %2967
      %v2969 = vsel %vm1193, %v2828, 0.0
      %v2970 = vadd.f32 %v2826, %v2969
      %2971 = vadd.xlane.f32.xlu0 %v2970
      %v2972 = vpop.xlane.xlu0 %2971
      %v2973 = vsel %vm1193, %v2832, 0.0
      %v2974 = vadd.f32 %v2830, %v2973
      %2975 = vadd.xlane.f32.xlu0 %v2974
      %v2976 = vpop.xlane.xlu0 %2975
      %v2977 = vsel %vm1193, %v2836, 0.0
      %v2978 = vadd.f32 %v2834, %v2977
      %2979 = vadd.xlane.f32.xlu0 %v2978
      %v2980 = vpop.xlane.xlu0 %2979
      %v2981 = vsel %vm1193, %v2840, 0.0
      %v2982 = vadd.f32 %v2838, %v2981
      %2983 = vadd.xlane.f32.xlu0 %v2982
      %v2984 = vpop.xlane.xlu0 %2983
      %v2985 = vsel %vm1193, %v2844, 0.0
      %v2986 = vadd.f32 %v2842, %v2985
      %2987 = vadd.xlane.f32.xlu0 %v2986
      %v2988 = vpop.xlane.xlu0 %2987
      %v2989 = vsel %vm1193, %v2848, 0.0
      %v2990 = vadd.f32 %v2846, %v2989
      %2991 = vadd.xlane.f32.xlu0 %v2990
      %v2992 = vpop.xlane.xlu0 %2991
      %v2993 = vsel %vm1193, %v2852, 0.0
      %v2994 = vadd.f32 %v2850, %v2993
      %2995 = vadd.xlane.f32.xlu0 %v2994
      %v2996 = vpop.xlane.xlu0 %2995
      %v2997 = vsel %vm1193, %v2856, 0.0
      %v2998 = vadd.f32 %v2854, %v2997
      %2999 = vadd.xlane.f32.xlu0 %v2998
      %v3000 = vpop.xlane.xlu0 %2999
      %v3001 = vsel %vm1193, %v2860, 0.0
      %v3002 = vadd.f32 %v2858, %v3001
      %3003 = vadd.xlane.f32.xlu0 %v3002
      %v3004 = vpop.xlane.xlu0 %3003
      %v3005 = vsel %vm1193, %v2864, 0.0
      %v3006 = vadd.f32 %v2862, %v3005
      %3007 = vadd.xlane.f32.xlu0 %v3006
      %v3008 = vpop.xlane.xlu0 %3007
      %v3009 = vsel %vm1193, %v2868, 0.0
      %v3010 = vadd.f32 %v2866, %v3009
      %3011 = vadd.xlane.f32.xlu0 %v3010
      %v3012 = vpop.xlane.xlu0 %3011
      %v3013 = vsel %vm1193, %v2872, 0.0
      %v3014 = vadd.f32 %v2870, %v3013
      %3015 = vadd.xlane.f32.xlu0 %v3014
      %v3016 = vpop.xlane.xlu0 %3015
      %v3017 = vsel %vm1193, %v2876, 0.0
      %v3018 = vadd.f32 %v2874, %v3017
      %3019 = vadd.xlane.f32.xlu0 %v3018
      %v3020 = vpop.xlane.xlu0 %3019
      %v3021 = vsel %vm1193, %v2880, 0.0
      %v3022 = vadd.f32 %v2878, %v3021
      %3023 = vadd.xlane.f32.xlu0 %v3022
      %v3024 = vpop.xlane.xlu0 %3023
      %v3025 = vsel %vm1193, %v2884, 0.0
      %v3026 = vadd.f32 %v2882, %v3025
      %3027 = vadd.xlane.f32.xlu0 %v3026
      %v3028 = vpop.xlane.xlu0 %3027
      %v3029 = vsel %vm1193, %v2888, 0.0
      %v3030 = vadd.f32 %v2886, %v3029
      %3031 = vadd.xlane.f32.xlu0 %v3030
      %v3032 = vpop.xlane.xlu0 %3031
      %v3033 = vsel %vm1193, %v2892, 0.0
      %v3034 = vadd.f32 %v2890, %v3033
      %3035 = vadd.xlane.f32.xlu0 %v3034
      %v3036 = vpop.xlane.xlu0 %3035
      %v3037 = vsel %vm1193, %v2896, 0.0
      %v3038 = vadd.f32 %v2894, %v3037
      %3039 = vadd.xlane.f32.xlu0 %v3038
      %v3040 = vpop.xlane.xlu0 %3039
      %v3041 = vsel %vm1193, %v2900, 0.0
      %v3042 = vadd.f32 %v2898, %v3041
      %3043 = vadd.xlane.f32.xlu0 %v3042
      %v3044 = vpop.xlane.xlu0 %3043
      %v3045 = vsel %vm1193, %v2904, 0.0
      %v3046 = vadd.f32 %v2902, %v3045
      %3047 = vadd.xlane.f32.xlu0 %v3046
      %v3048 = vpop.xlane.xlu0 %3047
      %v3049 = vsel %vm1193, %v2908, 0.0
      %v3050 = vadd.f32 %v2906, %v3049
      %3051 = vadd.xlane.f32.xlu0 %v3050
      %v3052 = vpop.xlane.xlu0 %3051
      %v3053 = vsel %vm1193, %v2912, 0.0
      %v3054 = vadd.f32 %v2910, %v3053
      %3055 = vadd.xlane.f32.xlu0 %v3054
      %v3056 = vpop.xlane.xlu0 %3055
      %v3057 = vsel %vm1193, %v2916, 0.0
      %v3058 = vadd.f32 %v2914, %v3057
      %3059 = vadd.xlane.f32.xlu0 %v3058
      %v3060 = vpop.xlane.xlu0 %3059
      %v3061 = vsel %vm1193, %v2920, 0.0
      %v3062 = vadd.f32 %v2918, %v3061
      %3063 = vadd.xlane.f32.xlu0 %v3062
      %v3064 = vpop.xlane.xlu0 %3063
      %v3065 = vsel %vm1193, %v2924, 0.0
      %v3066 = vadd.f32 %v2922, %v3065
      %3067 = vadd.xlane.f32.xlu0 %v3066
      %v3068 = vpop.xlane.xlu0 %3067
      %v3069 = vsel %vm1193, %v2928, 0.0
      %v3070 = vadd.f32 %v2926, %v3069
      %3071 = vadd.xlane.f32.xlu0 %v3070
      %v3072 = vpop.xlane.xlu0 %3071
      %v3073 = vsel %vm1193, %v2932, 0.0
      %v3074 = vadd.f32 %v2930, %v3073
      %3075 = vadd.xlane.f32.xlu0 %v3074
      %v3076 = vpop.xlane.xlu0 %3075
      %v3077 = vsel %vm1193, %v2936, 0.0
      %v3078 = vadd.f32 %v2934, %v3077
      %3079 = vadd.xlane.f32.xlu0 %v3078
      %v3080 = vpop.xlane.xlu0 %3079
      %v3081 = vsel %vm1193, %v2940, 0.0
      %v3082 = vadd.f32 %v2938, %v3081
      %3083 = vadd.xlane.f32.xlu0 %v3082
      %v3084 = vpop.xlane.xlu0 %3083
      %v3085 = vsel %vm1193, %v2944, 0.0
      %v3086 = vadd.f32 %v2942, %v3085
      %3087 = vadd.xlane.f32.xlu0 %v3086
      %v3088 = vpop.xlane.xlu0 %3087
      %v3089 = vsel %vm1193, %v2948, 0.0
      %v3090 = vadd.f32 %v2946, %v3089
      %3091 = vadd.xlane.f32.xlu0 %v3090
      %v3092 = vpop.xlane.xlu0 %3091
      %v3093 = vsel %vm1193, %v2952, 0.0
      %v3094 = vadd.f32 %v2950, %v3093
      %3095 = vadd.xlane.f32.xlu0 %v3094
      %v3096 = vpop.xlane.xlu0 %3095
      %v3097 = vsel %vm1193, %v2956, 0.0
      %v3098 = vadd.f32 %v2954, %v3097
      %3099 = vadd.xlane.f32.xlu0 %v3098
      %v3100 = vpop.xlane.xlu0 %3099
      %v3101 = vsel %vm1193, %v2960, 0.0
      %v3102 = vadd.f32 %v2958, %v3101
      %3103 = vadd.xlane.f32.xlu0 %v3102
      %v3104 = vpop.xlane.xlu0 %3103
      %v3105 = vsel %vm1193, %v2964, 0.0
      %v3106 = vadd.f32 %v2962, %v3105
      %3107 = vadd.xlane.f32.xlu0 %v3106
      %v3108 = vpop.xlane.xlu0 %3107
      %v3109 = vrcp.pop %v2968
      %v3110 = vrcp.pop %v2972
      %v3111 = vrcp.pop %v2976
      %v3112 = vrcp.pop %v2980
      %v3113 = vrcp.pop %v2984
      %v3114 = vrcp.pop %v2988
      %v3115 = vrcp.pop %v2992
      %v3116 = vrcp.pop %v2996
      %v3117 = vrcp.pop %v3000
      %v3118 = vrcp.pop %v3004
      %v3119 = vrcp.pop %v3008
      %v3120 = vrcp.pop %v3012
      %v3121 = vrcp.pop %v3016
      %v3122 = vrcp.pop %v3020
      %v3123 = vrcp.pop %v3024
      %v3124 = vrcp.pop %v3028
      %v3125 = vrcp.pop %v3032
      %v3126 = vrcp.pop %v3036
      %v3127 = vrcp.pop %v3040
      %v3128 = vrcp.pop %v3044
      %v3129 = vrcp.pop %v3048
      %v3130 = vrcp.pop %v3052
      %v3131 = vrcp.pop %v3056
      %v3132 = vrcp.pop %v3060
      %v3133 = vrcp.pop %v3064
      %v3134 = vrcp.pop %v3068
      %v3135 = vrcp.pop %v3072
      %v3136 = vrcp.pop %v3076
      %v3137 = vrcp.pop %v3080
      %v3138 = vrcp.pop %v3084
      %v3139 = vrcp.pop %v3088
      %v3140 = vrcp.pop %v3092
      %v3141 = vrcp.pop %v3096
      %v3142 = vrcp.pop %v3100
      %v3143 = vrcp.pop %v3104
      %v3144 = vrcp.pop %v3108
      %v3145 = vmul.f32 %v2822, %v3109
      %v3146 = vmul.f32 %v2824, %v3109
      %v3147 = vmul.f32 %v2826, %v3110
      %v3148 = vmul.f32 %v2828, %v3110
      %v3149 = vmul.f32 %v2830, %v3111
      %v3150 = vmul.f32 %v2832, %v3111
      %v3151 = vmul.f32 %v2834, %v3112
      %v3152 = vmul.f32 %v2836, %v3112
      %v3153 = vmul.f32 %v2838, %v3113
      %v3154 = vmul.f32 %v2840, %v3113
      %v3155 = vmul.f32 %v2842, %v3114
      %v3156 = vmul.f32 %v2844, %v3114
      %v3157 = vmul.f32 %v2846, %v3115
      %v3158 = vmul.f32 %v2848, %v3115
      %v3159 = vmul.f32 %v2850, %v3116
      %v3160 = vmul.f32 %v2852, %v3116
      %v3161 = vmul.f32 %v2854, %v3117
      %v3162 = vmul.f32 %v2856, %v3117
      %v3163 = vmul.f32 %v2858, %v3118
      %v3164 = vmul.f32 %v2860, %v3118
      %v3165 = vmul.f32 %v2862, %v3119
      %v3166 = vmul.f32 %v2864, %v3119
      %v3167 = vmul.f32 %v2866, %v3120
      %v3168 = vmul.f32 %v2868, %v3120
      %v3169 = vmul.f32 %v2870, %v3121
      %v3170 = vmul.f32 %v2872, %v3121
      %v3171 = vmul.f32 %v2874, %v3122
      %v3172 = vmul.f32 %v2876, %v3122
      %v3173 = vmul.f32 %v2878, %v3123
      %v3174 = vmul.f32 %v2880, %v3123
      %v3175 = vmul.f32 %v2882, %v3124
      %v3176 = vmul.f32 %v2884, %v3124
      %v3177 = vmul.f32 %v2886, %v3125
      %v3178 = vmul.f32 %v2888, %v3125
      %v3179 = vmul.f32 %v2890, %v3126
      %v3180 = vmul.f32 %v2892, %v3126
      %v3181 = vmul.f32 %v2894, %v3127
      %v3182 = vmul.f32 %v2896, %v3127
      %v3183 = vmul.f32 %v2898, %v3128
      %v3184 = vmul.f32 %v2900, %v3128
      %v3185 = vmul.f32 %v2902, %v3129
      %v3186 = vmul.f32 %v2904, %v3129
      %v3187 = vmul.f32 %v2906, %v3130
      %v3188 = vmul.f32 %v2908, %v3130
      %v3189 = vmul.f32 %v2910, %v3131
      %v3190 = vmul.f32 %v2912, %v3131
      %v3191 = vmul.f32 %v2914, %v3132
      %v3192 = vmul.f32 %v2916, %v3132
      %v3193 = vmul.f32 %v2918, %v3133
      %v3194 = vmul.f32 %v2920, %v3133
      %v3195 = vmul.f32 %v2922, %v3134
      %v3196 = vmul.f32 %v2924, %v3134
      %v3197 = vmul.f32 %v2926, %v3135
      %v3198 = vmul.f32 %v2928, %v3135
      %v3199 = vmul.f32 %v2930, %v3136
      %v3200 = vmul.f32 %v2932, %v3136
      %v3201 = vmul.f32 %v2934, %v3137
      %v3202 = vmul.f32 %v2936, %v3137
      %v3203 = vmul.f32 %v2938, %v3138
      %v3204 = vmul.f32 %v2940, %v3138
      %v3205 = vmul.f32 %v2942, %v3139
      %v3206 = vmul.f32 %v2944, %v3139
      %v3207 = vmul.f32 %v2946, %v3140
      %v3208 = vmul.f32 %v2948, %v3140
      %v3209 = vmul.f32 %v2950, %v3141
      %v3210 = vmul.f32 %v2952, %v3141
      %v3211 = vmul.f32 %v2954, %v3142
      %v3212 = vmul.f32 %v2956, %v3142
      %v3213 = vmul.f32 %v2958, %v3143
      %v3214 = vmul.f32 %v2960, %v3143
      %v3215 = vmul.f32 %v2962, %v3144
      %v3216 = vmul.f32 %v2964, %v3144
      %v3217 = vpack.c.bf16 %v3147, %v3145
      %v3218 = vpack.c.bf16 %v3148, %v3146
      %v3219 = vpack.c.bf16 %v3151, %v3149
      %v3220 = vpack.c.bf16 %v3152, %v3150
      %v3221 = vpack.c.bf16 %v3155, %v3153
      %v3222 = vpack.c.bf16 %v3156, %v3154
      %v3223 = vpack.c.bf16 %v3159, %v3157
      %v3224 = vpack.c.bf16 %v3160, %v3158
      %v3225 = vpack.c.bf16 %v3163, %v3161
      %v3226 = vpack.c.bf16 %v3164, %v3162
      %v3227 = vpack.c.bf16 %v3167, %v3165
      %v3228 = vpack.c.bf16 %v3168, %v3166
      %v3229 = vpack.c.bf16 %v3171, %v3169
      %v3230 = vpack.c.bf16 %v3172, %v3170
      %v3231 = vpack.c.bf16 %v3175, %v3173
      %v3232 = vpack.c.bf16 %v3176, %v3174
      %v3233 = vpack.c.bf16 %v3179, %v3177
      %v3234 = vpack.c.bf16 %v3180, %v3178
      %v3235 = vpack.c.bf16 %v3183, %v3181
      %v3236 = vpack.c.bf16 %v3184, %v3182
      %v3237 = vpack.c.bf16 %v3187, %v3185
      %v3238 = vpack.c.bf16 %v3188, %v3186
      %v3239 = vpack.c.bf16 %v3191, %v3189
      %v3240 = vpack.c.bf16 %v3192, %v3190
      %v3241 = vpack.c.bf16 %v3195, %v3193
      %v3242 = vpack.c.bf16 %v3196, %v3194
      %v3243 = vpack.c.bf16 %v3199, %v3197
      %v3244 = vpack.c.bf16 %v3200, %v3198
      %v3245 = vpack.c.bf16 %v3203, %v3201
      %v3246 = vpack.c.bf16 %v3204, %v3202
      %v3247 = vpack.c.bf16 %v3207, %v3205
      %v3248 = vpack.c.bf16 %v3208, %v3206
      %v3249 = vpack.c.bf16 %v3211, %v3209
      %v3250 = vpack.c.bf16 %v3212, %v3210
      %v3251 = vpack.c.bf16 %v3215, %v3213
      %v3252 = vpack.c.bf16 %v3216, %v3214
      %3253 = vrot.lane.b32.xlu0 %v766, 56
      %v3254 = vpop.permute.xlu0 %3253
      %3255 = vrot.lane.b32.xlu0 %v767, 56
      %v3256 = vpop.permute.xlu0 %3255
      %3257 = vrot.lane.b32.xlu0 %v768, 56
      %v3258 = vpop.permute.xlu0 %3257
      %3259 = vrot.lane.b32.xlu0 %v769, 56
      %v3260 = vpop.permute.xlu0 %3259
      %3261 = vrot.lane.b32.xlu0 %v770, 56
      %v3262 = vpop.permute.xlu0 %3261
      %3263 = vrot.lane.b32.xlu0 %v771, 56
      %v3264 = vpop.permute.xlu0 %3263
      %3265 = vrot.lane.b32.xlu0 %v772, 56
      %v3266 = vpop.permute.xlu0 %3265
      %3267 = vrot.lane.b32.xlu0 %v773, 56
      %v3268 = vpop.permute.xlu0 %3267
      %3269 = vrot.lane.b32.xlu0 %v774, 56
      %v3270 = vpop.permute.xlu0 %3269
      %v3281 = vsel %vm1193, %v3218, 0
      %v3284 = vsel %vm1193, %v3220, 0
      %v3287 = vsel %vm1193, %v3222, 0
      %v3290 = vsel %vm1193, %v3224, 0
      %v3293 = vsel %vm1193, %v3226, 0
      %v3296 = vsel %vm1193, %v3228, 0
      %v3299 = vsel %vm1193, %v3230, 0
      %v3302 = vsel %vm1193, %v3232, 0
      %v3305 = vsel %vm1193, %v3234, 0
      %3307 = vmatprep.subr.bf16.mxu0 0
      %3308 = vmatpush1.bf16.msra.mxu0 %v3254
      %3309 = vmatprep.subr.bf16.mxu0 0
      %3310 = vmatpush1.bf16.msra.mxu0 %v3256
      %3311 = vmatprep.subr.bf16.mxu0 0
      %3312 = vmatpush1.bf16.msra.mxu0 %v3258
      %3313 = vmatprep.subr.bf16.mxu0 0
      %3314 = vmatpush1.bf16.msra.mxu0 %v3260
      %3315 = vmatprep.subr.bf16.mxu0 0
      %3316 = vmatpush1.bf16.msra.mxu0 %v3262
      %3317 = vmatprep.subr.bf16.mxu0 0
      %3318 = vmatpush1.bf16.msra.mxu0 %v3264
      %3319 = vmatprep.subr.bf16.mxu0 0
      %3320 = vmatpush1.bf16.msra.mxu0 %v3266
      %3321 = vmatprep.subr.bf16.mxu0 0
      %3322 = vmatpush1.bf16.msra.mxu0 %v3268
      %3323 = vmatprep.subr.bf16.mxu0 0
      %3324 = vmatpush1.bf16.msra.mxu0 %v3270
      %3325 = vmatprep.subr.bf16.mxu0 0
      %3326 = vmatpush1.bf16.msra.mxu0 0
      %3327 = vmatprep.subr.bf16.mxu0 0
      %3328 = vmatpush1.bf16.msra.mxu0 0
      %3329 = vmatprep.subr.bf16.mxu0 0
      %3330 = vmatpush1.bf16.msra.mxu0 0
      %3331 = vmatprep.subr.bf16.mxu0 0
      %3332 = vmatpush1.bf16.msra.mxu0 0
      %3333 = vmatprep.subr.bf16.mxu0 0
      %3334 = vmatpush1.bf16.msra.mxu0 0
      %3335 = vmatprep.subr.bf16.mxu0 0
      %3336 = vmatpush1.bf16.msra.mxu0 0
      %3337 = vmatprep.subr.bf16.mxu0 0
      %3338 = vmatpush1.bf16.msra.mxu0 0
      %3339 = vmatprep.mubr.bf16.mxu0 %v3281
      %3340 = vmatmul.mubr.bf16.gmra.mrb[0].mxu0 %v3217
      %v3341 = vpop.f32.mrb[0].mxu0
      %v3342 = vadd.f32 0.0, %v3341
      %v3343 = vpop.f32.mrb[0].mxu0
      %v3344 = vpop.f32.mrb[0].mxu0
      %v3345 = vadd.f32 0.0, %v3344
      %v3346 = vpop.f32.mrb[0].mxu0
      %3347 = vmatprep.mubr.bf16.mxu0 %v3284
      %3348 = vmatmul.mubr.bf16.gmra.mrb[0].mxu0 %v3219
      %v3349 = vpop.f32.mrb[0].mxu0
      %v3350 = vadd.f32 0.0, %v3349
      %v3351 = vpop.f32.mrb[0].mxu0
      %v3352 = vpop.f32.mrb[0].mxu0
      %v3353 = vadd.f32 0.0, %v3352
      %v3354 = vpop.f32.mrb[0].mxu0
      %3355 = vmatprep.mubr.bf16.mxu0 %v3287
      %3356 = vmatmul.mubr.bf16.gmra.mrb[0].mxu0 %v3221
      %v3357 = vpop.f32.mrb[0].mxu0
      %v3358 = vadd.f32 0.0, %v3357
      %v3359 = vpop.f32.mrb[0].mxu0
      %v3360 = vpop.f32.mrb[0].mxu0
      %v3361 = vadd.f32 0.0, %v3360
      %v3362 = vpop.f32.mrb[0].mxu0
      %3363 = vmatprep.mubr.bf16.mxu0 %v3290
      %3364 = vmatmul.mubr.bf16.gmra.mrb[0].mxu0 %v3223
      %v3365 = vpop.f32.mrb[0].mxu0
      %v3366 = vadd.f32 0.0, %v3365
      %v3367 = vpop.f32.mrb[0].mxu0
      %v3368 = vpop.f32.mrb[0].mxu0
      %v3369 = vadd.f32 0.0, %v3368
      %v3370 = vpop.f32.mrb[0].mxu0
      %3371 = vmatprep.mubr.bf16.mxu0 %v3293
      %3372 = vmatmul.mubr.bf16.gmra.mrb[0].mxu0 %v3225
      %v3373 = vpop.f32.mrb[0].mxu0
      %v3374 = vadd.f32 0.0, %v3373
      %v3375 = vpop.f32.mrb[0].mxu0
      %v3376 = vpop.f32.mrb[0].mxu0
      %v3377 = vadd.f32 0.0, %v3376
      %v3378 = vpop.f32.mrb[0].mxu0
      %3379 = vmatprep.mubr.bf16.mxu0 %v3296
      %3380 = vmatmul.mubr.bf16.gmra.mrb[0].mxu0 %v3227
      %v3381 = vpop.f32.mrb[0].mxu0
      %v3382 = vadd.f32 0.0, %v3381
      %v3383 = vpop.f32.mrb[0].mxu0
      %v3384 = vpop.f32.mrb[0].mxu0
      %v3385 = vadd.f32 0.0, %v3384
      %v3386 = vpop.f32.mrb[0].mxu0
      %3387 = vmatprep.mubr.bf16.mxu0 %v3299
      %3388 = vmatmul.mubr.bf16.gmra.mrb[0].mxu0 %v3229
      %v3389 = vpop.f32.mrb[0].mxu0
      %v3390 = vadd.f32 0.0, %v3389
      %v3391 = vpop.f32.mrb[0].mxu0
      %v3392 = vpop.f32.mrb[0].mxu0
      %v3393 = vadd.f32 0.0, %v3392
      %v3394 = vpop.f32.mrb[0].mxu0
      %3395 = vmatprep.mubr.bf16.mxu0 %v3302
      %3396 = vmatmul.mubr.bf16.gmra.mrb[0].mxu0 %v3231
      %v3397 = vpop.f32.mrb[0].mxu0
      %v3398 = vadd.f32 0.0, %v3397
      %v3399 = vpop.f32.mrb[0].mxu0
      %v3400 = vpop.f32.mrb[0].mxu0
      %v3401 = vadd.f32 0.0, %v3400
      %v3402 = vpop.f32.mrb[0].mxu0
      %3403 = vmatprep.mubr.bf16.mxu0 %v3305
      %3404 = vmatmul.mubr.bf16.gmra.mrb[0].mxu0 %v3233
      %v3405 = vpop.f32.mrb[0].mxu0
      %v3406 = vadd.f32 0.0, %v3405
      %v3407 = vpop.f32.mrb[0].mxu0
      %v3408 = vpop.f32.mrb[0].mxu0
      %v3409 = vadd.f32 0.0, %v3408
      %v3410 = vpop.f32.mrb[0].mxu0
      %3411 = vdwg.mxu0
      %3412 = vrot.lane.b32.xlu0 %v775, 56
      %v3413 = vpop.permute.xlu0 %3412
      %3414 = vrot.lane.b32.xlu0 %v776, 56
      %v3415 = vpop.permute.xlu0 %3414
      %3416 = vrot.lane.b32.xlu0 %v777, 56
      %v3417 = vpop.permute.xlu0 %3416
      %3418 = vrot.lane.b32.xlu0 %v778, 56
      %v3419 = vpop.permute.xlu0 %3418
      %3420 = vrot.lane.b32.xlu0 %v779, 56
      %v3421 = vpop.permute.xlu0 %3420
      %3422 = vrot.lane.b32.xlu0 %v780, 56
      %v3423 = vpop.permute.xlu0 %3422
      %3424 = vrot.lane.b32.xlu0 %v781, 56
      %v3425 = vpop.permute.xlu0 %3424
      %3426 = vrot.lane.b32.xlu0 %v782, 56
      %v3427 = vpop.permute.xlu0 %3426
      %3428 = vrot.lane.b32.xlu0 %v783, 56
      %v3429 = vpop.permute.xlu0 %3428
      %v3440 = vsel %vm1193, %v3236, 0
      %v3443 = vsel %vm1193, %v3238, 0
      %v3446 = vsel %vm1193, %v3240, 0
      %v3449 = vsel %vm1193, %v3242, 0
      %v3452 = vsel %vm1193, %v3244, 0
      %v3455 = vsel %vm1193, %v3246, 0
      %v3458 = vsel %vm1193, %v3248, 0
      %v3461 = vsel %vm1193, %v3250, 0
      %v3464 = vsel %vm1193, %v3252, 0
      %3466 = vmatprep.subr.bf16.mxu0 0
      %3467 = vmatpush1.bf16.msra.mxu0 %v3413
      %3468 = vmatprep.subr.bf16.mxu0 0
      %3469 = vmatpush1.bf16.msra.mxu0 %v3415
      %3470 = vmatprep.subr.bf16.mxu0 0
      %3471 = vmatpush1.bf16.msra.mxu0 %v3417
      %3472 = vmatprep.subr.bf16.mxu0 0
      %3473 = vmatpush1.bf16.msra.mxu0 %v3419
      %3474 = vmatprep.subr.bf16.mxu0 0
      %3475 = vmatpush1.bf16.msra.mxu0 %v3421
      %3476 = vmatprep.subr.bf16.mxu0 0
      %3477 = vmatpush1.bf16.msra.mxu0 %v3423
      %3478 = vmatprep.subr.bf16.mxu0 0
      %3479 = vmatpush1.bf16.msra.mxu0 %v3425
      %3480 = vmatprep.subr.bf16.mxu0 0
      %3481 = vmatpush1.bf16.msra.mxu0 %v3427
      %3482 = vmatprep.subr.bf16.mxu0 0
      %3483 = vmatpush1.bf16.msra.mxu0 %v3429
      %3484 = vmatprep.subr.bf16.mxu0 0
      %3485 = vmatpush1.bf16.msra.mxu0 0
      %3486 = vmatprep.subr.bf16.mxu0 0
      %3487 = vmatpush1.bf16.msra.mxu0 0
      %3488 = vmatprep.subr.bf16.mxu0 0
      %3489 = vmatpush1.bf16.msra.mxu0 0
      %3490 = vmatprep.subr.bf16.mxu0 0
      %3491 = vmatpush1.bf16.msra.mxu0 0
      %3492 = vmatprep.subr.bf16.mxu0 0
      %3493 = vmatpush1.bf16.msra.mxu0 0
      %3494 = vmatprep.subr.bf16.mxu0 0
      %3495 = vmatpush1.bf16.msra.mxu0 0
      %3496 = vmatprep.subr.bf16.mxu0 0
      %3497 = vmatpush1.bf16.msra.mxu0 0
      %3498 = vmatprep.mubr.bf16.mxu0 %v3440
      %3499 = vmatmul.mubr.bf16.gmra.mrb[0].mxu0 %v3235
      %v3500 = vpop.f32.mrb[0].mxu0
      %v3501 = vadd.f32 0.0, %v3500
      %v3502 = vpop.f32.mrb[0].mxu0
      %v3503 = vpop.f32.mrb[0].mxu0
      %v3504 = vadd.f32 0.0, %v3503
      %v3505 = vpop.f32.mrb[0].mxu0
      %3506 = vmatprep.mubr.bf16.mxu0 %v3443
      %3507 = vmatmul.mubr.bf16.gmra.mrb[0].mxu0 %v3237
      %v3508 = vpop.f32.mrb[0].mxu0
      %v3509 = vadd.f32 0.0, %v3508
      %v3510 = vpop.f32.mrb[0].mxu0
      %v3511 = vpop.f32.mrb[0].mxu0
      %v3512 = vadd.f32 0.0, %v3511
      %v3513 = vpop.f32.mrb[0].mxu0
      %3514 = vmatprep.mubr.bf16.mxu0 %v3446
      %3515 = vmatmul.mubr.bf16.gmra.mrb[0].mxu0 %v3239
      %v3516 = vpop.f32.mrb[0].mxu0
      %v3517 = vadd.f32 0.0, %v3516
      %v3518 = vpop.f32.mrb[0].mxu0
      %v3519 = vpop.f32.mrb[0].mxu0
      %v3520 = vadd.f32 0.0, %v3519
      %v3521 = vpop.f32.mrb[0].mxu0
      %3522 = vmatprep.mubr.bf16.mxu0 %v3449
      %3523 = vmatmul.mubr.bf16.gmra.mrb[0].mxu0 %v3241
      %v3524 = vpop.f32.mrb[0].mxu0
      %v3525 = vadd.f32 0.0, %v3524
      %v3526 = vpop.f32.mrb[0].mxu0
      %v3527 = vpop.f32.mrb[0].mxu0
      %v3528 = vadd.f32 0.0, %v3527
      %v3529 = vpop.f32.mrb[0].mxu0
      %3530 = vmatprep.mubr.bf16.mxu0 %v3452
      %3531 = vmatmul.mubr.bf16.gmra.mrb[0].mxu0 %v3243
      %v3532 = vpop.f32.mrb[0].mxu0
      %v3533 = vadd.f32 0.0, %v3532
      %v3534 = vpop.f32.mrb[0].mxu0
      %v3535 = vpop.f32.mrb[0].mxu0
      %v3536 = vadd.f32 0.0, %v3535
      %v3537 = vpop.f32.mrb[0].mxu0
      %3538 = vmatprep.mubr.bf16.mxu0 %v3455
      %3539 = vmatmul.mubr.bf16.gmra.mrb[0].mxu0 %v3245
      %v3540 = vpop.f32.mrb[0].mxu0
      %v3541 = vadd.f32 0.0, %v3540
      %v3542 = vpop.f32.mrb[0].mxu0
      %v3543 = vpop.f32.mrb[0].mxu0
      %v3544 = vadd.f32 0.0, %v3543
      %v3545 = vpop.f32.mrb[0].mxu0
      %3546 = vmatprep.mubr.bf16.mxu0 %v3458
      %3547 = vmatmul.mubr.bf16.gmra.mrb[0].mxu0 %v3247
      %v3548 = vpop.f32.mrb[0].mxu0
      %v3549 = vadd.f32 0.0, %v3548
      %v3550 = vpop.f32.mrb[0].mxu0
      %v3551 = vpop.f32.mrb[0].mxu0
      %v3552 = vadd.f32 0.0, %v3551
      %v3553 = vpop.f32.mrb[0].mxu0
      %3554 = vmatprep.mubr.bf16.mxu0 %v3461
      %3555 = vmatmul.mubr.bf16.gmra.mrb[0].mxu0 %v3249
      %v3556 = vpop.f32.mrb[0].mxu0
      %v3557 = vadd.f32 0.0, %v3556
      %v3558 = vpop.f32.mrb[0].mxu0
      %v3559 = vpop.f32.mrb[0].mxu0
      %v3560 = vadd.f32 0.0, %v3559
      %v3561 = vpop.f32.mrb[0].mxu0
      %3562 = vmatprep.mubr.bf16.mxu0 %v3464
      %3563 = vmatmul.mubr.bf16.gmra.mrb[0].mxu0 %v3251
      %v3564 = vpop.f32.mrb[0].mxu0
      %v3565 = vadd.f32 0.0, %v3564
      %v3566 = vpop.f32.mrb[0].mxu0
      %v3567 = vpop.f32.mrb[0].mxu0
      %v3568 = vadd.f32 0.0, %v3567
      %v3569 = vpop.f32.mrb[0].mxu0
      %3570 = vdwg.mxu0
      %v3571 = vpack.c.bf16 %v3345, %v3342
      %v3572 = vpack.c.bf16 %v3353, %v3350
      %v3573 = vpack.c.bf16 %v3361, %v3358
      %v3574 = vpack.c.bf16 %v3369, %v3366
      %v3575 = vpack.c.bf16 %v3377, %v3374
      %v3576 = vpack.c.bf16 %v3385, %v3382
      %v3577 = vpack.c.bf16 %v3393, %v3390
      %v3578 = vpack.c.bf16 %v3401, %v3398
      %v3579 = vpack.c.bf16 %v3409, %v3406
      %v3580 = vpack.c.bf16 %v3504, %v3501
      %v3581 = vpack.c.bf16 %v3512, %v3509
      %v3582 = vpack.c.bf16 %v3520, %v3517
      %v3583 = vpack.c.bf16 %v3528, %v3525
      %v3584 = vpack.c.bf16 %v3536, %v3533
      %v3585 = vpack.c.bf16 %v3544, %v3541
      %v3586 = vpack.c.bf16 %v3552, %v3549
      %v3587 = vpack.c.bf16 %v3560, %v3557
      %v3588 = vpack.c.bf16 %v3568, %v3565
      %v3589 = vpack.c.bf16 %v763, %v763
      %v3591 = vsel %vm811, %v3571, 0
      %v3594 = vsel %vm811, %v3572, 0
      %v3597 = vsel %vm811, %v3573, 0
      %v3600 = vsel %vm811, %v3574, 0
      %v3603 = vsel %vm811, %v3575, 0
      %v3606 = vsel %vm811, %v3576, 0
      %v3609 = vsel %vm811, %v3577, 0
      %v3612 = vsel %vm811, %v3578, 0
      %v3615 = vsel %vm811, %v3579, 0
      %v3618 = vsel %vm811, %v3580, 0
      %v3621 = vsel %vm811, %v3581, 0
      %v3624 = vsel %vm811, %v3582, 0
      %v3627 = vsel %vm811, %v3583, 0
      %v3630 = vsel %vm811, %v3584, 0
      %v3633 = vsel %vm811, %v3585, 0
      %v3636 = vsel %vm811, %v3586, 0
      %v3639 = vsel %vm811, %v3587, 0
      %v3642 = vsel %vm811, %v3588, 0
      %vm3644 = vcmask 1043456
      %v3646 = vsel %vm3644, %v3589, 0
      %3648 = vmatprep.subr.bf16.mxu0 0
      %3649 = vmatpush1.bf16.msra.mxu0 %v3646
      %3650 = vmatprep.subr.bf16.mxu0 0
      %3651 = vmatpush1.bf16.msra.mxu0 0
      %3652 = vmatprep.subr.bf16.mxu0 0
      %3653 = vmatpush1.bf16.msra.mxu0 0
      %3654 = vmatprep.subr.bf16.mxu0 0
      %3655 = vmatpush1.bf16.msra.mxu0 0
      %3656 = vmatprep.subr.bf16.mxu0 0
      %3657 = vmatpush1.bf16.msra.mxu0 0
      %3658 = vmatprep.subr.bf16.mxu0 0
      %3659 = vmatpush1.bf16.msra.mxu0 0
      %3660 = vmatprep.subr.bf16.mxu0 0
      %3661 = vmatpush1.bf16.msra.mxu0 0
      %3662 = vmatprep.subr.bf16.mxu0 0
      %3663 = vmatpush1.bf16.msra.mxu0 0
      %3664 = vmatprep.subr.bf16.mxu0 0
      %3665 = vmatpush1.bf16.msra.mxu0 0
      %3666 = vmatprep.subr.bf16.mxu0 0
      %3667 = vmatpush1.bf16.msra.mxu0 0
      %3668 = vmatprep.subr.bf16.mxu0 0
      %3669 = vmatpush1.bf16.msra.mxu0 0
      %3670 = vmatprep.subr.bf16.mxu0 0
      %3671 = vmatpush1.bf16.msra.mxu0 0
      %3672 = vmatprep.subr.bf16.mxu0 0
      %3673 = vmatpush1.bf16.msra.mxu0 0
      %3674 = vmatprep.subr.bf16.mxu0 0
      %3675 = vmatpush1.bf16.msra.mxu0 0
      %3676 = vmatprep.subr.bf16.mxu0 0
      %3677 = vmatpush1.bf16.msra.mxu0 0
      %3678 = vmatprep.subr.bf16.mxu0 0
      %3679 = vmatpush1.bf16.msra.mxu0 0
      %3680 = vmatprep.mubr.bf16.mxu0 0
      %3681 = vmatmul.mubr.bf16.gmra.mrb[0].mxu0 %v3591
      %v3682 = vpop.f32.mrb[0].mxu0
      %v3683 = vadd.f32 0.0, %v3682
      %v3684 = vpop.f32.mrb[0].mxu0
      %v3685 = vpop.f32.mrb[0].mxu0
      %v3686 = vadd.f32 0.0, %v3685
      %v3687 = vpop.f32.mrb[0].mxu0
      %3688 = vmatprep.mubr.bf16.mxu0 0
      %3689 = vmatmul.mubr.bf16.gmra.mrb[0].mxu0 %v3594
      %v3690 = vpop.f32.mrb[0].mxu0
      %v3691 = vadd.f32 0.0, %v3690
      %v3692 = vpop.f32.mrb[0].mxu0
      %v3693 = vpop.f32.mrb[0].mxu0
      %v3694 = vadd.f32 0.0, %v3693
      %v3695 = vpop.f32.mrb[0].mxu0
      %3696 = vmatprep.mubr.bf16.mxu0 0
      %3697 = vmatmul.mubr.bf16.gmra.mrb[0].mxu0 %v3597
      %v3698 = vpop.f32.mrb[0].mxu0
      %v3699 = vadd.f32 0.0, %v3698
      %v3700 = vpop.f32.mrb[0].mxu0
      %v3701 = vpop.f32.mrb[0].mxu0
      %v3702 = vadd.f32 0.0, %v3701
      %v3703 = vpop.f32.mrb[0].mxu0
      %3704 = vmatprep.mubr.bf16.mxu0 0
      %3705 = vmatmul.mubr.bf16.gmra.mrb[0].mxu0 %v3600
      %v3706 = vpop.f32.mrb[0].mxu0
      %v3707 = vadd.f32 0.0, %v3706
      %v3708 = vpop.f32.mrb[0].mxu0
      %v3709 = vpop.f32.mrb[0].mxu0
      %v3710 = vadd.f32 0.0, %v3709
      %v3711 = vpop.f32.mrb[0].mxu0
      %3712 = vmatprep.mubr.bf16.mxu0 0
      %3713 = vmatmul.mubr.bf16.gmra.mrb[0].mxu0 %v3603
      %v3714 = vpop.f32.mrb[0].mxu0
      %v3715 = vadd.f32 0.0, %v3714
      %v3716 = vpop.f32.mrb[0].mxu0
      %v3717 = vpop.f32.mrb[0].mxu0
      %v3718 = vadd.f32 0.0, %v3717
      %v3719 = vpop.f32.mrb[0].mxu0
      %3720 = vmatprep.mubr.bf16.mxu0 0
      %3721 = vmatmul.mubr.bf16.gmra.mrb[0].mxu0 %v3606
      %v3722 = vpop.f32.mrb[0].mxu0
      %v3723 = vadd.f32 0.0, %v3722
      %v3724 = vpop.f32.mrb[0].mxu0
      %v3725 = vpop.f32.mrb[0].mxu0
      %v3726 = vadd.f32 0.0, %v3725
      %v3727 = vpop.f32.mrb[0].mxu0
      %3728 = vmatprep.mubr.bf16.mxu0 0
      %3729 = vmatmul.mubr.bf16.gmra.mrb[0].mxu0 %v3609
      %v3730 = vpop.f32.mrb[0].mxu0
      %v3731 = vadd.f32 0.0, %v3730
      %v3732 = vpop.f32.mrb[0].mxu0
      %v3733 = vpop.f32.mrb[0].mxu0
      %v3734 = vadd.f32 0.0, %v3733
      %v3735 = vpop.f32.mrb[0].mxu0
      %3736 = vmatprep.mubr.bf16.mxu0 0
      %3737 = vmatmul.mubr.bf16.gmra.mrb[0].mxu0 %v3612
      %v3738 = vpop.f32.mrb[0].mxu0
      %v3739 = vadd.f32 0.0, %v3738
      %v3740 = vpop.f32.mrb[0].mxu0
      %v3741 = vpop.f32.mrb[0].mxu0
      %v3742 = vadd.f32 0.0, %v3741
      %v3743 = vpop.f32.mrb[0].mxu0
      %3744 = vmatprep.mubr.bf16.mxu0 0
      %3745 = vmatmul.mubr.bf16.gmra.mrb[0].mxu0 %v3615
      %v3746 = vpop.f32.mrb[0].mxu0
      %v3747 = vadd.f32 0.0, %v3746
      %v3748 = vpop.f32.mrb[0].mxu0
      %v3749 = vpop.f32.mrb[0].mxu0
      %v3750 = vadd.f32 0.0, %v3749
      %v3751 = vpop.f32.mrb[0].mxu0
      %3752 = vmatprep.mubr.bf16.mxu0 0
      %3753 = vmatmul.mubr.bf16.gmra.mrb[0].mxu0 %v3618
      %v3754 = vpop.f32.mrb[0].mxu0
      %v3755 = vadd.f32 0.0, %v3754
      %v3756 = vpop.f32.mrb[0].mxu0
      %v3757 = vpop.f32.mrb[0].mxu0
      %v3758 = vadd.f32 0.0, %v3757
      %v3759 = vpop.f32.mrb[0].mxu0
      %3760 = vmatprep.mubr.bf16.mxu0 0
      %3761 = vmatmul.mubr.bf16.gmra.mrb[0].mxu0 %v3621
      %v3762 = vpop.f32.mrb[0].mxu0
      %v3763 = vadd.f32 0.0, %v3762
      %v3764 = vpop.f32.mrb[0].mxu0
      %v3765 = vpop.f32.mrb[0].mxu0
      %v3766 = vadd.f32 0.0, %v3765
      %v3767 = vpop.f32.mrb[0].mxu0
      %3768 = vmatprep.mubr.bf16.mxu0 0
      %3769 = vmatmul.mubr.bf16.gmra.mrb[0].mxu0 %v3624
      %v3770 = vpop.f32.mrb[0].mxu0
      %v3771 = vadd.f32 0.0, %v3770
      %v3772 = vpop.f32.mrb[0].mxu0
      %v3773 = vpop.f32.mrb[0].mxu0
      %v3774 = vadd.f32 0.0, %v3773
      %v3775 = vpop.f32.mrb[0].mxu0
      %3776 = vmatprep.mubr.bf16.mxu0 0
      %3777 = vmatmul.mubr.bf16.gmra.mrb[0].mxu0 %v3627
      %v3778 = vpop.f32.mrb[0].mxu0
      %v3779 = vadd.f32 0.0, %v3778
      %v3780 = vpop.f32.mrb[0].mxu0
      %v3781 = vpop.f32.mrb[0].mxu0
      %v3782 = vadd.f32 0.0, %v3781
      %v3783 = vpop.f32.mrb[0].mxu0
      %3784 = vmatprep.mubr.bf16.mxu0 0
      %3785 = vmatmul.mubr.bf16.gmra.mrb[0].mxu0 %v3630
      %v3786 = vpop.f32.mrb[0].mxu0
      %v3787 = vadd.f32 0.0, %v3786
      %v3788 = vpop.f32.mrb[0].mxu0
      %v3789 = vpop.f32.mrb[0].mxu0
      %v3790 = vadd.f32 0.0, %v3789
      %v3791 = vpop.f32.mrb[0].mxu0
      %3792 = vmatprep.mubr.bf16.mxu0 0
      %3793 = vmatmul.mubr.bf16.gmra.mrb[0].mxu0 %v3633
      %v3794 = vpop.f32.mrb[0].mxu0
      %v3795 = vadd.f32 0.0, %v3794
      %v3796 = vpop.f32.mrb[0].mxu0
      %v3797 = vpop.f32.mrb[0].mxu0
      %v3798 = vadd.f32 0.0, %v3797
      %v3799 = vpop.f32.mrb[0].mxu0
      %3800 = vmatprep.mubr.bf16.mxu0 0
      %3801 = vmatmul.mubr.bf16.gmra.mrb[0].mxu0 %v3636
      %v3802 = vpop.f32.mrb[0].mxu0
      %v3803 = vadd.f32 0.0, %v3802
      %v3804 = vpop.f32.mrb[0].mxu0
      %v3805 = vpop.f32.mrb[0].mxu0
      %v3806 = vadd.f32 0.0, %v3805
      %v3807 = vpop.f32.mrb[0].mxu0
      %3808 = vmatprep.mubr.bf16.mxu0 0
      %3809 = vmatmul.mubr.bf16.gmra.mrb[0].mxu0 %v3639
      %v3810 = vpop.f32.mrb[0].mxu0
      %v3811 = vadd.f32 0.0, %v3810
      %v3812 = vpop.f32.mrb[0].mxu0
      %v3813 = vpop.f32.mrb[0].mxu0
      %v3814 = vadd.f32 0.0, %v3813
      %v3815 = vpop.f32.mrb[0].mxu0
      %3816 = vmatprep.mubr.bf16.mxu0 0
      %3817 = vmatmul.mubr.bf16.gmra.mrb[0].mxu0 %v3642
      %v3818 = vpop.f32.mrb[0].mxu0
      %v3819 = vadd.f32 0.0, %v3818
      %v3820 = vpop.f32.mrb[0].mxu0
      %v3821 = vpop.f32.mrb[0].mxu0
      %v3822 = vadd.f32 0.0, %v3821
      %v3823 = vpop.f32.mrb[0].mxu0
      %3824 = vdwg.mxu0
      %v3826 = vsel %vm811, %v2160, 0
      %v3829 = vsel %vm811, %v2161, 0
      %v3832 = vsel %vm811, %v2162, 0
      %v3835 = vsel %vm811, %v2163, 0
      %v3838 = vsel %vm811, %v2164, 0
      %v3841 = vsel %vm811, %v2165, 0
      %v3844 = vsel %vm811, %v2166, 0
      %v3847 = vsel %vm811, %v2167, 0
      %v3850 = vsel %vm811, %v2168, 0
      %v3853 = vsel %vm811, %v2169, 0
      %v3856 = vsel %vm811, %v2170, 0
      %v3859 = vsel %vm811, %v2171, 0
      %v3862 = vsel %vm811, %v2172, 0
      %v3865 = vsel %vm811, %v2173, 0
      %v3868 = vsel %vm811, %v2174, 0
      %v3871 = vsel %vm811, %v2175, 0
      %v3874 = vsel %vm811, %v2176, 0
      %v3877 = vsel %vm811, %v2177, 0
      %v3880 = vsel %vm3644, %v2178, 0
      %3882 = vmatprep.subr.bf16.mxu0 0
      %3883 = vmatpush1.bf16.msra.mxu0 %v3880
      %3884 = vmatprep.subr.bf16.mxu0 0
      %3885 = vmatpush1.bf16.msra.mxu0 0
      %3886 = vmatprep.subr.bf16.mxu0 0
      %3887 = vmatpush1.bf16.msra.mxu0 0
      %3888 = vmatprep.subr.bf16.mxu0 0
      %3889 = vmatpush1.bf16.msra.mxu0 0
      %3890 = vmatprep.subr.bf16.mxu0 0
      %3891 = vmatpush1.bf16.msra.mxu0 0
      %3892 = vmatprep.subr.bf16.mxu0 0
      %3893 = vmatpush1.bf16.msra.mxu0 0
      %3894 = vmatprep.subr.bf16.mxu0 0
      %3895 = vmatpush1.bf16.msra.mxu0 0
      %3896 = vmatprep.subr.bf16.mxu0 0
      %3897 = vmatpush1.bf16.msra.mxu0 0
      %3898 = vmatprep.subr.bf16.mxu0 0
      %3899 = vmatpush1.bf16.msra.mxu0 0
      %3900 = vmatprep.subr.bf16.mxu0 0
      %3901 = vmatpush1.bf16.msra.mxu0 0
      %3902 = vmatprep.subr.bf16.mxu0 0
      %3903 = vmatpush1.bf16.msra.mxu0 0
      %3904 = vmatprep.subr.bf16.mxu0 0
      %3905 = vmatpush1.bf16.msra.mxu0 0
      %3906 = vmatprep.subr.bf16.mxu0 0
      %3907 = vmatpush1.bf16.msra.mxu0 0
      %3908 = vmatprep.subr.bf16.mxu0 0
      %3909 = vmatpush1.bf16.msra.mxu0 0
      %3910 = vmatprep.subr.bf16.mxu0 0
      %3911 = vmatpush1.bf16.msra.mxu0 0
      %3912 = vmatprep.subr.bf16.mxu0 0
      %3913 = vmatpush1.bf16.msra.mxu0 0
      %3914 = vmatprep.mubr.bf16.mxu0 0
      %3915 = vmatmul.mubr.bf16.gmra.mrb[0].mxu0 %v3826
      %v3916 = vpop.f32.mrb[0].mxu0
      %v3917 = vadd.f32 %v3683, %v3916
      %v3918 = vpop.f32.mrb[0].mxu0
      %v3919 = vpop.f32.mrb[0].mxu0
      %v3920 = vadd.f32 %v3686, %v3919
      %v3921 = vpop.f32.mrb[0].mxu0
      %3922 = vmatprep.mubr.bf16.mxu0 0
      %3923 = vmatmul.mubr.bf16.gmra.mrb[0].mxu0 %v3829
      %v3924 = vpop.f32.mrb[0].mxu0
      %v3925 = vadd.f32 %v3691, %v3924
      %v3926 = vpop.f32.mrb[0].mxu0
      %v3927 = vpop.f32.mrb[0].mxu0
      %v3928 = vadd.f32 %v3694, %v3927
      %v3929 = vpop.f32.mrb[0].mxu0
      %3930 = vmatprep.mubr.bf16.mxu0 0
      %3931 = vmatmul.mubr.bf16.gmra.mrb[0].mxu0 %v3832
      %v3932 = vpop.f32.mrb[0].mxu0
      %v3933 = vadd.f32 %v3699, %v3932
      %v3934 = vpop.f32.mrb[0].mxu0
      %v3935 = vpop.f32.mrb[0].mxu0
      %v3936 = vadd.f32 %v3702, %v3935
      %v3937 = vpop.f32.mrb[0].mxu0
      %3938 = vmatprep.mubr.bf16.mxu0 0
      %3939 = vmatmul.mubr.bf16.gmra.mrb[0].mxu0 %v3835
      %v3940 = vpop.f32.mrb[0].mxu0
      %v3941 = vadd.f32 %v3707, %v3940
      %v3942 = vpop.f32.mrb[0].mxu0
      %v3943 = vpop.f32.mrb[0].mxu0
      %v3944 = vadd.f32 %v3710, %v3943
      %v3945 = vpop.f32.mrb[0].mxu0
      %3946 = vmatprep.mubr.bf16.mxu0 0
      %3947 = vmatmul.mubr.bf16.gmra.mrb[0].mxu0 %v3838
      %v3948 = vpop.f32.mrb[0].mxu0
      %v3949 = vadd.f32 %v3715, %v3948
      %v3950 = vpop.f32.mrb[0].mxu0
      %v3951 = vpop.f32.mrb[0].mxu0
      %v3952 = vadd.f32 %v3718, %v3951
      %v3953 = vpop.f32.mrb[0].mxu0
      %3954 = vmatprep.mubr.bf16.mxu0 0
      %3955 = vmatmul.mubr.bf16.gmra.mrb[0].mxu0 %v3841
      %v3956 = vpop.f32.mrb[0].mxu0
      %v3957 = vadd.f32 %v3723, %v3956
      %v3958 = vpop.f32.mrb[0].mxu0
      %v3959 = vpop.f32.mrb[0].mxu0
      %v3960 = vadd.f32 %v3726, %v3959
      %v3961 = vpop.f32.mrb[0].mxu0
      %3962 = vmatprep.mubr.bf16.mxu0 0
      %3963 = vmatmul.mubr.bf16.gmra.mrb[0].mxu0 %v3844
      %v3964 = vpop.f32.mrb[0].mxu0
      %v3965 = vadd.f32 %v3731, %v3964
      %v3966 = vpop.f32.mrb[0].mxu0
      %v3967 = vpop.f32.mrb[0].mxu0
      %v3968 = vadd.f32 %v3734, %v3967
      %v3969 = vpop.f32.mrb[0].mxu0
      %3970 = vmatprep.mubr.bf16.mxu0 0
      %3971 = vmatmul.mubr.bf16.gmra.mrb[0].mxu0 %v3847
      %v3972 = vpop.f32.mrb[0].mxu0
      %v3973 = vadd.f32 %v3739, %v3972
      %v3974 = vpop.f32.mrb[0].mxu0
      %v3975 = vpop.f32.mrb[0].mxu0
      %v3976 = vadd.f32 %v3742, %v3975
      %v3977 = vpop.f32.mrb[0].mxu0
      %3978 = vmatprep.mubr.bf16.mxu0 0
      %3979 = vmatmul.mubr.bf16.gmra.mrb[0].mxu0 %v3850
      %v3980 = vpop.f32.mrb[0].mxu0
      %v3981 = vadd.f32 %v3747, %v3980
      %v3982 = vpop.f32.mrb[0].mxu0
      %v3983 = vpop.f32.mrb[0].mxu0
      %v3984 = vadd.f32 %v3750, %v3983
      %v3985 = vpop.f32.mrb[0].mxu0
      %3986 = vmatprep.mubr.bf16.mxu0 0
      %3987 = vmatmul.mubr.bf16.gmra.mrb[0].mxu0 %v3853
      %v3988 = vpop.f32.mrb[0].mxu0
      %v3989 = vadd.f32 %v3755, %v3988
      %v3990 = vpop.f32.mrb[0].mxu0
      %v3991 = vpop.f32.mrb[0].mxu0
      %v3992 = vadd.f32 %v3758, %v3991
      %v3993 = vpop.f32.mrb[0].mxu0
      %3994 = vmatprep.mubr.bf16.mxu0 0
      %3995 = vmatmul.mubr.bf16.gmra.mrb[0].mxu0 %v3856
      %v3996 = vpop.f32.mrb[0].mxu0
      %v3997 = vadd.f32 %v3763, %v3996
      %v3998 = vpop.f32.mrb[0].mxu0
      %v3999 = vpop.f32.mrb[0].mxu0
      %v4000 = vadd.f32 %v3766, %v3999
      %v4001 = vpop.f32.mrb[0].mxu0
      %4002 = vmatprep.mubr.bf16.mxu0 0
      %4003 = vmatmul.mubr.bf16.gmra.mrb[0].mxu0 %v3859
      %v4004 = vpop.f32.mrb[0].mxu0
      %v4005 = vadd.f32 %v3771, %v4004
      %v4006 = vpop.f32.mrb[0].mxu0
      %v4007 = vpop.f32.mrb[0].mxu0
      %v4008 = vadd.f32 %v3774, %v4007
      %v4009 = vpop.f32.mrb[0].mxu0
      %4010 = vmatprep.mubr.bf16.mxu0 0
      %4011 = vmatmul.mubr.bf16.gmra.mrb[0].mxu0 %v3862
      %v4012 = vpop.f32.mrb[0].mxu0
      %v4013 = vadd.f32 %v3779, %v4012
      %v4014 = vpop.f32.mrb[0].mxu0
      %v4015 = vpop.f32.mrb[0].mxu0
      %v4016 = vadd.f32 %v3782, %v4015
      %v4017 = vpop.f32.mrb[0].mxu0
      %4018 = vmatprep.mubr.bf16.mxu0 0
      %4019 = vmatmul.mubr.bf16.gmra.mrb[0].mxu0 %v3865
      %v4020 = vpop.f32.mrb[0].mxu0
      %v4021 = vadd.f32 %v3787, %v4020
      %v4022 = vpop.f32.mrb[0].mxu0
      %v4023 = vpop.f32.mrb[0].mxu0
      %v4024 = vadd.f32 %v3790, %v4023
      %v4025 = vpop.f32.mrb[0].mxu0
      %4026 = vmatprep.mubr.bf16.mxu0 0
      %4027 = vmatmul.mubr.bf16.gmra.mrb[0].mxu0 %v3868
      %v4028 = vpop.f32.mrb[0].mxu0
      %v4029 = vadd.f32 %v3795, %v4028
      %v4030 = vpop.f32.mrb[0].mxu0
      %v4031 = vpop.f32.mrb[0].mxu0
      %v4032 = vadd.f32 %v3798, %v4031
      %v4033 = vpop.f32.mrb[0].mxu0
      %4034 = vmatprep.mubr.bf16.mxu0 0
      %4035 = vmatmul.mubr.bf16.gmra.mrb[0].mxu0 %v3871
      %v4036 = vpop.f32.mrb[0].mxu0
      %v4037 = vadd.f32 %v3803, %v4036
      %v4038 = vpop.f32.mrb[0].mxu0
      %v4039 = vpop.f32.mrb[0].mxu0
      %v4040 = vadd.f32 %v3806, %v4039
      %v4041 = vpop.f32.mrb[0].mxu0
      %4042 = vmatprep.mubr.bf16.mxu0 0
      %4043 = vmatmul.mubr.bf16.gmra.mrb[0].mxu0 %v3874
      %v4044 = vpop.f32.mrb[0].mxu0
      %v4045 = vadd.f32 %v3811, %v4044
      %v4046 = vpop.f32.mrb[0].mxu0
      %v4047 = vpop.f32.mrb[0].mxu0
      %v4048 = vadd.f32 %v3814, %v4047
      %v4049 = vpop.f32.mrb[0].mxu0
      %4050 = vmatprep.mubr.bf16.mxu0 0
      %4051 = vmatmul.mubr.bf16.gmra.mrb[0].mxu0 %v3877
      %v4052 = vpop.f32.mrb[0].mxu0
      %v4053 = vadd.f32 %v3819, %v4052
      %v4054 = vpop.f32.mrb[0].mxu0
      %v4055 = vpop.f32.mrb[0].mxu0
      %v4056 = vadd.f32 %v3822, %v4055
      %v4057 = vpop.f32.mrb[0].mxu0
      %4058 = vdwg.mxu0
      %4059 = vrot.lane.b32.xlu0 %v766, 112
      %v4060 = vpop.permute.xlu0 %4059
      %4061 = vrot.lane.b32.xlu0 %v767, 112
      %v4062 = vpop.permute.xlu0 %4061
      %4063 = vrot.lane.b32.xlu0 %v768, 112
      %v4064 = vpop.permute.xlu0 %4063
      %4065 = vrot.lane.b32.xlu0 %v769, 112
      %v4066 = vpop.permute.xlu0 %4065
      %4067 = vrot.lane.b32.xlu0 %v770, 112
      %v4068 = vpop.permute.xlu0 %4067
      %4069 = vrot.lane.b32.xlu0 %v771, 112
      %v4070 = vpop.permute.xlu0 %4069
      %4071 = vrot.lane.b32.xlu0 %v772, 112
      %v4072 = vpop.permute.xlu0 %4071
      %4073 = vrot.lane.b32.xlu0 %v773, 112
      %v4074 = vpop.permute.xlu0 %4073
      %4075 = vrot.lane.b32.xlu0 %v774, 112
      %v4076 = vpop.permute.xlu0 %4075
      %4077 = vrot.lane.b32.xlu0 %v766, 80
      %v4078 = vpop.permute.xlu0 %4077
      %4079 = vrot.lane.b32.xlu0 %v767, 80
      %v4080 = vpop.permute.xlu0 %4079
      %4081 = vrot.lane.b32.xlu0 %v768, 80
      %v4082 = vpop.permute.xlu0 %4081
      %4083 = vrot.lane.b32.xlu0 %v769, 80
      %v4084 = vpop.permute.xlu0 %4083
      %4085 = vrot.lane.b32.xlu0 %v770, 80
      %v4086 = vpop.permute.xlu0 %4085
      %4087 = vrot.lane.b32.xlu0 %v771, 80
      %v4088 = vpop.permute.xlu0 %4087
      %4089 = vrot.lane.b32.xlu0 %v772, 80
      %v4090 = vpop.permute.xlu0 %4089
      %4091 = vrot.lane.b32.xlu0 %v773, 80
      %v4092 = vpop.permute.xlu0 %4091
      %4093 = vrot.lane.b32.xlu0 %v774, 80
      %v4094 = vpop.permute.xlu0 %4093
      %v4096 = vsel %vm811, %v4060, 0
      %v4099 = vsel %vm811, %v4062, 0
      %v4102 = vsel %vm811, %v4064, 0
      %v4105 = vsel %vm811, %v4066, 0
      %v4108 = vsel %vm811, %v4068, 0
      %v4111 = vsel %vm811, %v4070, 0
      %v4114 = vsel %vm811, %v4072, 0
      %v4117 = vsel %vm811, %v4074, 0
      %v4120 = vsel %vm811, %v4076, 0
      %v4123 = vsel %vm811, %v4078, 0
      %v4126 = vsel %vm811, %v4080, 0
      %v4129 = vsel %vm811, %v4082, 0
      %v4132 = vsel %vm811, %v4084, 0
      %v4135 = vsel %vm811, %v4086, 0
      %v4138 = vsel %vm811, %v4088, 0
      %v4141 = vsel %vm811, %v4090, 0
      %v4144 = vsel %vm811, %v4092, 0
      %v4147 = vsel %vm811, %v4094, 0
      %4149 = vmatprep.subr.bf16.mxu0 0
      %4150 = vmatpush1.bf16.xpose.msra.mxu0 %v4123
      %4151 = vmatprep.subr.bf16.mxu0 0
      %4152 = vmatpush1.bf16.xpose.msra.mxu0 %v4126
      %4153 = vmatprep.subr.bf16.mxu0 0
      %4154 = vmatpush1.bf16.xpose.msra.mxu0 %v4129
      %4155 = vmatprep.subr.bf16.mxu0 0
      %4156 = vmatpush1.bf16.xpose.msra.mxu0 %v4132
      %4157 = vmatprep.subr.bf16.mxu0 0
      %4158 = vmatpush1.bf16.xpose.msra.mxu0 %v4135
      %4159 = vmatprep.subr.bf16.mxu0 0
      %4160 = vmatpush1.bf16.xpose.msra.mxu0 %v4138
      %4161 = vmatprep.subr.bf16.mxu0 0
      %4162 = vmatpush1.bf16.xpose.msra.mxu0 %v4141
      %4163 = vmatprep.subr.bf16.mxu0 0
      %4164 = vmatpush1.bf16.xpose.msra.mxu0 %v4144
      %4165 = vmatprep.subr.bf16.mxu0 0
      %4166 = vmatpush1.bf16.xpose.msra.mxu0 %v4147
      %4167 = vmatprep.subr.bf16.mxu0 0
      %4168 = vmatpush1.bf16.xpose.msra.mxu0 0
      %4169 = vmatprep.subr.bf16.mxu0 0
      %4170 = vmatpush1.bf16.xpose.msra.mxu0 0
      %4171 = vmatprep.subr.bf16.mxu0 0
      %4172 = vmatpush1.bf16.xpose.msra.mxu0 0
      %4173 = vmatprep.subr.bf16.mxu0 0
      %4174 = vmatpush1.bf16.xpose.msra.mxu0 0
      %4175 = vmatprep.subr.bf16.mxu0 0
      %4176 = vmatpush1.bf16.xpose.msra.mxu0 0
      %4177 = vmatprep.subr.bf16.mxu0 0
      %4178 = vmatpush1.bf16.xpose.msra.mxu0 0
      %4179 = vmatprep.subr.bf16.mxu0 0
      %4180 = vmatpush1.bf16.xpose.msra.mxu0 0
      %4181 = vmatprep.mubr.bf16.mxu0 0
      %4182 = vmatmul.mubr.bf16.gmra.mrb[0].mxu0 %v4096
      %v4183 = vpop.f32.mrb[0].mxu0
      %v4184 = vadd.f32 %v690, %v4183
      %v4185 = vpop.f32.mrb[0].mxu0
      %v4186 = vadd.f32 %v691, %v4185
      %v4187 = vpop.f32.mrb[0].mxu0
      %v4188 = vadd.f32 %v692, %v4187
      %v4189 = vpop.f32.mrb[0].mxu0
      %v4190 = vadd.f32 %v693, %v4189
      %4191 = vmatprep.mubr.bf16.mxu0 0
      %4192 = vmatmul.mubr.bf16.gmra.mrb[0].mxu0 %v4099
      %v4193 = vpop.f32.mrb[0].mxu0
      %v4194 = vadd.f32 %v694, %v4193
      %v4195 = vpop.f32.mrb[0].mxu0
      %v4196 = vadd.f32 %v695, %v4195
      %v4197 = vpop.f32.mrb[0].mxu0
      %v4198 = vadd.f32 %v696, %v4197
      %v4199 = vpop.f32.mrb[0].mxu0
      %v4200 = vadd.f32 %v697, %v4199
      %4201 = vmatprep.mubr.bf16.mxu0 0
      %4202 = vmatmul.mubr.bf16.gmra.mrb[0].mxu0 %v4102
      %v4203 = vpop.f32.mrb[0].mxu0
      %v4204 = vadd.f32 %v698, %v4203
      %v4205 = vpop.f32.mrb[0].mxu0
      %v4206 = vadd.f32 %v699, %v4205
      %v4207 = vpop.f32.mrb[0].mxu0
      %v4208 = vadd.f32 %v700, %v4207
      %v4209 = vpop.f32.mrb[0].mxu0
      %v4210 = vadd.f32 %v701, %v4209
      %4211 = vmatprep.mubr.bf16.mxu0 0
      %4212 = vmatmul.mubr.bf16.gmra.mrb[0].mxu0 %v4105
      %v4213 = vpop.f32.mrb[0].mxu0
      %v4214 = vadd.f32 %v702, %v4213
      %v4215 = vpop.f32.mrb[0].mxu0
      %v4216 = vadd.f32 %v703, %v4215
      %v4217 = vpop.f32.mrb[0].mxu0
      %v4218 = vadd.f32 %v704, %v4217
      %v4219 = vpop.f32.mrb[0].mxu0
      %v4220 = vadd.f32 %v705, %v4219
      %4221 = vmatprep.mubr.bf16.mxu0 0
      %4222 = vmatmul.mubr.bf16.gmra.mrb[0].mxu0 %v4108
      %v4223 = vpop.f32.mrb[0].mxu0
      %v4224 = vadd.f32 %v706, %v4223
      %v4225 = vpop.f32.mrb[0].mxu0
      %v4226 = vadd.f32 %v707, %v4225
      %v4227 = vpop.f32.mrb[0].mxu0
      %v4228 = vadd.f32 %v708, %v4227
      %v4229 = vpop.f32.mrb[0].mxu0
      %v4230 = vadd.f32 %v709, %v4229
      %4231 = vmatprep.mubr.bf16.mxu0 0
      %4232 = vmatmul.mubr.bf16.gmra.mrb[0].mxu0 %v4111
      %v4233 = vpop.f32.mrb[0].mxu0
      %v4234 = vadd.f32 %v710, %v4233
      %v4235 = vpop.f32.mrb[0].mxu0
      %v4236 = vadd.f32 %v711, %v4235
      %v4237 = vpop.f32.mrb[0].mxu0
      %v4238 = vadd.f32 %v712, %v4237
      %v4239 = vpop.f32.mrb[0].mxu0
      %v4240 = vadd.f32 %v713, %v4239
      %4241 = vmatprep.mubr.bf16.mxu0 0
      %4242 = vmatmul.mubr.bf16.gmra.mrb[0].mxu0 %v4114
      %v4243 = vpop.f32.mrb[0].mxu0
      %v4244 = vadd.f32 %v714, %v4243
      %v4245 = vpop.f32.mrb[0].mxu0
      %v4246 = vadd.f32 %v715, %v4245
      %v4247 = vpop.f32.mrb[0].mxu0
      %v4248 = vadd.f32 %v716, %v4247
      %v4249 = vpop.f32.mrb[0].mxu0
      %v4250 = vadd.f32 %v717, %v4249
      %4251 = vmatprep.mubr.bf16.mxu0 0
      %4252 = vmatmul.mubr.bf16.gmra.mrb[0].mxu0 %v4117
      %v4253 = vpop.f32.mrb[0].mxu0
      %v4254 = vadd.f32 %v718, %v4253
      %v4255 = vpop.f32.mrb[0].mxu0
      %v4256 = vadd.f32 %v719, %v4255
      %v4257 = vpop.f32.mrb[0].mxu0
      %v4258 = vadd.f32 %v720, %v4257
      %v4259 = vpop.f32.mrb[0].mxu0
      %v4260 = vadd.f32 %v721, %v4259
      %4261 = vmatprep.mubr.bf16.mxu0 0
      %4262 = vmatmul.mubr.bf16.gmra.mrb[0].mxu0 %v4120
      %v4263 = vpop.f32.mrb[0].mxu0
      %v4264 = vadd.f32 %v722, %v4263
      %v4265 = vpop.f32.mrb[0].mxu0
      %v4266 = vadd.f32 %v723, %v4265
      %v4267 = vpop.f32.mrb[0].mxu0
      %v4268 = vadd.f32 %v724, %v4267
      %v4269 = vpop.f32.mrb[0].mxu0
      %v4270 = vadd.f32 %v725, %v4269
      %4271 = vdwg.mxu0
      %4272 = vrot.lane.b32.xlu0 %v775, 112
      %v4273 = vpop.permute.xlu0 %4272
      %4274 = vrot.lane.b32.xlu0 %v776, 112
      %v4275 = vpop.permute.xlu0 %4274
      %4276 = vrot.lane.b32.xlu0 %v777, 112
      %v4277 = vpop.permute.xlu0 %4276
      %4278 = vrot.lane.b32.xlu0 %v778, 112
      %v4279 = vpop.permute.xlu0 %4278
      %4280 = vrot.lane.b32.xlu0 %v779, 112
      %v4281 = vpop.permute.xlu0 %4280
      %4282 = vrot.lane.b32.xlu0 %v780, 112
      %v4283 = vpop.permute.xlu0 %4282
      %4284 = vrot.lane.b32.xlu0 %v781, 112
      %v4285 = vpop.permute.xlu0 %4284
      %4286 = vrot.lane.b32.xlu0 %v782, 112
      %v4287 = vpop.permute.xlu0 %4286
      %4288 = vrot.lane.b32.xlu0 %v783, 112
      %v4289 = vpop.permute.xlu0 %4288
      %4290 = vrot.lane.b32.xlu0 %v775, 80
      %v4291 = vpop.permute.xlu0 %4290
      %4292 = vrot.lane.b32.xlu0 %v776, 80
      %v4293 = vpop.permute.xlu0 %4292
      %4294 = vrot.lane.b32.xlu0 %v777, 80
      %v4295 = vpop.permute.xlu0 %4294
      %4296 = vrot.lane.b32.xlu0 %v778, 80
      %v4297 = vpop.permute.xlu0 %4296
      %4298 = vrot.lane.b32.xlu0 %v779, 80
      %v4299 = vpop.permute.xlu0 %4298
      %4300 = vrot.lane.b32.xlu0 %v780, 80
      %v4301 = vpop.permute.xlu0 %4300
      %4302 = vrot.lane.b32.xlu0 %v781, 80
      %v4303 = vpop.permute.xlu0 %4302
      %4304 = vrot.lane.b32.xlu0 %v782, 80
      %v4305 = vpop.permute.xlu0 %4304
      %4306 = vrot.lane.b32.xlu0 %v783, 80
      %v4307 = vpop.permute.xlu0 %4306
      %v4309 = vsel %vm811, %v4273, 0
      %v4312 = vsel %vm811, %v4275, 0
      %v4315 = vsel %vm811, %v4277, 0
      %v4318 = vsel %vm811, %v4279, 0
      %v4321 = vsel %vm811, %v4281, 0
      %v4324 = vsel %vm811, %v4283, 0
      %v4327 = vsel %vm811, %v4285, 0
      %v4330 = vsel %vm811, %v4287, 0
      %v4333 = vsel %vm811, %v4289, 0
      %v4336 = vsel %vm811, %v4291, 0
      %v4339 = vsel %vm811, %v4293, 0
      %v4342 = vsel %vm811, %v4295, 0
      %v4345 = vsel %vm811, %v4297, 0
      %v4348 = vsel %vm811, %v4299, 0
      %v4351 = vsel %vm811, %v4301, 0
      %v4354 = vsel %vm811, %v4303, 0
      %v4357 = vsel %vm811, %v4305, 0
      %v4360 = vsel %vm811, %v4307, 0
      %4362 = vmatprep.subr.bf16.mxu0 0
      %4363 = vmatpush1.bf16.xpose.msra.mxu0 %v4336
      %4364 = vmatprep.subr.bf16.mxu0 0
      %4365 = vmatpush1.bf16.xpose.msra.mxu0 %v4339
      %4366 = vmatprep.subr.bf16.mxu0 0
      %4367 = vmatpush1.bf16.xpose.msra.mxu0 %v4342
      %4368 = vmatprep.subr.bf16.mxu0 0
      %4369 = vmatpush1.bf16.xpose.msra.mxu0 %v4345
      %4370 = vmatprep.subr.bf16.mxu0 0
      %4371 = vmatpush1.bf16.xpose.msra.mxu0 %v4348
      %4372 = vmatprep.subr.bf16.mxu0 0
      %4373 = vmatpush1.bf16.xpose.msra.mxu0 %v4351
      %4374 = vmatprep.subr.bf16.mxu0 0
      %4375 = vmatpush1.bf16.xpose.msra.mxu0 %v4354
      %4376 = vmatprep.subr.bf16.mxu0 0
      %4377 = vmatpush1.bf16.xpose.msra.mxu0 %v4357
      %4378 = vmatprep.subr.bf16.mxu0 0
      %4379 = vmatpush1.bf16.xpose.msra.mxu0 %v4360
      %4380 = vmatprep.subr.bf16.mxu0 0
      %4381 = vmatpush1.bf16.xpose.msra.mxu0 0
      %4382 = vmatprep.subr.bf16.mxu0 0
      %4383 = vmatpush1.bf16.xpose.msra.mxu0 0
      %4384 = vmatprep.subr.bf16.mxu0 0
      %4385 = vmatpush1.bf16.xpose.msra.mxu0 0
      %4386 = vmatprep.subr.bf16.mxu0 0
      %4387 = vmatpush1.bf16.xpose.msra.mxu0 0
      %4388 = vmatprep.subr.bf16.mxu0 0
      %4389 = vmatpush1.bf16.xpose.msra.mxu0 0
      %4390 = vmatprep.subr.bf16.mxu0 0
      %4391 = vmatpush1.bf16.xpose.msra.mxu0 0
      %4392 = vmatprep.subr.bf16.mxu0 0
      %4393 = vmatpush1.bf16.xpose.msra.mxu0 0
      %4394 = vmatprep.mubr.bf16.mxu0 0
      %4395 = vmatmul.mubr.bf16.gmra.mrb[0].mxu0 %v4309
      %v4396 = vpop.f32.mrb[0].mxu0
      %v4397 = vadd.f32 %v690, %v4396
      %v4398 = vpop.f32.mrb[0].mxu0
      %v4399 = vadd.f32 %v691, %v4398
      %v4400 = vpop.f32.mrb[0].mxu0
      %v4401 = vadd.f32 %v692, %v4400
      %v4402 = vpop.f32.mrb[0].mxu0
      %v4403 = vadd.f32 %v693, %v4402
      %4404 = vmatprep.mubr.bf16.mxu0 0
      %4405 = vmatmul.mubr.bf16.gmra.mrb[0].mxu0 %v4312
      %v4406 = vpop.f32.mrb[0].mxu0
      %v4407 = vadd.f32 %v694, %v4406
      %v4408 = vpop.f32.mrb[0].mxu0
      %v4409 = vadd.f32 %v695, %v4408
      %v4410 = vpop.f32.mrb[0].mxu0
      %v4411 = vadd.f32 %v696, %v4410
      %v4412 = vpop.f32.mrb[0].mxu0
      %v4413 = vadd.f32 %v697, %v4412
      %4414 = vmatprep.mubr.bf16.mxu0 0
      %4415 = vmatmul.mubr.bf16.gmra.mrb[0].mxu0 %v4315
      %v4416 = vpop.f32.mrb[0].mxu0
      %v4417 = vadd.f32 %v698, %v4416
      %v4418 = vpop.f32.mrb[0].mxu0
      %v4419 = vadd.f32 %v699, %v4418
      %v4420 = vpop.f32.mrb[0].mxu0
      %v4421 = vadd.f32 %v700, %v4420
      %v4422 = vpop.f32.mrb[0].mxu0
      %v4423 = vadd.f32 %v701, %v4422
      %4424 = vmatprep.mubr.bf16.mxu0 0
      %4425 = vmatmul.mubr.bf16.gmra.mrb[0].mxu0 %v4318
      %v4426 = vpop.f32.mrb[0].mxu0
      %v4427 = vadd.f32 %v702, %v4426
      %v4428 = vpop.f32.mrb[0].mxu0
      %v4429 = vadd.f32 %v703, %v4428
      %v4430 = vpop.f32.mrb[0].mxu0
      %v4431 = vadd.f32 %v704, %v4430
      %v4432 = vpop.f32.mrb[0].mxu0
      %v4433 = vadd.f32 %v705, %v4432
      %4434 = vmatprep.mubr.bf16.mxu0 0
      %4435 = vmatmul.mubr.bf16.gmra.mrb[0].mxu0 %v4321
      %v4436 = vpop.f32.mrb[0].mxu0
      %v4437 = vadd.f32 %v706, %v4436
      %v4438 = vpop.f32.mrb[0].mxu0
      %v4439 = vadd.f32 %v707, %v4438
      %v4440 = vpop.f32.mrb[0].mxu0
      %v4441 = vadd.f32 %v708, %v4440
      %v4442 = vpop.f32.mrb[0].mxu0
      %v4443 = vadd.f32 %v709, %v4442
      %4444 = vmatprep.mubr.bf16.mxu0 0
      %4445 = vmatmul.mubr.bf16.gmra.mrb[0].mxu0 %v4324
      %v4446 = vpop.f32.mrb[0].mxu0
      %v4447 = vadd.f32 %v710, %v4446
      %v4448 = vpop.f32.mrb[0].mxu0
      %v4449 = vadd.f32 %v711, %v4448
      %v4450 = vpop.f32.mrb[0].mxu0
      %v4451 = vadd.f32 %v712, %v4450
      %v4452 = vpop.f32.mrb[0].mxu0
      %v4453 = vadd.f32 %v713, %v4452
      %4454 = vmatprep.mubr.bf16.mxu0 0
      %4455 = vmatmul.mubr.bf16.gmra.mrb[0].mxu0 %v4327
      %v4456 = vpop.f32.mrb[0].mxu0
      %v4457 = vadd.f32 %v714, %v4456
      %v4458 = vpop.f32.mrb[0].mxu0
      %v4459 = vadd.f32 %v715, %v4458
      %v4460 = vpop.f32.mrb[0].mxu0
      %v4461 = vadd.f32 %v716, %v4460
      %v4462 = vpop.f32.mrb[0].mxu0
      %v4463 = vadd.f32 %v717, %v4462
      %4464 = vmatprep.mubr.bf16.mxu0 0
      %4465 = vmatmul.mubr.bf16.gmra.mrb[0].mxu0 %v4330
      %v4466 = vpop.f32.mrb[0].mxu0
      %v4467 = vadd.f32 %v718, %v4466
      %v4468 = vpop.f32.mrb[0].mxu0
      %v4469 = vadd.f32 %v719, %v4468
      %v4470 = vpop.f32.mrb[0].mxu0
      %v4471 = vadd.f32 %v720, %v4470
      %v4472 = vpop.f32.mrb[0].mxu0
      %v4473 = vadd.f32 %v721, %v4472
      %4474 = vmatprep.mubr.bf16.mxu0 0
      %4475 = vmatmul.mubr.bf16.gmra.mrb[0].mxu0 %v4333
      %v4476 = vpop.f32.mrb[0].mxu0
      %v4477 = vadd.f32 %v722, %v4476
      %v4478 = vpop.f32.mrb[0].mxu0
      %v4479 = vadd.f32 %v723, %v4478
      %v4480 = vpop.f32.mrb[0].mxu0
      %v4481 = vadd.f32 %v724, %v4480
      %v4482 = vpop.f32.mrb[0].mxu0
      %v4483 = vadd.f32 %v725, %v4482
      %4484 = vdwg.mxu0
      %v4485 = vsel %vm1193, %v4186, -inf
      %v4486 = vmax.f32 %v4184, %v4485
      %4487 = vmax.xlane.f32.xlu0 %v4486
      %v4488 = vpop.xlane.xlu0 %4487
      %v4489 = vsel %vm1193, %v4190, -inf
      %v4490 = vmax.f32 %v4188, %v4489
      %4491 = vmax.xlane.f32.xlu0 %v4490
      %v4492 = vpop.xlane.xlu0 %4491
      %v4493 = vsel %vm1193, %v4196, -inf
      %v4494 = vmax.f32 %v4194, %v4493
      %4495 = vmax.xlane.f32.xlu0 %v4494
      %v4496 = vpop.xlane.xlu0 %4495
      %v4497 = vsel %vm1193, %v4200, -inf
      %v4498 = vmax.f32 %v4198, %v4497
      %4499 = vmax.xlane.f32.xlu0 %v4498
      %v4500 = vpop.xlane.xlu0 %4499
      %v4501 = vsel %vm1193, %v4206, -inf
      %v4502 = vmax.f32 %v4204, %v4501
      %4503 = vmax.xlane.f32.xlu0 %v4502
      %v4504 = vpop.xlane.xlu0 %4503
      %v4505 = vsel %vm1193, %v4210, -inf
      %v4506 = vmax.f32 %v4208, %v4505
      %4507 = vmax.xlane.f32.xlu0 %v4506
      %v4508 = vpop.xlane.xlu0 %4507
      %v4509 = vsel %vm1193, %v4216, -inf
      %v4510 = vmax.f32 %v4214, %v4509
      %4511 = vmax.xlane.f32.xlu0 %v4510
      %v4512 = vpop.xlane.xlu0 %4511
      %v4513 = vsel %vm1193, %v4220, -inf
      %v4514 = vmax.f32 %v4218, %v4513
      %4515 = vmax.xlane.f32.xlu0 %v4514
      %v4516 = vpop.xlane.xlu0 %4515
      %v4517 = vsel %vm1193, %v4226, -inf
      %v4518 = vmax.f32 %v4224, %v4517
      %4519 = vmax.xlane.f32.xlu0 %v4518
      %v4520 = vpop.xlane.xlu0 %4519
      %v4521 = vsel %vm1193, %v4230, -inf
      %v4522 = vmax.f32 %v4228, %v4521
      %4523 = vmax.xlane.f32.xlu0 %v4522
      %v4524 = vpop.xlane.xlu0 %4523
      %v4525 = vsel %vm1193, %v4236, -inf
      %v4526 = vmax.f32 %v4234, %v4525
      %4527 = vmax.xlane.f32.xlu0 %v4526
      %v4528 = vpop.xlane.xlu0 %4527
      %v4529 = vsel %vm1193, %v4240, -inf
      %v4530 = vmax.f32 %v4238, %v4529
      %4531 = vmax.xlane.f32.xlu0 %v4530
      %v4532 = vpop.xlane.xlu0 %4531
      %v4533 = vsel %vm1193, %v4246, -inf
      %v4534 = vmax.f32 %v4244, %v4533
      %4535 = vmax.xlane.f32.xlu0 %v4534
      %v4536 = vpop.xlane.xlu0 %4535
      %v4537 = vsel %vm1193, %v4250, -inf
      %v4538 = vmax.f32 %v4248, %v4537
      %4539 = vmax.xlane.f32.xlu0 %v4538
      %v4540 = vpop.xlane.xlu0 %4539
      %v4541 = vsel %vm1193, %v4256, -inf
      %v4542 = vmax.f32 %v4254, %v4541
      %4543 = vmax.xlane.f32.xlu0 %v4542
      %v4544 = vpop.xlane.xlu0 %4543
      %v4545 = vsel %vm1193, %v4260, -inf
      %v4546 = vmax.f32 %v4258, %v4545
      %4547 = vmax.xlane.f32.xlu0 %v4546
      %v4548 = vpop.xlane.xlu0 %4547
      %v4549 = vsel %vm1193, %v4266, -inf
      %v4550 = vmax.f32 %v4264, %v4549
      %4551 = vmax.xlane.f32.xlu0 %v4550
      %v4552 = vpop.xlane.xlu0 %4551
      %v4553 = vsel %vm1193, %v4270, -inf
      %v4554 = vmax.f32 %v4268, %v4553
      %4555 = vmax.xlane.f32.xlu0 %v4554
      %v4556 = vpop.xlane.xlu0 %4555
      %v4557 = vsel %vm1193, %v4399, -inf
      %v4558 = vmax.f32 %v4397, %v4557
      %4559 = vmax.xlane.f32.xlu0 %v4558
      %v4560 = vpop.xlane.xlu0 %4559
      %v4561 = vsel %vm1193, %v4403, -inf
      %v4562 = vmax.f32 %v4401, %v4561
      %4563 = vmax.xlane.f32.xlu0 %v4562
      %v4564 = vpop.xlane.xlu0 %4563
      %v4565 = vsel %vm1193, %v4409, -inf
      %v4566 = vmax.f32 %v4407, %v4565
      %4567 = vmax.xlane.f32.xlu0 %v4566
      %v4568 = vpop.xlane.xlu0 %4567
      %v4569 = vsel %vm1193, %v4413, -inf
      %v4570 = vmax.f32 %v4411, %v4569
      %4571 = vmax.xlane.f32.xlu0 %v4570
      %v4572 = vpop.xlane.xlu0 %4571
      %v4573 = vsel %vm1193, %v4419, -inf
      %v4574 = vmax.f32 %v4417, %v4573
      %4575 = vmax.xlane.f32.xlu0 %v4574
      %v4576 = vpop.xlane.xlu0 %4575
      %v4577 = vsel %vm1193, %v4423, -inf
      %v4578 = vmax.f32 %v4421, %v4577
      %4579 = vmax.xlane.f32.xlu0 %v4578
      %v4580 = vpop.xlane.xlu0 %4579
      %v4581 = vsel %vm1193, %v4429, -inf
      %v4582 = vmax.f32 %v4427, %v4581
      %4583 = vmax.xlane.f32.xlu0 %v4582
      %v4584 = vpop.xlane.xlu0 %4583
      %v4585 = vsel %vm1193, %v4433, -inf
      %v4586 = vmax.f32 %v4431, %v4585
      %4587 = vmax.xlane.f32.xlu0 %v4586
      %v4588 = vpop.xlane.xlu0 %4587
      %v4589 = vsel %vm1193, %v4439, -inf
      %v4590 = vmax.f32 %v4437, %v4589
      %4591 = vmax.xlane.f32.xlu0 %v4590
      %v4592 = vpop.xlane.xlu0 %4591
      %v4593 = vsel %vm1193, %v4443, -inf
      %v4594 = vmax.f32 %v4441, %v4593
      %4595 = vmax.xlane.f32.xlu0 %v4594
      %v4596 = vpop.xlane.xlu0 %4595
      %v4597 = vsel %vm1193, %v4449, -inf
      %v4598 = vmax.f32 %v4447, %v4597
      %4599 = vmax.xlane.f32.xlu0 %v4598
      %v4600 = vpop.xlane.xlu0 %4599
      %v4601 = vsel %vm1193, %v4453, -inf
      %v4602 = vmax.f32 %v4451, %v4601
      %4603 = vmax.xlane.f32.xlu0 %v4602
      %v4604 = vpop.xlane.xlu0 %4603
      %v4605 = vsel %vm1193, %v4459, -inf
      %v4606 = vmax.f32 %v4457, %v4605
      %4607 = vmax.xlane.f32.xlu0 %v4606
      %v4608 = vpop.xlane.xlu0 %4607
      %v4609 = vsel %vm1193, %v4463, -inf
      %v4610 = vmax.f32 %v4461, %v4609
      %4611 = vmax.xlane.f32.xlu0 %v4610
      %v4612 = vpop.xlane.xlu0 %4611
      %v4613 = vsel %vm1193, %v4469, -inf
      %v4614 = vmax.f32 %v4467, %v4613
      %4615 = vmax.xlane.f32.xlu0 %v4614
      %v4616 = vpop.xlane.xlu0 %4615
      %v4617 = vsel %vm1193, %v4473, -inf
      %v4618 = vmax.f32 %v4471, %v4617
      %4619 = vmax.xlane.f32.xlu0 %v4618
      %v4620 = vpop.xlane.xlu0 %4619
      %v4621 = vsel %vm1193, %v4479, -inf
      %v4622 = vmax.f32 %v4477, %v4621
      %4623 = vmax.xlane.f32.xlu0 %v4622
      %v4624 = vpop.xlane.xlu0 %4623
      %v4625 = vsel %vm1193, %v4483, -inf
      %v4626 = vmax.f32 %v4481, %v4625
      %4627 = vmax.xlane.f32.xlu0 %v4626
      %v4628 = vpop.xlane.xlu0 %4627
      %v4629 = vsub.f32 %v4184, %v4488
      %v4630 = vsub.f32 %v4186, %v4488
      %v4631 = vsub.f32 %v4188, %v4492
      %v4632 = vsub.f32 %v4190, %v4492
      %v4633 = vsub.f32 %v4194, %v4496
      %v4634 = vsub.f32 %v4196, %v4496
      %v4635 = vsub.f32 %v4198, %v4500
      %v4636 = vsub.f32 %v4200, %v4500
      %v4637 = vsub.f32 %v4204, %v4504
      %v4638 = vsub.f32 %v4206, %v4504
      %v4639 = vsub.f32 %v4208, %v4508
      %v4640 = vsub.f32 %v4210, %v4508
      %v4641 = vsub.f32 %v4214, %v4512
      %v4642 = vsub.f32 %v4216, %v4512
      %v4643 = vsub.f32 %v4218, %v4516
      %v4644 = vsub.f32 %v4220, %v4516
      %v4645 = vsub.f32 %v4224, %v4520
      %v4646 = vsub.f32 %v4226, %v4520
      %v4647 = vsub.f32 %v4228, %v4524
      %v4648 = vsub.f32 %v4230, %v4524
      %v4649 = vsub.f32 %v4234, %v4528
      %v4650 = vsub.f32 %v4236, %v4528
      %v4651 = vsub.f32 %v4238, %v4532
      %v4652 = vsub.f32 %v4240, %v4532
      %v4653 = vsub.f32 %v4244, %v4536
      %v4654 = vsub.f32 %v4246, %v4536
      %v4655 = vsub.f32 %v4248, %v4540
      %v4656 = vsub.f32 %v4250, %v4540
      %v4657 = vsub.f32 %v4254, %v4544
      %v4658 = vsub.f32 %v4256, %v4544
      %v4659 = vsub.f32 %v4258, %v4548
      %v4660 = vsub.f32 %v4260, %v4548
      %v4661 = vsub.f32 %v4264, %v4552
      %v4662 = vsub.f32 %v4266, %v4552
      %v4663 = vsub.f32 %v4268, %v4556
      %v4664 = vsub.f32 %v4270, %v4556
      %v4665 = vsub.f32 %v4397, %v4560
      %v4666 = vsub.f32 %v4399, %v4560
      %v4667 = vsub.f32 %v4401, %v4564
      %v4668 = vsub.f32 %v4403, %v4564
      %v4669 = vsub.f32 %v4407, %v4568
      %v4670 = vsub.f32 %v4409, %v4568
      %v4671 = vsub.f32 %v4411, %v4572
      %v4672 = vsub.f32 %v4413, %v4572
      %v4673 = vsub.f32 %v4417, %v4576
      %v4674 = vsub.f32 %v4419, %v4576
      %v4675 = vsub.f32 %v4421, %v4580
      %v4676 = vsub.f32 %v4423, %v4580
      %v4677 = vsub.f32 %v4427, %v4584
      %v4678 = vsub.f32 %v4429, %v4584
      %v4679 = vsub.f32 %v4431, %v4588
      %v4680 = vsub.f32 %v4433, %v4588
      %v4681 = vsub.f32 %v4437, %v4592
      %v4682 = vsub.f32 %v4439, %v4592
      %v4683 = vsub.f32 %v4441, %v4596
      %v4684 = vsub.f32 %v4443, %v4596
      %v4685 = vsub.f32 %v4447, %v4600
      %v4686 = vsub.f32 %v4449, %v4600
      %v4687 = vsub.f32 %v4451, %v4604
      %v4688 = vsub.f32 %v4453, %v4604
      %v4689 = vsub.f32 %v4457, %v4608
      %v4690 = vsub.f32 %v4459, %v4608
      %v4691 = vsub.f32 %v4461, %v4612
      %v4692 = vsub.f32 %v4463, %v4612
      %v4693 = vsub.f32 %v4467, %v4616
      %v4694 = vsub.f32 %v4469, %v4616
      %v4695 = vsub.f32 %v4471, %v4620
      %v4696 = vsub.f32 %v4473, %v4620
      %v4697 = vsub.f32 %v4477, %v4624
      %v4698 = vsub.f32 %v4479, %v4624
      %v4699 = vsub.f32 %v4481, %v4628
      %v4700 = vsub.f32 %v4483, %v4628
      %v4701 = vmul.f32 %v4629, 1.442695
      %v4702 = vpow.pop %v4701
      %v4703 = vmul.f32 %v4630, 1.442695
      %v4704 = vpow.pop %v4703
      %v4705 = vmul.f32 %v4631, 1.442695
      %v4706 = vpow.pop %v4705
      %v4707 = vmul.f32 %v4632, 1.442695
      %v4708 = vpow.pop %v4707
      %v4709 = vmul.f32 %v4633, 1.442695
      %v4710 = vpow.pop %v4709
      %v4711 = vmul.f32 %v4634, 1.442695
      %v4712 = vpow.pop %v4711
      %v4713 = vmul.f32 %v4635, 1.442695
      %v4714 = vpow.pop %v4713
      %v4715 = vmul.f32 %v4636, 1.442695
      %v4716 = vpow.pop %v4715
      %v4717 = vmul.f32 %v4637, 1.442695
      %v4718 = vpow.pop %v4717
      %v4719 = vmul.f32 %v4638, 1.442695
      %v4720 = vpow.pop %v4719
      %v4721 = vmul.f32 %v4639, 1.442695
      %v4722 = vpow.pop %v4721
      %v4723 = vmul.f32 %v4640, 1.442695
      %v4724 = vpow.pop %v4723
      %v4725 = vmul.f32 %v4641, 1.442695
      %v4726 = vpow.pop %v4725
      %v4727 = vmul.f32 %v4642, 1.442695
      %v4728 = vpow.pop %v4727
      %v4729 = vmul.f32 %v4643, 1.442695
      %v4730 = vpow.pop %v4729
      %v4731 = vmul.f32 %v4644, 1.442695
      %v4732 = vpow.pop %v4731
      %v4733 = vmul.f32 %v4645, 1.442695
      %v4734 = vpow.pop %v4733
      %v4735 = vmul.f32 %v4646, 1.442695
      %v4736 = vpow.pop %v4735
      %v4737 = vmul.f32 %v4647, 1.442695
      %v4738 = vpow.pop %v4737
      %v4739 = vmul.f32 %v4648, 1.442695
      %v4740 = vpow.pop %v4739
      %v4741 = vmul.f32 %v4649, 1.442695
      %v4742 = vpow.pop %v4741
      %v4743 = vmul.f32 %v4650, 1.442695
      %v4744 = vpow.pop %v4743
      %v4745 = vmul.f32 %v4651, 1.442695
      %v4746 = vpow.pop %v4745
      %v4747 = vmul.f32 %v4652, 1.442695
      %v4748 = vpow.pop %v4747
      %v4749 = vmul.f32 %v4653, 1.442695
      %v4750 = vpow.pop %v4749
      %v4751 = vmul.f32 %v4654, 1.442695
      %v4752 = vpow.pop %v4751
      %v4753 = vmul.f32 %v4655, 1.442695
      %v4754 = vpow.pop %v4753
      %v4755 = vmul.f32 %v4656, 1.442695
      %v4756 = vpow.pop %v4755
      %v4757 = vmul.f32 %v4657, 1.442695
      %v4758 = vpow.pop %v4757
      %v4759 = vmul.f32 %v4658, 1.442695
      %v4760 = vpow.pop %v4759
      %v4761 = vmul.f32 %v4659, 1.442695
      %v4762 = vpow.pop %v4761
      %v4763 = vmul.f32 %v4660, 1.442695
      %v4764 = vpow.pop %v4763
      %v4765 = vmul.f32 %v4661, 1.442695
      %v4766 = vpow.pop %v4765
      %v4767 = vmul.f32 %v4662, 1.442695
      %v4768 = vpow.pop %v4767
      %v4769 = vmul.f32 %v4663, 1.442695
      %v4770 = vpow.pop %v4769
      %v4771 = vmul.f32 %v4664, 1.442695
      %v4772 = vpow.pop %v4771
      %v4773 = vmul.f32 %v4665, 1.442695
      %v4774 = vpow.pop %v4773
      %v4775 = vmul.f32 %v4666, 1.442695
      %v4776 = vpow.pop %v4775
      %v4777 = vmul.f32 %v4667, 1.442695
      %v4778 = vpow.pop %v4777
      %v4779 = vmul.f32 %v4668, 1.442695
      %v4780 = vpow.pop %v4779
      %v4781 = vmul.f32 %v4669, 1.442695
      %v4782 = vpow.pop %v4781
      %v4783 = vmul.f32 %v4670, 1.442695
      %v4784 = vpow.pop %v4783
      %v4785 = vmul.f32 %v4671, 1.442695
      %v4786 = vpow.pop %v4785
      %v4787 = vmul.f32 %v4672, 1.442695
      %v4788 = vpow.pop %v4787
      %v4789 = vmul.f32 %v4673, 1.442695
      %v4790 = vpow.pop %v4789
      %v4791 = vmul.f32 %v4674, 1.442695
      %v4792 = vpow.pop %v4791
      %v4793 = vmul.f32 %v4675, 1.442695
      %v4794 = vpow.pop %v4793
      %v4795 = vmul.f32 %v4676, 1.442695
      %v4796 = vpow.pop %v4795
      %v4797 = vmul.f32 %v4677, 1.442695
      %v4798 = vpow.pop %v4797
      %v4799 = vmul.f32 %v4678, 1.442695
      %v4800 = vpow.pop %v4799
      %v4801 = vmul.f32 %v4679, 1.442695
      %v4802 = vpow.pop %v4801
      %v4803 = vmul.f32 %v4680, 1.442695
      %v4804 = vpow.pop %v4803
      %v4805 = vmul.f32 %v4681, 1.442695
      %v4806 = vpow.pop %v4805
      %v4807 = vmul.f32 %v4682, 1.442695
      %v4808 = vpow.pop %v4807
      %v4809 = vmul.f32 %v4683, 1.442695
      %v4810 = vpow.pop %v4809
      %v4811 = vmul.f32 %v4684, 1.442695
      %v4812 = vpow.pop %v4811
      %v4813 = vmul.f32 %v4685, 1.442695
      %v4814 = vpow.pop %v4813
      %v4815 = vmul.f32 %v4686, 1.442695
      %v4816 = vpow.pop %v4815
      %v4817 = vmul.f32 %v4687, 1.442695
      %v4818 = vpow.pop %v4817
      %v4819 = vmul.f32 %v4688, 1.442695
      %v4820 = vpow.pop %v4819
      %v4821 = vmul.f32 %v4689, 1.442695
      %v4822 = vpow.pop %v4821
      %v4823 = vmul.f32 %v4690, 1.442695
      %v4824 = vpow.pop %v4823
      %v4825 = vmul.f32 %v4691, 1.442695
      %v4826 = vpow.pop %v4825
      %v4827 = vmul.f32 %v4692, 1.442695
      %v4828 = vpow.pop %v4827
      %v4829 = vmul.f32 %v4693, 1.442695
      %v4830 = vpow.pop %v4829
      %v4831 = vmul.f32 %v4694, 1.442695
      %v4832 = vpow.pop %v4831
      %v4833 = vmul.f32 %v4695, 1.442695
      %v4834 = vpow.pop %v4833
      %v4835 = vmul.f32 %v4696, 1.442695
      %v4836 = vpow.pop %v4835
      %v4837 = vmul.f32 %v4697, 1.442695
      %v4838 = vpow.pop %v4837
      %v4839 = vmul.f32 %v4698, 1.442695
      %v4840 = vpow.pop %v4839
      %v4841 = vmul.f32 %v4699, 1.442695
      %v4842 = vpow.pop %v4841
      %v4843 = vmul.f32 %v4700, 1.442695
      %v4844 = vpow.pop %v4843
      %v4845 = vsel %vm1193, %v4704, 0.0
      %v4846 = vadd.f32 %v4702, %v4845
      %4847 = vadd.xlane.f32.xlu0 %v4846
      %v4848 = vpop.xlane.xlu0 %4847
      %v4849 = vsel %vm1193, %v4708, 0.0
      %v4850 = vadd.f32 %v4706, %v4849
      %4851 = vadd.xlane.f32.xlu0 %v4850
      %v4852 = vpop.xlane.xlu0 %4851
      %v4853 = vsel %vm1193, %v4712, 0.0
      %v4854 = vadd.f32 %v4710, %v4853
      %4855 = vadd.xlane.f32.xlu0 %v4854
      %v4856 = vpop.xlane.xlu0 %4855
      %v4857 = vsel %vm1193, %v4716, 0.0
      %v4858 = vadd.f32 %v4714, %v4857
      %4859 = vadd.xlane.f32.xlu0 %v4858
      %v4860 = vpop.xlane.xlu0 %4859
      %v4861 = vsel %vm1193, %v4720, 0.0
      %v4862 = vadd.f32 %v4718, %v4861
      %4863 = vadd.xlane.f32.xlu0 %v4862
      %v4864 = vpop.xlane.xlu0 %4863
      %v4865 = vsel %vm1193, %v4724, 0.0
      %v4866 = vadd.f32 %v4722, %v4865
      %4867 = vadd.xlane.f32.xlu0 %v4866
      %v4868 = vpop.xlane.xlu0 %4867
      %v4869 = vsel %vm1193, %v4728, 0.0
      %v4870 = vadd.f32 %v4726, %v4869
      %4871 = vadd.xlane.f32.xlu0 %v4870
      %v4872 = vpop.xlane.xlu0 %4871
      %v4873 = vsel %vm1193, %v4732, 0.0
      %v4874 = vadd.f32 %v4730, %v4873
      %4875 = vadd.xlane.f32.xlu0 %v4874
      %v4876 = vpop.xlane.xlu0 %4875
      %v4877 = vsel %vm1193, %v4736, 0.0
      %v4878 = vadd.f32 %v4734, %v4877
      %4879 = vadd.xlane.f32.xlu0 %v4878
      %v4880 = vpop.xlane.xlu0 %4879
      %v4881 = vsel %vm1193, %v4740, 0.0
      %v4882 = vadd.f32 %v4738, %v4881
      %4883 = vadd.xlane.f32.xlu0 %v4882
      %v4884 = vpop.xlane.xlu0 %4883
      %v4885 = vsel %vm1193, %v4744, 0.0
      %v4886 = vadd.f32 %v4742, %v4885
      %4887 = vadd.xlane.f32.xlu0 %v4886
      %v4888 = vpop.xlane.xlu0 %4887
      %v4889 = vsel %vm1193, %v4748, 0.0
      %v4890 = vadd.f32 %v4746, %v4889
      %4891 = vadd.xlane.f32.xlu0 %v4890
      %v4892 = vpop.xlane.xlu0 %4891
      %v4893 = vsel %vm1193, %v4752, 0.0
      %v4894 = vadd.f32 %v4750, %v4893
      %4895 = vadd.xlane.f32.xlu0 %v4894
      %v4896 = vpop.xlane.xlu0 %4895
      %v4897 = vsel %vm1193, %v4756, 0.0
      %v4898 = vadd.f32 %v4754, %v4897
      %4899 = vadd.xlane.f32.xlu0 %v4898
      %v4900 = vpop.xlane.xlu0 %4899
      %v4901 = vsel %vm1193, %v4760, 0.0
      %v4902 = vadd.f32 %v4758, %v4901
      %4903 = vadd.xlane.f32.xlu0 %v4902
      %v4904 = vpop.xlane.xlu0 %4903
      %v4905 = vsel %vm1193, %v4764, 0.0
      %v4906 = vadd.f32 %v4762, %v4905
      %4907 = vadd.xlane.f32.xlu0 %v4906
      %v4908 = vpop.xlane.xlu0 %4907
      %v4909 = vsel %vm1193, %v4768, 0.0
      %v4910 = vadd.f32 %v4766, %v4909
      %4911 = vadd.xlane.f32.xlu0 %v4910
      %v4912 = vpop.xlane.xlu0 %4911
      %v4913 = vsel %vm1193, %v4772, 0.0
      %v4914 = vadd.f32 %v4770, %v4913
      %4915 = vadd.xlane.f32.xlu0 %v4914
      %v4916 = vpop.xlane.xlu0 %4915
      %v4917 = vsel %vm1193, %v4776, 0.0
      %v4918 = vadd.f32 %v4774, %v4917
      %4919 = vadd.xlane.f32.xlu0 %v4918
      %v4920 = vpop.xlane.xlu0 %4919
      %v4921 = vsel %vm1193, %v4780, 0.0
      %v4922 = vadd.f32 %v4778, %v4921
      %4923 = vadd.xlane.f32.xlu0 %v4922
      %v4924 = vpop.xlane.xlu0 %4923
      %v4925 = vsel %vm1193, %v4784, 0.0
      %v4926 = vadd.f32 %v4782, %v4925
      %4927 = vadd.xlane.f32.xlu0 %v4926
      %v4928 = vpop.xlane.xlu0 %4927
      %v4929 = vsel %vm1193, %v4788, 0.0
      %v4930 = vadd.f32 %v4786, %v4929
      %4931 = vadd.xlane.f32.xlu0 %v4930
      %v4932 = vpop.xlane.xlu0 %4931
      %v4933 = vsel %vm1193, %v4792, 0.0
      %v4934 = vadd.f32 %v4790, %v4933
      %4935 = vadd.xlane.f32.xlu0 %v4934
      %v4936 = vpop.xlane.xlu0 %4935
      %v4937 = vsel %vm1193, %v4796, 0.0
      %v4938 = vadd.f32 %v4794, %v4937
      %4939 = vadd.xlane.f32.xlu0 %v4938
      %v4940 = vpop.xlane.xlu0 %4939
      %v4941 = vsel %vm1193, %v4800, 0.0
      %v4942 = vadd.f32 %v4798, %v4941
      %4943 = vadd.xlane.f32.xlu0 %v4942
      %v4944 = vpop.xlane.xlu0 %4943
      %v4945 = vsel %vm1193, %v4804, 0.0
      %v4946 = vadd.f32 %v4802, %v4945
      %4947 = vadd.xlane.f32.xlu0 %v4946
      %v4948 = vpop.xlane.xlu0 %4947
      %v4949 = vsel %vm1193, %v4808, 0.0
      %v4950 = vadd.f32 %v4806, %v4949
      %4951 = vadd.xlane.f32.xlu0 %v4950
      %v4952 = vpop.xlane.xlu0 %4951
      %v4953 = vsel %vm1193, %v4812, 0.0
      %v4954 = vadd.f32 %v4810, %v4953
      %4955 = vadd.xlane.f32.xlu0 %v4954
      %v4956 = vpop.xlane.xlu0 %4955
      %v4957 = vsel %vm1193, %v4816, 0.0
      %v4958 = vadd.f32 %v4814, %v4957
      %4959 = vadd.xlane.f32.xlu0 %v4958
      %v4960 = vpop.xlane.xlu0 %4959
      %v4961 = vsel %vm1193, %v4820, 0.0
      %v4962 = vadd.f32 %v4818, %v4961
      %4963 = vadd.xlane.f32.xlu0 %v4962
      %v4964 = vpop.xlane.xlu0 %4963
      %v4965 = vsel %vm1193, %v4824, 0.0
      %v4966 = vadd.f32 %v4822, %v4965
      %4967 = vadd.xlane.f32.xlu0 %v4966
      %v4968 = vpop.xlane.xlu0 %4967
      %v4969 = vsel %vm1193, %v4828, 0.0
      %v4970 = vadd.f32 %v4826, %v4969
      %4971 = vadd.xlane.f32.xlu0 %v4970
      %v4972 = vpop.xlane.xlu0 %4971
      %v4973 = vsel %vm1193, %v4832, 0.0
      %v4974 = vadd.f32 %v4830, %v4973
      %4975 = vadd.xlane.f32.xlu0 %v4974
      %v4976 = vpop.xlane.xlu0 %4975
      %v4977 = vsel %vm1193, %v4836, 0.0
      %v4978 = vadd.f32 %v4834, %v4977
      %4979 = vadd.xlane.f32.xlu0 %v4978
      %v4980 = vpop.xlane.xlu0 %4979
      %v4981 = vsel %vm1193, %v4840, 0.0
      %v4982 = vadd.f32 %v4838, %v4981
      %4983 = vadd.xlane.f32.xlu0 %v4982
      %v4984 = vpop.xlane.xlu0 %4983
      %v4985 = vsel %vm1193, %v4844, 0.0
      %v4986 = vadd.f32 %v4842, %v4985
      %4987 = vadd.xlane.f32.xlu0 %v4986
      %v4988 = vpop.xlane.xlu0 %4987
      %v4989 = vrcp.pop %v4848
      %v4990 = vrcp.pop %v4852
      %v4991 = vrcp.pop %v4856
      %v4992 = vrcp.pop %v4860
      %v4993 = vrcp.pop %v4864
      %v4994 = vrcp.pop %v4868
      %v4995 = vrcp.pop %v4872
      %v4996 = vrcp.pop %v4876
      %v4997 = vrcp.pop %v4880
      %v4998 = vrcp.pop %v4884
      %v4999 = vrcp.pop %v4888
      %v5000 = vrcp.pop %v4892
      %v5001 = vrcp.pop %v4896
      %v5002 = vrcp.pop %v4900
      %v5003 = vrcp.pop %v4904
      %v5004 = vrcp.pop %v4908
      %v5005 = vrcp.pop %v4912
      %v5006 = vrcp.pop %v4916
      %v5007 = vrcp.pop %v4920
      %v5008 = vrcp.pop %v4924
      %v5009 = vrcp.pop %v4928
      %v5010 = vrcp.pop %v4932
      %v5011 = vrcp.pop %v4936
      %v5012 = vrcp.pop %v4940
      %v5013 = vrcp.pop %v4944
      %v5014 = vrcp.pop %v4948
      %v5015 = vrcp.pop %v4952
      %v5016 = vrcp.pop %v4956
      %v5017 = vrcp.pop %v4960
      %v5018 = vrcp.pop %v4964
      %v5019 = vrcp.pop %v4968
      %v5020 = vrcp.pop %v4972
      %v5021 = vrcp.pop %v4976
      %v5022 = vrcp.pop %v4980
      %v5023 = vrcp.pop %v4984
      %v5024 = vrcp.pop %v4988
      %v5025 = vmul.f32 %v4702, %v4989
      %v5026 = vmul.f32 %v4704, %v4989
      %v5027 = vmul.f32 %v4706, %v4990
      %v5028 = vmul.f32 %v4708, %v4990
      %v5029 = vmul.f32 %v4710, %v4991
      %v5030 = vmul.f32 %v4712, %v4991
      %v5031 = vmul.f32 %v4714, %v4992
      %v5032 = vmul.f32 %v4716, %v4992
      %v5033 = vmul.f32 %v4718, %v4993
      %v5034 = vmul.f32 %v4720, %v4993
      %v5035 = vmul.f32 %v4722, %v4994
      %v5036 = vmul.f32 %v4724, %v4994
      %v5037 = vmul.f32 %v4726, %v4995
      %v5038 = vmul.f32 %v4728, %v4995
      %v5039 = vmul.f32 %v4730, %v4996
      %v5040 = vmul.f32 %v4732, %v4996
      %v5041 = vmul.f32 %v4734, %v4997
      %v5042 = vmul.f32 %v4736, %v4997
      %v5043 = vmul.f32 %v4738, %v4998
      %v5044 = vmul.f32 %v4740, %v4998
      %v5045 = vmul.f32 %v4742, %v4999
      %v5046 = vmul.f32 %v4744, %v4999
      %v5047 = vmul.f32 %v4746, %v5000
      %v5048 = vmul.f32 %v4748, %v5000
      %v5049 = vmul.f32 %v4750, %v5001
      %v5050 = vmul.f32 %v4752, %v5001
      %v5051 = vmul.f32 %v4754, %v5002
      %v5052 = vmul.f32 %v4756, %v5002
      %v5053 = vmul.f32 %v4758, %v5003
      %v5054 = vmul.f32 %v4760, %v5003
      %v5055 = vmul.f32 %v4762, %v5004
      %v5056 = vmul.f32 %v4764, %v5004
      %v5057 = vmul.f32 %v4766, %v5005
      %v5058 = vmul.f32 %v4768, %v5005
      %v5059 = vmul.f32 %v4770, %v5006
      %v5060 = vmul.f32 %v4772, %v5006
      %v5061 = vmul.f32 %v4774, %v5007
      %v5062 = vmul.f32 %v4776, %v5007
      %v5063 = vmul.f32 %v4778, %v5008
      %v5064 = vmul.f32 %v4780, %v5008
      %v5065 = vmul.f32 %v4782, %v5009
      %v5066 = vmul.f32 %v4784, %v5009
      %v5067 = vmul.f32 %v4786, %v5010
      %v5068 = vmul.f32 %v4788, %v5010
      %v5069 = vmul.f32 %v4790, %v5011
      %v5070 = vmul.f32 %v4792, %v5011
      %v5071 = vmul.f32 %v4794, %v5012
      %v5072 = vmul.f32 %v4796, %v5012
      %v5073 = vmul.f32 %v4798, %v5013
      %v5074 = vmul.f32 %v4800, %v5013
      %v5075 = vmul.f32 %v4802, %v5014
      %v5076 = vmul.f32 %v4804, %v5014
      %v5077 = vmul.f32 %v4806, %v5015
      %v5078 = vmul.f32 %v4808, %v5015
      %v5079 = vmul.f32 %v4810, %v5016
      %v5080 = vmul.f32 %v4812, %v5016
      %v5081 = vmul.f32 %v4814, %v5017
      %v5082 = vmul.f32 %v4816, %v5017
      %v5083 = vmul.f32 %v4818, %v5018
      %v5084 = vmul.f32 %v4820, %v5018
      %v5085 = vmul.f32 %v4822, %v5019
      %v5086 = vmul.f32 %v4824, %v5019
      %v5087 = vmul.f32 %v4826, %v5020
      %v5088 = vmul.f32 %v4828, %v5020
      %v5089 = vmul.f32 %v4830, %v5021
      %v5090 = vmul.f32 %v4832, %v5021
      %v5091 = vmul.f32 %v4834, %v5022
      %v5092 = vmul.f32 %v4836, %v5022
      %v5093 = vmul.f32 %v4838, %v5023
      %v5094 = vmul.f32 %v4840, %v5023
      %v5095 = vmul.f32 %v4842, %v5024
      %v5096 = vmul.f32 %v4844, %v5024
      %v5097 = vpack.c.bf16 %v5027, %v5025
      %v5098 = vpack.c.bf16 %v5028, %v5026
      %v5099 = vpack.c.bf16 %v5031, %v5029
      %v5100 = vpack.c.bf16 %v5032, %v5030
      %v5101 = vpack.c.bf16 %v5035, %v5033
      %v5102 = vpack.c.bf16 %v5036, %v5034
      %v5103 = vpack.c.bf16 %v5039, %v5037
      %v5104 = vpack.c.bf16 %v5040, %v5038
      %v5105 = vpack.c.bf16 %v5043, %v5041
      %v5106 = vpack.c.bf16 %v5044, %v5042
      %v5107 = vpack.c.bf16 %v5047, %v5045
      %v5108 = vpack.c.bf16 %v5048, %v5046
      %v5109 = vpack.c.bf16 %v5051, %v5049
      %v5110 = vpack.c.bf16 %v5052, %v5050
      %v5111 = vpack.c.bf16 %v5055, %v5053
      %v5112 = vpack.c.bf16 %v5056, %v5054
      %v5113 = vpack.c.bf16 %v5059, %v5057
      %v5114 = vpack.c.bf16 %v5060, %v5058
      %v5115 = vpack.c.bf16 %v5063, %v5061
      %v5116 = vpack.c.bf16 %v5064, %v5062
      %v5117 = vpack.c.bf16 %v5067, %v5065
      %v5118 = vpack.c.bf16 %v5068, %v5066
      %v5119 = vpack.c.bf16 %v5071, %v5069
      %v5120 = vpack.c.bf16 %v5072, %v5070
      %v5121 = vpack.c.bf16 %v5075, %v5073
      %v5122 = vpack.c.bf16 %v5076, %v5074
      %v5123 = vpack.c.bf16 %v5079, %v5077
      %v5124 = vpack.c.bf16 %v5080, %v5078
      %v5125 = vpack.c.bf16 %v5083, %v5081
      %v5126 = vpack.c.bf16 %v5084, %v5082
      %v5127 = vpack.c.bf16 %v5087, %v5085
      %v5128 = vpack.c.bf16 %v5088, %v5086
      %v5129 = vpack.c.bf16 %v5091, %v5089
      %v5130 = vpack.c.bf16 %v5092, %v5090
      %v5131 = vpack.c.bf16 %v5095, %v5093
      %v5132 = vpack.c.bf16 %v5096, %v5094
      %5133 = vrot.lane.b32.xlu0 %v766, 48
      %v5134 = vpop.permute.xlu0 %5133
      %5135 = vrot.lane.b32.xlu0 %v767, 48
      %v5136 = vpop.permute.xlu0 %5135
      %5137 = vrot.lane.b32.xlu0 %v768, 48
      %v5138 = vpop.permute.xlu0 %5137
      %5139 = vrot.lane.b32.xlu0 %v769, 48
      %v5140 = vpop.permute.xlu0 %5139
      %5141 = vrot.lane.b32.xlu0 %v770, 48
      %v5142 = vpop.permute.xlu0 %5141
      %5143 = vrot.lane.b32.xlu0 %v771, 48
      %v5144 = vpop.permute.xlu0 %5143
      %5145 = vrot.lane.b32.xlu0 %v772, 48
      %v5146 = vpop.permute.xlu0 %5145
      %5147 = vrot.lane.b32.xlu0 %v773, 48
      %v5148 = vpop.permute.xlu0 %5147
      %5149 = vrot.lane.b32.xlu0 %v774, 48
      %v5150 = vpop.permute.xlu0 %5149
      %v5161 = vsel %vm1193, %v5098, 0
      %v5164 = vsel %vm1193, %v5100, 0
      %v5167 = vsel %vm1193, %v5102, 0
      %v5170 = vsel %vm1193, %v5104, 0
      %v5173 = vsel %vm1193, %v5106, 0
      %v5176 = vsel %vm1193, %v5108, 0
      %v5179 = vsel %vm1193, %v5110, 0
      %v5182 = vsel %vm1193, %v5112, 0
      %v5185 = vsel %vm1193, %v5114, 0
      %5187 = vmatprep.subr.bf16.mxu0 0
      %5188 = vmatpush1.bf16.msra.mxu0 %v5134
      %5189 = vmatprep.subr.bf16.mxu0 0
      %5190 = vmatpush1.bf16.msra.mxu0 %v5136
      %5191 = vmatprep.subr.bf16.mxu0 0
      %5192 = vmatpush1.bf16.msra.mxu0 %v5138
      %5193 = vmatprep.subr.bf16.mxu0 0
      %5194 = vmatpush1.bf16.msra.mxu0 %v5140
      %5195 = vmatprep.subr.bf16.mxu0 0
      %5196 = vmatpush1.bf16.msra.mxu0 %v5142
      %5197 = vmatprep.subr.bf16.mxu0 0
      %5198 = vmatpush1.bf16.msra.mxu0 %v5144
      %5199 = vmatprep.subr.bf16.mxu0 0
      %5200 = vmatpush1.bf16.msra.mxu0 %v5146
      %5201 = vmatprep.subr.bf16.mxu0 0
      %5202 = vmatpush1.bf16.msra.mxu0 %v5148
      %5203 = vmatprep.subr.bf16.mxu0 0
      %5204 = vmatpush1.bf16.msra.mxu0 %v5150
      %5205 = vmatprep.subr.bf16.mxu0 0
      %5206 = vmatpush1.bf16.msra.mxu0 0
      %5207 = vmatprep.subr.bf16.mxu0 0
      %5208 = vmatpush1.bf16.msra.mxu0 0
      %5209 = vmatprep.subr.bf16.mxu0 0
      %5210 = vmatpush1.bf16.msra.mxu0 0
      %5211 = vmatprep.subr.bf16.mxu0 0
      %5212 = vmatpush1.bf16.msra.mxu0 0
      %5213 = vmatprep.subr.bf16.mxu0 0
      %5214 = vmatpush1.bf16.msra.mxu0 0
      %5215 = vmatprep.subr.bf16.mxu0 0
      %5216 = vmatpush1.bf16.msra.mxu0 0
      %5217 = vmatprep.subr.bf16.mxu0 0
      %5218 = vmatpush1.bf16.msra.mxu0 0
      %5219 = vmatprep.mubr.bf16.mxu0 %v5161
      %5220 = vmatmul.mubr.bf16.gmra.mrb[0].mxu0 %v5097
      %v5221 = vpop.f32.mrb[0].mxu0
      %v5222 = vadd.f32 0.0, %v5221
      %v5223 = vpop.f32.mrb[0].mxu0
      %v5224 = vpop.f32.mrb[0].mxu0
      %v5225 = vadd.f32 0.0, %v5224
      %v5226 = vpop.f32.mrb[0].mxu0
      %5227 = vmatprep.mubr.bf16.mxu0 %v5164
      %5228 = vmatmul.mubr.bf16.gmra.mrb[0].mxu0 %v5099
      %v5229 = vpop.f32.mrb[0].mxu0
      %v5230 = vadd.f32 0.0, %v5229
      %v5231 = vpop.f32.mrb[0].mxu0
      %v5232 = vpop.f32.mrb[0].mxu0
      %v5233 = vadd.f32 0.0, %v5232
      %v5234 = vpop.f32.mrb[0].mxu0
      %5235 = vmatprep.mubr.bf16.mxu0 %v5167
      %5236 = vmatmul.mubr.bf16.gmra.mrb[0].mxu0 %v5101
      %v5237 = vpop.f32.mrb[0].mxu0
      %v5238 = vadd.f32 0.0, %v5237
      %v5239 = vpop.f32.mrb[0].mxu0
      %v5240 = vpop.f32.mrb[0].mxu0
      %v5241 = vadd.f32 0.0, %v5240
      %v5242 = vpop.f32.mrb[0].mxu0
      %5243 = vmatprep.mubr.bf16.mxu0 %v5170
      %5244 = vmatmul.mubr.bf16.gmra.mrb[0].mxu0 %v5103
      %v5245 = vpop.f32.mrb[0].mxu0
      %v5246 = vadd.f32 0.0, %v5245
      %v5247 = vpop.f32.mrb[0].mxu0
      %v5248 = vpop.f32.mrb[0].mxu0
      %v5249 = vadd.f32 0.0, %v5248
      %v5250 = vpop.f32.mrb[0].mxu0
      %5251 = vmatprep.mubr.bf16.mxu0 %v5173
      %5252 = vmatmul.mubr.bf16.gmra.mrb[0].mxu0 %v5105
      %v5253 = vpop.f32.mrb[0].mxu0
      %v5254 = vadd.f32 0.0, %v5253
      %v5255 = vpop.f32.mrb[0].mxu0
      %v5256 = vpop.f32.mrb[0].mxu0
      %v5257 = vadd.f32 0.0, %v5256
      %v5258 = vpop.f32.mrb[0].mxu0
      %5259 = vmatprep.mubr.bf16.mxu0 %v5176
      %5260 = vmatmul.mubr.bf16.gmra.mrb[0].mxu0 %v5107
      %v5261 = vpop.f32.mrb[0].mxu0
      %v5262 = vadd.f32 0.0, %v5261
      %v5263 = vpop.f32.mrb[0].mxu0
      %v5264 = vpop.f32.mrb[0].mxu0
      %v5265 = vadd.f32 0.0, %v5264
      %v5266 = vpop.f32.mrb[0].mxu0
      %5267 = vmatprep.mubr.bf16.mxu0 %v5179
      %5268 = vmatmul.mubr.bf16.gmra.mrb[0].mxu0 %v5109
      %v5269 = vpop.f32.mrb[0].mxu0
      %v5270 = vadd.f32 0.0, %v5269
      %v5271 = vpop.f32.mrb[0].mxu0
      %v5272 = vpop.f32.mrb[0].mxu0
      %v5273 = vadd.f32 0.0, %v5272
      %v5274 = vpop.f32.mrb[0].mxu0
      %5275 = vmatprep.mubr.bf16.mxu0 %v5182
      %5276 = vmatmul.mubr.bf16.gmra.mrb[0].mxu0 %v5111
      %v5277 = vpop.f32.mrb[0].mxu0
      %v5278 = vadd.f32 0.0, %v5277
      %v5279 = vpop.f32.mrb[0].mxu0
      %v5280 = vpop.f32.mrb[0].mxu0
      %v5281 = vadd.f32 0.0, %v5280
      %v5282 = vpop.f32.mrb[0].mxu0
      %5283 = vmatprep.mubr.bf16.mxu0 %v5185
      %5284 = vmatmul.mubr.bf16.gmra.mrb[0].mxu0 %v5113
      %v5285 = vpop.f32.mrb[0].mxu0
      %v5286 = vadd.f32 0.0, %v5285
      %v5287 = vpop.f32.mrb[0].mxu0
      %v5288 = vpop.f32.mrb[0].mxu0
      %v5289 = vadd.f32 0.0, %v5288
      %v5290 = vpop.f32.mrb[0].mxu0
      %5291 = vdwg.mxu0
      %5292 = vrot.lane.b32.xlu0 %v775, 48
      %v5293 = vpop.permute.xlu0 %5292
      %5294 = vrot.lane.b32.xlu0 %v776, 48
      %v5295 = vpop.permute.xlu0 %5294
      %5296 = vrot.lane.b32.xlu0 %v777, 48
      %v5297 = vpop.permute.xlu0 %5296
      %5298 = vrot.lane.b32.xlu0 %v778, 48
      %v5299 = vpop.permute.xlu0 %5298
      %5300 = vrot.lane.b32.xlu0 %v779, 48
      %v5301 = vpop.permute.xlu0 %5300
      %5302 = vrot.lane.b32.xlu0 %v780, 48
      %v5303 = vpop.permute.xlu0 %5302
      %5304 = vrot.lane.b32.xlu0 %v781, 48
      %v5305 = vpop.permute.xlu0 %5304
      %5306 = vrot.lane.b32.xlu0 %v782, 48
      %v5307 = vpop.permute.xlu0 %5306
      %5308 = vrot.lane.b32.xlu0 %v783, 48
      %v5309 = vpop.permute.xlu0 %5308
      %v5320 = vsel %vm1193, %v5116, 0
      %v5323 = vsel %vm1193, %v5118, 0
      %v5326 = vsel %vm1193, %v5120, 0
      %v5329 = vsel %vm1193, %v5122, 0
      %v5332 = vsel %vm1193, %v5124, 0
      %v5335 = vsel %vm1193, %v5126, 0
      %v5338 = vsel %vm1193, %v5128, 0
      %v5341 = vsel %vm1193, %v5130, 0
      %v5344 = vsel %vm1193, %v5132, 0
      %5346 = vmatprep.subr.bf16.mxu0 0
      %5347 = vmatpush1.bf16.msra.mxu0 %v5293
      %5348 = vmatprep.subr.bf16.mxu0 0
      %5349 = vmatpush1.bf16.msra.mxu0 %v5295
      %5350 = vmatprep.subr.bf16.mxu0 0
      %5351 = vmatpush1.bf16.msra.mxu0 %v5297
      %5352 = vmatprep.subr.bf16.mxu0 0
      %5353 = vmatpush1.bf16.msra.mxu0 %v5299
      %5354 = vmatprep.subr.bf16.mxu0 0
      %5355 = vmatpush1.bf16.msra.mxu0 %v5301
      %5356 = vmatprep.subr.bf16.mxu0 0
      %5357 = vmatpush1.bf16.msra.mxu0 %v5303
      %5358 = vmatprep.subr.bf16.mxu0 0
      %5359 = vmatpush1.bf16.msra.mxu0 %v5305
      %5360 = vmatprep.subr.bf16.mxu0 0
      %5361 = vmatpush1.bf16.msra.mxu0 %v5307
      %5362 = vmatprep.subr.bf16.mxu0 0
      %5363 = vmatpush1.bf16.msra.mxu0 %v5309
      %5364 = vmatprep.subr.bf16.mxu0 0
      %5365 = vmatpush1.bf16.msra.mxu0 0
      %5366 = vmatprep.subr.bf16.mxu0 0
      %5367 = vmatpush1.bf16.msra.mxu0 0
      %5368 = vmatprep.subr.bf16.mxu0 0
      %5369 = vmatpush1.bf16.msra.mxu0 0
      %5370 = vmatprep.subr.bf16.mxu0 0
      %5371 = vmatpush1.bf16.msra.mxu0 0
      %5372 = vmatprep.subr.bf16.mxu0 0
      %5373 = vmatpush1.bf16.msra.mxu0 0
      %5374 = vmatprep.subr.bf16.mxu0 0
      %5375 = vmatpush1.bf16.msra.mxu0 0
      %5376 = vmatprep.subr.bf16.mxu0 0
      %5377 = vmatpush1.bf16.msra.mxu0 0
      %5378 = vmatprep.mubr.bf16.mxu0 %v5320
      %5379 = vmatmul.mubr.bf16.gmra.mrb[0].mxu0 %v5115
      %v5380 = vpop.f32.mrb[0].mxu0
      %v5381 = vadd.f32 0.0, %v5380
      %v5382 = vpop.f32.mrb[0].mxu0
      %v5383 = vpop.f32.mrb[0].mxu0
      %v5384 = vadd.f32 0.0, %v5383
      %v5385 = vpop.f32.mrb[0].mxu0
      %5386 = vmatprep.mubr.bf16.mxu0 %v5323
      %5387 = vmatmul.mubr.bf16.gmra.mrb[0].mxu0 %v5117
      %v5388 = vpop.f32.mrb[0].mxu0
      %v5389 = vadd.f32 0.0, %v5388
      %v5390 = vpop.f32.mrb[0].mxu0
      %v5391 = vpop.f32.mrb[0].mxu0
      %v5392 = vadd.f32 0.0, %v5391
      %v5393 = vpop.f32.mrb[0].mxu0
      %5394 = vmatprep.mubr.bf16.mxu0 %v5326
      %5395 = vmatmul.mubr.bf16.gmra.mrb[0].mxu0 %v5119
      %v5396 = vpop.f32.mrb[0].mxu0
      %v5397 = vadd.f32 0.0, %v5396
      %v5398 = vpop.f32.mrb[0].mxu0
      %v5399 = vpop.f32.mrb[0].mxu0
      %v5400 = vadd.f32 0.0, %v5399
      %v5401 = vpop.f32.mrb[0].mxu0
      %5402 = vmatprep.mubr.bf16.mxu0 %v5329
      %5403 = vmatmul.mubr.bf16.gmra.mrb[0].mxu0 %v5121
      %v5404 = vpop.f32.mrb[0].mxu0
      %v5405 = vadd.f32 0.0, %v5404
      %v5406 = vpop.f32.mrb[0].mxu0
      %v5407 = vpop.f32.mrb[0].mxu0
      %v5408 = vadd.f32 0.0, %v5407
      %v5409 = vpop.f32.mrb[0].mxu0
      %5410 = vmatprep.mubr.bf16.mxu0 %v5332
      %5411 = vmatmul.mubr.bf16.gmra.mrb[0].mxu0 %v5123
      %v5412 = vpop.f32.mrb[0].mxu0
      %v5413 = vadd.f32 0.0, %v5412
      %v5414 = vpop.f32.mrb[0].mxu0
      %v5415 = vpop.f32.mrb[0].mxu0
      %v5416 = vadd.f32 0.0, %v5415
      %v5417 = vpop.f32.mrb[0].mxu0
      %5418 = vmatprep.mubr.bf16.mxu0 %v5335
      %5419 = vmatmul.mubr.bf16.gmra.mrb[0].mxu0 %v5125
      %v5420 = vpop.f32.mrb[0].mxu0
      %v5421 = vadd.f32 0.0, %v5420
      %v5422 = vpop.f32.mrb[0].mxu0
      %v5423 = vpop.f32.mrb[0].mxu0
      %v5424 = vadd.f32 0.0, %v5423
      %v5425 = vpop.f32.mrb[0].mxu0
      %5426 = vmatprep.mubr.bf16.mxu0 %v5338
      %5427 = vmatmul.mubr.bf16.gmra.mrb[0].mxu0 %v5127
      %v5428 = vpop.f32.mrb[0].mxu0
      %v5429 = vadd.f32 0.0, %v5428
      %v5430 = vpop.f32.mrb[0].mxu0
      %v5431 = vpop.f32.mrb[0].mxu0
      %v5432 = vadd.f32 0.0, %v5431
      %v5433 = vpop.f32.mrb[0].mxu0
      %5434 = vmatprep.mubr.bf16.mxu0 %v5341
      %5435 = vmatmul.mubr.bf16.gmra.mrb[0].mxu0 %v5129
      %v5436 = vpop.f32.mrb[0].mxu0
      %v5437 = vadd.f32 0.0, %v5436
      %v5438 = vpop.f32.mrb[0].mxu0
      %v5439 = vpop.f32.mrb[0].mxu0
      %v5440 = vadd.f32 0.0, %v5439
      %v5441 = vpop.f32.mrb[0].mxu0
      %5442 = vmatprep.mubr.bf16.mxu0 %v5344
      %5443 = vmatmul.mubr.bf16.gmra.mrb[0].mxu0 %v5131
      %v5444 = vpop.f32.mrb[0].mxu0
      %v5445 = vadd.f32 0.0, %v5444
      %v5446 = vpop.f32.mrb[0].mxu0
      %v5447 = vpop.f32.mrb[0].mxu0
      %v5448 = vadd.f32 0.0, %v5447
      %v5449 = vpop.f32.mrb[0].mxu0
      %5450 = vdwg.mxu0
      %v5451 = vpack.c.bf16 %v5225, %v5222
      %v5452 = vpack.c.bf16 %v5233, %v5230
      %v5453 = vpack.c.bf16 %v5241, %v5238
      %v5454 = vpack.c.bf16 %v5249, %v5246
      %v5455 = vpack.c.bf16 %v5257, %v5254
      %v5456 = vpack.c.bf16 %v5265, %v5262
      %v5457 = vpack.c.bf16 %v5273, %v5270
      %v5458 = vpack.c.bf16 %v5281, %v5278
      %v5459 = vpack.c.bf16 %v5289, %v5286
      %v5460 = vpack.c.bf16 %v5384, %v5381
      %v5461 = vpack.c.bf16 %v5392, %v5389
      %v5462 = vpack.c.bf16 %v5400, %v5397
      %v5463 = vpack.c.bf16 %v5408, %v5405
      %v5464 = vpack.c.bf16 %v5416, %v5413
      %v5465 = vpack.c.bf16 %v5424, %v5421
      %v5466 = vpack.c.bf16 %v5432, %v5429
      %v5467 = vpack.c.bf16 %v5440, %v5437
      %v5468 = vpack.c.bf16 %v5448, %v5445
      %v5469 = vpack.c.bf16 %v764, %v764
      %v5471 = vsel %vm811, %v5451, 0
      %v5474 = vsel %vm811, %v5452, 0
      %v5477 = vsel %vm811, %v5453, 0
      %v5480 = vsel %vm811, %v5454, 0
      %v5483 = vsel %vm811, %v5455, 0
      %v5486 = vsel %vm811, %v5456, 0
      %v5489 = vsel %vm811, %v5457, 0
      %v5492 = vsel %vm811, %v5458, 0
      %v5495 = vsel %vm811, %v5459, 0
      %v5498 = vsel %vm811, %v5460, 0
      %v5501 = vsel %vm811, %v5461, 0
      %v5504 = vsel %vm811, %v5462, 0
      %v5507 = vsel %vm811, %v5463, 0
      %v5510 = vsel %vm811, %v5464, 0
      %v5513 = vsel %vm811, %v5465, 0
      %v5516 = vsel %vm811, %v5466, 0
      %v5519 = vsel %vm811, %v5467, 0
      %v5522 = vsel %vm811, %v5468, 0
      %v5525 = vsel %vm3644, %v5469, 0
      %5527 = vmatprep.subr.bf16.mxu0 0
      %5528 = vmatpush1.bf16.msra.mxu0 %v5525
      %5529 = vmatprep.subr.bf16.mxu0 0
      %5530 = vmatpush1.bf16.msra.mxu0 0
      %5531 = vmatprep.subr.bf16.mxu0 0
      %5532 = vmatpush1.bf16.msra.mxu0 0
      %5533 = vmatprep.subr.bf16.mxu0 0
      %5534 = vmatpush1.bf16.msra.mxu0 0
      %5535 = vmatprep.subr.bf16.mxu0 0
      %5536 = vmatpush1.bf16.msra.mxu0 0
      %5537 = vmatprep.subr.bf16.mxu0 0
      %5538 = vmatpush1.bf16.msra.mxu0 0
      %5539 = vmatprep.subr.bf16.mxu0 0
      %5540 = vmatpush1.bf16.msra.mxu0 0
      %5541 = vmatprep.subr.bf16.mxu0 0
      %5542 = vmatpush1.bf16.msra.mxu0 0
      %5543 = vmatprep.subr.bf16.mxu0 0
      %5544 = vmatpush1.bf16.msra.mxu0 0
      %5545 = vmatprep.subr.bf16.mxu0 0
      %5546 = vmatpush1.bf16.msra.mxu0 0
      %5547 = vmatprep.subr.bf16.mxu0 0
      %5548 = vmatpush1.bf16.msra.mxu0 0
      %5549 = vmatprep.subr.bf16.mxu0 0
      %5550 = vmatpush1.bf16.msra.mxu0 0
      %5551 = vmatprep.subr.bf16.mxu0 0
      %5552 = vmatpush1.bf16.msra.mxu0 0
      %5553 = vmatprep.subr.bf16.mxu0 0
      %5554 = vmatpush1.bf16.msra.mxu0 0
      %5555 = vmatprep.subr.bf16.mxu0 0
      %5556 = vmatpush1.bf16.msra.mxu0 0
      %5557 = vmatprep.subr.bf16.mxu0 0
      %5558 = vmatpush1.bf16.msra.mxu0 0
      %5559 = vmatprep.mubr.bf16.mxu0 0
      %5560 = vmatmul.mubr.bf16.gmra.mrb[0].mxu0 %v5471
      %v5561 = vpop.f32.mrb[0].mxu0
      %v5562 = vadd.f32 0.0, %v5561
      %v5563 = vpop.f32.mrb[0].mxu0
      %v5564 = vpop.f32.mrb[0].mxu0
      %v5565 = vadd.f32 0.0, %v5564
      %v5566 = vpop.f32.mrb[0].mxu0
      %5567 = vmatprep.mubr.bf16.mxu0 0
      %5568 = vmatmul.mubr.bf16.gmra.mrb[0].mxu0 %v5474
      %v5569 = vpop.f32.mrb[0].mxu0
      %v5570 = vadd.f32 0.0, %v5569
      %v5571 = vpop.f32.mrb[0].mxu0
      %v5572 = vpop.f32.mrb[0].mxu0
      %v5573 = vadd.f32 0.0, %v5572
      %v5574 = vpop.f32.mrb[0].mxu0
      %5575 = vmatprep.mubr.bf16.mxu0 0
      %5576 = vmatmul.mubr.bf16.gmra.mrb[0].mxu0 %v5477
      %v5577 = vpop.f32.mrb[0].mxu0
      %v5578 = vadd.f32 0.0, %v5577
      %v5579 = vpop.f32.mrb[0].mxu0
      %v5580 = vpop.f32.mrb[0].mxu0
      %v5581 = vadd.f32 0.0, %v5580
      %v5582 = vpop.f32.mrb[0].mxu0
      %5583 = vmatprep.mubr.bf16.mxu0 0
      %5584 = vmatmul.mubr.bf16.gmra.mrb[0].mxu0 %v5480
      %v5585 = vpop.f32.mrb[0].mxu0
      %v5586 = vadd.f32 0.0, %v5585
      %v5587 = vpop.f32.mrb[0].mxu0
      %v5588 = vpop.f32.mrb[0].mxu0
      %v5589 = vadd.f32 0.0, %v5588
      %v5590 = vpop.f32.mrb[0].mxu0
      %5591 = vmatprep.mubr.bf16.mxu0 0
      %5592 = vmatmul.mubr.bf16.gmra.mrb[0].mxu0 %v5483
      %v5593 = vpop.f32.mrb[0].mxu0
      %v5594 = vadd.f32 0.0, %v5593
      %v5595 = vpop.f32.mrb[0].mxu0
      %v5596 = vpop.f32.mrb[0].mxu0
      %v5597 = vadd.f32 0.0, %v5596
      %v5598 = vpop.f32.mrb[0].mxu0
      %5599 = vmatprep.mubr.bf16.mxu0 0
      %5600 = vmatmul.mubr.bf16.gmra.mrb[0].mxu0 %v5486
      %v5601 = vpop.f32.mrb[0].mxu0
      %v5602 = vadd.f32 0.0, %v5601
      %v5603 = vpop.f32.mrb[0].mxu0
      %v5604 = vpop.f32.mrb[0].mxu0
      %v5605 = vadd.f32 0.0, %v5604
      %v5606 = vpop.f32.mrb[0].mxu0
      %5607 = vmatprep.mubr.bf16.mxu0 0
      %5608 = vmatmul.mubr.bf16.gmra.mrb[0].mxu0 %v5489
      %v5609 = vpop.f32.mrb[0].mxu0
      %v5610 = vadd.f32 0.0, %v5609
      %v5611 = vpop.f32.mrb[0].mxu0
      %v5612 = vpop.f32.mrb[0].mxu0
      %v5613 = vadd.f32 0.0, %v5612
      %v5614 = vpop.f32.mrb[0].mxu0
      %5615 = vmatprep.mubr.bf16.mxu0 0
      %5616 = vmatmul.mubr.bf16.gmra.mrb[0].mxu0 %v5492
      %v5617 = vpop.f32.mrb[0].mxu0
      %v5618 = vadd.f32 0.0, %v5617
      %v5619 = vpop.f32.mrb[0].mxu0
      %v5620 = vpop.f32.mrb[0].mxu0
      %v5621 = vadd.f32 0.0, %v5620
      %v5622 = vpop.f32.mrb[0].mxu0
      %5623 = vmatprep.mubr.bf16.mxu0 0
      %5624 = vmatmul.mubr.bf16.gmra.mrb[0].mxu0 %v5495
      %v5625 = vpop.f32.mrb[0].mxu0
      %v5626 = vadd.f32 0.0, %v5625
      %v5627 = vpop.f32.mrb[0].mxu0
      %v5628 = vpop.f32.mrb[0].mxu0
      %v5629 = vadd.f32 0.0, %v5628
      %v5630 = vpop.f32.mrb[0].mxu0
      %5631 = vmatprep.mubr.bf16.mxu0 0
      %5632 = vmatmul.mubr.bf16.gmra.mrb[0].mxu0 %v5498
      %v5633 = vpop.f32.mrb[0].mxu0
      %v5634 = vadd.f32 0.0, %v5633
      %v5635 = vpop.f32.mrb[0].mxu0
      %v5636 = vpop.f32.mrb[0].mxu0
      %v5637 = vadd.f32 0.0, %v5636
      %v5638 = vpop.f32.mrb[0].mxu0
      %5639 = vmatprep.mubr.bf16.mxu0 0
      %5640 = vmatmul.mubr.bf16.gmra.mrb[0].mxu0 %v5501
      %v5641 = vpop.f32.mrb[0].mxu0
      %v5642 = vadd.f32 0.0, %v5641
      %v5643 = vpop.f32.mrb[0].mxu0
      %v5644 = vpop.f32.mrb[0].mxu0
      %v5645 = vadd.f32 0.0, %v5644
      %v5646 = vpop.f32.mrb[0].mxu0
      %5647 = vmatprep.mubr.bf16.mxu0 0
      %5648 = vmatmul.mubr.bf16.gmra.mrb[0].mxu0 %v5504
      %v5649 = vpop.f32.mrb[0].mxu0
      %v5650 = vadd.f32 0.0, %v5649
      %v5651 = vpop.f32.mrb[0].mxu0
      %v5652 = vpop.f32.mrb[0].mxu0
      %v5653 = vadd.f32 0.0, %v5652
      %v5654 = vpop.f32.mrb[0].mxu0
      %5655 = vmatprep.mubr.bf16.mxu0 0
      %5656 = vmatmul.mubr.bf16.gmra.mrb[0].mxu0 %v5507
      %v5657 = vpop.f32.mrb[0].mxu0
      %v5658 = vadd.f32 0.0, %v5657
      %v5659 = vpop.f32.mrb[0].mxu0
      %v5660 = vpop.f32.mrb[0].mxu0
      %v5661 = vadd.f32 0.0, %v5660
      %v5662 = vpop.f32.mrb[0].mxu0
      %5663 = vmatprep.mubr.bf16.mxu0 0
      %5664 = vmatmul.mubr.bf16.gmra.mrb[0].mxu0 %v5510
      %v5665 = vpop.f32.mrb[0].mxu0
      %v5666 = vadd.f32 0.0, %v5665
      %v5667 = vpop.f32.mrb[0].mxu0
      %v5668 = vpop.f32.mrb[0].mxu0
      %v5669 = vadd.f32 0.0, %v5668
      %v5670 = vpop.f32.mrb[0].mxu0
      %5671 = vmatprep.mubr.bf16.mxu0 0
      %5672 = vmatmul.mubr.bf16.gmra.mrb[0].mxu0 %v5513
      %v5673 = vpop.f32.mrb[0].mxu0
      %v5674 = vadd.f32 0.0, %v5673
      %v5675 = vpop.f32.mrb[0].mxu0
      %v5676 = vpop.f32.mrb[0].mxu0
      %v5677 = vadd.f32 0.0, %v5676
      %v5678 = vpop.f32.mrb[0].mxu0
      %5679 = vmatprep.mubr.bf16.mxu0 0
      %5680 = vmatmul.mubr.bf16.gmra.mrb[0].mxu0 %v5516
      %v5681 = vpop.f32.mrb[0].mxu0
      %v5682 = vadd.f32 0.0, %v5681
      %v5683 = vpop.f32.mrb[0].mxu0
      %v5684 = vpop.f32.mrb[0].mxu0
      %v5685 = vadd.f32 0.0, %v5684
      %v5686 = vpop.f32.mrb[0].mxu0
      %5687 = vmatprep.mubr.bf16.mxu0 0
      %5688 = vmatmul.mubr.bf16.gmra.mrb[0].mxu0 %v5519
      %v5689 = vpop.f32.mrb[0].mxu0
      %v5690 = vadd.f32 0.0, %v5689
      %v5691 = vpop.f32.mrb[0].mxu0
      %v5692 = vpop.f32.mrb[0].mxu0
      %v5693 = vadd.f32 0.0, %v5692
      %v5694 = vpop.f32.mrb[0].mxu0
      %5695 = vmatprep.mubr.bf16.mxu0 0
      %5696 = vmatmul.mubr.bf16.gmra.mrb[0].mxu0 %v5522
      %v5697 = vpop.f32.mrb[0].mxu0
      %v5698 = vadd.f32 0.0, %v5697
      %v5699 = vpop.f32.mrb[0].mxu0
      %v5700 = vpop.f32.mrb[0].mxu0
      %v5701 = vadd.f32 0.0, %v5700
      %v5702 = vpop.f32.mrb[0].mxu0
      %5703 = vdwg.mxu0
      %v5704 = vadd.f32 %v3917, %v5562
      %v5705 = vadd.f32 %v3920, %v5565
      %v5706 = vadd.f32 %v3925, %v5570
      %v5707 = vadd.f32 %v3928, %v5573
      %v5708 = vadd.f32 %v3933, %v5578
      %v5709 = vadd.f32 %v3936, %v5581
      %v5710 = vadd.f32 %v3941, %v5586
      %v5711 = vadd.f32 %v3944, %v5589
      %v5712 = vadd.f32 %v3949, %v5594
      %v5713 = vadd.f32 %v3952, %v5597
      %v5714 = vadd.f32 %v3957, %v5602
      %v5715 = vadd.f32 %v3960, %v5605
      %v5716 = vadd.f32 %v3965, %v5610
      %v5717 = vadd.f32 %v3968, %v5613
      %v5718 = vadd.f32 %v3973, %v5618
      %v5719 = vadd.f32 %v3976, %v5621
      %v5720 = vadd.f32 %v3981, %v5626
      %v5721 = vadd.f32 %v3984, %v5629
      %v5722 = vadd.f32 %v3989, %v5634
      %v5723 = vadd.f32 %v3992, %v5637
      %v5724 = vadd.f32 %v3997, %v5642
      %v5725 = vadd.f32 %v4000, %v5645
      %v5726 = vadd.f32 %v4005, %v5650
      %v5727 = vadd.f32 %v4008, %v5653
      %v5728 = vadd.f32 %v4013, %v5658
      %v5729 = vadd.f32 %v4016, %v5661
      %v5730 = vadd.f32 %v4021, %v5666
      %v5731 = vadd.f32 %v4024, %v5669
      %v5732 = vadd.f32 %v4029, %v5674
      %v5733 = vadd.f32 %v4032, %v5677
      %v5734 = vadd.f32 %v4037, %v5682
      %v5735 = vadd.f32 %v4040, %v5685
      %v5736 = vadd.f32 %v4045, %v5690
      %v5737 = vadd.f32 %v4048, %v5693
      %v5738 = vadd.f32 %v4053, %v5698
      %v5739 = vadd.f32 %v4056, %v5701
      %5740 = vrot.lane.b32.xlu0 %v766, 104
      %v5741 = vpop.permute.xlu0 %5740
      %5742 = vrot.lane.b32.xlu0 %v767, 104
      %v5743 = vpop.permute.xlu0 %5742
      %5744 = vrot.lane.b32.xlu0 %v768, 104
      %v5745 = vpop.permute.xlu0 %5744
      %5746 = vrot.lane.b32.xlu0 %v769, 104
      %v5747 = vpop.permute.xlu0 %5746
      %5748 = vrot.lane.b32.xlu0 %v770, 104
      %v5749 = vpop.permute.xlu0 %5748
      %5750 = vrot.lane.b32.xlu0 %v771, 104
      %v5751 = vpop.permute.xlu0 %5750
      %5752 = vrot.lane.b32.xlu0 %v772, 104
      %v5753 = vpop.permute.xlu0 %5752
      %5754 = vrot.lane.b32.xlu0 %v773, 104
      %v5755 = vpop.permute.xlu0 %5754
      %5756 = vrot.lane.b32.xlu0 %v774, 104
      %v5757 = vpop.permute.xlu0 %5756
      %5758 = vrot.lane.b32.xlu0 %v766, 72
      %v5759 = vpop.permute.xlu0 %5758
      %5760 = vrot.lane.b32.xlu0 %v767, 72
      %v5761 = vpop.permute.xlu0 %5760
      %5762 = vrot.lane.b32.xlu0 %v768, 72
      %v5763 = vpop.permute.xlu0 %5762
      %5764 = vrot.lane.b32.xlu0 %v769, 72
      %v5765 = vpop.permute.xlu0 %5764
      %5766 = vrot.lane.b32.xlu0 %v770, 72
      %v5767 = vpop.permute.xlu0 %5766
      %5768 = vrot.lane.b32.xlu0 %v771, 72
      %v5769 = vpop.permute.xlu0 %5768
      %5770 = vrot.lane.b32.xlu0 %v772, 72
      %v5771 = vpop.permute.xlu0 %5770
      %5772 = vrot.lane.b32.xlu0 %v773, 72
      %v5773 = vpop.permute.xlu0 %5772
      %5774 = vrot.lane.b32.xlu0 %v774, 72
      %v5775 = vpop.permute.xlu0 %5774
      %v5777 = vsel %vm811, %v5741, 0
      %v5780 = vsel %vm811, %v5743, 0
      %v5783 = vsel %vm811, %v5745, 0
      %v5786 = vsel %vm811, %v5747, 0
      %v5789 = vsel %vm811, %v5749, 0
      %v5792 = vsel %vm811, %v5751, 0
      %v5795 = vsel %vm811, %v5753, 0
      %v5798 = vsel %vm811, %v5755, 0
      %v5801 = vsel %vm811, %v5757, 0
      %v5804 = vsel %vm811, %v5759, 0
      %v5807 = vsel %vm811, %v5761, 0
      %v5810 = vsel %vm811, %v5763, 0
      %v5813 = vsel %vm811, %v5765, 0
      %v5816 = vsel %vm811, %v5767, 0
      %v5819 = vsel %vm811, %v5769, 0
      %v5822 = vsel %vm811, %v5771, 0
      %v5825 = vsel %vm811, %v5773, 0
      %v5828 = vsel %vm811, %v5775, 0
      %5830 = vmatprep.subr.bf16.mxu0 0
      %5831 = vmatpush1.bf16.xpose.msra.mxu0 %v5804
      %5832 = vmatprep.subr.bf16.mxu0 0
      %5833 = vmatpush1.bf16.xpose.msra.mxu0 %v5807
      %5834 = vmatprep.subr.bf16.mxu0 0
      %5835 = vmatpush1.bf16.xpose.msra.mxu0 %v5810
      %5836 = vmatprep.subr.bf16.mxu0 0
      %5837 = vmatpush1.bf16.xpose.msra.mxu0 %v5813
      %5838 = vmatprep.subr.bf16.mxu0 0
      %5839 = vmatpush1.bf16.xpose.msra.mxu0 %v5816
      %5840 = vmatprep.subr.bf16.mxu0 0
      %5841 = vmatpush1.bf16.xpose.msra.mxu0 %v5819
      %5842 = vmatprep.subr.bf16.mxu0 0
      %5843 = vmatpush1.bf16.xpose.msra.mxu0 %v5822
      %5844 = vmatprep.subr.bf16.mxu0 0
      %5845 = vmatpush1.bf16.xpose.msra.mxu0 %v5825
      %5846 = vmatprep.subr.bf16.mxu0 0
      %5847 = vmatpush1.bf16.xpose.msra.mxu0 %v5828
      %5848 = vmatprep.subr.bf16.mxu0 0
      %5849 = vmatpush1.bf16.xpose.msra.mxu0 0
      %5850 = vmatprep.subr.bf16.mxu0 0
      %5851 = vmatpush1.bf16.xpose.msra.mxu0 0
      %5852 = vmatprep.subr.bf16.mxu0 0
      %5853 = vmatpush1.bf16.xpose.msra.mxu0 0
      %5854 = vmatprep.subr.bf16.mxu0 0
      %5855 = vmatpush1.bf16.xpose.msra.mxu0 0
      %5856 = vmatprep.subr.bf16.mxu0 0
      %5857 = vmatpush1.bf16.xpose.msra.mxu0 0
      %5858 = vmatprep.subr.bf16.mxu0 0
      %5859 = vmatpush1.bf16.xpose.msra.mxu0 0
      %5860 = vmatprep.subr.bf16.mxu0 0
      %5861 = vmatpush1.bf16.xpose.msra.mxu0 0
      %5862 = vmatprep.mubr.bf16.mxu0 0
      %5863 = vmatmul.mubr.bf16.gmra.mrb[0].mxu0 %v5777
      %v5864 = vpop.f32.mrb[0].mxu0
      %v5865 = vadd.f32 %v726, %v5864
      %v5866 = vpop.f32.mrb[0].mxu0
      %v5867 = vadd.f32 %v727, %v5866
      %v5868 = vpop.f32.mrb[0].mxu0
      %v5869 = vadd.f32 %v728, %v5868
      %v5870 = vpop.f32.mrb[0].mxu0
      %v5871 = vadd.f32 %v729, %v5870
      %5872 = vmatprep.mubr.bf16.mxu0 0
      %5873 = vmatmul.mubr.bf16.gmra.mrb[0].mxu0 %v5780
      %v5874 = vpop.f32.mrb[0].mxu0
      %v5875 = vadd.f32 %v730, %v5874
      %v5876 = vpop.f32.mrb[0].mxu0
      %v5877 = vadd.f32 %v731, %v5876
      %v5878 = vpop.f32.mrb[0].mxu0
      %v5879 = vadd.f32 %v732, %v5878
      %v5880 = vpop.f32.mrb[0].mxu0
      %v5881 = vadd.f32 %v733, %v5880
      %5882 = vmatprep.mubr.bf16.mxu0 0
      %5883 = vmatmul.mubr.bf16.gmra.mrb[0].mxu0 %v5783
      %v5884 = vpop.f32.mrb[0].mxu0
      %v5885 = vadd.f32 %v734, %v5884
      %v5886 = vpop.f32.mrb[0].mxu0
      %v5887 = vadd.f32 %v735, %v5886
      %v5888 = vpop.f32.mrb[0].mxu0
      %v5889 = vadd.f32 %v736, %v5888
      %v5890 = vpop.f32.mrb[0].mxu0
      %v5891 = vadd.f32 %v737, %v5890
      %5892 = vmatprep.mubr.bf16.mxu0 0
      %5893 = vmatmul.mubr.bf16.gmra.mrb[0].mxu0 %v5786
      %v5894 = vpop.f32.mrb[0].mxu0
      %v5895 = vadd.f32 %v738, %v5894
      %v5896 = vpop.f32.mrb[0].mxu0
      %v5897 = vadd.f32 %v739, %v5896
      %v5898 = vpop.f32.mrb[0].mxu0
      %v5899 = vadd.f32 %v740, %v5898
      %v5900 = vpop.f32.mrb[0].mxu0
      %v5901 = vadd.f32 %v741, %v5900
      %5902 = vmatprep.mubr.bf16.mxu0 0
      %5903 = vmatmul.mubr.bf16.gmra.mrb[0].mxu0 %v5789
      %v5904 = vpop.f32.mrb[0].mxu0
      %v5905 = vadd.f32 %v742, %v5904
      %v5906 = vpop.f32.mrb[0].mxu0
      %v5907 = vadd.f32 %v743, %v5906
      %v5908 = vpop.f32.mrb[0].mxu0
      %v5909 = vadd.f32 %v744, %v5908
      %v5910 = vpop.f32.mrb[0].mxu0
      %v5911 = vadd.f32 %v745, %v5910
      %5912 = vmatprep.mubr.bf16.mxu0 0
      %5913 = vmatmul.mubr.bf16.gmra.mrb[0].mxu0 %v5792
      %v5914 = vpop.f32.mrb[0].mxu0
      %v5915 = vadd.f32 %v746, %v5914
      %v5916 = vpop.f32.mrb[0].mxu0
      %v5917 = vadd.f32 %v747, %v5916
      %v5918 = vpop.f32.mrb[0].mxu0
      %v5919 = vadd.f32 %v748, %v5918
      %v5920 = vpop.f32.mrb[0].mxu0
      %v5921 = vadd.f32 %v749, %v5920
      %5922 = vmatprep.mubr.bf16.mxu0 0
      %5923 = vmatmul.mubr.bf16.gmra.mrb[0].mxu0 %v5795
      %v5924 = vpop.f32.mrb[0].mxu0
      %v5925 = vadd.f32 %v750, %v5924
      %v5926 = vpop.f32.mrb[0].mxu0
      %v5927 = vadd.f32 %v751, %v5926
      %v5928 = vpop.f32.mrb[0].mxu0
      %v5929 = vadd.f32 %v752, %v5928
      %v5930 = vpop.f32.mrb[0].mxu0
      %v5931 = vadd.f32 %v753, %v5930
      %5932 = vmatprep.mubr.bf16.mxu0 0
      %5933 = vmatmul.mubr.bf16.gmra.mrb[0].mxu0 %v5798
      %v5934 = vpop.f32.mrb[0].mxu0
      %v5935 = vadd.f32 %v754, %v5934
      %v5936 = vpop.f32.mrb[0].mxu0
      %v5937 = vadd.f32 %v755, %v5936
      %v5938 = vpop.f32.mrb[0].mxu0
      %v5939 = vadd.f32 %v756, %v5938
      %v5940 = vpop.f32.mrb[0].mxu0
      %v5941 = vadd.f32 %v757, %v5940
      %5942 = vmatprep.mubr.bf16.mxu0 0
      %5943 = vmatmul.mubr.bf16.gmra.mrb[0].mxu0 %v5801
      %v5944 = vpop.f32.mrb[0].mxu0
      %v5945 = vadd.f32 %v758, %v5944
      %v5946 = vpop.f32.mrb[0].mxu0
      %v5947 = vadd.f32 %v759, %v5946
      %v5948 = vpop.f32.mrb[0].mxu0
      %v5949 = vadd.f32 %v760, %v5948
      %v5950 = vpop.f32.mrb[0].mxu0
      %v5951 = vadd.f32 %v761, %v5950
      %5952 = vdwg.mxu0
      %5953 = vrot.lane.b32.xlu0 %v775, 104
      %v5954 = vpop.permute.xlu0 %5953
      %5955 = vrot.lane.b32.xlu0 %v776, 104
      %v5956 = vpop.permute.xlu0 %5955
      %5957 = vrot.lane.b32.xlu0 %v777, 104
      %v5958 = vpop.permute.xlu0 %5957
      %5959 = vrot.lane.b32.xlu0 %v778, 104
      %v5960 = vpop.permute.xlu0 %5959
      %5961 = vrot.lane.b32.xlu0 %v779, 104
      %v5962 = vpop.permute.xlu0 %5961
      %5963 = vrot.lane.b32.xlu0 %v780, 104
      %v5964 = vpop.permute.xlu0 %5963
      %5965 = vrot.lane.b32.xlu0 %v781, 104
      %v5966 = vpop.permute.xlu0 %5965
      %5967 = vrot.lane.b32.xlu0 %v782, 104
      %v5968 = vpop.permute.xlu0 %5967
      %5969 = vrot.lane.b32.xlu0 %v783, 104
      %v5970 = vpop.permute.xlu0 %5969
      %5971 = vrot.lane.b32.xlu0 %v775, 72
      %v5972 = vpop.permute.xlu0 %5971
      %5973 = vrot.lane.b32.xlu0 %v776, 72
      %v5974 = vpop.permute.xlu0 %5973
      %5975 = vrot.lane.b32.xlu0 %v777, 72
      %v5976 = vpop.permute.xlu0 %5975
      %5977 = vrot.lane.b32.xlu0 %v778, 72
      %v5978 = vpop.permute.xlu0 %5977
      %5979 = vrot.lane.b32.xlu0 %v779, 72
      %v5980 = vpop.permute.xlu0 %5979
      %5981 = vrot.lane.b32.xlu0 %v780, 72
      %v5982 = vpop.permute.xlu0 %5981
      %5983 = vrot.lane.b32.xlu0 %v781, 72
      %v5984 = vpop.permute.xlu0 %5983
      %5985 = vrot.lane.b32.xlu0 %v782, 72
      %v5986 = vpop.permute.xlu0 %5985
      %5987 = vrot.lane.b32.xlu0 %v783, 72
      %v5988 = vpop.permute.xlu0 %5987
      %v5990 = vsel %vm811, %v5954, 0
      %v5993 = vsel %vm811, %v5956, 0
      %v5996 = vsel %vm811, %v5958, 0
      %v5999 = vsel %vm811, %v5960, 0
      %v6002 = vsel %vm811, %v5962, 0
      %v6005 = vsel %vm811, %v5964, 0
      %v6008 = vsel %vm811, %v5966, 0
      %v6011 = vsel %vm811, %v5968, 0
      %v6014 = vsel %vm811, %v5970, 0
      %v6017 = vsel %vm811, %v5972, 0
      %v6020 = vsel %vm811, %v5974, 0
      %v6023 = vsel %vm811, %v5976, 0
      %v6026 = vsel %vm811, %v5978, 0
      %v6029 = vsel %vm811, %v5980, 0
      %v6032 = vsel %vm811, %v5982, 0
      %v6035 = vsel %vm811, %v5984, 0
      %v6038 = vsel %vm811, %v5986, 0
      %v6041 = vsel %vm811, %v5988, 0
      %6043 = vmatprep.subr.bf16.mxu0 0
      %6044 = vmatpush1.bf16.xpose.msra.mxu0 %v6017
      %6045 = vmatprep.subr.bf16.mxu0 0
      %6046 = vmatpush1.bf16.xpose.msra.mxu0 %v6020
      %6047 = vmatprep.subr.bf16.mxu0 0
      %6048 = vmatpush1.bf16.xpose.msra.mxu0 %v6023
      %6049 = vmatprep.subr.bf16.mxu0 0
      %6050 = vmatpush1.bf16.xpose.msra.mxu0 %v6026
      %6051 = vmatprep.subr.bf16.mxu0 0
      %6052 = vmatpush1.bf16.xpose.msra.mxu0 %v6029
      %6053 = vmatprep.subr.bf16.mxu0 0
      %6054 = vmatpush1.bf16.xpose.msra.mxu0 %v6032
      %6055 = vmatprep.subr.bf16.mxu0 0
      %6056 = vmatpush1.bf16.xpose.msra.mxu0 %v6035
      %6057 = vmatprep.subr.bf16.mxu0 0
      %6058 = vmatpush1.bf16.xpose.msra.mxu0 %v6038
      %6059 = vmatprep.subr.bf16.mxu0 0
      %6060 = vmatpush1.bf16.xpose.msra.mxu0 %v6041
      %6061 = vmatprep.subr.bf16.mxu0 0
      %6062 = vmatpush1.bf16.xpose.msra.mxu0 0
      %6063 = vmatprep.subr.bf16.mxu0 0
      %6064 = vmatpush1.bf16.xpose.msra.mxu0 0
      %6065 = vmatprep.subr.bf16.mxu0 0
      %6066 = vmatpush1.bf16.xpose.msra.mxu0 0
      %6067 = vmatprep.subr.bf16.mxu0 0
      %6068 = vmatpush1.bf16.xpose.msra.mxu0 0
      %6069 = vmatprep.subr.bf16.mxu0 0
      %6070 = vmatpush1.bf16.xpose.msra.mxu0 0
      %6071 = vmatprep.subr.bf16.mxu0 0
      %6072 = vmatpush1.bf16.xpose.msra.mxu0 0
      %6073 = vmatprep.subr.bf16.mxu0 0
      %6074 = vmatpush1.bf16.xpose.msra.mxu0 0
      %6075 = vmatprep.mubr.bf16.mxu0 0
      %6076 = vmatmul.mubr.bf16.gmra.mrb[0].mxu0 %v5990
      %v6077 = vpop.f32.mrb[0].mxu0
      %v6078 = vadd.f32 %v726, %v6077
      %v6079 = vpop.f32.mrb[0].mxu0
      %v6080 = vadd.f32 %v727, %v6079
      %v6081 = vpop.f32.mrb[0].mxu0
      %v6082 = vadd.f32 %v728, %v6081
      %v6083 = vpop.f32.mrb[0].mxu0
      %v6084 = vadd.f32 %v729, %v6083
      %6085 = vmatprep.mubr.bf16.mxu0 0
      %6086 = vmatmul.mubr.bf16.gmra.mrb[0].mxu0 %v5993
      %v6087 = vpop.f32.mrb[0].mxu0
      %v6088 = vadd.f32 %v730, %v6087
      %v6089 = vpop.f32.mrb[0].mxu0
      %v6090 = vadd.f32 %v731, %v6089
      %v6091 = vpop.f32.mrb[0].mxu0
      %v6092 = vadd.f32 %v732, %v6091
      %v6093 = vpop.f32.mrb[0].mxu0
      %v6094 = vadd.f32 %v733, %v6093
      %6095 = vmatprep.mubr.bf16.mxu0 0
      %6096 = vmatmul.mubr.bf16.gmra.mrb[0].mxu0 %v5996
      %v6097 = vpop.f32.mrb[0].mxu0
      %v6098 = vadd.f32 %v734, %v6097
      %v6099 = vpop.f32.mrb[0].mxu0
      %v6100 = vadd.f32 %v735, %v6099
      %v6101 = vpop.f32.mrb[0].mxu0
      %v6102 = vadd.f32 %v736, %v6101
      %v6103 = vpop.f32.mrb[0].mxu0
      %v6104 = vadd.f32 %v737, %v6103
      %6105 = vmatprep.mubr.bf16.mxu0 0
      %6106 = vmatmul.mubr.bf16.gmra.mrb[0].mxu0 %v5999
      %v6107 = vpop.f32.mrb[0].mxu0
      %v6108 = vadd.f32 %v738, %v6107
      %v6109 = vpop.f32.mrb[0].mxu0
      %v6110 = vadd.f32 %v739, %v6109
      %v6111 = vpop.f32.mrb[0].mxu0
      %v6112 = vadd.f32 %v740, %v6111
      %v6113 = vpop.f32.mrb[0].mxu0
      %v6114 = vadd.f32 %v741, %v6113
      %6115 = vmatprep.mubr.bf16.mxu0 0
      %6116 = vmatmul.mubr.bf16.gmra.mrb[0].mxu0 %v6002
      %v6117 = vpop.f32.mrb[0].mxu0
      %v6118 = vadd.f32 %v742, %v6117
      %v6119 = vpop.f32.mrb[0].mxu0
      %v6120 = vadd.f32 %v743, %v6119
      %v6121 = vpop.f32.mrb[0].mxu0
      %v6122 = vadd.f32 %v744, %v6121
      %v6123 = vpop.f32.mrb[0].mxu0
      %v6124 = vadd.f32 %v745, %v6123
      %6125 = vmatprep.mubr.bf16.mxu0 0
      %6126 = vmatmul.mubr.bf16.gmra.mrb[0].mxu0 %v6005
      %v6127 = vpop.f32.mrb[0].mxu0
      %v6128 = vadd.f32 %v746, %v6127
      %v6129 = vpop.f32.mrb[0].mxu0
      %v6130 = vadd.f32 %v747, %v6129
      %v6131 = vpop.f32.mrb[0].mxu0
      %v6132 = vadd.f32 %v748, %v6131
      %v6133 = vpop.f32.mrb[0].mxu0
      %v6134 = vadd.f32 %v749, %v6133
      %6135 = vmatprep.mubr.bf16.mxu0 0
      %6136 = vmatmul.mubr.bf16.gmra.mrb[0].mxu0 %v6008
      %v6137 = vpop.f32.mrb[0].mxu0
      %v6138 = vadd.f32 %v750, %v6137
      %v6139 = vpop.f32.mrb[0].mxu0
      %v6140 = vadd.f32 %v751, %v6139
      %v6141 = vpop.f32.mrb[0].mxu0
      %v6142 = vadd.f32 %v752, %v6141
      %v6143 = vpop.f32.mrb[0].mxu0
      %v6144 = vadd.f32 %v753, %v6143
      %6145 = vmatprep.mubr.bf16.mxu0 0
      %6146 = vmatmul.mubr.bf16.gmra.mrb[0].mxu0 %v6011
      %v6147 = vpop.f32.mrb[0].mxu0
      %v6148 = vadd.f32 %v754, %v6147
      %v6149 = vpop.f32.mrb[0].mxu0
      %v6150 = vadd.f32 %v755, %v6149
      %v6151 = vpop.f32.mrb[0].mxu0
      %v6152 = vadd.f32 %v756, %v6151
      %v6153 = vpop.f32.mrb[0].mxu0
      %v6154 = vadd.f32 %v757, %v6153
      %6155 = vmatprep.mubr.bf16.mxu0 0
      %6156 = vmatmul.mubr.bf16.gmra.mrb[0].mxu0 %v6014
      %v6157 = vpop.f32.mrb[0].mxu0
      %v6158 = vadd.f32 %v758, %v6157
      %v6159 = vpop.f32.mrb[0].mxu0
      %v6160 = vadd.f32 %v759, %v6159
      %v6161 = vpop.f32.mrb[0].mxu0
      %v6162 = vadd.f32 %v760, %v6161
      %v6163 = vpop.f32.mrb[0].mxu0
      %v6164 = vadd.f32 %v761, %v6163
      %6165 = vdwg.mxu0
      %v6166 = vsel %vm1193, %v5867, -inf
      %v6167 = vmax.f32 %v5865, %v6166
      %6168 = vmax.xlane.f32.xlu0 %v6167
      %v6169 = vpop.xlane.xlu0 %6168
      %v6170 = vsel %vm1193, %v5871, -inf
      %v6171 = vmax.f32 %v5869, %v6170
      %6172 = vmax.xlane.f32.xlu0 %v6171
      %v6173 = vpop.xlane.xlu0 %6172
      %v6174 = vsel %vm1193, %v5877, -inf
      %v6175 = vmax.f32 %v5875, %v6174
      %6176 = vmax.xlane.f32.xlu0 %v6175
      %v6177 = vpop.xlane.xlu0 %6176
      %v6178 = vsel %vm1193, %v5881, -inf
      %v6179 = vmax.f32 %v5879, %v6178
      %6180 = vmax.xlane.f32.xlu0 %v6179
      %v6181 = vpop.xlane.xlu0 %6180
      %v6182 = vsel %vm1193, %v5887, -inf
      %v6183 = vmax.f32 %v5885, %v6182
      %6184 = vmax.xlane.f32.xlu0 %v6183
      %v6185 = vpop.xlane.xlu0 %6184
      %v6186 = vsel %vm1193, %v5891, -inf
      %v6187 = vmax.f32 %v5889, %v6186
      %6188 = vmax.xlane.f32.xlu0 %v6187
      %v6189 = vpop.xlane.xlu0 %6188
      %v6190 = vsel %vm1193, %v5897, -inf
      %v6191 = vmax.f32 %v5895, %v6190
      %6192 = vmax.xlane.f32.xlu0 %v6191
      %v6193 = vpop.xlane.xlu0 %6192
      %v6194 = vsel %vm1193, %v5901, -inf
      %v6195 = vmax.f32 %v5899, %v6194
      %6196 = vmax.xlane.f32.xlu0 %v6195
      %v6197 = vpop.xlane.xlu0 %6196
      %v6198 = vsel %vm1193, %v5907, -inf
      %v6199 = vmax.f32 %v5905, %v6198
      %6200 = vmax.xlane.f32.xlu0 %v6199
      %v6201 = vpop.xlane.xlu0 %6200
      %v6202 = vsel %vm1193, %v5911, -inf
      %v6203 = vmax.f32 %v5909, %v6202
      %6204 = vmax.xlane.f32.xlu0 %v6203
      %v6205 = vpop.xlane.xlu0 %6204
      %v6206 = vsel %vm1193, %v5917, -inf
      %v6207 = vmax.f32 %v5915, %v6206
      %6208 = vmax.xlane.f32.xlu0 %v6207
      %v6209 = vpop.xlane.xlu0 %6208
      %v6210 = vsel %vm1193, %v5921, -inf
      %v6211 = vmax.f32 %v5919, %v6210
      %6212 = vmax.xlane.f32.xlu0 %v6211
      %v6213 = vpop.xlane.xlu0 %6212
      %v6214 = vsel %vm1193, %v5927, -inf
      %v6215 = vmax.f32 %v5925, %v6214
      %6216 = vmax.xlane.f32.xlu0 %v6215
      %v6217 = vpop.xlane.xlu0 %6216
      %v6218 = vsel %vm1193, %v5931, -inf
      %v6219 = vmax.f32 %v5929, %v6218
      %6220 = vmax.xlane.f32.xlu0 %v6219
      %v6221 = vpop.xlane.xlu0 %6220
      %v6222 = vsel %vm1193, %v5937, -inf
      %v6223 = vmax.f32 %v5935, %v6222
      %6224 = vmax.xlane.f32.xlu0 %v6223
      %v6225 = vpop.xlane.xlu0 %6224
      %v6226 = vsel %vm1193, %v5941, -inf
      %v6227 = vmax.f32 %v5939, %v6226
      %6228 = vmax.xlane.f32.xlu0 %v6227
      %v6229 = vpop.xlane.xlu0 %6228
      %v6230 = vsel %vm1193, %v5947, -inf
      %v6231 = vmax.f32 %v5945, %v6230
      %6232 = vmax.xlane.f32.xlu0 %v6231
      %v6233 = vpop.xlane.xlu0 %6232
      %v6234 = vsel %vm1193, %v5951, -inf
      %v6235 = vmax.f32 %v5949, %v6234
      %6236 = vmax.xlane.f32.xlu0 %v6235
      %v6237 = vpop.xlane.xlu0 %6236
      %v6238 = vsel %vm1193, %v6080, -inf
      %v6239 = vmax.f32 %v6078, %v6238
      %6240 = vmax.xlane.f32.xlu0 %v6239
      %v6241 = vpop.xlane.xlu0 %6240
      %v6242 = vsel %vm1193, %v6084, -inf
      %v6243 = vmax.f32 %v6082, %v6242
      %6244 = vmax.xlane.f32.xlu0 %v6243
      %v6245 = vpop.xlane.xlu0 %6244
      %v6246 = vsel %vm1193, %v6090, -inf
      %v6247 = vmax.f32 %v6088, %v6246
      %6248 = vmax.xlane.f32.xlu0 %v6247
      %v6249 = vpop.xlane.xlu0 %6248
      %v6250 = vsel %vm1193, %v6094, -inf
      %v6251 = vmax.f32 %v6092, %v6250
      %6252 = vmax.xlane.f32.xlu0 %v6251
      %v6253 = vpop.xlane.xlu0 %6252
      %v6254 = vsel %vm1193, %v6100, -inf
      %v6255 = vmax.f32 %v6098, %v6254
      %6256 = vmax.xlane.f32.xlu0 %v6255
      %v6257 = vpop.xlane.xlu0 %6256
      %v6258 = vsel %vm1193, %v6104, -inf
      %v6259 = vmax.f32 %v6102, %v6258
      %6260 = vmax.xlane.f32.xlu0 %v6259
      %v6261 = vpop.xlane.xlu0 %6260
      %v6262 = vsel %vm1193, %v6110, -inf
      %v6263 = vmax.f32 %v6108, %v6262
      %6264 = vmax.xlane.f32.xlu0 %v6263
      %v6265 = vpop.xlane.xlu0 %6264
      %v6266 = vsel %vm1193, %v6114, -inf
      %v6267 = vmax.f32 %v6112, %v6266
      %6268 = vmax.xlane.f32.xlu0 %v6267
      %v6269 = vpop.xlane.xlu0 %6268
      %v6270 = vsel %vm1193, %v6120, -inf
      %v6271 = vmax.f32 %v6118, %v6270
      %6272 = vmax.xlane.f32.xlu0 %v6271
      %v6273 = vpop.xlane.xlu0 %6272
      %v6274 = vsel %vm1193, %v6124, -inf
      %v6275 = vmax.f32 %v6122, %v6274
      %6276 = vmax.xlane.f32.xlu0 %v6275
      %v6277 = vpop.xlane.xlu0 %6276
      %v6278 = vsel %vm1193, %v6130, -inf
      %v6279 = vmax.f32 %v6128, %v6278
      %6280 = vmax.xlane.f32.xlu0 %v6279
      %v6281 = vpop.xlane.xlu0 %6280
      %v6282 = vsel %vm1193, %v6134, -inf
      %v6283 = vmax.f32 %v6132, %v6282
      %6284 = vmax.xlane.f32.xlu0 %v6283
      %v6285 = vpop.xlane.xlu0 %6284
      %v6286 = vsel %vm1193, %v6140, -inf
      %v6287 = vmax.f32 %v6138, %v6286
      %6288 = vmax.xlane.f32.xlu0 %v6287
      %v6289 = vpop.xlane.xlu0 %6288
      %v6290 = vsel %vm1193, %v6144, -inf
      %v6291 = vmax.f32 %v6142, %v6290
      %6292 = vmax.xlane.f32.xlu0 %v6291
      %v6293 = vpop.xlane.xlu0 %6292
      %v6294 = vsel %vm1193, %v6150, -inf
      %v6295 = vmax.f32 %v6148, %v6294
      %6296 = vmax.xlane.f32.xlu0 %v6295
      %v6297 = vpop.xlane.xlu0 %6296
      %v6298 = vsel %vm1193, %v6154, -inf
      %v6299 = vmax.f32 %v6152, %v6298
      %6300 = vmax.xlane.f32.xlu0 %v6299
      %v6301 = vpop.xlane.xlu0 %6300
      %v6302 = vsel %vm1193, %v6160, -inf
      %v6303 = vmax.f32 %v6158, %v6302
      %6304 = vmax.xlane.f32.xlu0 %v6303
      %v6305 = vpop.xlane.xlu0 %6304
      %v6306 = vsel %vm1193, %v6164, -inf
      %v6307 = vmax.f32 %v6162, %v6306
      %6308 = vmax.xlane.f32.xlu0 %v6307
      %v6309 = vpop.xlane.xlu0 %6308
      %v6310 = vsub.f32 %v5865, %v6169
      %v6311 = vsub.f32 %v5867, %v6169
      %v6312 = vsub.f32 %v5869, %v6173
      %v6313 = vsub.f32 %v5871, %v6173
      %v6314 = vsub.f32 %v5875, %v6177
      %v6315 = vsub.f32 %v5877, %v6177
      %v6316 = vsub.f32 %v5879, %v6181
      %v6317 = vsub.f32 %v5881, %v6181
      %v6318 = vsub.f32 %v5885, %v6185
      %v6319 = vsub.f32 %v5887, %v6185
      %v6320 = vsub.f32 %v5889, %v6189
      %v6321 = vsub.f32 %v5891, %v6189
      %v6322 = vsub.f32 %v5895, %v6193
      %v6323 = vsub.f32 %v5897, %v6193
      %v6324 = vsub.f32 %v5899, %v6197
      %v6325 = vsub.f32 %v5901, %v6197
      %v6326 = vsub.f32 %v5905, %v6201
      %v6327 = vsub.f32 %v5907, %v6201
      %v6328 = vsub.f32 %v5909, %v6205
      %v6329 = vsub.f32 %v5911, %v6205
      %v6330 = vsub.f32 %v5915, %v6209
      %v6331 = vsub.f32 %v5917, %v6209
      %v6332 = vsub.f32 %v5919, %v6213
      %v6333 = vsub.f32 %v5921, %v6213
      %v6334 = vsub.f32 %v5925, %v6217
      %v6335 = vsub.f32 %v5927, %v6217
      %v6336 = vsub.f32 %v5929, %v6221
      %v6337 = vsub.f32 %v5931, %v6221
      %v6338 = vsub.f32 %v5935, %v6225
      %v6339 = vsub.f32 %v5937, %v6225
      %v6340 = vsub.f32 %v5939, %v6229
      %v6341 = vsub.f32 %v5941, %v6229
      %v6342 = vsub.f32 %v5945, %v6233
      %v6343 = vsub.f32 %v5947, %v6233
      %v6344 = vsub.f32 %v5949, %v6237
      %v6345 = vsub.f32 %v5951, %v6237
      %v6346 = vsub.f32 %v6078, %v6241
      %v6347 = vsub.f32 %v6080, %v6241
      %v6348 = vsub.f32 %v6082, %v6245
      %v6349 = vsub.f32 %v6084, %v6245
      %v6350 = vsub.f32 %v6088, %v6249
      %v6351 = vsub.f32 %v6090, %v6249
      %v6352 = vsub.f32 %v6092, %v6253
      %v6353 = vsub.f32 %v6094, %v6253
      %v6354 = vsub.f32 %v6098, %v6257
      %v6355 = vsub.f32 %v6100, %v6257
      %v6356 = vsub.f32 %v6102, %v6261
      %v6357 = vsub.f32 %v6104, %v6261
      %v6358 = vsub.f32 %v6108, %v6265
      %v6359 = vsub.f32 %v6110, %v6265
      %v6360 = vsub.f32 %v6112, %v6269
      %v6361 = vsub.f32 %v6114, %v6269
      %v6362 = vsub.f32 %v6118, %v6273
      %v6363 = vsub.f32 %v6120, %v6273
      %v6364 = vsub.f32 %v6122, %v6277
      %v6365 = vsub.f32 %v6124, %v6277
      %v6366 = vsub.f32 %v6128, %v6281
      %v6367 = vsub.f32 %v6130, %v6281
      %v6368 = vsub.f32 %v6132, %v6285
      %v6369 = vsub.f32 %v6134, %v6285
      %v6370 = vsub.f32 %v6138, %v6289
      %v6371 = vsub.f32 %v6140, %v6289
      %v6372 = vsub.f32 %v6142, %v6293
      %v6373 = vsub.f32 %v6144, %v6293
      %v6374 = vsub.f32 %v6148, %v6297
      %v6375 = vsub.f32 %v6150, %v6297
      %v6376 = vsub.f32 %v6152, %v6301
      %v6377 = vsub.f32 %v6154, %v6301
      %v6378 = vsub.f32 %v6158, %v6305
      %v6379 = vsub.f32 %v6160, %v6305
      %v6380 = vsub.f32 %v6162, %v6309
      %v6381 = vsub.f32 %v6164, %v6309
      %v6382 = vmul.f32 %v6310, 1.442695
      %v6383 = vpow.pop %v6382
      %v6384 = vmul.f32 %v6311, 1.442695
      %v6385 = vpow.pop %v6384
      %v6386 = vmul.f32 %v6312, 1.442695
      %v6387 = vpow.pop %v6386
      %v6388 = vmul.f32 %v6313, 1.442695
      %v6389 = vpow.pop %v6388
      %v6390 = vmul.f32 %v6314, 1.442695
      %v6391 = vpow.pop %v6390
      %v6392 = vmul.f32 %v6315, 1.442695
      %v6393 = vpow.pop %v6392
      %v6394 = vmul.f32 %v6316, 1.442695
      %v6395 = vpow.pop %v6394
      %v6396 = vmul.f32 %v6317, 1.442695
      %v6397 = vpow.pop %v6396
      %v6398 = vmul.f32 %v6318, 1.442695
      %v6399 = vpow.pop %v6398
      %v6400 = vmul.f32 %v6319, 1.442695
      %v6401 = vpow.pop %v6400
      %v6402 = vmul.f32 %v6320, 1.442695
      %v6403 = vpow.pop %v6402
      %v6404 = vmul.f32 %v6321, 1.442695
      %v6405 = vpow.pop %v6404
      %v6406 = vmul.f32 %v6322, 1.442695
      %v6407 = vpow.pop %v6406
      %v6408 = vmul.f32 %v6323, 1.442695
      %v6409 = vpow.pop %v6408
      %v6410 = vmul.f32 %v6324, 1.442695
      %v6411 = vpow.pop %v6410
      %v6412 = vmul.f32 %v6325, 1.442695
      %v6413 = vpow.pop %v6412
      %v6414 = vmul.f32 %v6326, 1.442695
      %v6415 = vpow.pop %v6414
      %v6416 = vmul.f32 %v6327, 1.442695
      %v6417 = vpow.pop %v6416
      %v6418 = vmul.f32 %v6328, 1.442695
      %v6419 = vpow.pop %v6418
      %v6420 = vmul.f32 %v6329, 1.442695
      %v6421 = vpow.pop %v6420
      %v6422 = vmul.f32 %v6330, 1.442695
      %v6423 = vpow.pop %v6422
      %v6424 = vmul.f32 %v6331, 1.442695
      %v6425 = vpow.pop %v6424
      %v6426 = vmul.f32 %v6332, 1.442695
      %v6427 = vpow.pop %v6426
      %v6428 = vmul.f32 %v6333, 1.442695
      %v6429 = vpow.pop %v6428
      %v6430 = vmul.f32 %v6334, 1.442695
      %v6431 = vpow.pop %v6430
      %v6432 = vmul.f32 %v6335, 1.442695
      %v6433 = vpow.pop %v6432
      %v6434 = vmul.f32 %v6336, 1.442695
      %v6435 = vpow.pop %v6434
      %v6436 = vmul.f32 %v6337, 1.442695
      %v6437 = vpow.pop %v6436
      %v6438 = vmul.f32 %v6338, 1.442695
      %v6439 = vpow.pop %v6438
      %v6440 = vmul.f32 %v6339, 1.442695
      %v6441 = vpow.pop %v6440
      %v6442 = vmul.f32 %v6340, 1.442695
      %v6443 = vpow.pop %v6442
      %v6444 = vmul.f32 %v6341, 1.442695
      %v6445 = vpow.pop %v6444
      %v6446 = vmul.f32 %v6342, 1.442695
      %v6447 = vpow.pop %v6446
      %v6448 = vmul.f32 %v6343, 1.442695
      %v6449 = vpow.pop %v6448
      %v6450 = vmul.f32 %v6344, 1.442695
      %v6451 = vpow.pop %v6450
      %v6452 = vmul.f32 %v6345, 1.442695
      %v6453 = vpow.pop %v6452
      %v6454 = vmul.f32 %v6346, 1.442695
      %v6455 = vpow.pop %v6454
      %v6456 = vmul.f32 %v6347, 1.442695
      %v6457 = vpow.pop %v6456
      %v6458 = vmul.f32 %v6348, 1.442695
      %v6459 = vpow.pop %v6458
      %v6460 = vmul.f32 %v6349, 1.442695
      %v6461 = vpow.pop %v6460
      %v6462 = vmul.f32 %v6350, 1.442695
      %v6463 = vpow.pop %v6462
      %v6464 = vmul.f32 %v6351, 1.442695
      %v6465 = vpow.pop %v6464
      %v6466 = vmul.f32 %v6352, 1.442695
      %v6467 = vpow.pop %v6466
      %v6468 = vmul.f32 %v6353, 1.442695
      %v6469 = vpow.pop %v6468
      %v6470 = vmul.f32 %v6354, 1.442695
      %v6471 = vpow.pop %v6470
      %v6472 = vmul.f32 %v6355, 1.442695
      %v6473 = vpow.pop %v6472
      %v6474 = vmul.f32 %v6356, 1.442695
      %v6475 = vpow.pop %v6474
      %v6476 = vmul.f32 %v6357, 1.442695
      %v6477 = vpow.pop %v6476
      %v6478 = vmul.f32 %v6358, 1.442695
      %v6479 = vpow.pop %v6478
      %v6480 = vmul.f32 %v6359, 1.442695
      %v6481 = vpow.pop %v6480
      %v6482 = vmul.f32 %v6360, 1.442695
      %v6483 = vpow.pop %v6482
      %v6484 = vmul.f32 %v6361, 1.442695
      %v6485 = vpow.pop %v6484
      %v6486 = vmul.f32 %v6362, 1.442695
      %v6487 = vpow.pop %v6486
      %v6488 = vmul.f32 %v6363, 1.442695
      %v6489 = vpow.pop %v6488
      %v6490 = vmul.f32 %v6364, 1.442695
      %v6491 = vpow.pop %v6490
      %v6492 = vmul.f32 %v6365, 1.442695
      %v6493 = vpow.pop %v6492
      %v6494 = vmul.f32 %v6366, 1.442695
      %v6495 = vpow.pop %v6494
      %v6496 = vmul.f32 %v6367, 1.442695
      %v6497 = vpow.pop %v6496
      %v6498 = vmul.f32 %v6368, 1.442695
      %v6499 = vpow.pop %v6498
      %v6500 = vmul.f32 %v6369, 1.442695
      %v6501 = vpow.pop %v6500
      %v6502 = vmul.f32 %v6370, 1.442695
      %v6503 = vpow.pop %v6502
      %v6504 = vmul.f32 %v6371, 1.442695
      %v6505 = vpow.pop %v6504
      %v6506 = vmul.f32 %v6372, 1.442695
      %v6507 = vpow.pop %v6506
      %v6508 = vmul.f32 %v6373, 1.442695
      %v6509 = vpow.pop %v6508
      %v6510 = vmul.f32 %v6374, 1.442695
      %v6511 = vpow.pop %v6510
      %v6512 = vmul.f32 %v6375, 1.442695
      %v6513 = vpow.pop %v6512
      %v6514 = vmul.f32 %v6376, 1.442695
      %v6515 = vpow.pop %v6514
      %v6516 = vmul.f32 %v6377, 1.442695
      %v6517 = vpow.pop %v6516
      %v6518 = vmul.f32 %v6378, 1.442695
      %v6519 = vpow.pop %v6518
      %v6520 = vmul.f32 %v6379, 1.442695
      %v6521 = vpow.pop %v6520
      %v6522 = vmul.f32 %v6380, 1.442695
      %v6523 = vpow.pop %v6522
      %v6524 = vmul.f32 %v6381, 1.442695
      %v6525 = vpow.pop %v6524
      %v6526 = vsel %vm1193, %v6385, 0.0
      %v6527 = vadd.f32 %v6383, %v6526
      %6528 = vadd.xlane.f32.xlu0 %v6527
      %v6529 = vpop.xlane.xlu0 %6528
      %v6530 = vsel %vm1193, %v6389, 0.0
      %v6531 = vadd.f32 %v6387, %v6530
      %6532 = vadd.xlane.f32.xlu0 %v6531
      %v6533 = vpop.xlane.xlu0 %6532
      %v6534 = vsel %vm1193, %v6393, 0.0
      %v6535 = vadd.f32 %v6391, %v6534
      %6536 = vadd.xlane.f32.xlu0 %v6535
      %v6537 = vpop.xlane.xlu0 %6536
      %v6538 = vsel %vm1193, %v6397, 0.0
      %v6539 = vadd.f32 %v6395, %v6538
      %6540 = vadd.xlane.f32.xlu0 %v6539
      %v6541 = vpop.xlane.xlu0 %6540
      %v6542 = vsel %vm1193, %v6401, 0.0
      %v6543 = vadd.f32 %v6399, %v6542
      %6544 = vadd.xlane.f32.xlu0 %v6543
      %v6545 = vpop.xlane.xlu0 %6544
      %v6546 = vsel %vm1193, %v6405, 0.0
      %v6547 = vadd.f32 %v6403, %v6546
      %6548 = vadd.xlane.f32.xlu0 %v6547
      %v6549 = vpop.xlane.xlu0 %6548
      %v6550 = vsel %vm1193, %v6409, 0.0
      %v6551 = vadd.f32 %v6407, %v6550
      %6552 = vadd.xlane.f32.xlu0 %v6551
      %v6553 = vpop.xlane.xlu0 %6552
      %v6554 = vsel %vm1193, %v6413, 0.0
      %v6555 = vadd.f32 %v6411, %v6554
      %6556 = vadd.xlane.f32.xlu0 %v6555
      %v6557 = vpop.xlane.xlu0 %6556
      %v6558 = vsel %vm1193, %v6417, 0.0
      %v6559 = vadd.f32 %v6415, %v6558
      %6560 = vadd.xlane.f32.xlu0 %v6559
      %v6561 = vpop.xlane.xlu0 %6560
      %v6562 = vsel %vm1193, %v6421, 0.0
      %v6563 = vadd.f32 %v6419, %v6562
      %6564 = vadd.xlane.f32.xlu0 %v6563
      %v6565 = vpop.xlane.xlu0 %6564
      %v6566 = vsel %vm1193, %v6425, 0.0
      %v6567 = vadd.f32 %v6423, %v6566
      %6568 = vadd.xlane.f32.xlu0 %v6567
      %v6569 = vpop.xlane.xlu0 %6568
      %v6570 = vsel %vm1193, %v6429, 0.0
      %v6571 = vadd.f32 %v6427, %v6570
      %6572 = vadd.xlane.f32.xlu0 %v6571
      %v6573 = vpop.xlane.xlu0 %6572
      %v6574 = vsel %vm1193, %v6433, 0.0
      %v6575 = vadd.f32 %v6431, %v6574
      %6576 = vadd.xlane.f32.xlu0 %v6575
      %v6577 = vpop.xlane.xlu0 %6576
      %v6578 = vsel %vm1193, %v6437, 0.0
      %v6579 = vadd.f32 %v6435, %v6578
      %6580 = vadd.xlane.f32.xlu0 %v6579
      %v6581 = vpop.xlane.xlu0 %6580
      %v6582 = vsel %vm1193, %v6441, 0.0
      %v6583 = vadd.f32 %v6439, %v6582
      %6584 = vadd.xlane.f32.xlu0 %v6583
      %v6585 = vpop.xlane.xlu0 %6584
      %v6586 = vsel %vm1193, %v6445, 0.0
      %v6587 = vadd.f32 %v6443, %v6586
      %6588 = vadd.xlane.f32.xlu0 %v6587
      %v6589 = vpop.xlane.xlu0 %6588
      %v6590 = vsel %vm1193, %v6449, 0.0
      %v6591 = vadd.f32 %v6447, %v6590
      %6592 = vadd.xlane.f32.xlu0 %v6591
      %v6593 = vpop.xlane.xlu0 %6592
      %v6594 = vsel %vm1193, %v6453, 0.0
      %v6595 = vadd.f32 %v6451, %v6594
      %6596 = vadd.xlane.f32.xlu0 %v6595
      %v6597 = vpop.xlane.xlu0 %6596
      %v6598 = vsel %vm1193, %v6457, 0.0
      %v6599 = vadd.f32 %v6455, %v6598
      %6600 = vadd.xlane.f32.xlu0 %v6599
      %v6601 = vpop.xlane.xlu0 %6600
      %v6602 = vsel %vm1193, %v6461, 0.0
      %v6603 = vadd.f32 %v6459, %v6602
      %6604 = vadd.xlane.f32.xlu0 %v6603
      %v6605 = vpop.xlane.xlu0 %6604
      %v6606 = vsel %vm1193, %v6465, 0.0
      %v6607 = vadd.f32 %v6463, %v6606
      %6608 = vadd.xlane.f32.xlu0 %v6607
      %v6609 = vpop.xlane.xlu0 %6608
      %v6610 = vsel %vm1193, %v6469, 0.0
      %v6611 = vadd.f32 %v6467, %v6610
      %6612 = vadd.xlane.f32.xlu0 %v6611
      %v6613 = vpop.xlane.xlu0 %6612
      %v6614 = vsel %vm1193, %v6473, 0.0
      %v6615 = vadd.f32 %v6471, %v6614
      %6616 = vadd.xlane.f32.xlu0 %v6615
      %v6617 = vpop.xlane.xlu0 %6616
      %v6618 = vsel %vm1193, %v6477, 0.0
      %v6619 = vadd.f32 %v6475, %v6618
      %6620 = vadd.xlane.f32.xlu0 %v6619
      %v6621 = vpop.xlane.xlu0 %6620
      %v6622 = vsel %vm1193, %v6481, 0.0
      %v6623 = vadd.f32 %v6479, %v6622
      %6624 = vadd.xlane.f32.xlu0 %v6623
      %v6625 = vpop.xlane.xlu0 %6624
      %v6626 = vsel %vm1193, %v6485, 0.0
      %v6627 = vadd.f32 %v6483, %v6626
      %6628 = vadd.xlane.f32.xlu0 %v6627
      %v6629 = vpop.xlane.xlu0 %6628
      %v6630 = vsel %vm1193, %v6489, 0.0
      %v6631 = vadd.f32 %v6487, %v6630
      %6632 = vadd.xlane.f32.xlu0 %v6631
      %v6633 = vpop.xlane.xlu0 %6632
      %v6634 = vsel %vm1193, %v6493, 0.0
      %v6635 = vadd.f32 %v6491, %v6634
      %6636 = vadd.xlane.f32.xlu0 %v6635
      %v6637 = vpop.xlane.xlu0 %6636
      %v6638 = vsel %vm1193, %v6497, 0.0
      %v6639 = vadd.f32 %v6495, %v6638
      %6640 = vadd.xlane.f32.xlu0 %v6639
      %v6641 = vpop.xlane.xlu0 %6640
      %v6642 = vsel %vm1193, %v6501, 0.0
      %v6643 = vadd.f32 %v6499, %v6642
      %6644 = vadd.xlane.f32.xlu0 %v6643
      %v6645 = vpop.xlane.xlu0 %6644
      %v6646 = vsel %vm1193, %v6505, 0.0
      %v6647 = vadd.f32 %v6503, %v6646
      %6648 = vadd.xlane.f32.xlu0 %v6647
      %v6649 = vpop.xlane.xlu0 %6648
      %v6650 = vsel %vm1193, %v6509, 0.0
      %v6651 = vadd.f32 %v6507, %v6650
      %6652 = vadd.xlane.f32.xlu0 %v6651
      %v6653 = vpop.xlane.xlu0 %6652
      %v6654 = vsel %vm1193, %v6513, 0.0
      %v6655 = vadd.f32 %v6511, %v6654
      %6656 = vadd.xlane.f32.xlu0 %v6655
      %v6657 = vpop.xlane.xlu0 %6656
      %v6658 = vsel %vm1193, %v6517, 0.0
      %v6659 = vadd.f32 %v6515, %v6658
      %6660 = vadd.xlane.f32.xlu0 %v6659
      %v6661 = vpop.xlane.xlu0 %6660
      %v6662 = vsel %vm1193, %v6521, 0.0
      %v6663 = vadd.f32 %v6519, %v6662
      %6664 = vadd.xlane.f32.xlu0 %v6663
      %v6665 = vpop.xlane.xlu0 %6664
      %v6666 = vsel %vm1193, %v6525, 0.0
      %v6667 = vadd.f32 %v6523, %v6666
      %6668 = vadd.xlane.f32.xlu0 %v6667
      %v6669 = vpop.xlane.xlu0 %6668
      %v6670 = vrcp.pop %v6529
      %v6671 = vrcp.pop %v6533
      %v6672 = vrcp.pop %v6537
      %v6673 = vrcp.pop %v6541
      %v6674 = vrcp.pop %v6545
      %v6675 = vrcp.pop %v6549
      %v6676 = vrcp.pop %v6553
      %v6677 = vrcp.pop %v6557
      %v6678 = vrcp.pop %v6561
      %v6679 = vrcp.pop %v6565
      %v6680 = vrcp.pop %v6569
      %v6681 = vrcp.pop %v6573
      %v6682 = vrcp.pop %v6577
      %v6683 = vrcp.pop %v6581
      %v6684 = vrcp.pop %v6585
      %v6685 = vrcp.pop %v6589
      %v6686 = vrcp.pop %v6593
      %v6687 = vrcp.pop %v6597
      %v6688 = vrcp.pop %v6601
      %v6689 = vrcp.pop %v6605
      %v6690 = vrcp.pop %v6609
      %v6691 = vrcp.pop %v6613
      %v6692 = vrcp.pop %v6617
      %v6693 = vrcp.pop %v6621
      %v6694 = vrcp.pop %v6625
      %v6695 = vrcp.pop %v6629
      %v6696 = vrcp.pop %v6633
      %v6697 = vrcp.pop %v6637
      %v6698 = vrcp.pop %v6641
      %v6699 = vrcp.pop %v6645
      %v6700 = vrcp.pop %v6649
      %v6701 = vrcp.pop %v6653
      %v6702 = vrcp.pop %v6657
      %v6703 = vrcp.pop %v6661
      %v6704 = vrcp.pop %v6665
      %v6705 = vrcp.pop %v6669
      %v6706 = vmul.f32 %v6383, %v6670
      %v6707 = vmul.f32 %v6385, %v6670
      %v6708 = vmul.f32 %v6387, %v6671
      %v6709 = vmul.f32 %v6389, %v6671
      %v6710 = vmul.f32 %v6391, %v6672
      %v6711 = vmul.f32 %v6393, %v6672
      %v6712 = vmul.f32 %v6395, %v6673
      %v6713 = vmul.f32 %v6397, %v6673
      %v6714 = vmul.f32 %v6399, %v6674
      %v6715 = vmul.f32 %v6401, %v6674
      %v6716 = vmul.f32 %v6403, %v6675
      %v6717 = vmul.f32 %v6405, %v6675
      %v6718 = vmul.f32 %v6407, %v6676
      %v6719 = vmul.f32 %v6409, %v6676
      %v6720 = vmul.f32 %v6411, %v6677
      %v6721 = vmul.f32 %v6413, %v6677
      %v6722 = vmul.f32 %v6415, %v6678
      %v6723 = vmul.f32 %v6417, %v6678
      %v6724 = vmul.f32 %v6419, %v6679
      %v6725 = vmul.f32 %v6421, %v6679
      %v6726 = vmul.f32 %v6423, %v6680
      %v6727 = vmul.f32 %v6425, %v6680
      %v6728 = vmul.f32 %v6427, %v6681
      %v6729 = vmul.f32 %v6429, %v6681
      %v6730 = vmul.f32 %v6431, %v6682
      %v6731 = vmul.f32 %v6433, %v6682
      %v6732 = vmul.f32 %v6435, %v6683
      %v6733 = vmul.f32 %v6437, %v6683
      %v6734 = vmul.f32 %v6439, %v6684
      %v6735 = vmul.f32 %v6441, %v6684
      %v6736 = vmul.f32 %v6443, %v6685
      %v6737 = vmul.f32 %v6445, %v6685
      %v6738 = vmul.f32 %v6447, %v6686
      %v6739 = vmul.f32 %v6449, %v6686
      %v6740 = vmul.f32 %v6451, %v6687
      %v6741 = vmul.f32 %v6453, %v6687
      %v6742 = vmul.f32 %v6455, %v6688
      %v6743 = vmul.f32 %v6457, %v6688
      %v6744 = vmul.f32 %v6459, %v6689
      %v6745 = vmul.f32 %v6461, %v6689
      %v6746 = vmul.f32 %v6463, %v6690
      %v6747 = vmul.f32 %v6465, %v6690
      %v6748 = vmul.f32 %v6467, %v6691
      %v6749 = vmul.f32 %v6469, %v6691
      %v6750 = vmul.f32 %v6471, %v6692
      %v6751 = vmul.f32 %v6473, %v6692
      %v6752 = vmul.f32 %v6475, %v6693
      %v6753 = vmul.f32 %v6477, %v6693
      %v6754 = vmul.f32 %v6479, %v6694
      %v6755 = vmul.f32 %v6481, %v6694
      %v6756 = vmul.f32 %v6483, %v6695
      %v6757 = vmul.f32 %v6485, %v6695
      %v6758 = vmul.f32 %v6487, %v6696
      %v6759 = vmul.f32 %v6489, %v6696
      %v6760 = vmul.f32 %v6491, %v6697
      %v6761 = vmul.f32 %v6493, %v6697
      %v6762 = vmul.f32 %v6495, %v6698
      %v6763 = vmul.f32 %v6497, %v6698
      %v6764 = vmul.f32 %v6499, %v6699
      %v6765 = vmul.f32 %v6501, %v6699
      %v6766 = vmul.f32 %v6503, %v6700
      %v6767 = vmul.f32 %v6505, %v6700
      %v6768 = vmul.f32 %v6507, %v6701
      %v6769 = vmul.f32 %v6509, %v6701
      %v6770 = vmul.f32 %v6511, %v6702
      %v6771 = vmul.f32 %v6513, %v6702
      %v6772 = vmul.f32 %v6515, %v6703
      %v6773 = vmul.f32 %v6517, %v6703
      %v6774 = vmul.f32 %v6519, %v6704
      %v6775 = vmul.f32 %v6521, %v6704
      %v6776 = vmul.f32 %v6523, %v6705
      %v6777 = vmul.f32 %v6525, %v6705
      %v6778 = vpack.c.bf16 %v6708, %v6706
      %v6779 = vpack.c.bf16 %v6709, %v6707
      %v6780 = vpack.c.bf16 %v6712, %v6710
      %v6781 = vpack.c.bf16 %v6713, %v6711
      %v6782 = vpack.c.bf16 %v6716, %v6714
      %v6783 = vpack.c.bf16 %v6717, %v6715
      %v6784 = vpack.c.bf16 %v6720, %v6718
      %v6785 = vpack.c.bf16 %v6721, %v6719
      %v6786 = vpack.c.bf16 %v6724, %v6722
      %v6787 = vpack.c.bf16 %v6725, %v6723
      %v6788 = vpack.c.bf16 %v6728, %v6726
      %v6789 = vpack.c.bf16 %v6729, %v6727
      %v6790 = vpack.c.bf16 %v6732, %v6730
      %v6791 = vpack.c.bf16 %v6733, %v6731
      %v6792 = vpack.c.bf16 %v6736, %v6734
      %v6793 = vpack.c.bf16 %v6737, %v6735
      %v6794 = vpack.c.bf16 %v6740, %v6738
      %v6795 = vpack.c.bf16 %v6741, %v6739
      %v6796 = vpack.c.bf16 %v6744, %v6742
      %v6797 = vpack.c.bf16 %v6745, %v6743
      %v6798 = vpack.c.bf16 %v6748, %v6746
      %v6799 = vpack.c.bf16 %v6749, %v6747
      %v6800 = vpack.c.bf16 %v6752, %v6750
      %v6801 = vpack.c.bf16 %v6753, %v6751
      %v6802 = vpack.c.bf16 %v6756, %v6754
      %v6803 = vpack.c.bf16 %v6757, %v6755
      %v6804 = vpack.c.bf16 %v6760, %v6758
      %v6805 = vpack.c.bf16 %v6761, %v6759
      %v6806 = vpack.c.bf16 %v6764, %v6762
      %v6807 = vpack.c.bf16 %v6765, %v6763
      %v6808 = vpack.c.bf16 %v6768, %v6766
      %v6809 = vpack.c.bf16 %v6769, %v6767
      %v6810 = vpack.c.bf16 %v6772, %v6770
      %v6811 = vpack.c.bf16 %v6773, %v6771
      %v6812 = vpack.c.bf16 %v6776, %v6774
      %v6813 = vpack.c.bf16 %v6777, %v6775
      %6814 = vrot.lane.b32.xlu0 %v766, 40
      %v6815 = vpop.permute.xlu0 %6814
      %6816 = vrot.lane.b32.xlu0 %v767, 40
      %v6817 = vpop.permute.xlu0 %6816
      %6818 = vrot.lane.b32.xlu0 %v768, 40
      %v6819 = vpop.permute.xlu0 %6818
      %6820 = vrot.lane.b32.xlu0 %v769, 40
      %v6821 = vpop.permute.xlu0 %6820
      %6822 = vrot.lane.b32.xlu0 %v770, 40
      %v6823 = vpop.permute.xlu0 %6822
      %6824 = vrot.lane.b32.xlu0 %v771, 40
      %v6825 = vpop.permute.xlu0 %6824
      %6826 = vrot.lane.b32.xlu0 %v772, 40
      %v6827 = vpop.permute.xlu0 %6826
      %6828 = vrot.lane.b32.xlu0 %v773, 40
      %v6829 = vpop.permute.xlu0 %6828
      %6830 = vrot.lane.b32.xlu0 %v774, 40
      %v6831 = vpop.permute.xlu0 %6830
      %v6842 = vsel %vm1193, %v6779, 0
      %v6845 = vsel %vm1193, %v6781, 0
      %v6848 = vsel %vm1193, %v6783, 0
      %v6851 = vsel %vm1193, %v6785, 0
      %v6854 = vsel %vm1193, %v6787, 0
      %v6857 = vsel %vm1193, %v6789, 0
      %v6860 = vsel %vm1193, %v6791, 0
      %v6863 = vsel %vm1193, %v6793, 0
      %v6866 = vsel %vm1193, %v6795, 0
      %6868 = vmatprep.subr.bf16.mxu0 0
      %6869 = vmatpush1.bf16.msra.mxu0 %v6815
      %6870 = vmatprep.subr.bf16.mxu0 0
      %6871 = vmatpush1.bf16.msra.mxu0 %v6817
      %6872 = vmatprep.subr.bf16.mxu0 0
      %6873 = vmatpush1.bf16.msra.mxu0 %v6819
      %6874 = vmatprep.subr.bf16.mxu0 0
      %6875 = vmatpush1.bf16.msra.mxu0 %v6821
      %6876 = vmatprep.subr.bf16.mxu0 0
      %6877 = vmatpush1.bf16.msra.mxu0 %v6823
      %6878 = vmatprep.subr.bf16.mxu0 0
      %6879 = vmatpush1.bf16.msra.mxu0 %v6825
      %6880 = vmatprep.subr.bf16.mxu0 0
      %6881 = vmatpush1.bf16.msra.mxu0 %v6827
      %6882 = vmatprep.subr.bf16.mxu0 0
      %6883 = vmatpush1.bf16.msra.mxu0 %v6829
      %6884 = vmatprep.subr.bf16.mxu0 0
      %6885 = vmatpush1.bf16.msra.mxu0 %v6831
      %6886 = vmatprep.subr.bf16.mxu0 0
      %6887 = vmatpush1.bf16.msra.mxu0 0
      %6888 = vmatprep.subr.bf16.mxu0 0
      %6889 = vmatpush1.bf16.msra.mxu0 0
      %6890 = vmatprep.subr.bf16.mxu0 0
      %6891 = vmatpush1.bf16.msra.mxu0 0
      %6892 = vmatprep.subr.bf16.mxu0 0
      %6893 = vmatpush1.bf16.msra.mxu0 0
      %6894 = vmatprep.subr.bf16.mxu0 0
      %6895 = vmatpush1.bf16.msra.mxu0 0
      %6896 = vmatprep.subr.bf16.mxu0 0
      %6897 = vmatpush1.bf16.msra.mxu0 0
      %6898 = vmatprep.subr.bf16.mxu0 0
      %6899 = vmatpush1.bf16.msra.mxu0 0
      %6900 = vmatprep.mubr.bf16.mxu0 %v6842
      %6901 = vmatmul.mubr.bf16.gmra.mrb[0].mxu0 %v6778
      %v6902 = vpop.f32.mrb[0].mxu0
      %v6903 = vadd.f32 0.0, %v6902
      %v6904 = vpop.f32.mrb[0].mxu0
      %v6905 = vpop.f32.mrb[0].mxu0
      %v6906 = vadd.f32 0.0, %v6905
      %v6907 = vpop.f32.mrb[0].mxu0
      %6908 = vmatprep.mubr.bf16.mxu0 %v6845
      %6909 = vmatmul.mubr.bf16.gmra.mrb[0].mxu0 %v6780
      %v6910 = vpop.f32.mrb[0].mxu0
      %v6911 = vadd.f32 0.0, %v6910
      %v6912 = vpop.f32.mrb[0].mxu0
      %v6913 = vpop.f32.mrb[0].mxu0
      %v6914 = vadd.f32 0.0, %v6913
      %v6915 = vpop.f32.mrb[0].mxu0
      %6916 = vmatprep.mubr.bf16.mxu0 %v6848
      %6917 = vmatmul.mubr.bf16.gmra.mrb[0].mxu0 %v6782
      %v6918 = vpop.f32.mrb[0].mxu0
      %v6919 = vadd.f32 0.0, %v6918
      %v6920 = vpop.f32.mrb[0].mxu0
      %v6921 = vpop.f32.mrb[0].mxu0
      %v6922 = vadd.f32 0.0, %v6921
      %v6923 = vpop.f32.mrb[0].mxu0
      %6924 = vmatprep.mubr.bf16.mxu0 %v6851
      %6925 = vmatmul.mubr.bf16.gmra.mrb[0].mxu0 %v6784
      %v6926 = vpop.f32.mrb[0].mxu0
      %v6927 = vadd.f32 0.0, %v6926
      %v6928 = vpop.f32.mrb[0].mxu0
      %v6929 = vpop.f32.mrb[0].mxu0
      %v6930 = vadd.f32 0.0, %v6929
      %v6931 = vpop.f32.mrb[0].mxu0
      %6932 = vmatprep.mubr.bf16.mxu0 %v6854
      %6933 = vmatmul.mubr.bf16.gmra.mrb[0].mxu0 %v6786
      %v6934 = vpop.f32.mrb[0].mxu0
      %v6935 = vadd.f32 0.0, %v6934
      %v6936 = vpop.f32.mrb[0].mxu0
      %v6937 = vpop.f32.mrb[0].mxu0
      %v6938 = vadd.f32 0.0, %v6937
      %v6939 = vpop.f32.mrb[0].mxu0
      %6940 = vmatprep.mubr.bf16.mxu0 %v6857
      %6941 = vmatmul.mubr.bf16.gmra.mrb[0].mxu0 %v6788
      %v6942 = vpop.f32.mrb[0].mxu0
      %v6943 = vadd.f32 0.0, %v6942
      %v6944 = vpop.f32.mrb[0].mxu0
      %v6945 = vpop.f32.mrb[0].mxu0
      %v6946 = vadd.f32 0.0, %v6945
      %v6947 = vpop.f32.mrb[0].mxu0
      %6948 = vmatprep.mubr.bf16.mxu0 %v6860
      %6949 = vmatmul.mubr.bf16.gmra.mrb[0].mxu0 %v6790
      %v6950 = vpop.f32.mrb[0].mxu0
      %v6951 = vadd.f32 0.0, %v6950
      %v6952 = vpop.f32.mrb[0].mxu0
      %v6953 = vpop.f32.mrb[0].mxu0
      %v6954 = vadd.f32 0.0, %v6953
      %v6955 = vpop.f32.mrb[0].mxu0
      %6956 = vmatprep.mubr.bf16.mxu0 %v6863
      %6957 = vmatmul.mubr.bf16.gmra.mrb[0].mxu0 %v6792
      %v6958 = vpop.f32.mrb[0].mxu0
      %v6959 = vadd.f32 0.0, %v6958
      %v6960 = vpop.f32.mrb[0].mxu0
      %v6961 = vpop.f32.mrb[0].mxu0
      %v6962 = vadd.f32 0.0, %v6961
      %v6963 = vpop.f32.mrb[0].mxu0
      %6964 = vmatprep.mubr.bf16.mxu0 %v6866
      %6965 = vmatmul.mubr.bf16.gmra.mrb[0].mxu0 %v6794
      %v6966 = vpop.f32.mrb[0].mxu0
      %v6967 = vadd.f32 0.0, %v6966
      %v6968 = vpop.f32.mrb[0].mxu0
      %v6969 = vpop.f32.mrb[0].mxu0
      %v6970 = vadd.f32 0.0, %v6969
      %v6971 = vpop.f32.mrb[0].mxu0
      %6972 = vdwg.mxu0
      %6973 = vrot.lane.b32.xlu0 %v775, 40
      %v6974 = vpop.permute.xlu0 %6973
      %6975 = vrot.lane.b32.xlu0 %v776, 40
      %v6976 = vpop.permute.xlu0 %6975
      %6977 = vrot.lane.b32.xlu0 %v777, 40
      %v6978 = vpop.permute.xlu0 %6977
      %6979 = vrot.lane.b32.xlu0 %v778, 40
      %v6980 = vpop.permute.xlu0 %6979
      %6981 = vrot.lane.b32.xlu0 %v779, 40
      %v6982 = vpop.permute.xlu0 %6981
      %6983 = vrot.lane.b32.xlu0 %v780, 40
      %v6984 = vpop.permute.xlu0 %6983
      %6985 = vrot.lane.b32.xlu0 %v781, 40
      %v6986 = vpop.permute.xlu0 %6985
      %6987 = vrot.lane.b32.xlu0 %v782, 40
      %v6988 = vpop.permute.xlu0 %6987
      %6989 = vrot.lane.b32.xlu0 %v783, 40
      %v6990 = vpop.permute.xlu0 %6989
      %v7001 = vsel %vm1193, %v6797, 0
      %v7004 = vsel %vm1193, %v6799, 0
      %v7007 = vsel %vm1193, %v6801, 0
      %v7010 = vsel %vm1193, %v6803, 0
      %v7013 = vsel %vm1193, %v6805, 0
      %v7016 = vsel %vm1193, %v6807, 0
      %v7019 = vsel %vm1193, %v6809, 0
      %v7022 = vsel %vm1193, %v6811, 0
      %v7025 = vsel %vm1193, %v6813, 0
      %7027 = vmatprep.subr.bf16.mxu0 0
      %7028 = vmatpush1.bf16.msra.mxu0 %v6974
      %7029 = vmatprep.subr.bf16.mxu0 0
      %7030 = vmatpush1.bf16.msra.mxu0 %v6976
      %7031 = vmatprep.subr.bf16.mxu0 0
      %7032 = vmatpush1.bf16.msra.mxu0 %v6978
      %7033 = vmatprep.subr.bf16.mxu0 0
      %7034 = vmatpush1.bf16.msra.mxu0 %v6980
      %7035 = vmatprep.subr.bf16.mxu0 0
      %7036 = vmatpush1.bf16.msra.mxu0 %v6982
      %7037 = vmatprep.subr.bf16.mxu0 0
      %7038 = vmatpush1.bf16.msra.mxu0 %v6984
      %7039 = vmatprep.subr.bf16.mxu0 0
      %7040 = vmatpush1.bf16.msra.mxu0 %v6986
      %7041 = vmatprep.subr.bf16.mxu0 0
      %7042 = vmatpush1.bf16.msra.mxu0 %v6988
      %7043 = vmatprep.subr.bf16.mxu0 0
      %7044 = vmatpush1.bf16.msra.mxu0 %v6990
      %7045 = vmatprep.subr.bf16.mxu0 0
      %7046 = vmatpush1.bf16.msra.mxu0 0
      %7047 = vmatprep.subr.bf16.mxu0 0
      %7048 = vmatpush1.bf16.msra.mxu0 0
      %7049 = vmatprep.subr.bf16.mxu0 0
      %7050 = vmatpush1.bf16.msra.mxu0 0
      %7051 = vmatprep.subr.bf16.mxu0 0
      %7052 = vmatpush1.bf16.msra.mxu0 0
      %7053 = vmatprep.subr.bf16.mxu0 0
      %7054 = vmatpush1.bf16.msra.mxu0 0
      %7055 = vmatprep.subr.bf16.mxu0 0
      %7056 = vmatpush1.bf16.msra.mxu0 0
      %7057 = vmatprep.subr.bf16.mxu0 0
      %7058 = vmatpush1.bf16.msra.mxu0 0
      %7059 = vmatprep.mubr.bf16.mxu0 %v7001
      %7060 = vmatmul.mubr.bf16.gmra.mrb[0].mxu0 %v6796
      %v7061 = vpop.f32.mrb[0].mxu0
      %v7062 = vadd.f32 0.0, %v7061
      %v7063 = vpop.f32.mrb[0].mxu0
      %v7064 = vpop.f32.mrb[0].mxu0
      %v7065 = vadd.f32 0.0, %v7064
      %v7066 = vpop.f32.mrb[0].mxu0
      %7067 = vmatprep.mubr.bf16.mxu0 %v7004
      %7068 = vmatmul.mubr.bf16.gmra.mrb[0].mxu0 %v6798
      %v7069 = vpop.f32.mrb[0].mxu0
      %v7070 = vadd.f32 0.0, %v7069
      %v7071 = vpop.f32.mrb[0].mxu0
      %v7072 = vpop.f32.mrb[0].mxu0
      %v7073 = vadd.f32 0.0, %v7072
      %v7074 = vpop.f32.mrb[0].mxu0
      %7075 = vmatprep.mubr.bf16.mxu0 %v7007
      %7076 = vmatmul.mubr.bf16.gmra.mrb[0].mxu0 %v6800
      %v7077 = vpop.f32.mrb[0].mxu0
      %v7078 = vadd.f32 0.0, %v7077
      %v7079 = vpop.f32.mrb[0].mxu0
      %v7080 = vpop.f32.mrb[0].mxu0
      %v7081 = vadd.f32 0.0, %v7080
      %v7082 = vpop.f32.mrb[0].mxu0
      %7083 = vmatprep.mubr.bf16.mxu0 %v7010
      %7084 = vmatmul.mubr.bf16.gmra.mrb[0].mxu0 %v6802
      %v7085 = vpop.f32.mrb[0].mxu0
      %v7086 = vadd.f32 0.0, %v7085
      %v7087 = vpop.f32.mrb[0].mxu0
      %v7088 = vpop.f32.mrb[0].mxu0
      %v7089 = vadd.f32 0.0, %v7088
      %v7090 = vpop.f32.mrb[0].mxu0
      %7091 = vmatprep.mubr.bf16.mxu0 %v7013
      %7092 = vmatmul.mubr.bf16.gmra.mrb[0].mxu0 %v6804
      %v7093 = vpop.f32.mrb[0].mxu0
      %v7094 = vadd.f32 0.0, %v7093
      %v7095 = vpop.f32.mrb[0].mxu0
      %v7096 = vpop.f32.mrb[0].mxu0
      %v7097 = vadd.f32 0.0, %v7096
      %v7098 = vpop.f32.mrb[0].mxu0
      %7099 = vmatprep.mubr.bf16.mxu0 %v7016
      %7100 = vmatmul.mubr.bf16.gmra.mrb[0].mxu0 %v6806
      %v7101 = vpop.f32.mrb[0].mxu0
      %v7102 = vadd.f32 0.0, %v7101
      %v7103 = vpop.f32.mrb[0].mxu0
      %v7104 = vpop.f32.mrb[0].mxu0
      %v7105 = vadd.f32 0.0, %v7104
      %v7106 = vpop.f32.mrb[0].mxu0
      %7107 = vmatprep.mubr.bf16.mxu0 %v7019
      %7108 = vmatmul.mubr.bf16.gmra.mrb[0].mxu0 %v6808
      %v7109 = vpop.f32.mrb[0].mxu0
      %v7110 = vadd.f32 0.0, %v7109
      %v7111 = vpop.f32.mrb[0].mxu0
      %v7112 = vpop.f32.mrb[0].mxu0
      %v7113 = vadd.f32 0.0, %v7112
      %v7114 = vpop.f32.mrb[0].mxu0
      %7115 = vmatprep.mubr.bf16.mxu0 %v7022
      %7116 = vmatmul.mubr.bf16.gmra.mrb[0].mxu0 %v6810
      %v7117 = vpop.f32.mrb[0].mxu0
      %v7118 = vadd.f32 0.0, %v7117
      %v7119 = vpop.f32.mrb[0].mxu0
      %v7120 = vpop.f32.mrb[0].mxu0
      %v7121 = vadd.f32 0.0, %v7120
      %v7122 = vpop.f32.mrb[0].mxu0
      %7123 = vmatprep.mubr.bf16.mxu0 %v7025
      %7124 = vmatmul.mubr.bf16.gmra.mrb[0].mxu0 %v6812
      %v7125 = vpop.f32.mrb[0].mxu0
      %v7126 = vadd.f32 0.0, %v7125
      %v7127 = vpop.f32.mrb[0].mxu0
      %v7128 = vpop.f32.mrb[0].mxu0
      %v7129 = vadd.f32 0.0, %v7128
      %v7130 = vpop.f32.mrb[0].mxu0
      %7131 = vdwg.mxu0
      %v7132 = vpack.c.bf16 %v6906, %v6903
      %v7133 = vpack.c.bf16 %v6914, %v6911
      %v7134 = vpack.c.bf16 %v6922, %v6919
      %v7135 = vpack.c.bf16 %v6930, %v6927
      %v7136 = vpack.c.bf16 %v6938, %v6935
      %v7137 = vpack.c.bf16 %v6946, %v6943
      %v7138 = vpack.c.bf16 %v6954, %v6951
      %v7139 = vpack.c.bf16 %v6962, %v6959
      %v7140 = vpack.c.bf16 %v6970, %v6967
      %v7141 = vpack.c.bf16 %v7065, %v7062
      %v7142 = vpack.c.bf16 %v7073, %v7070
      %v7143 = vpack.c.bf16 %v7081, %v7078
      %v7144 = vpack.c.bf16 %v7089, %v7086
      %v7145 = vpack.c.bf16 %v7097, %v7094
      %v7146 = vpack.c.bf16 %v7105, %v7102
      %v7147 = vpack.c.bf16 %v7113, %v7110
      %v7148 = vpack.c.bf16 %v7121, %v7118
      %v7149 = vpack.c.bf16 %v7129, %v7126
      %v7150 = vpack.c.bf16 %v765, %v765
      %v7152 = vsel %vm811, %v7132, 0
      %v7155 = vsel %vm811, %v7133, 0
      %v7158 = vsel %vm811, %v7134, 0
      %v7161 = vsel %vm811, %v7135, 0
      %v7164 = vsel %vm811, %v7136, 0
      %v7167 = vsel %vm811, %v7137, 0
      %v7170 = vsel %vm811, %v7138, 0
      %v7173 = vsel %vm811, %v7139, 0
      %v7176 = vsel %vm811, %v7140, 0
      %v7179 = vsel %vm811, %v7141, 0
      %v7182 = vsel %vm811, %v7142, 0
      %v7185 = vsel %vm811, %v7143, 0
      %v7188 = vsel %vm811, %v7144, 0
      %v7191 = vsel %vm811, %v7145, 0
      %v7194 = vsel %vm811, %v7146, 0
      %v7197 = vsel %vm811, %v7147, 0
      %v7200 = vsel %vm811, %v7148, 0
      %v7203 = vsel %vm811, %v7149, 0
      %v7206 = vsel %vm3644, %v7150, 0
      %7208 = vmatprep.subr.bf16.mxu0 0
      %7209 = vmatpush1.bf16.msra.mxu0 %v7206
      %7210 = vmatprep.subr.bf16.mxu0 0
      %7211 = vmatpush1.bf16.msra.mxu0 0
      %7212 = vmatprep.subr.bf16.mxu0 0
      %7213 = vmatpush1.bf16.msra.mxu0 0
      %7214 = vmatprep.subr.bf16.mxu0 0
      %7215 = vmatpush1.bf16.msra.mxu0 0
      %7216 = vmatprep.subr.bf16.mxu0 0
      %7217 = vmatpush1.bf16.msra.mxu0 0
      %7218 = vmatprep.subr.bf16.mxu0 0
      %7219 = vmatpush1.bf16.msra.mxu0 0
      %7220 = vmatprep.subr.bf16.mxu0 0
      %7221 = vmatpush1.bf16.msra.mxu0 0
      %7222 = vmatprep.subr.bf16.mxu0 0
      %7223 = vmatpush1.bf16.msra.mxu0 0
      %7224 = vmatprep.subr.bf16.mxu0 0
      %7225 = vmatpush1.bf16.msra.mxu0 0
      %7226 = vmatprep.subr.bf16.mxu0 0
      %7227 = vmatpush1.bf16.msra.mxu0 0
      %7228 = vmatprep.subr.bf16.mxu0 0
      %7229 = vmatpush1.bf16.msra.mxu0 0
      %7230 = vmatprep.subr.bf16.mxu0 0
      %7231 = vmatpush1.bf16.msra.mxu0 0
      %7232 = vmatprep.subr.bf16.mxu0 0
      %7233 = vmatpush1.bf16.msra.mxu0 0
      %7234 = vmatprep.subr.bf16.mxu0 0
      %7235 = vmatpush1.bf16.msra.mxu0 0
      %7236 = vmatprep.subr.bf16.mxu0 0
      %7237 = vmatpush1.bf16.msra.mxu0 0
      %7238 = vmatprep.subr.bf16.mxu0 0
      %7239 = vmatpush1.bf16.msra.mxu0 0
      %7240 = vmatprep.mubr.bf16.mxu0 0
      %7241 = vmatmul.mubr.bf16.gmra.mrb[0].mxu0 %v7152
      %v7242 = vpop.f32.mrb[0].mxu0
      %v7243 = vadd.f32 0.0, %v7242
      %v7244 = vpop.f32.mrb[0].mxu0
      %v7245 = vpop.f32.mrb[0].mxu0
      %v7246 = vadd.f32 0.0, %v7245
      %v7247 = vpop.f32.mrb[0].mxu0
      %7248 = vmatprep.mubr.bf16.mxu0 0
      %7249 = vmatmul.mubr.bf16.gmra.mrb[0].mxu0 %v7155
      %v7250 = vpop.f32.mrb[0].mxu0
      %v7251 = vadd.f32 0.0, %v7250
      %v7252 = vpop.f32.mrb[0].mxu0
      %v7253 = vpop.f32.mrb[0].mxu0
      %v7254 = vadd.f32 0.0, %v7253
      %v7255 = vpop.f32.mrb[0].mxu0
      %7256 = vmatprep.mubr.bf16.mxu0 0
      %7257 = vmatmul.mubr.bf16.gmra.mrb[0].mxu0 %v7158
      %v7258 = vpop.f32.mrb[0].mxu0
      %v7259 = vadd.f32 0.0, %v7258
      %v7260 = vpop.f32.mrb[0].mxu0
      %v7261 = vpop.f32.mrb[0].mxu0
      %v7262 = vadd.f32 0.0, %v7261
      %v7263 = vpop.f32.mrb[0].mxu0
      %7264 = vmatprep.mubr.bf16.mxu0 0
      %7265 = vmatmul.mubr.bf16.gmra.mrb[0].mxu0 %v7161
      %v7266 = vpop.f32.mrb[0].mxu0
      %v7267 = vadd.f32 0.0, %v7266
      %v7268 = vpop.f32.mrb[0].mxu0
      %v7269 = vpop.f32.mrb[0].mxu0
      %v7270 = vadd.f32 0.0, %v7269
      %v7271 = vpop.f32.mrb[0].mxu0
      %7272 = vmatprep.mubr.bf16.mxu0 0
      %7273 = vmatmul.mubr.bf16.gmra.mrb[0].mxu0 %v7164
      %v7274 = vpop.f32.mrb[0].mxu0
      %v7275 = vadd.f32 0.0, %v7274
      %v7276 = vpop.f32.mrb[0].mxu0
      %v7277 = vpop.f32.mrb[0].mxu0
      %v7278 = vadd.f32 0.0, %v7277
      %v7279 = vpop.f32.mrb[0].mxu0
      %7280 = vmatprep.mubr.bf16.mxu0 0
      %7281 = vmatmul.mubr.bf16.gmra.mrb[0].mxu0 %v7167
      %v7282 = vpop.f32.mrb[0].mxu0
      %v7283 = vadd.f32 0.0, %v7282
      %v7284 = vpop.f32.mrb[0].mxu0
      %v7285 = vpop.f32.mrb[0].mxu0
      %v7286 = vadd.f32 0.0, %v7285
      %v7287 = vpop.f32.mrb[0].mxu0
      %7288 = vmatprep.mubr.bf16.mxu0 0
      %7289 = vmatmul.mubr.bf16.gmra.mrb[0].mxu0 %v7170
      %v7290 = vpop.f32.mrb[0].mxu0
      %v7291 = vadd.f32 0.0, %v7290
      %v7292 = vpop.f32.mrb[0].mxu0
      %v7293 = vpop.f32.mrb[0].mxu0
      %v7294 = vadd.f32 0.0, %v7293
      %v7295 = vpop.f32.mrb[0].mxu0
      %7296 = vmatprep.mubr.bf16.mxu0 0
      %7297 = vmatmul.mubr.bf16.gmra.mrb[0].mxu0 %v7173
      %v7298 = vpop.f32.mrb[0].mxu0
      %v7299 = vadd.f32 0.0, %v7298
      %v7300 = vpop.f32.mrb[0].mxu0
      %v7301 = vpop.f32.mrb[0].mxu0
      %v7302 = vadd.f32 0.0, %v7301
      %v7303 = vpop.f32.mrb[0].mxu0
      %7304 = vmatprep.mubr.bf16.mxu0 0
      %7305 = vmatmul.mubr.bf16.gmra.mrb[0].mxu0 %v7176
      %v7306 = vpop.f32.mrb[0].mxu0
      %v7307 = vadd.f32 0.0, %v7306
      %v7308 = vpop.f32.mrb[0].mxu0
      %v7309 = vpop.f32.mrb[0].mxu0
      %v7310 = vadd.f32 0.0, %v7309
      %v7311 = vpop.f32.mrb[0].mxu0
      %7312 = vmatprep.mubr.bf16.mxu0 0
      %7313 = vmatmul.mubr.bf16.gmra.mrb[0].mxu0 %v7179
      %v7314 = vpop.f32.mrb[0].mxu0
      %v7315 = vadd.f32 0.0, %v7314
      %v7316 = vpop.f32.mrb[0].mxu0
      %v7317 = vpop.f32.mrb[0].mxu0
      %v7318 = vadd.f32 0.0, %v7317
      %v7319 = vpop.f32.mrb[0].mxu0
      %7320 = vmatprep.mubr.bf16.mxu0 0
      %7321 = vmatmul.mubr.bf16.gmra.mrb[0].mxu0 %v7182
      %v7322 = vpop.f32.mrb[0].mxu0
      %v7323 = vadd.f32 0.0, %v7322
      %v7324 = vpop.f32.mrb[0].mxu0
      %v7325 = vpop.f32.mrb[0].mxu0
      %v7326 = vadd.f32 0.0, %v7325
      %v7327 = vpop.f32.mrb[0].mxu0
      %7328 = vmatprep.mubr.bf16.mxu0 0
      %7329 = vmatmul.mubr.bf16.gmra.mrb[0].mxu0 %v7185
      %v7330 = vpop.f32.mrb[0].mxu0
      %v7331 = vadd.f32 0.0, %v7330
      %v7332 = vpop.f32.mrb[0].mxu0
      %v7333 = vpop.f32.mrb[0].mxu0
      %v7334 = vadd.f32 0.0, %v7333
      %v7335 = vpop.f32.mrb[0].mxu0
      %7336 = vmatprep.mubr.bf16.mxu0 0
      %7337 = vmatmul.mubr.bf16.gmra.mrb[0].mxu0 %v7188
      %v7338 = vpop.f32.mrb[0].mxu0
      %v7339 = vadd.f32 0.0, %v7338
      %v7340 = vpop.f32.mrb[0].mxu0
      %v7341 = vpop.f32.mrb[0].mxu0
      %v7342 = vadd.f32 0.0, %v7341
      %v7343 = vpop.f32.mrb[0].mxu0
      %7344 = vmatprep.mubr.bf16.mxu0 0
      %7345 = vmatmul.mubr.bf16.gmra.mrb[0].mxu0 %v7191
      %v7346 = vpop.f32.mrb[0].mxu0
      %v7347 = vadd.f32 0.0, %v7346
      %v7348 = vpop.f32.mrb[0].mxu0
      %v7349 = vpop.f32.mrb[0].mxu0
      %v7350 = vadd.f32 0.0, %v7349
      %v7351 = vpop.f32.mrb[0].mxu0
      %7352 = vmatprep.mubr.bf16.mxu0 0
      %7353 = vmatmul.mubr.bf16.gmra.mrb[0].mxu0 %v7194
      %v7354 = vpop.f32.mrb[0].mxu0
      %v7355 = vadd.f32 0.0, %v7354
      %v7356 = vpop.f32.mrb[0].mxu0
      %v7357 = vpop.f32.mrb[0].mxu0
      %v7358 = vadd.f32 0.0, %v7357
      %v7359 = vpop.f32.mrb[0].mxu0
      %7360 = vmatprep.mubr.bf16.mxu0 0
      %7361 = vmatmul.mubr.bf16.gmra.mrb[0].mxu0 %v7197
      %v7362 = vpop.f32.mrb[0].mxu0
      %v7363 = vadd.f32 0.0, %v7362
      %v7364 = vpop.f32.mrb[0].mxu0
      %v7365 = vpop.f32.mrb[0].mxu0
      %v7366 = vadd.f32 0.0, %v7365
      %v7367 = vpop.f32.mrb[0].mxu0
      %7368 = vmatprep.mubr.bf16.mxu0 0
      %7369 = vmatmul.mubr.bf16.gmra.mrb[0].mxu0 %v7200
      %v7370 = vpop.f32.mrb[0].mxu0
      %v7371 = vadd.f32 0.0, %v7370
      %v7372 = vpop.f32.mrb[0].mxu0
      %v7373 = vpop.f32.mrb[0].mxu0
      %v7374 = vadd.f32 0.0, %v7373
      %v7375 = vpop.f32.mrb[0].mxu0
      %7376 = vmatprep.mubr.bf16.mxu0 0
      %7377 = vmatmul.mubr.bf16.gmra.mrb[0].mxu0 %v7203
      %v7378 = vpop.f32.mrb[0].mxu0
      %v7379 = vadd.f32 0.0, %v7378
      %v7380 = vpop.f32.mrb[0].mxu0
      %v7381 = vpop.f32.mrb[0].mxu0
      %v7382 = vadd.f32 0.0, %v7381
      %v7383 = vpop.f32.mrb[0].mxu0
      %7384 = vdwg.mxu0
      %v7385 = vadd.f32 %v5704, %v7243
      %v7386 = vadd.f32 %v5705, %v7246
      %v7387 = vadd.f32 %v5706, %v7251
      %v7388 = vadd.f32 %v5707, %v7254
      %v7389 = vadd.f32 %v5708, %v7259
      %v7390 = vadd.f32 %v5709, %v7262
      %v7391 = vadd.f32 %v5710, %v7267
      %v7392 = vadd.f32 %v5711, %v7270
      %v7393 = vadd.f32 %v5712, %v7275
      %v7394 = vadd.f32 %v5713, %v7278
      %v7395 = vadd.f32 %v5714, %v7283
      %v7396 = vadd.f32 %v5715, %v7286
      %v7397 = vadd.f32 %v5716, %v7291
      %v7398 = vadd.f32 %v5717, %v7294
      %v7399 = vadd.f32 %v5718, %v7299
      %v7400 = vadd.f32 %v5719, %v7302
      %v7401 = vadd.f32 %v5720, %v7307
      %v7402 = vadd.f32 %v5721, %v7310
      %v7403 = vadd.f32 %v5722, %v7315
      %v7404 = vadd.f32 %v5723, %v7318
      %v7405 = vadd.f32 %v5724, %v7323
      %v7406 = vadd.f32 %v5725, %v7326
      %v7407 = vadd.f32 %v5726, %v7331
      %v7408 = vadd.f32 %v5727, %v7334
      %v7409 = vadd.f32 %v5728, %v7339
      %v7410 = vadd.f32 %v5729, %v7342
      %v7411 = vadd.f32 %v5730, %v7347
      %v7412 = vadd.f32 %v5731, %v7350
      %v7413 = vadd.f32 %v5732, %v7355
      %v7414 = vadd.f32 %v5733, %v7358
      %v7415 = vadd.f32 %v5734, %v7363
      %v7416 = vadd.f32 %v5735, %v7366
      %v7417 = vadd.f32 %v5736, %v7371
      %v7418 = vadd.f32 %v5737, %v7374
      %v7419 = vadd.f32 %v5738, %v7379
      %v7420 = vadd.f32 %v5739, %v7382
      %v7421 = vld [vmem:[%s4] sm:$0x1]
      %v7423 = vlaneseq
      %v7424 = vshrl.u32 %v7423, 7
      %v7425 = vsub.s32 0, %v7424
      %v7426 = vrot.slane %v7421, %v7425
      %v7428 = vadd.f32 %v7385, %v7426
      %v7429 = vadd.f32 %v7386, %v7426
      %v7430 = vadd.f32 %v7387, %v7426
      %v7431 = vadd.f32 %v7388, %v7426
      %v7432 = vadd.f32 %v7389, %v7426
      %v7433 = vadd.f32 %v7390, %v7426
      %v7434 = vadd.f32 %v7391, %v7426
      %v7435 = vadd.f32 %v7392, %v7426
      %v7436 = vadd.f32 %v7393, %v7426
      %v7437 = vadd.f32 %v7394, %v7426
      %v7438 = vadd.f32 %v7395, %v7426
      %v7439 = vadd.f32 %v7396, %v7426
      %v7440 = vadd.f32 %v7397, %v7426
      %v7441 = vadd.f32 %v7398, %v7426
      %v7442 = vadd.f32 %v7399, %v7426
      %v7443 = vadd.f32 %v7400, %v7426
      %v7444 = vadd.f32 %v7401, %v7426
      %v7445 = vadd.f32 %v7402, %v7426
      %v7446 = vadd.f32 %v7403, %v7426
      %v7447 = vadd.f32 %v7404, %v7426
      %v7448 = vadd.f32 %v7405, %v7426
      %v7449 = vadd.f32 %v7406, %v7426
      %v7450 = vadd.f32 %v7407, %v7426
      %v7451 = vadd.f32 %v7408, %v7426
      %v7452 = vadd.f32 %v7409, %v7426
      %v7453 = vadd.f32 %v7410, %v7426
      %v7454 = vadd.f32 %v7411, %v7426
      %v7455 = vadd.f32 %v7412, %v7426
      %v7456 = vadd.f32 %v7413, %v7426
      %v7457 = vadd.f32 %v7414, %v7426
      %v7458 = vadd.f32 %v7415, %v7426
      %v7459 = vadd.f32 %v7416, %v7426
      %v7460 = vadd.f32 %v7417, %v7426
      %v7461 = vadd.f32 %v7418, %v7426
      %v7462 = vadd.f32 %v7419, %v7426
      %v7463 = vadd.f32 %v7420, %v7426
      %7464 = vst.msk [vmem:[%s307] sm:$0xff] %vm386, %v7428
      %7465 = vst.msk [vmem:[%s307 + $0x8] sm:$0xff] %vm386, %v7429
      %7466 = vst.msk [vmem:[%s307 + $0x10] sm:$0xff] %vm386, %v7430
      %7467 = vst.msk [vmem:[%s307 + $0x18] sm:$0xff] %vm386, %v7431
      %7468 = vst.msk [vmem:[%s307 + $0x20] sm:$0xff] %vm386, %v7432
      %7469 = vst.msk [vmem:[%s307 + $0x28] sm:$0xff] %vm386, %v7433
      %7470 = vst.msk [vmem:[%s307 + $0x30] sm:$0xff] %vm386, %v7434
      %7471 = vst.msk [vmem:[%s307 + $0x38] sm:$0xff] %vm386, %v7435
      %7472 = vst.msk [vmem:[%s307 + $0x40] sm:$0xff] %vm386, %v7436
      %7473 = vst.msk [vmem:[%s307 + $0x48] sm:$0xff] %vm386, %v7437
      %7474 = vst.msk [vmem:[%s307 + $0x50] sm:$0xff] %vm386, %v7438
      %7475 = vst.msk [vmem:[%s307 + $0x58] sm:$0xff] %vm386, %v7439
      %7476 = vst.msk [vmem:[%s307 + $0x60] sm:$0xff] %vm386, %v7440
      %7477 = vst.msk [vmem:[%s307 + $0x68] sm:$0xff] %vm386, %v7441
      %7478 = vst.msk [vmem:[%s307 + $0x70] sm:$0xff] %vm386, %v7442
      %7479 = vst.msk [vmem:[%s307 + $0x78] sm:$0xff] %vm386, %v7443
      %7480 = vst.msk [vmem:[%s307 + $0x80] sm:$0xff] %vm386, %v7444
      %7481 = vst.msk [vmem:[%s307 + $0x88] sm:$0xff] %vm386, %v7445
      %7482 = vst.msk [vmem:[%s307 + $0x90] sm:$0xff] %vm386, %v7446
      %7483 = vst.msk [vmem:[%s307 + $0x98] sm:$0xff] %vm386, %v7447
      %7484 = vst.msk [vmem:[%s307 + $0xa0] sm:$0xff] %vm386, %v7448
      %7485 = vst.msk [vmem:[%s307 + $0xa8] sm:$0xff] %vm386, %v7449
      %7486 = vst.msk [vmem:[%s307 + $0xb0] sm:$0xff] %vm386, %v7450
      %7487 = vst.msk [vmem:[%s307 + $0xb8] sm:$0xff] %vm386, %v7451
      %7488 = vst.msk [vmem:[%s307 + $0xc0] sm:$0xff] %vm386, %v7452
      %7489 = vst.msk [vmem:[%s307 + $0xc8] sm:$0xff] %vm386, %v7453
      %7490 = vst.msk [vmem:[%s307 + $0xd0] sm:$0xff] %vm386, %v7454
      %7491 = vst.msk [vmem:[%s307 + $0xd8] sm:$0xff] %vm386, %v7455
      %7492 = vst.msk [vmem:[%s307 + $0xe0] sm:$0xff] %vm386, %v7456
      %7493 = vst.msk [vmem:[%s307 + $0xe8] sm:$0xff] %vm386, %v7457
      %7494 = vst.msk [vmem:[%s307 + $0xf0] sm:$0xff] %vm386, %v7458
      %7495 = vst.msk [vmem:[%s307 + $0xf8] sm:$0xff] %vm386, %v7459
      %7496 = vst.msk [vmem:[%s307 + $0x100] sm:$0xff] %vm386, %v7460
      %7497 = vst.msk [vmem:[%s307 + $0x108] sm:$0xff] %vm386, %v7461
      %7498 = vst.msk [vmem:[%s307 + $0x110] sm:$0xff] %vm386, %v7462
      %7499 = vst.msk [vmem:[%s307 + $0x118] sm:$0xff] %vm386, %v7463
      %p7500 = scmp.lt.s32.totalorder %s21, 1
      %s7501 = scalar_select %p7500, %s21, 1
      %p7502 = scmp.lt.s32.totalorder %s22, 3
      %s7503 = scalar_select %p7502, %s22, 3
      %s7504 = smul.addr %s7503, 36
      %s7505 = smul.addr %s7501, 144
      %s7506 = sadd.s32 %s7504, %s7505
      %s7507 = smul.addr %s7506, 8
      %s7508 = scalar_lea.vmem %s6, %s7507
      // Predicated region
      $region45: #{earth_specific_block.2} parent=43 // pred_check
        %p7509 = pneg %p187
      $region46: #{earth_specific_block.2} parent=43 // pred_check_branch
        %7511 = sbr.rel (%p7509) target = $region48
      $region47: #{earth_specific_block.2} parent=43 // pred_region
        _
      $region48: #{earth_specific_block.2} parent=43 // pred_fallthru
        _
    $region44: #{earth_specific_block.2} parent=5 // pred_fallthru
      _
    %p7512 = scmp.le.s32.totalorder 2, %s12
    // Predicated region
    $region49: #{earth_specific_block.2} parent=5 // pred_check
      %p7513 = pneg %p7512
    $region50: #{earth_specific_block.2} parent=5 // pred_check_branch
      %7515 = sbr.rel (%p7513) target = $region52
    $region51: #{earth_specific_block.2} parent=5 // pred_region
      %s7516 = ssub.s32 %s12, 2
      // Predicated region
      $region53: #{earth_specific_block.2} parent=51 // pred_check
        %p7517 = pneg %p193
      $region54: #{earth_specific_block.2} parent=51 // pred_check_branch
        %7519 = sbr.rel (%p7517) target = $region56
      $region55: #{earth_specific_block.2} parent=51 // pred_region
        %p7520 = scmp.lt.s32.totalorder %s23, 1
        %s7521 = scalar_select %p7520, %s23, 1
        %p7522 = scmp.lt.s32.totalorder %s24, 3
        %s7523 = scalar_select %p7522, %s24, 3
        %s7524 = smul.addr %s7523, 36
        %s7525 = smul.addr %s7521, 144
        %s7526 = sadd.s32 %s7524, %s7525
        %s7527 = smul.addr %s7526, 8
        %s7528 = scalar_lea.vmem %s6, %s7527
      $region56: #{earth_specific_block.2} parent=51 // pred_fallthru
        _
    $region52: #{earth_specific_block.2} parent=5 // pred_fallthru
      _
  $region6: #{earth_specific_block.2} parent=0 // loop_footer
    %s16 = sadd.s32 1, %s12
  $region7: #{earth_specific_block.2} parent=0 // loop_footer_branch
    %11 = sbr.rel target = $region3
  $region8: #{earth_specific_block.2} parent=0 // loop_exit
    _

// kernel: earth_specific_block.3
$region0: #{earth_specific_block.3}
  #allocation0 [shape = 'u32[]', space=smem, size = 0x4, offset = 0x4, fixed_abs, tag = 'smem constant byte address 0x4 - core index']
  #allocation1 [shape = 'u32[144,128]{1,0:T(1,128)}', space=vmem, size = 0x12000, scoped, tag = 'internal scratch']
  %s0 = inlined_call_operand.vmem [shape: f32[2560,32], index: 0, kind: input, shape index: {}]
  %s1 = inlined_call_operand.vmem [shape: f32[2560,32], index: 1, kind: input, shape index: {}]
  %s2 = inlined_call_operand.vmem [shape: f32[1,32], index: 2, kind: input, shape index: {}]
  %s3 = inlined_call_operand.vmem [shape: f32[1,32], index: 3, kind: input, shape index: {}]
  %s4 = inlined_call_operand.vmem [shape: f32[1,32], index: 4, kind: input, shape index: {}]
  %s5 = inlined_call_operand.vmem [shape: f32[1,32], index: 5, kind: input, shape index: {}]
  %s6 = inlined_call_operand.vmem [shape: bf16[32,128], index: 6, kind: input, shape index: {}]
  %s7 = inlined_call_operand.vmem [shape: f32[1,128], index: 7, kind: input, shape index: {}]
  %s8 = inlined_call_operand.vmem [shape: bf16[128,32], index: 8, kind: input, shape index: {}]
  %s9 = inlined_call_operand.vmem [shape: f32[1,32], index: 9, kind: input, shape index: {}]
  %s10 = inlined_call_operand.vmem [shape: f32[2560,32], index: 10, kind: output, shape index: {}]
  %s11 = sld [smem:[#allocation0]]
  $region73: #{earth_specific_block.3} parent=0
    _
  %s13 = ssub.s32 1, %s11
  %s14 = scalar_select 0, %s13, %s11
  loop: start=0, step=1, limit=7
  $region2: #{earth_specific_block.3} parent=0 // loop_pre_header
    _
  $region3: #{earth_specific_block.3} parent=0 // loop_header
    %s16 = sphi 0, %s20
    %p17 = scmp.ge.s32.totalorder %s16, 7
    %s26 = sphi 0, %s28
    %s29 = sphi 0, %s26
    %s30 = sphi 0, %s29
    %s46 = sphi 0, %s30
    %s52 = sphi 0, %s54
    %s55 = sphi 0, %s52
    %s56 = sphi 0, %s55
    %s72 = sphi 0, %s56
    %s76 = sphi 0, %s76
    %s78 = sphi 0, %s76
    %s79 = sphi 0, %s78
    %s93 = sphi 0, %s79
    %s97 = sphi 0, %s97
    %s99 = sphi 0, %s97
    %s100 = sphi 0, %s99
    %s114 = sphi 0, %s100
    %s118 = sphi 0, %s118
    %s120 = sphi 0, %s118
    %s121 = sphi 0, %s120
    %s135 = sphi 0, %s121
    %s139 = sphi 0, %s139
    %s141 = sphi 0, %s139
    %s142 = sphi 0, %s141
    %s156 = sphi 0, %s142
    %s160 = sphi 0, %s160
    %s162 = sphi 0, %s160
    %s163 = sphi 0, %s162
    %s177 = sphi 0, %s163
    %s181 = sphi 0, %s181
    %s183 = sphi 0, %s181
    %s184 = sphi 0, %s183
    %s198 = sphi 0, %s184
    %s202 = sphi 0, %s202
    %s204 = sphi 0, %s202
    %s205 = sphi 0, %s204
    %s219 = sphi 0, %s205
    %s223 = sphi 0, %s223
    %s225 = sphi 0, %s223
    %s226 = sphi 0, %s225
    %s240 = sphi 0, %s226
    %s246 = sphi 0, %s248
    %s249 = sphi 0, %s246
    %s250 = sphi 0, %s249
    %s266 = sphi 0, %s250
  $region4: #{earth_specific_block.3} parent=0 // loop_header_branch
    %19 = sbr.rel (%p17) target = $region8
  $region5: #{earth_specific_block.3} parent=0 // loop_body
    %s21 = ssub.s32 %s16, 1
    %s22 = ssub.s32 %s16, 2
    %s23 = sadd.s32 %s16, 1
    %s24 = ssub.s32 %s16, %s23
    %p25 = scmp.eq.s32.totalorder %s24, 0
    %s27 = sadd.s32 %s26, 1
    %s28 = scalar_select %p25, %s26, %s27
    %p31 = pneg %p25
    %p32 = scmp.eq.s32.totalorder %s16, 4
    %p33 = por %p31, %p32
    %p34 = scmp.ne.s32.totalorder %s26, %s29
    %p35 = scmp.eq.s32.totalorder %s16, 0
    %p36 = por %p34, %p35
    %p37 = scmp.ne.s32.totalorder %s26, %s29
    %p38 = scmp.eq.s32.totalorder %s21, 4
    %p39 = por %p37, %p38
    %p40 = scmp.ne.s32.totalorder %s29, %s30
    %p41 = scmp.eq.s32.totalorder %s21, 0
    %p42 = por %p40, %p41
    %p43 = scmp.ne.s32.totalorder %s29, %s30
    %p44 = scmp.eq.s32.totalorder %s22, 4
    %p45 = por %p43, %p44
    %p47 = scmp.ne.s32.totalorder %s30, %s46
    %p48 = scmp.eq.s32.totalorder %s22, 0
    %p49 = por %p47, %p48
    %s50 = ssub.s32 %s16, %s23
    %p51 = scmp.eq.s32.totalorder %s50, 0
    %s53 = sadd.s32 %s52, 1
    %s54 = scalar_select %p51, %s52, %s53
    %p57 = pneg %p51
    %p58 = scmp.eq.s32.totalorder %s16, 4
    %p59 = por %p57, %p58
    %p60 = scmp.ne.s32.totalorder %s52, %s55
    %p61 = scmp.eq.s32.totalorder %s16, 0
    %p62 = por %p60, %p61
    %p63 = scmp.ne.s32.totalorder %s52, %s55
    %p64 = scmp.eq.s32.totalorder %s21, 4
    %p65 = por %p63, %p64
    %p66 = scmp.ne.s32.totalorder %s55, %s56
    %p67 = scmp.eq.s32.totalorder %s21, 0
    %p68 = por %p66, %p67
    %p69 = scmp.ne.s32.totalorder %s55, %s56
    %p70 = scmp.eq.s32.totalorder %s22, 4
    %p71 = por %p69, %p70
    %p73 = scmp.ne.s32.totalorder %s56, %s72
    %p74 = scmp.eq.s32.totalorder %s22, 0
    %p75 = por %p73, %p74
    %s77 = sadd.s32 %s76, 1
    %p80 = scmp.eq.s32.totalorder %s16, 4
    %p81 = scmp.ne.s32.totalorder %s76, %s78
    %p82 = scmp.eq.s32.totalorder %s16, 0
    %p83 = por %p81, %p82
    %p84 = scmp.ne.s32.totalorder %s76, %s78
    %p85 = scmp.eq.s32.totalorder %s21, 4
    %p86 = por %p84, %p85
    %p87 = scmp.ne.s32.totalorder %s78, %s79
    %p88 = scmp.eq.s32.totalorder %s21, 0
    %p89 = por %p87, %p88
    %p90 = scmp.ne.s32.totalorder %s78, %s79
    %p91 = scmp.eq.s32.totalorder %s22, 4
    %p92 = por %p90, %p91
    %p94 = scmp.ne.s32.totalorder %s79, %s93
    %p95 = scmp.eq.s32.totalorder %s22, 0
    %p96 = por %p94, %p95
    %s98 = sadd.s32 %s97, 1
    %p101 = scmp.eq.s32.totalorder %s16, 4
    %p102 = scmp.ne.s32.totalorder %s97, %s99
    %p103 = scmp.eq.s32.totalorder %s16, 0
    %p104 = por %p102, %p103
    %p105 = scmp.ne.s32.totalorder %s97, %s99
    %p106 = scmp.eq.s32.totalorder %s21, 4
    %p107 = por %p105, %p106
    %p108 = scmp.ne.s32.totalorder %s99, %s100
    %p109 = scmp.eq.s32.totalorder %s21, 0
    %p110 = por %p108, %p109
    %p111 = scmp.ne.s32.totalorder %s99, %s100
    %p112 = scmp.eq.s32.totalorder %s22, 4
    %p113 = por %p111, %p112
    %p115 = scmp.ne.s32.totalorder %s100, %s114
    %p116 = scmp.eq.s32.totalorder %s22, 0
    %p117 = por %p115, %p116
    %s119 = sadd.s32 %s118, 1
    %p122 = scmp.eq.s32.totalorder %s16, 4
    %p123 = scmp.ne.s32.totalorder %s118, %s120
    %p124 = scmp.eq.s32.totalorder %s16, 0
    %p125 = por %p123, %p124
    %p126 = scmp.ne.s32.totalorder %s118, %s120
    %p127 = scmp.eq.s32.totalorder %s21, 4
    %p128 = por %p126, %p127
    %p129 = scmp.ne.s32.totalorder %s120, %s121
    %p130 = scmp.eq.s32.totalorder %s21, 0
    %p131 = por %p129, %p130
    %p132 = scmp.ne.s32.totalorder %s120, %s121
    %p133 = scmp.eq.s32.totalorder %s22, 4
    %p134 = por %p132, %p133
    %p136 = scmp.ne.s32.totalorder %s121, %s135
    %p137 = scmp.eq.s32.totalorder %s22, 0
    %p138 = por %p136, %p137
    %s140 = sadd.s32 %s139, 1
    %p143 = scmp.eq.s32.totalorder %s16, 4
    %p144 = scmp.ne.s32.totalorder %s139, %s141
    %p145 = scmp.eq.s32.totalorder %s16, 0
    %p146 = por %p144, %p145
    %p147 = scmp.ne.s32.totalorder %s139, %s141
    %p148 = scmp.eq.s32.totalorder %s21, 4
    %p149 = por %p147, %p148
    %p150 = scmp.ne.s32.totalorder %s141, %s142
    %p151 = scmp.eq.s32.totalorder %s21, 0
    %p152 = por %p150, %p151
    %p153 = scmp.ne.s32.totalorder %s141, %s142
    %p154 = scmp.eq.s32.totalorder %s22, 4
    %p155 = por %p153, %p154
    %p157 = scmp.ne.s32.totalorder %s142, %s156
    %p158 = scmp.eq.s32.totalorder %s22, 0
    %p159 = por %p157, %p158
    %s161 = sadd.s32 %s160, 1
    %p164 = scmp.eq.s32.totalorder %s16, 4
    %p165 = scmp.ne.s32.totalorder %s160, %s162
    %p166 = scmp.eq.s32.totalorder %s16, 0
    %p167 = por %p165, %p166
    %p168 = scmp.ne.s32.totalorder %s160, %s162
    %p169 = scmp.eq.s32.totalorder %s21, 4
    %p170 = por %p168, %p169
    %p171 = scmp.ne.s32.totalorder %s162, %s163
    %p172 = scmp.eq.s32.totalorder %s21, 0
    %p173 = por %p171, %p172
    %p174 = scmp.ne.s32.totalorder %s162, %s163
    %p175 = scmp.eq.s32.totalorder %s22, 4
    %p176 = por %p174, %p175
    %p178 = scmp.ne.s32.totalorder %s163, %s177
    %p179 = scmp.eq.s32.totalorder %s22, 0
    %p180 = por %p178, %p179
    %s182 = sadd.s32 %s181, 1
    %p185 = scmp.eq.s32.totalorder %s16, 4
    %p186 = scmp.ne.s32.totalorder %s181, %s183
    %p187 = scmp.eq.s32.totalorder %s16, 0
    %p188 = por %p186, %p187
    %p189 = scmp.ne.s32.totalorder %s181, %s183
    %p190 = scmp.eq.s32.totalorder %s21, 4
    %p191 = por %p189, %p190
    %p192 = scmp.ne.s32.totalorder %s183, %s184
    %p193 = scmp.eq.s32.totalorder %s21, 0
    %p194 = por %p192, %p193
    %p195 = scmp.ne.s32.totalorder %s183, %s184
    %p196 = scmp.eq.s32.totalorder %s22, 4
    %p197 = por %p195, %p196
    %p199 = scmp.ne.s32.totalorder %s184, %s198
    %p200 = scmp.eq.s32.totalorder %s22, 0
    %p201 = por %p199, %p200
    %s203 = sadd.s32 %s202, 1
    %p206 = scmp.eq.s32.totalorder %s16, 4
    %p207 = scmp.ne.s32.totalorder %s202, %s204
    %p208 = scmp.eq.s32.totalorder %s16, 0
    %p209 = por %p207, %p208
    %p210 = scmp.ne.s32.totalorder %s202, %s204
    %p211 = scmp.eq.s32.totalorder %s21, 4
    %p212 = por %p210, %p211
    %p213 = scmp.ne.s32.totalorder %s204, %s205
    %p214 = scmp.eq.s32.totalorder %s21, 0
    %p215 = por %p213, %p214
    %p216 = scmp.ne.s32.totalorder %s204, %s205
    %p217 = scmp.eq.s32.totalorder %s22, 4
    %p218 = por %p216, %p217
    %p220 = scmp.ne.s32.totalorder %s205, %s219
    %p221 = scmp.eq.s32.totalorder %s22, 0
    %p222 = por %p220, %p221
    %s224 = sadd.s32 %s223, 1
    %p227 = scmp.eq.s32.totalorder %s16, 4
    %p228 = scmp.ne.s32.totalorder %s223, %s225
    %p229 = scmp.eq.s32.totalorder %s16, 0
    %p230 = por %p228, %p229
    %p231 = scmp.ne.s32.totalorder %s223, %s225
    %p232 = scmp.eq.s32.totalorder %s21, 4
    %p233 = por %p231, %p232
    %p234 = scmp.ne.s32.totalorder %s225, %s226
    %p235 = scmp.eq.s32.totalorder %s21, 0
    %p236 = por %p234, %p235
    %p237 = scmp.ne.s32.totalorder %s225, %s226
    %p238 = scmp.eq.s32.totalorder %s22, 4
    %p239 = por %p237, %p238
    %p241 = scmp.ne.s32.totalorder %s226, %s240
    %p242 = scmp.eq.s32.totalorder %s22, 0
    %p243 = por %p241, %p242
    %s244 = ssub.s32 %s16, %s23
    %p245 = scmp.eq.s32.totalorder %s244, 0
    %s247 = sadd.s32 %s246, 1
    %s248 = scalar_select %p245, %s246, %s247
    %p251 = pneg %p245
    %p252 = scmp.eq.s32.totalorder %s16, 4
    %p253 = por %p251, %p252
    %p254 = scmp.ne.s32.totalorder %s246, %s249
    %p255 = scmp.eq.s32.totalorder %s16, 0
    %p256 = por %p254, %p255
    %p257 = scmp.ne.s32.totalorder %s246, %s249
    %p258 = scmp.eq.s32.totalorder %s21, 4
    %p259 = por %p257, %p258
    %p260 = scmp.ne.s32.totalorder %s249, %s250
    %p261 = scmp.eq.s32.totalorder %s21, 0
    %p262 = por %p260, %p261
    %p263 = scmp.ne.s32.totalorder %s249, %s250
    %p264 = scmp.eq.s32.totalorder %s22, 4
    %p265 = por %p263, %p264
    %p267 = scmp.ne.s32.totalorder %s250, %s266
    %p268 = scmp.eq.s32.totalorder %s22, 0
    %p269 = por %p267, %p268
    %p270 = scmp.le.s32.totalorder 1, %s16
    %p271 = scmp.lt.s32.totalorder %s16, 6
    %p272 = pnand %p270, %p271
    %p273 = pneg %p272
    // Predicated region
    $region9: #{earth_specific_block.3} parent=5 // pred_check
      _
    $region10: #{earth_specific_block.3} parent=5 // pred_check_branch
      %275 = sbr.rel (%p272) target = $region12
    $region11: #{earth_specific_block.3} parent=5 // pred_region
      %s276 = ssub.s32 %s16, 1
      // Predicated region
      $region13: #{earth_specific_block.3} parent=11 // pred_check
        %p277 = pneg %p89
      $region14: #{earth_specific_block.3} parent=11 // pred_check_branch
        %279 = sbr.rel (%p277) target = $region16
      $region15: #{earth_specific_block.3} parent=11 // pred_region
        _
      $region16: #{earth_specific_block.3} parent=11 // pred_fallthru
        _
      // Predicated region
      $region17: #{earth_specific_block.3} parent=11 // pred_check
        %p280 = pneg %p110
      $region18: #{earth_specific_block.3} parent=11 // pred_check_branch
        %282 = sbr.rel (%p280) target = $region20
      $region19: #{earth_specific_block.3} parent=11 // pred_region
        _
      $region20: #{earth_specific_block.3} parent=11 // pred_fallthru
        _
      // Predicated region
      $region21: #{earth_specific_block.3} parent=11 // pred_check
        %p283 = pneg %p131
      $region22: #{earth_specific_block.3} parent=11 // pred_check_branch
        %285 = sbr.rel (%p283) target = $region24
      $region23: #{earth_specific_block.3} parent=11 // pred_region
        _
      $region24: #{earth_specific_block.3} parent=11 // pred_fallthru
        _
      // Predicated region
      $region25: #{earth_specific_block.3} parent=11 // pred_check
        %p286 = pneg %p152
      $region26: #{earth_specific_block.3} parent=11 // pred_check_branch
        %288 = sbr.rel (%p286) target = $region28
      $region27: #{earth_specific_block.3} parent=11 // pred_region
        _
      $region28: #{earth_specific_block.3} parent=11 // pred_fallthru
        _
      // Predicated region
      $region29: #{earth_specific_block.3} parent=11 // pred_check
        %p289 = pneg %p173
      $region30: #{earth_specific_block.3} parent=11 // pred_check_branch
        %291 = sbr.rel (%p289) target = $region32
      $region31: #{earth_specific_block.3} parent=11 // pred_region
        _
      $region32: #{earth_specific_block.3} parent=11 // pred_fallthru
        _
      // Predicated region
      $region33: #{earth_specific_block.3} parent=11 // pred_check
        %p292 = pneg %p194
      $region34: #{earth_specific_block.3} parent=11 // pred_check_branch
        %294 = sbr.rel (%p292) target = $region36
      $region35: #{earth_specific_block.3} parent=11 // pred_region
        _
      $region36: #{earth_specific_block.3} parent=11 // pred_fallthru
        _
      // Predicated region
      $region37: #{earth_specific_block.3} parent=11 // pred_check
        %p295 = pneg %p215
      $region38: #{earth_specific_block.3} parent=11 // pred_check_branch
        %297 = sbr.rel (%p295) target = $region40
      $region39: #{earth_specific_block.3} parent=11 // pred_region
        _
      $region40: #{earth_specific_block.3} parent=11 // pred_fallthru
        _
      // Predicated region
      $region41: #{earth_specific_block.3} parent=11 // pred_check
        %p298 = pneg %p236
      $region42: #{earth_specific_block.3} parent=11 // pred_check_branch
        %300 = sbr.rel (%p298) target = $region44
      $region43: #{earth_specific_block.3} parent=11 // pred_region
        _
      $region44: #{earth_specific_block.3} parent=11 // pred_fallthru
        _
    $region12: #{earth_specific_block.3} parent=5 // pred_fallthru
      _
    %p301 = scmp.lt.s32.totalorder %s16, 5
    // Predicated region
    $region45: #{earth_specific_block.3} parent=5 // pred_check
      %p302 = pneg %p301
    $region46: #{earth_specific_block.3} parent=5 // pred_check_branch
      %304 = sbr.rel (%p302) target = $region48
    $region47: #{earth_specific_block.3} parent=5 // pred_region
      // Predicated region
      $region49: #{earth_specific_block.3} parent=47 // pred_check
        %p305 = pneg %p36
      $region50: #{earth_specific_block.3} parent=47 // pred_check_branch
        %307 = sbr.rel (%p305) target = $region52
      $region51: #{earth_specific_block.3} parent=47 // pred_region
        %s308 = smul.u32 64, %s16
        %p309 = scmp.lt.s32.totalorder %s308, 319
        %s310 = scalar_select %p309, %s308, 319
        %s311 = smul.addr %s310, 8
        %s312 = scalar_lea.vmem %s0, %s311
        %s313 = smul.u32 64, %s16
      $region52: #{earth_specific_block.3} parent=47 // pred_fallthru
        _
      // Predicated region
      $region53: #{earth_specific_block.3} parent=47 // pred_check
        %p314 = pneg %p62
      $region54: #{earth_specific_block.3} parent=47 // pred_check_branch
        %316 = sbr.rel (%p314) target = $region56
      $region55: #{earth_specific_block.3} parent=47 // pred_region
        %s317 = smul.u32 64, %s16
        %p318 = scmp.lt.s32.totalorder %s317, 319
        %s319 = scalar_select %p318, %s317, 319
        %s320 = smul.addr %s319, 8
        %s321 = scalar_lea.vmem %s1, %s320
        %s322 = smul.u32 64, %s16
      $region56: #{earth_specific_block.3} parent=47 // pred_fallthru
        _
    $region48: #{earth_specific_block.3} parent=5 // pred_fallthru
      _
    %p323 = scmp.le.s32.totalorder 1, %s16
    %p324 = scmp.lt.s32.totalorder %s16, 6
    %p325 = pnand %p323, %p324
    %p326 = pneg %p325
    // Predicated region
    $region57: #{earth_specific_block.3} parent=5 // pred_check
      _
    $region58: #{earth_specific_block.3} parent=5 // pred_check_branch
      %328 = sbr.rel (%p325) target = $region60
    $region59: #{earth_specific_block.3} parent=5 // pred_region
      %s329 = ssub.s32 %s16, 1
      %s330 = smul.u32 64, %s21
      %p331 = scmp.lt.s32.totalorder %s330, 319
      %s332 = scalar_select %p331, %s330, 319
      %s333 = smul.addr %s332, 8
      %s334 = scalar_lea.vmem %s0, %s333
      %p335 = pneg %p42
      %p336 = pneg %p39
      %s337 = smul.u32 64, %s21
      %p338 = scmp.lt.s32.totalorder %s337, 319
      %s339 = scalar_select %p338, %s337, 319
      %s340 = smul.addr %s339, 8
      %s341 = scalar_lea.vmem %s1, %s340
      %p342 = pneg %p68
      %p343 = pneg %p65
      %p344 = pneg %p89
      %p345 = pneg %p86
      %p346 = pneg %p110
      %p347 = pneg %p107
      %p348 = pneg %p131
      %p349 = pneg %p128
      %p350 = pneg %p152
      %p351 = pneg %p149
      %p352 = pneg %p173
      %p353 = pneg %p170
      %p354 = pneg %p194
      %p355 = pneg %p191
      %p356 = pneg %p215
      %p357 = pneg %p212
      %p358 = pneg %p236
      %p359 = pneg %p233
      %p360 = pneg %p262
      %p361 = pneg %p259
      %s362 = smul.u32 64, %s21
      %p363 = scmp.lt.s32.totalorder %s362, 319
      %s364 = scalar_select %p363, %s362, 319
      %s365 = smul.addr %s364, 8
      %s366 = scalar_lea.vmem %s10, %s365
      %s367 = smul.u32 64, %s21
      %p368 = scmp.lt.s32.totalorder %s367, 319
      %s369 = scalar_select %p368, %s367, 319
      %s370 = smul.addr %s369, 8
      %s371 = scalar_lea.vmem %s0, %s370
      %s372 = smul.u32 64, %s21
      %s373 = smul.u32 64, %s21
      %p374 = scmp.lt.s32.totalorder %s373, 319
      %s375 = scalar_select %p374, %s373, 319
      %s376 = smul.addr %s375, 8
      %s377 = scalar_lea.vmem %s1, %s376
      %s378 = smul.u32 64, %s21
      %s379 = smul.u32 64, %s21
      %p380 = scmp.lt.s32.totalorder %s379, 319
      %s381 = scalar_select %p380, %s379, 319
      %s382 = smul.addr %s381, 8
      %s383 = scalar_lea.vmem %s10, %s382
      %s384 = smul.u32 64, %s21
      %v386 = vld [vmem:[%s371] sm:$0xff]
      %v387 = vld [vmem:[%s371 + $0x8] sm:$0xff]
      %v388 = vld [vmem:[%s371 + $0x10] sm:$0xff]
      %v389 = vld [vmem:[%s371 + $0x18] sm:$0xff]
      %v390 = vld [vmem:[%s371 + $0x20] sm:$0xff]
      %v391 = vld [vmem:[%s371 + $0x28] sm:$0xff]
      %v392 = vld [vmem:[%s371 + $0x30] sm:$0xff]
      %v393 = vld [vmem:[%s371 + $0x38] sm:$0xff]
      %v394 = vld [vmem:[%s371 + $0x40] sm:$0xff]
      %v395 = vld [vmem:[%s371 + $0x48] sm:$0xff]
      %v396 = vld [vmem:[%s371 + $0x50] sm:$0xff]
      %v397 = vld [vmem:[%s371 + $0x58] sm:$0xff]
      %v398 = vld [vmem:[%s371 + $0x60] sm:$0xff]
      %v399 = vld [vmem:[%s371 + $0x68] sm:$0xff]
      %v400 = vld [vmem:[%s371 + $0x70] sm:$0xff]
      %v401 = vld [vmem:[%s371 + $0x78] sm:$0xff]
      %v402 = vld [vmem:[%s371 + $0x80] sm:$0xff]
      %v403 = vld [vmem:[%s371 + $0x88] sm:$0xff]
      %v404 = vld [vmem:[%s371 + $0x90] sm:$0xff]
      %v405 = vld [vmem:[%s371 + $0x98] sm:$0xff]
      %v406 = vld [vmem:[%s371 + $0xa0] sm:$0xff]
      %v407 = vld [vmem:[%s371 + $0xa8] sm:$0xff]
      %v408 = vld [vmem:[%s371 + $0xb0] sm:$0xff]
      %v409 = vld [vmem:[%s371 + $0xb8] sm:$0xff]
      %v410 = vld [vmem:[%s371 + $0xc0] sm:$0xff]
      %v411 = vld [vmem:[%s371 + $0xc8] sm:$0xff]
      %v412 = vld [vmem:[%s371 + $0xd0] sm:$0xff]
      %v413 = vld [vmem:[%s371 + $0xd8] sm:$0xff]
      %v414 = vld [vmem:[%s371 + $0xe0] sm:$0xff]
      %v415 = vld [vmem:[%s371 + $0xe8] sm:$0xff]
      %v416 = vld [vmem:[%s371 + $0xf0] sm:$0xff]
      %v417 = vld [vmem:[%s371 + $0xf8] sm:$0xff]
      %v418 = vld [vmem:[%s371 + $0x100] sm:$0xff]
      %v419 = vld [vmem:[%s371 + $0x108] sm:$0xff]
      %v420 = vld [vmem:[%s371 + $0x110] sm:$0xff]
      %v421 = vld [vmem:[%s371 + $0x118] sm:$0xff]
      %v422 = vld [vmem:[%s371 + $0x120] sm:$0xff]
      %v423 = vld [vmem:[%s371 + $0x128] sm:$0xff]
      %v424 = vld [vmem:[%s371 + $0x130] sm:$0xff]
      %v425 = vld [vmem:[%s371 + $0x138] sm:$0xff]
      %v426 = vld [vmem:[%s371 + $0x140] sm:$0xff]
      %v427 = vld [vmem:[%s371 + $0x148] sm:$0xff]
      %v428 = vld [vmem:[%s371 + $0x150] sm:$0xff]
      %v429 = vld [vmem:[%s371 + $0x158] sm:$0xff]
      %v430 = vld [vmem:[%s371 + $0x160] sm:$0xff]
      %v431 = vld [vmem:[%s371 + $0x168] sm:$0xff]
      %v432 = vld [vmem:[%s371 + $0x170] sm:$0xff]
      %v433 = vld [vmem:[%s371 + $0x178] sm:$0xff]
      %v434 = vld [vmem:[%s371 + $0x180] sm:$0xff]
      %v435 = vld [vmem:[%s371 + $0x188] sm:$0xff]
      %v436 = vld [vmem:[%s371 + $0x190] sm:$0xff]
      %v437 = vld [vmem:[%s371 + $0x198] sm:$0xff]
      %v438 = vld [vmem:[%s371 + $0x1a0] sm:$0xff]
      %v439 = vld [vmem:[%s371 + $0x1a8] sm:$0xff]
      %v440 = vld [vmem:[%s371 + $0x1b0] sm:$0xff]
      %v441 = vld [vmem:[%s371 + $0x1b8] sm:$0xff]
      %v442 = vld [vmem:[%s371 + $0x1c0] sm:$0xff]
      %v443 = vld [vmem:[%s371 + $0x1c8] sm:$0xff]
      %v444 = vld [vmem:[%s371 + $0x1d0] sm:$0xff]
      %v445 = vld [vmem:[%s371 + $0x1d8] sm:$0xff]
      %v446 = vld [vmem:[%s371 + $0x1e0] sm:$0xff]
      %v447 = vld [vmem:[%s371 + $0x1e8] sm:$0xff]
      %v448 = vld [vmem:[%s371 + $0x1f0] sm:$0xff]
      %v449 = vld [vmem:[%s371 + $0x1f8] sm:$0xff]
      %v450 = vld [vmem:[%s377] sm:$0xff]
      %v451 = vld [vmem:[%s377 + $0x8] sm:$0xff]
      %v452 = vld [vmem:[%s377 + $0x10] sm:$0xff]
      %v453 = vld [vmem:[%s377 + $0x18] sm:$0xff]
      %v454 = vld [vmem:[%s377 + $0x20] sm:$0xff]
      %v455 = vld [vmem:[%s377 + $0x28] sm:$0xff]
      %v456 = vld [vmem:[%s377 + $0x30] sm:$0xff]
      %v457 = vld [vmem:[%s377 + $0x38] sm:$0xff]
      %v458 = vld [vmem:[%s377 + $0x40] sm:$0xff]
      %v459 = vld [vmem:[%s377 + $0x48] sm:$0xff]
      %v460 = vld [vmem:[%s377 + $0x50] sm:$0xff]
      %v461 = vld [vmem:[%s377 + $0x58] sm:$0xff]
      %v462 = vld [vmem:[%s377 + $0x60] sm:$0xff]
      %v463 = vld [vmem:[%s377 + $0x68] sm:$0xff]
      %v464 = vld [vmem:[%s377 + $0x70] sm:$0xff]
      %v465 = vld [vmem:[%s377 + $0x78] sm:$0xff]
      %v466 = vld [vmem:[%s377 + $0x80] sm:$0xff]
      %v467 = vld [vmem:[%s377 + $0x88] sm:$0xff]
      %v468 = vld [vmem:[%s377 + $0x90] sm:$0xff]
      %v469 = vld [vmem:[%s377 + $0x98] sm:$0xff]
      %v470 = vld [vmem:[%s377 + $0xa0] sm:$0xff]
      %v471 = vld [vmem:[%s377 + $0xa8] sm:$0xff]
      %v472 = vld [vmem:[%s377 + $0xb0] sm:$0xff]
      %v473 = vld [vmem:[%s377 + $0xb8] sm:$0xff]
      %v474 = vld [vmem:[%s377 + $0xc0] sm:$0xff]
      %v475 = vld [vmem:[%s377 + $0xc8] sm:$0xff]
      %v476 = vld [vmem:[%s377 + $0xd0] sm:$0xff]
      %v477 = vld [vmem:[%s377 + $0xd8] sm:$0xff]
      %v478 = vld [vmem:[%s377 + $0xe0] sm:$0xff]
      %v479 = vld [vmem:[%s377 + $0xe8] sm:$0xff]
      %v480 = vld [vmem:[%s377 + $0xf0] sm:$0xff]
      %v481 = vld [vmem:[%s377 + $0xf8] sm:$0xff]
      %v482 = vld [vmem:[%s377 + $0x100] sm:$0xff]
      %v483 = vld [vmem:[%s377 + $0x108] sm:$0xff]
      %v484 = vld [vmem:[%s377 + $0x110] sm:$0xff]
      %v485 = vld [vmem:[%s377 + $0x118] sm:$0xff]
      %v486 = vld [vmem:[%s377 + $0x120] sm:$0xff]
      %v487 = vld [vmem:[%s377 + $0x128] sm:$0xff]
      %v488 = vld [vmem:[%s377 + $0x130] sm:$0xff]
      %v489 = vld [vmem:[%s377 + $0x138] sm:$0xff]
      %v490 = vld [vmem:[%s377 + $0x140] sm:$0xff]
      %v491 = vld [vmem:[%s377 + $0x148] sm:$0xff]
      %v492 = vld [vmem:[%s377 + $0x150] sm:$0xff]
      %v493 = vld [vmem:[%s377 + $0x158] sm:$0xff]
      %v494 = vld [vmem:[%s377 + $0x160] sm:$0xff]
      %v495 = vld [vmem:[%s377 + $0x168] sm:$0xff]
      %v496 = vld [vmem:[%s377 + $0x170] sm:$0xff]
      %v497 = vld [vmem:[%s377 + $0x178] sm:$0xff]
      %v498 = vld [vmem:[%s377 + $0x180] sm:$0xff]
      %v499 = vld [vmem:[%s377 + $0x188] sm:$0xff]
      %v500 = vld [vmem:[%s377 + $0x190] sm:$0xff]
      %v501 = vld [vmem:[%s377 + $0x198] sm:$0xff]
      %v502 = vld [vmem:[%s377 + $0x1a0] sm:$0xff]
      %v503 = vld [vmem:[%s377 + $0x1a8] sm:$0xff]
      %v504 = vld [vmem:[%s377 + $0x1b0] sm:$0xff]
      %v505 = vld [vmem:[%s377 + $0x1b8] sm:$0xff]
      %v506 = vld [vmem:[%s377 + $0x1c0] sm:$0xff]
      %v507 = vld [vmem:[%s377 + $0x1c8] sm:$0xff]
      %v508 = vld [vmem:[%s377 + $0x1d0] sm:$0xff]
      %v509 = vld [vmem:[%s377 + $0x1d8] sm:$0xff]
      %v510 = vld [vmem:[%s377 + $0x1e0] sm:$0xff]
      %v511 = vld [vmem:[%s377 + $0x1e8] sm:$0xff]
      %v512 = vld [vmem:[%s377 + $0x1f0] sm:$0xff]
      %v513 = vld [vmem:[%s377 + $0x1f8] sm:$0xff]
      %v514 = vld [vmem:[%s2] sm:$0x1]
      %v515 = vld [vmem:[%s3] sm:$0x1]
      %vm516 = vcmask 261120
      %v517 = vsel %vm516, %v386, 0.0
      %518 = vadd.xlane.f32.xlu0 %v517
      %v519 = vpop.xlane.xlu0 %518
      %v520 = vsel %vm516, %v387, 0.0
      %521 = vadd.xlane.f32.xlu0 %v520
      %v522 = vpop.xlane.xlu0 %521
      %v523 = vsel %vm516, %v388, 0.0
      %524 = vadd.xlane.f32.xlu0 %v523
      %v525 = vpop.xlane.xlu0 %524
      %v526 = vsel %vm516, %v389, 0.0
      %527 = vadd.xlane.f32.xlu0 %v526
      %v528 = vpop.xlane.xlu0 %527
      %v529 = vsel %vm516, %v390, 0.0
      %530 = vadd.xlane.f32.xlu0 %v529
      %v531 = vpop.xlane.xlu0 %530
      %v532 = vsel %vm516, %v391, 0.0
      %533 = vadd.xlane.f32.xlu0 %v532
      %v534 = vpop.xlane.xlu0 %533
      %v535 = vsel %vm516, %v392, 0.0
      %536 = vadd.xlane.f32.xlu0 %v535
      %v537 = vpop.xlane.xlu0 %536
      %v538 = vsel %vm516, %v393, 0.0
      %539 = vadd.xlane.f32.xlu0 %v538
      %v540 = vpop.xlane.xlu0 %539
      %v541 = vsel %vm516, %v394, 0.0
      %542 = vadd.xlane.f32.xlu0 %v541
      %v543 = vpop.xlane.xlu0 %542
      %v544 = vsel %vm516, %v395, 0.0
      %545 = vadd.xlane.f32.xlu0 %v544
      %v546 = vpop.xlane.xlu0 %545
      %v547 = vsel %vm516, %v396, 0.0
      %548 = vadd.xlane.f32.xlu0 %v547
      %v549 = vpop.xlane.xlu0 %548
      %v550 = vsel %vm516, %v397, 0.0
      %551 = vadd.xlane.f32.xlu0 %v550
      %v552 = vpop.xlane.xlu0 %551
      %v553 = vsel %vm516, %v398, 0.0
      %554 = vadd.xlane.f32.xlu0 %v553
      %v555 = vpop.xlane.xlu0 %554
      %v556 = vsel %vm516, %v399, 0.0
      %557 = vadd.xlane.f32.xlu0 %v556
      %v558 = vpop.xlane.xlu0 %557
      %v559 = vsel %vm516, %v400, 0.0
      %560 = vadd.xlane.f32.xlu0 %v559
      %v561 = vpop.xlane.xlu0 %560
      %v562 = vsel %vm516, %v401, 0.0
      %563 = vadd.xlane.f32.xlu0 %v562
      %v564 = vpop.xlane.xlu0 %563
      %v565 = vsel %vm516, %v402, 0.0
      %566 = vadd.xlane.f32.xlu0 %v565
      %v567 = vpop.xlane.xlu0 %566
      %v568 = vsel %vm516, %v403, 0.0
      %569 = vadd.xlane.f32.xlu0 %v568
      %v570 = vpop.xlane.xlu0 %569
      %v571 = vsel %vm516, %v404, 0.0
      %572 = vadd.xlane.f32.xlu0 %v571
      %v573 = vpop.xlane.xlu0 %572
      %v574 = vsel %vm516, %v405, 0.0
      %575 = vadd.xlane.f32.xlu0 %v574
      %v576 = vpop.xlane.xlu0 %575
      %v577 = vsel %vm516, %v406, 0.0
      %578 = vadd.xlane.f32.xlu0 %v577
      %v579 = vpop.xlane.xlu0 %578
      %v580 = vsel %vm516, %v407, 0.0
      %581 = vadd.xlane.f32.xlu0 %v580
      %v582 = vpop.xlane.xlu0 %581
      %v583 = vsel %vm516, %v408, 0.0
      %584 = vadd.xlane.f32.xlu0 %v583
      %v585 = vpop.xlane.xlu0 %584
      %v586 = vsel %vm516, %v409, 0.0
      %587 = vadd.xlane.f32.xlu0 %v586
      %v588 = vpop.xlane.xlu0 %587
      %v589 = vsel %vm516, %v410, 0.0
      %590 = vadd.xlane.f32.xlu0 %v589
      %v591 = vpop.xlane.xlu0 %590
      %v592 = vsel %vm516, %v411, 0.0
      %593 = vadd.xlane.f32.xlu0 %v592
      %v594 = vpop.xlane.xlu0 %593
      %v595 = vsel %vm516, %v412, 0.0
      %596 = vadd.xlane.f32.xlu0 %v595
      %v597 = vpop.xlane.xlu0 %596
      %v598 = vsel %vm516, %v413, 0.0
      %599 = vadd.xlane.f32.xlu0 %v598
      %v600 = vpop.xlane.xlu0 %599
      %v601 = vsel %vm516, %v414, 0.0
      %602 = vadd.xlane.f32.xlu0 %v601
      %v603 = vpop.xlane.xlu0 %602
      %v604 = vsel %vm516, %v415, 0.0
      %605 = vadd.xlane.f32.xlu0 %v604
      %v606 = vpop.xlane.xlu0 %605
      %v607 = vsel %vm516, %v416, 0.0
      %608 = vadd.xlane.f32.xlu0 %v607
      %v609 = vpop.xlane.xlu0 %608
      %v610 = vsel %vm516, %v417, 0.0
      %611 = vadd.xlane.f32.xlu0 %v610
      %v612 = vpop.xlane.xlu0 %611
      %v613 = vsel %vm516, %v418, 0.0
      %614 = vadd.xlane.f32.xlu0 %v613
      %v615 = vpop.xlane.xlu0 %614
      %v616 = vsel %vm516, %v419, 0.0
      %617 = vadd.xlane.f32.xlu0 %v616
      %v618 = vpop.xlane.xlu0 %617
      %v619 = vsel %vm516, %v420, 0.0
      %620 = vadd.xlane.f32.xlu0 %v619
      %v621 = vpop.xlane.xlu0 %620
      %v622 = vsel %vm516, %v421, 0.0
      %623 = vadd.xlane.f32.xlu0 %v622
      %v624 = vpop.xlane.xlu0 %623
      %v625 = vsel %vm516, %v422, 0.0
      %626 = vadd.xlane.f32.xlu0 %v625
      %v627 = vpop.xlane.xlu0 %626
      %v628 = vsel %vm516, %v423, 0.0
      %629 = vadd.xlane.f32.xlu0 %v628
      %v630 = vpop.xlane.xlu0 %629
      %v631 = vsel %vm516, %v424, 0.0
      %632 = vadd.xlane.f32.xlu0 %v631
      %v633 = vpop.xlane.xlu0 %632
      %v634 = vsel %vm516, %v425, 0.0
      %635 = vadd.xlane.f32.xlu0 %v634
      %v636 = vpop.xlane.xlu0 %635
      %v637 = vsel %vm516, %v426, 0.0
      %638 = vadd.xlane.f32.xlu0 %v637
      %v639 = vpop.xlane.xlu0 %638
      %v640 = vsel %vm516, %v427, 0.0
      %641 = vadd.xlane.f32.xlu0 %v640
      %v642 = vpop.xlane.xlu0 %641
      %v643 = vsel %vm516, %v428, 0.0
      %644 = vadd.xlane.f32.xlu0 %v643
      %v645 = vpop.xlane.xlu0 %644
      %v646 = vsel %vm516, %v429, 0.0
      %647 = vadd.xlane.f32.xlu0 %v646
      %v648 = vpop.xlane.xlu0 %647
      %v649 = vsel %vm516, %v430, 0.0
      %650 = vadd.xlane.f32.xlu0 %v649
      %v651 = vpop.xlane.xlu0 %650
      %v652 = vsel %vm516, %v431, 0.0
      %653 = vadd.xlane.f32.xlu0 %v652
      %v654 = vpop.xlane.xlu0 %653
      %v655 = vsel %vm516, %v432, 0.0
      %656 = vadd.xlane.f32.xlu0 %v655
      %v657 = vpop.xlane.xlu0 %656
      %v658 = vsel %vm516, %v433, 0.0
      %659 = vadd.xlane.f32.xlu0 %v658
      %v660 = vpop.xlane.xlu0 %659
      %v661 = vsel %vm516, %v434, 0.0
      %662 = vadd.xlane.f32.xlu0 %v661
      %v663 = vpop.xlane.xlu0 %662
      %v664 = vsel %vm516, %v435, 0.0
      %665 = vadd.xlane.f32.xlu0 %v664
      %v666 = vpop.xlane.xlu0 %665
      %v667 = vsel %vm516, %v436, 0.0
      %668 = vadd.xlane.f32.xlu0 %v667
      %v669 = vpop.xlane.xlu0 %668
      %v670 = vsel %vm516, %v437, 0.0
      %671 = vadd.xlane.f32.xlu0 %v670
      %v672 = vpop.xlane.xlu0 %671
      %v673 = vsel %vm516, %v438, 0.0
      %674 = vadd.xlane.f32.xlu0 %v673
      %v675 = vpop.xlane.xlu0 %674
      %v676 = vsel %vm516, %v439, 0.0
      %677 = vadd.xlane.f32.xlu0 %v676
      %v678 = vpop.xlane.xlu0 %677
      %v679 = vsel %vm516, %v440, 0.0
      %680 = vadd.xlane.f32.xlu0 %v679
      %v681 = vpop.xlane.xlu0 %680
      %v682 = vsel %vm516, %v441, 0.0
      %683 = vadd.xlane.f32.xlu0 %v682
      %v684 = vpop.xlane.xlu0 %683
      %v685 = vsel %vm516, %v442, 0.0
      %686 = vadd.xlane.f32.xlu0 %v685
      %v687 = vpop.xlane.xlu0 %686
      %v688 = vsel %vm516, %v443, 0.0
      %689 = vadd.xlane.f32.xlu0 %v688
      %v690 = vpop.xlane.xlu0 %689
      %v691 = vsel %vm516, %v444, 0.0
      %692 = vadd.xlane.f32.xlu0 %v691
      %v693 = vpop.xlane.xlu0 %692
      %v694 = vsel %vm516, %v445, 0.0
      %695 = vadd.xlane.f32.xlu0 %v694
      %v696 = vpop.xlane.xlu0 %695
      %v697 = vsel %vm516, %v446, 0.0
      %698 = vadd.xlane.f32.xlu0 %v697
      %v699 = vpop.xlane.xlu0 %698
      %v700 = vsel %vm516, %v447, 0.0
      %701 = vadd.xlane.f32.xlu0 %v700
      %v702 = vpop.xlane.xlu0 %701
      %v703 = vsel %vm516, %v448, 0.0
      %704 = vadd.xlane.f32.xlu0 %v703
      %v705 = vpop.xlane.xlu0 %704
      %v706 = vsel %vm516, %v449, 0.0
      %707 = vadd.xlane.f32.xlu0 %v706
      %v708 = vpop.xlane.xlu0 %707
      %v709 = vrcp.pop 32.0
      %v710 = vmul.f32 %v519, %v709
      %v711 = vmul.f32 %v522, %v709
      %v712 = vmul.f32 %v525, %v709
      %v713 = vmul.f32 %v528, %v709
      %v714 = vmul.f32 %v531, %v709
      %v715 = vmul.f32 %v534, %v709
      %v716 = vmul.f32 %v537, %v709
      %v717 = vmul.f32 %v540, %v709
      %v718 = vmul.f32 %v543, %v709
      %v719 = vmul.f32 %v546, %v709
      %v720 = vmul.f32 %v549, %v709
      %v721 = vmul.f32 %v552, %v709
      %v722 = vmul.f32 %v555, %v709
      %v723 = vmul.f32 %v558, %v709
      %v724 = vmul.f32 %v561, %v709
      %v725 = vmul.f32 %v564, %v709
      %v726 = vmul.f32 %v567, %v709
      %v727 = vmul.f32 %v570, %v709
      %v728 = vmul.f32 %v573, %v709
      %v729 = vmul.f32 %v576, %v709
      %v730 = vmul.f32 %v579, %v709
      %v731 = vmul.f32 %v582, %v709
      %v732 = vmul.f32 %v585, %v709
      %v733 = vmul.f32 %v588, %v709
      %v734 = vmul.f32 %v591, %v709
      %v735 = vmul.f32 %v594, %v709
      %v736 = vmul.f32 %v597, %v709
      %v737 = vmul.f32 %v600, %v709
      %v738 = vmul.f32 %v603, %v709
      %v739 = vmul.f32 %v606, %v709
      %v740 = vmul.f32 %v609, %v709
      %v741 = vmul.f32 %v612, %v709
      %v742 = vmul.f32 %v615, %v709
      %v743 = vmul.f32 %v618, %v709
      %v744 = vmul.f32 %v621, %v709
      %v745 = vmul.f32 %v624, %v709
      %v746 = vmul.f32 %v627, %v709
      %v747 = vmul.f32 %v630, %v709
      %v748 = vmul.f32 %v633, %v709
      %v749 = vmul.f32 %v636, %v709
      %v750 = vmul.f32 %v639, %v709
      %v751 = vmul.f32 %v642, %v709
      %v752 = vmul.f32 %v645, %v709
      %v753 = vmul.f32 %v648, %v709
      %v754 = vmul.f32 %v651, %v709
      %v755 = vmul.f32 %v654, %v709
      %v756 = vmul.f32 %v657, %v709
      %v757 = vmul.f32 %v660, %v709
      %v758 = vmul.f32 %v663, %v709
      %v759 = vmul.f32 %v666, %v709
      %v760 = vmul.f32 %v669, %v709
      %v761 = vmul.f32 %v672, %v709
      %v762 = vmul.f32 %v675, %v709
      %v763 = vmul.f32 %v678, %v709
      %v764 = vmul.f32 %v681, %v709
      %v765 = vmul.f32 %v684, %v709
      %v766 = vmul.f32 %v687, %v709
      %v767 = vmul.f32 %v690, %v709
      %v768 = vmul.f32 %v693, %v709
      %v769 = vmul.f32 %v696, %v709
      %v770 = vmul.f32 %v699, %v709
      %v771 = vmul.f32 %v702, %v709
      %v772 = vmul.f32 %v705, %v709
      %v773 = vmul.f32 %v708, %v709
      %v774 = vsub.f32 %v386, %v710
      %v775 = vsub.f32 %v387, %v711
      %v776 = vsub.f32 %v388, %v712
      %v777 = vsub.f32 %v389, %v713
      %v778 = vsub.f32 %v390, %v714
      %v779 = vsub.f32 %v391, %v715
      %v780 = vsub.f32 %v392, %v716
      %v781 = vsub.f32 %v393, %v717
      %v782 = vsub.f32 %v394, %v718
      %v783 = vsub.f32 %v395, %v719
      %v784 = vsub.f32 %v396, %v720
      %v785 = vsub.f32 %v397, %v721
      %v786 = vsub.f32 %v398, %v722
      %v787 = vsub.f32 %v399, %v723
      %v788 = vsub.f32 %v400, %v724
      %v789 = vsub.f32 %v401, %v725
      %v790 = vsub.f32 %v402, %v726
      %v791 = vsub.f32 %v403, %v727
      %v792 = vsub.f32 %v404, %v728
      %v793 = vsub.f32 %v405, %v729
      %v794 = vsub.f32 %v406, %v730
      %v795 = vsub.f32 %v407, %v731
      %v796 = vsub.f32 %v408, %v732
      %v797 = vsub.f32 %v409, %v733
      %v798 = vsub.f32 %v410, %v734
      %v799 = vsub.f32 %v411, %v735
      %v800 = vsub.f32 %v412, %v736
      %v801 = vsub.f32 %v413, %v737
      %v802 = vsub.f32 %v414, %v738
      %v803 = vsub.f32 %v415, %v739
      %v804 = vsub.f32 %v416, %v740
      %v805 = vsub.f32 %v417, %v741
      %v806 = vsub.f32 %v418, %v742
      %v807 = vsub.f32 %v419, %v743
      %v808 = vsub.f32 %v420, %v744
      %v809 = vsub.f32 %v421, %v745
      %v810 = vsub.f32 %v422, %v746
      %v811 = vsub.f32 %v423, %v747
      %v812 = vsub.f32 %v424, %v748
      %v813 = vsub.f32 %v425, %v749
      %v814 = vsub.f32 %v426, %v750
      %v815 = vsub.f32 %v427, %v751
      %v816 = vsub.f32 %v428, %v752
      %v817 = vsub.f32 %v429, %v753
      %v818 = vsub.f32 %v430, %v754
      %v819 = vsub.f32 %v431, %v755
      %v820 = vsub.f32 %v432, %v756
      %v821 = vsub.f32 %v433, %v757
      %v822 = vsub.f32 %v434, %v758
      %v823 = vsub.f32 %v435, %v759
      %v824 = vsub.f32 %v436, %v760
      %v825 = vsub.f32 %v437, %v761
      %v826 = vsub.f32 %v438, %v762
      %v827 = vsub.f32 %v439, %v763
      %v828 = vsub.f32 %v440, %v764
      %v829 = vsub.f32 %v441, %v765
      %v830 = vsub.f32 %v442, %v766
      %v831 = vsub.f32 %v443, %v767
      %v832 = vsub.f32 %v444, %v768
      %v833 = vsub.f32 %v445, %v769
      %v834 = vsub.f32 %v446, %v770
      %v835 = vsub.f32 %v447, %v771
      %v836 = vsub.f32 %v448, %v772
      %v837 = vsub.f32 %v449, %v773
      %v838 = vmul.f32 %v774, %v774
      %v839 = vmul.f32 %v775, %v775
      %v840 = vmul.f32 %v776, %v776
      %v841 = vmul.f32 %v777, %v777
      %v842 = vmul.f32 %v778, %v778
      %v843 = vmul.f32 %v779, %v779
      %v844 = vmul.f32 %v780, %v780
      %v845 = vmul.f32 %v781, %v781
      %v846 = vmul.f32 %v782, %v782
      %v847 = vmul.f32 %v783, %v783
      %v848 = vmul.f32 %v784, %v784
      %v849 = vmul.f32 %v785, %v785
      %v850 = vmul.f32 %v786, %v786
      %v851 = vmul.f32 %v787, %v787
      %v852 = vmul.f32 %v788, %v788
      %v853 = vmul.f32 %v789, %v789
      %v854 = vmul.f32 %v790, %v790
      %v855 = vmul.f32 %v791, %v791
      %v856 = vmul.f32 %v792, %v792
      %v857 = vmul.f32 %v793, %v793
      %v858 = vmul.f32 %v794, %v794
      %v859 = vmul.f32 %v795, %v795
      %v860 = vmul.f32 %v796, %v796
      %v861 = vmul.f32 %v797, %v797
      %v862 = vmul.f32 %v798, %v798
      %v863 = vmul.f32 %v799, %v799
      %v864 = vmul.f32 %v800, %v800
      %v865 = vmul.f32 %v801, %v801
      %v866 = vmul.f32 %v802, %v802
      %v867 = vmul.f32 %v803, %v803
      %v868 = vmul.f32 %v804, %v804
      %v869 = vmul.f32 %v805, %v805
      %v870 = vmul.f32 %v806, %v806
      %v871 = vmul.f32 %v807, %v807
      %v872 = vmul.f32 %v808, %v808
      %v873 = vmul.f32 %v809, %v809
      %v874 = vmul.f32 %v810, %v810
      %v875 = vmul.f32 %v811, %v811
      %v876 = vmul.f32 %v812, %v812
      %v877 = vmul.f32 %v813, %v813
      %v878 = vmul.f32 %v814, %v814
      %v879 = vmul.f32 %v815, %v815
      %v880 = vmul.f32 %v816, %v816
      %v881 = vmul.f32 %v817, %v817
      %v882 = vmul.f32 %v818, %v818
      %v883 = vmul.f32 %v819, %v819
      %v884 = vmul.f32 %v820, %v820
      %v885 = vmul.f32 %v821, %v821
      %v886 = vmul.f32 %v822, %v822
      %v887 = vmul.f32 %v823, %v823
      %v888 = vmul.f32 %v824, %v824
      %v889 = vmul.f32 %v825, %v825
      %v890 = vmul.f32 %v826, %v826
      %v891 = vmul.f32 %v827, %v827
      %v892 = vmul.f32 %v828, %v828
      %v893 = vmul.f32 %v829, %v829
      %v894 = vmul.f32 %v830, %v830
      %v895 = vmul.f32 %v831, %v831
      %v896 = vmul.f32 %v832, %v832
      %v897 = vmul.f32 %v833, %v833
      %v898 = vmul.f32 %v834, %v834
      %v899 = vmul.f32 %v835, %v835
      %v900 = vmul.f32 %v836, %v836
      %v901 = vmul.f32 %v837, %v837
      %v902 = vsel %vm516, %v838, 0.0
      %903 = vadd.xlane.f32.xlu0 %v902
      %v904 = vpop.xlane.xlu0 %903
      %v905 = vsel %vm516, %v839, 0.0
      %906 = vadd.xlane.f32.xlu0 %v905
      %v907 = vpop.xlane.xlu0 %906
      %v908 = vsel %vm516, %v840, 0.0
      %909 = vadd.xlane.f32.xlu0 %v908
      %v910 = vpop.xlane.xlu0 %909
      %v911 = vsel %vm516, %v841, 0.0
      %912 = vadd.xlane.f32.xlu0 %v911
      %v913 = vpop.xlane.xlu0 %912
      %v914 = vsel %vm516, %v842, 0.0
      %915 = vadd.xlane.f32.xlu0 %v914
      %v916 = vpop.xlane.xlu0 %915
      %v917 = vsel %vm516, %v843, 0.0
      %918 = vadd.xlane.f32.xlu0 %v917
      %v919 = vpop.xlane.xlu0 %918
      %v920 = vsel %vm516, %v844, 0.0
      %921 = vadd.xlane.f32.xlu0 %v920
      %v922 = vpop.xlane.xlu0 %921
      %v923 = vsel %vm516, %v845, 0.0
      %924 = vadd.xlane.f32.xlu0 %v923
      %v925 = vpop.xlane.xlu0 %924
      %v926 = vsel %vm516, %v846, 0.0
      %927 = vadd.xlane.f32.xlu0 %v926
      %v928 = vpop.xlane.xlu0 %927
      %v929 = vsel %vm516, %v847, 0.0
      %930 = vadd.xlane.f32.xlu0 %v929
      %v931 = vpop.xlane.xlu0 %930
      %v932 = vsel %vm516, %v848, 0.0
      %933 = vadd.xlane.f32.xlu0 %v932
      %v934 = vpop.xlane.xlu0 %933
      %v935 = vsel %vm516, %v849, 0.0
      %936 = vadd.xlane.f32.xlu0 %v935
      %v937 = vpop.xlane.xlu0 %936
      %v938 = vsel %vm516, %v850, 0.0
      %939 = vadd.xlane.f32.xlu0 %v938
      %v940 = vpop.xlane.xlu0 %939
      %v941 = vsel %vm516, %v851, 0.0
      %942 = vadd.xlane.f32.xlu0 %v941
      %v943 = vpop.xlane.xlu0 %942
      %v944 = vsel %vm516, %v852, 0.0
      %945 = vadd.xlane.f32.xlu0 %v944
      %v946 = vpop.xlane.xlu0 %945
      %v947 = vsel %vm516, %v853, 0.0
      %948 = vadd.xlane.f32.xlu0 %v947
      %v949 = vpop.xlane.xlu0 %948
      %v950 = vsel %vm516, %v854, 0.0
      %951 = vadd.xlane.f32.xlu0 %v950
      %v952 = vpop.xlane.xlu0 %951
      %v953 = vsel %vm516, %v855, 0.0
      %954 = vadd.xlane.f32.xlu0 %v953
      %v955 = vpop.xlane.xlu0 %954
      %v956 = vsel %vm516, %v856, 0.0
      %957 = vadd.xlane.f32.xlu0 %v956
      %v958 = vpop.xlane.xlu0 %957
      %v959 = vsel %vm516, %v857, 0.0
      %960 = vadd.xlane.f32.xlu0 %v959
      %v961 = vpop.xlane.xlu0 %960
      %v962 = vsel %vm516, %v858, 0.0
      %963 = vadd.xlane.f32.xlu0 %v962
      %v964 = vpop.xlane.xlu0 %963
      %v965 = vsel %vm516, %v859, 0.0
      %966 = vadd.xlane.f32.xlu0 %v965
      %v967 = vpop.xlane.xlu0 %966
      %v968 = vsel %vm516, %v860, 0.0
      %969 = vadd.xlane.f32.xlu0 %v968
      %v970 = vpop.xlane.xlu0 %969
      %v971 = vsel %vm516, %v861, 0.0
      %972 = vadd.xlane.f32.xlu0 %v971
      %v973 = vpop.xlane.xlu0 %972
      %v974 = vsel %vm516, %v862, 0.0
      %975 = vadd.xlane.f32.xlu0 %v974
      %v976 = vpop.xlane.xlu0 %975
      %v977 = vsel %vm516, %v863, 0.0
      %978 = vadd.xlane.f32.xlu0 %v977
      %v979 = vpop.xlane.xlu0 %978
      %v980 = vsel %vm516, %v864, 0.0
      %981 = vadd.xlane.f32.xlu0 %v980
      %v982 = vpop.xlane.xlu0 %981
      %v983 = vsel %vm516, %v865, 0.0
      %984 = vadd.xlane.f32.xlu0 %v983
      %v985 = vpop.xlane.xlu0 %984
      %v986 = vsel %vm516, %v866, 0.0
      %987 = vadd.xlane.f32.xlu0 %v986
      %v988 = vpop.xlane.xlu0 %987
      %v989 = vsel %vm516, %v867, 0.0
      %990 = vadd.xlane.f32.xlu0 %v989
      %v991 = vpop.xlane.xlu0 %990
      %v992 = vsel %vm516, %v868, 0.0
      %993 = vadd.xlane.f32.xlu0 %v992
      %v994 = vpop.xlane.xlu0 %993
      %v995 = vsel %vm516, %v869, 0.0
      %996 = vadd.xlane.f32.xlu0 %v995
      %v997 = vpop.xlane.xlu0 %996
      %v998 = vsel %vm516, %v870, 0.0
      %999 = vadd.xlane.f32.xlu0 %v998
      %v1000 = vpop.xlane.xlu0 %999
      %v1001 = vsel %vm516, %v871, 0.0
      %1002 = vadd.xlane.f32.xlu0 %v1001
      %v1003 = vpop.xlane.xlu0 %1002
      %v1004 = vsel %vm516, %v872, 0.0
      %1005 = vadd.xlane.f32.xlu0 %v1004
      %v1006 = vpop.xlane.xlu0 %1005
      %v1007 = vsel %vm516, %v873, 0.0
      %1008 = vadd.xlane.f32.xlu0 %v1007
      %v1009 = vpop.xlane.xlu0 %1008
      %v1010 = vsel %vm516, %v874, 0.0
      %1011 = vadd.xlane.f32.xlu0 %v1010
      %v1012 = vpop.xlane.xlu0 %1011
      %v1013 = vsel %vm516, %v875, 0.0
      %1014 = vadd.xlane.f32.xlu0 %v1013
      %v1015 = vpop.xlane.xlu0 %1014
      %v1016 = vsel %vm516, %v876, 0.0
      %1017 = vadd.xlane.f32.xlu0 %v1016
      %v1018 = vpop.xlane.xlu0 %1017
      %v1019 = vsel %vm516, %v877, 0.0
      %1020 = vadd.xlane.f32.xlu0 %v1019
      %v1021 = vpop.xlane.xlu0 %1020
      %v1022 = vsel %vm516, %v878, 0.0
      %1023 = vadd.xlane.f32.xlu0 %v1022
      %v1024 = vpop.xlane.xlu0 %1023
      %v1025 = vsel %vm516, %v879, 0.0
      %1026 = vadd.xlane.f32.xlu0 %v1025
      %v1027 = vpop.xlane.xlu0 %1026
      %v1028 = vsel %vm516, %v880, 0.0
      %1029 = vadd.xlane.f32.xlu0 %v1028
      %v1030 = vpop.xlane.xlu0 %1029
      %v1031 = vsel %vm516, %v881, 0.0
      %1032 = vadd.xlane.f32.xlu0 %v1031
      %v1033 = vpop.xlane.xlu0 %1032
      %v1034 = vsel %vm516, %v882, 0.0
      %1035 = vadd.xlane.f32.xlu0 %v1034
      %v1036 = vpop.xlane.xlu0 %1035
      %v1037 = vsel %vm516, %v883, 0.0
      %1038 = vadd.xlane.f32.xlu0 %v1037
      %v1039 = vpop.xlane.xlu0 %1038
      %v1040 = vsel %vm516, %v884, 0.0
      %1041 = vadd.xlane.f32.xlu0 %v1040
      %v1042 = vpop.xlane.xlu0 %1041
      %v1043 = vsel %vm516, %v885, 0.0
      %1044 = vadd.xlane.f32.xlu0 %v1043
      %v1045 = vpop.xlane.xlu0 %1044
      %v1046 = vsel %vm516, %v886, 0.0
      %1047 = vadd.xlane.f32.xlu0 %v1046
      %v1048 = vpop.xlane.xlu0 %1047
      %v1049 = vsel %vm516, %v887, 0.0
      %1050 = vadd.xlane.f32.xlu0 %v1049
      %v1051 = vpop.xlane.xlu0 %1050
      %v1052 = vsel %vm516, %v888, 0.0
      %1053 = vadd.xlane.f32.xlu0 %v1052
      %v1054 = vpop.xlane.xlu0 %1053
      %v1055 = vsel %vm516, %v889, 0.0
      %1056 = vadd.xlane.f32.xlu0 %v1055
      %v1057 = vpop.xlane.xlu0 %1056
      %v1058 = vsel %vm516, %v890, 0.0
      %1059 = vadd.xlane.f32.xlu0 %v1058
      %v1060 = vpop.xlane.xlu0 %1059
      %v1061 = vsel %vm516, %v891, 0.0
      %1062 = vadd.xlane.f32.xlu0 %v1061
      %v1063 = vpop.xlane.xlu0 %1062
      %v1064 = vsel %vm516, %v892, 0.0
      %1065 = vadd.xlane.f32.xlu0 %v1064
      %v1066 = vpop.xlane.xlu0 %1065
      %v1067 = vsel %vm516, %v893, 0.0
      %1068 = vadd.xlane.f32.xlu0 %v1067
      %v1069 = vpop.xlane.xlu0 %1068
      %v1070 = vsel %vm516, %v894, 0.0
      %1071 = vadd.xlane.f32.xlu0 %v1070
      %v1072 = vpop.xlane.xlu0 %1071
      %v1073 = vsel %vm516, %v895, 0.0
      %1074 = vadd.xlane.f32.xlu0 %v1073
      %v1075 = vpop.xlane.xlu0 %1074
      %v1076 = vsel %vm516, %v896, 0.0
      %1077 = vadd.xlane.f32.xlu0 %v1076
      %v1078 = vpop.xlane.xlu0 %1077
      %v1079 = vsel %vm516, %v897, 0.0
      %1080 = vadd.xlane.f32.xlu0 %v1079
      %v1081 = vpop.xlane.xlu0 %1080
      %v1082 = vsel %vm516, %v898, 0.0
      %1083 = vadd.xlane.f32.xlu0 %v1082
      %v1084 = vpop.xlane.xlu0 %1083
      %v1085 = vsel %vm516, %v899, 0.0
      %1086 = vadd.xlane.f32.xlu0 %v1085
      %v1087 = vpop.xlane.xlu0 %1086
      %v1088 = vsel %vm516, %v900, 0.0
      %1089 = vadd.xlane.f32.xlu0 %v1088
      %v1090 = vpop.xlane.xlu0 %1089
      %v1091 = vsel %vm516, %v901, 0.0
      %1092 = vadd.xlane.f32.xlu0 %v1091
      %v1093 = vpop.xlane.xlu0 %1092
      %v1094 = vmul.f32 %v904, %v709
      %v1095 = vmul.f32 %v907, %v709
      %v1096 = vmul.f32 %v910, %v709
      %v1097 = vmul.f32 %v913, %v709
      %v1098 = vmul.f32 %v916, %v709
      %v1099 = vmul.f32 %v919, %v709
      %v1100 = vmul.f32 %v922, %v709
      %v1101 = vmul.f32 %v925, %v709
      %v1102 = vmul.f32 %v928, %v709
      %v1103 = vmul.f32 %v931, %v709
      %v1104 = vmul.f32 %v934, %v709
      %v1105 = vmul.f32 %v937, %v709
      %v1106 = vmul.f32 %v940, %v709
      %v1107 = vmul.f32 %v943, %v709
      %v1108 = vmul.f32 %v946, %v709
      %v1109 = vmul.f32 %v949, %v709
      %v1110 = vmul.f32 %v952, %v709
      %v1111 = vmul.f32 %v955, %v709
      %v1112 = vmul.f32 %v958, %v709
      %v1113 = vmul.f32 %v961, %v709
      %v1114 = vmul.f32 %v964, %v709
      %v1115 = vmul.f32 %v967, %v709
      %v1116 = vmul.f32 %v970, %v709
      %v1117 = vmul.f32 %v973, %v709
      %v1118 = vmul.f32 %v976, %v709
      %v1119 = vmul.f32 %v979, %v709
      %v1120 = vmul.f32 %v982, %v709
      %v1121 = vmul.f32 %v985, %v709
      %v1122 = vmul.f32 %v988, %v709
      %v1123 = vmul.f32 %v991, %v709
      %v1124 = vmul.f32 %v994, %v709
      %v1125 = vmul.f32 %v997, %v709
      %v1126 = vmul.f32 %v1000, %v709
      %v1127 = vmul.f32 %v1003, %v709
      %v1128 = vmul.f32 %v1006, %v709
      %v1129 = vmul.f32 %v1009, %v709
      %v1130 = vmul.f32 %v1012, %v709
      %v1131 = vmul.f32 %v1015, %v709
      %v1132 = vmul.f32 %v1018, %v709
      %v1133 = vmul.f32 %v1021, %v709
      %v1134 = vmul.f32 %v1024, %v709
      %v1135 = vmul.f32 %v1027, %v709
      %v1136 = vmul.f32 %v1030, %v709
      %v1137 = vmul.f32 %v1033, %v709
      %v1138 = vmul.f32 %v1036, %v709
      %v1139 = vmul.f32 %v1039, %v709
      %v1140 = vmul.f32 %v1042, %v709
      %v1141 = vmul.f32 %v1045, %v709
      %v1142 = vmul.f32 %v1048, %v709
      %v1143 = vmul.f32 %v1051, %v709
      %v1144 = vmul.f32 %v1054, %v709
      %v1145 = vmul.f32 %v1057, %v709
      %v1146 = vmul.f32 %v1060, %v709
      %v1147 = vmul.f32 %v1063, %v709
      %v1148 = vmul.f32 %v1066, %v709
      %v1149 = vmul.f32 %v1069, %v709
      %v1150 = vmul.f32 %v1072, %v709
      %v1151 = vmul.f32 %v1075, %v709
      %v1152 = vmul.f32 %v1078, %v709
      %v1153 = vmul.f32 %v1081, %v709
      %v1154 = vmul.f32 %v1084, %v709
      %v1155 = vmul.f32 %v1087, %v709
      %v1156 = vmul.f32 %v1090, %v709
      %v1157 = vmul.f32 %v1093, %v709
      %v1158 = vadd.f32 %v1094, 1e-05
      %v1159 = vadd.f32 %v1095, 1e-05
      %v1160 = vadd.f32 %v1096, 1e-05
      %v1161 = vadd.f32 %v1097, 1e-05
      %v1162 = vadd.f32 %v1098, 1e-05
      %v1163 = vadd.f32 %v1099, 1e-05
      %v1164 = vadd.f32 %v1100, 1e-05
      %v1165 = vadd.f32 %v1101, 1e-05
      %v1166 = vadd.f32 %v1102, 1e-05
      %v1167 = vadd.f32 %v1103, 1e-05
      %v1168 = vadd.f32 %v1104, 1e-05
      %v1169 = vadd.f32 %v1105, 1e-05
      %v1170 = vadd.f32 %v1106, 1e-05
      %v1171 = vadd.f32 %v1107, 1e-05
      %v1172 = vadd.f32 %v1108, 1e-05
      %v1173 = vadd.f32 %v1109, 1e-05
      %v1174 = vadd.f32 %v1110, 1e-05
      %v1175 = vadd.f32 %v1111, 1e-05
      %v1176 = vadd.f32 %v1112, 1e-05
      %v1177 = vadd.f32 %v1113, 1e-05
      %v1178 = vadd.f32 %v1114, 1e-05
      %v1179 = vadd.f32 %v1115, 1e-05
      %v1180 = vadd.f32 %v1116, 1e-05
      %v1181 = vadd.f32 %v1117, 1e-05
      %v1182 = vadd.f32 %v1118, 1e-05
      %v1183 = vadd.f32 %v1119, 1e-05
      %v1184 = vadd.f32 %v1120, 1e-05
      %v1185 = vadd.f32 %v1121, 1e-05
      %v1186 = vadd.f32 %v1122, 1e-05
      %v1187 = vadd.f32 %v1123, 1e-05
      %v1188 = vadd.f32 %v1124, 1e-05
      %v1189 = vadd.f32 %v1125, 1e-05
      %v1190 = vadd.f32 %v1126, 1e-05
      %v1191 = vadd.f32 %v1127, 1e-05
      %v1192 = vadd.f32 %v1128, 1e-05
      %v1193 = vadd.f32 %v1129, 1e-05
      %v1194 = vadd.f32 %v1130, 1e-05
      %v1195 = vadd.f32 %v1131, 1e-05
      %v1196 = vadd.f32 %v1132, 1e-05
      %v1197 = vadd.f32 %v1133, 1e-05
      %v1198 = vadd.f32 %v1134, 1e-05
      %v1199 = vadd.f32 %v1135, 1e-05
      %v1200 = vadd.f32 %v1136, 1e-05
      %v1201 = vadd.f32 %v1137, 1e-05
      %v1202 = vadd.f32 %v1138, 1e-05
      %v1203 = vadd.f32 %v1139, 1e-05
      %v1204 = vadd.f32 %v1140, 1e-05
      %v1205 = vadd.f32 %v1141, 1e-05
      %v1206 = vadd.f32 %v1142, 1e-05
      %v1207 = vadd.f32 %v1143, 1e-05
      %v1208 = vadd.f32 %v1144, 1e-05
      %v1209 = vadd.f32 %v1145, 1e-05
      %v1210 = vadd.f32 %v1146, 1e-05
      %v1211 = vadd.f32 %v1147, 1e-05
      %v1212 = vadd.f32 %v1148, 1e-05
      %v1213 = vadd.f32 %v1149, 1e-05
      %v1214 = vadd.f32 %v1150, 1e-05
      %v1215 = vadd.f32 %v1151, 1e-05
      %v1216 = vadd.f32 %v1152, 1e-05
      %v1217 = vadd.f32 %v1153, 1e-05
      %v1218 = vadd.f32 %v1154, 1e-05
      %v1219 = vadd.f32 %v1155, 1e-05
      %v1220 = vadd.f32 %v1156, 1e-05
      %v1221 = vadd.f32 %v1157, 1e-05
      %v1222 = vrsqrt.pop %v1158
      %v1223 = vrsqrt.pop %v1159
      %v1224 = vrsqrt.pop %v1160
      %v1225 = vrsqrt.pop %v1161
      %v1226 = vrsqrt.pop %v1162
      %v1227 = vrsqrt.pop %v1163
      %v1228 = vrsqrt.pop %v1164
      %v1229 = vrsqrt.pop %v1165
      %v1230 = vrsqrt.pop %v1166
      %v1231 = vrsqrt.pop %v1167
      %v1232 = vrsqrt.pop %v1168
      %v1233 = vrsqrt.pop %v1169
      %v1234 = vrsqrt.pop %v1170
      %v1235 = vrsqrt.pop %v1171
      %v1236 = vrsqrt.pop %v1172
      %v1237 = vrsqrt.pop %v1173
      %v1238 = vrsqrt.pop %v1174
      %v1239 = vrsqrt.pop %v1175
      %v1240 = vrsqrt.pop %v1176
      %v1241 = vrsqrt.pop %v1177
      %v1242 = vrsqrt.pop %v1178
      %v1243 = vrsqrt.pop %v1179
      %v1244 = vrsqrt.pop %v1180
      %v1245 = vrsqrt.pop %v1181
      %v1246 = vrsqrt.pop %v1182
      %v1247 = vrsqrt.pop %v1183
      %v1248 = vrsqrt.pop %v1184
      %v1249 = vrsqrt.pop %v1185
      %v1250 = vrsqrt.pop %v1186
      %v1251 = vrsqrt.pop %v1187
      %v1252 = vrsqrt.pop %v1188
      %v1253 = vrsqrt.pop %v1189
      %v1254 = vrsqrt.pop %v1190
      %v1255 = vrsqrt.pop %v1191
      %v1256 = vrsqrt.pop %v1192
      %v1257 = vrsqrt.pop %v1193
      %v1258 = vrsqrt.pop %v1194
      %v1259 = vrsqrt.pop %v1195
      %v1260 = vrsqrt.pop %v1196
      %v1261 = vrsqrt.pop %v1197
      %v1262 = vrsqrt.pop %v1198
      %v1263 = vrsqrt.pop %v1199
      %v1264 = vrsqrt.pop %v1200
      %v1265 = vrsqrt.pop %v1201
      %v1266 = vrsqrt.pop %v1202
      %v1267 = vrsqrt.pop %v1203
      %v1268 = vrsqrt.pop %v1204
      %v1269 = vrsqrt.pop %v1205
      %v1270 = vrsqrt.pop %v1206
      %v1271 = vrsqrt.pop %v1207
      %v1272 = vrsqrt.pop %v1208
      %v1273 = vrsqrt.pop %v1209
      %v1274 = vrsqrt.pop %v1210
      %v1275 = vrsqrt.pop %v1211
      %v1276 = vrsqrt.pop %v1212
      %v1277 = vrsqrt.pop %v1213
      %v1278 = vrsqrt.pop %v1214
      %v1279 = vrsqrt.pop %v1215
      %v1280 = vrsqrt.pop %v1216
      %v1281 = vrsqrt.pop %v1217
      %v1282 = vrsqrt.pop %v1218
      %v1283 = vrsqrt.pop %v1219
      %v1284 = vrsqrt.pop %v1220
      %v1285 = vrsqrt.pop %v1221
      %v1286 = vmul.f32 %v774, %v1222
      %v1287 = vmul.f32 %v775, %v1223
      %v1288 = vmul.f32 %v776, %v1224
      %v1289 = vmul.f32 %v777, %v1225
      %v1290 = vmul.f32 %v778, %v1226
      %v1291 = vmul.f32 %v779, %v1227
      %v1292 = vmul.f32 %v780, %v1228
      %v1293 = vmul.f32 %v781, %v1229
      %v1294 = vmul.f32 %v782, %v1230
      %v1295 = vmul.f32 %v783, %v1231
      %v1296 = vmul.f32 %v784, %v1232
      %v1297 = vmul.f32 %v785, %v1233
      %v1298 = vmul.f32 %v786, %v1234
      %v1299 = vmul.f32 %v787, %v1235
      %v1300 = vmul.f32 %v788, %v1236
      %v1301 = vmul.f32 %v789, %v1237
      %v1302 = vmul.f32 %v790, %v1238
      %v1303 = vmul.f32 %v791, %v1239
      %v1304 = vmul.f32 %v792, %v1240
      %v1305 = vmul.f32 %v793, %v1241
      %v1306 = vmul.f32 %v794, %v1242
      %v1307 = vmul.f32 %v795, %v1243
      %v1308 = vmul.f32 %v796, %v1244
      %v1309 = vmul.f32 %v797, %v1245
      %v1310 = vmul.f32 %v798, %v1246
      %v1311 = vmul.f32 %v799, %v1247
      %v1312 = vmul.f32 %v800, %v1248
      %v1313 = vmul.f32 %v801, %v1249
      %v1314 = vmul.f32 %v802, %v1250
      %v1315 = vmul.f32 %v803, %v1251
      %v1316 = vmul.f32 %v804, %v1252
      %v1317 = vmul.f32 %v805, %v1253
      %v1318 = vmul.f32 %v806, %v1254
      %v1319 = vmul.f32 %v807, %v1255
      %v1320 = vmul.f32 %v808, %v1256
      %v1321 = vmul.f32 %v809, %v1257
      %v1322 = vmul.f32 %v810, %v1258
      %v1323 = vmul.f32 %v811, %v1259
      %v1324 = vmul.f32 %v812, %v1260
      %v1325 = vmul.f32 %v813, %v1261
      %v1326 = vmul.f32 %v814, %v1262
      %v1327 = vmul.f32 %v815, %v1263
      %v1328 = vmul.f32 %v816, %v1264
      %v1329 = vmul.f32 %v817, %v1265
      %v1330 = vmul.f32 %v818, %v1266
      %v1331 = vmul.f32 %v819, %v1267
      %v1332 = vmul.f32 %v820, %v1268
      %v1333 = vmul.f32 %v821, %v1269
      %v1334 = vmul.f32 %v822, %v1270
      %v1335 = vmul.f32 %v823, %v1271
      %v1336 = vmul.f32 %v824, %v1272
      %v1337 = vmul.f32 %v825, %v1273
      %v1338 = vmul.f32 %v826, %v1274
      %v1339 = vmul.f32 %v827, %v1275
      %v1340 = vmul.f32 %v828, %v1276
      %v1341 = vmul.f32 %v829, %v1277
      %v1342 = vmul.f32 %v830, %v1278
      %v1343 = vmul.f32 %v831, %v1279
      %v1344 = vmul.f32 %v832, %v1280
      %v1345 = vmul.f32 %v833, %v1281
      %v1346 = vmul.f32 %v834, %v1282
      %v1347 = vmul.f32 %v835, %v1283
      %v1348 = vmul.f32 %v836, %v1284
      %v1349 = vmul.f32 %v837, %v1285
      %v1351 = vlaneseq
      %v1352 = vshrl.u32 %v1351, 7
      %v1353 = vsub.s32 0, %v1352
      %v1354 = vrot.slane %v514, %v1353
      %v1356 = vmul.f32 %v1286, %v1354
      %v1357 = vmul.f32 %v1287, %v1354
      %v1358 = vmul.f32 %v1288, %v1354
      %v1359 = vmul.f32 %v1289, %v1354
      %v1360 = vmul.f32 %v1290, %v1354
      %v1361 = vmul.f32 %v1291, %v1354
      %v1362 = vmul.f32 %v1292, %v1354
      %v1363 = vmul.f32 %v1293, %v1354
      %v1364 = vmul.f32 %v1294, %v1354
      %v1365 = vmul.f32 %v1295, %v1354
      %v1366 = vmul.f32 %v1296, %v1354
      %v1367 = vmul.f32 %v1297, %v1354
      %v1368 = vmul.f32 %v1298, %v1354
      %v1369 = vmul.f32 %v1299, %v1354
      %v1370 = vmul.f32 %v1300, %v1354
      %v1371 = vmul.f32 %v1301, %v1354
      %v1372 = vmul.f32 %v1302, %v1354
      %v1373 = vmul.f32 %v1303, %v1354
      %v1374 = vmul.f32 %v1304, %v1354
      %v1375 = vmul.f32 %v1305, %v1354
      %v1376 = vmul.f32 %v1306, %v1354
      %v1377 = vmul.f32 %v1307, %v1354
      %v1378 = vmul.f32 %v1308, %v1354
      %v1379 = vmul.f32 %v1309, %v1354
      %v1380 = vmul.f32 %v1310, %v1354
      %v1381 = vmul.f32 %v1311, %v1354
      %v1382 = vmul.f32 %v1312, %v1354
      %v1383 = vmul.f32 %v1313, %v1354
      %v1384 = vmul.f32 %v1314, %v1354
      %v1385 = vmul.f32 %v1315, %v1354
      %v1386 = vmul.f32 %v1316, %v1354
      %v1387 = vmul.f32 %v1317, %v1354
      %v1388 = vmul.f32 %v1318, %v1354
      %v1389 = vmul.f32 %v1319, %v1354
      %v1390 = vmul.f32 %v1320, %v1354
      %v1391 = vmul.f32 %v1321, %v1354
      %v1392 = vmul.f32 %v1322, %v1354
      %v1393 = vmul.f32 %v1323, %v1354
      %v1394 = vmul.f32 %v1324, %v1354
      %v1395 = vmul.f32 %v1325, %v1354
      %v1396 = vmul.f32 %v1326, %v1354
      %v1397 = vmul.f32 %v1327, %v1354
      %v1398 = vmul.f32 %v1328, %v1354
      %v1399 = vmul.f32 %v1329, %v1354
      %v1400 = vmul.f32 %v1330, %v1354
      %v1401 = vmul.f32 %v1331, %v1354
      %v1402 = vmul.f32 %v1332, %v1354
      %v1403 = vmul.f32 %v1333, %v1354
      %v1404 = vmul.f32 %v1334, %v1354
      %v1405 = vmul.f32 %v1335, %v1354
      %v1406 = vmul.f32 %v1336, %v1354
      %v1407 = vmul.f32 %v1337, %v1354
      %v1408 = vmul.f32 %v1338, %v1354
      %v1409 = vmul.f32 %v1339, %v1354
      %v1410 = vmul.f32 %v1340, %v1354
      %v1411 = vmul.f32 %v1341, %v1354
      %v1412 = vmul.f32 %v1342, %v1354
      %v1413 = vmul.f32 %v1343, %v1354
      %v1414 = vmul.f32 %v1344, %v1354
      %v1415 = vmul.f32 %v1345, %v1354
      %v1416 = vmul.f32 %v1346, %v1354
      %v1417 = vmul.f32 %v1347, %v1354
      %v1418 = vmul.f32 %v1348, %v1354
      %v1419 = vmul.f32 %v1349, %v1354
      %v1421 = vlaneseq
      %v1422 = vshrl.u32 %v1421, 7
      %v1423 = vsub.s32 0, %v1422
      %v1424 = vrot.slane %v515, %v1423
      %v1426 = vadd.f32 %v1356, %v1424
      %v1427 = vadd.f32 %v1357, %v1424
      %v1428 = vadd.f32 %v1358, %v1424
      %v1429 = vadd.f32 %v1359, %v1424
      %v1430 = vadd.f32 %v1360, %v1424
      %v1431 = vadd.f32 %v1361, %v1424
      %v1432 = vadd.f32 %v1362, %v1424
      %v1433 = vadd.f32 %v1363, %v1424
      %v1434 = vadd.f32 %v1364, %v1424
      %v1435 = vadd.f32 %v1365, %v1424
      %v1436 = vadd.f32 %v1366, %v1424
      %v1437 = vadd.f32 %v1367, %v1424
      %v1438 = vadd.f32 %v1368, %v1424
      %v1439 = vadd.f32 %v1369, %v1424
      %v1440 = vadd.f32 %v1370, %v1424
      %v1441 = vadd.f32 %v1371, %v1424
      %v1442 = vadd.f32 %v1372, %v1424
      %v1443 = vadd.f32 %v1373, %v1424
      %v1444 = vadd.f32 %v1374, %v1424
      %v1445 = vadd.f32 %v1375, %v1424
      %v1446 = vadd.f32 %v1376, %v1424
      %v1447 = vadd.f32 %v1377, %v1424
      %v1448 = vadd.f32 %v1378, %v1424
      %v1449 = vadd.f32 %v1379, %v1424
      %v1450 = vadd.f32 %v1380, %v1424
      %v1451 = vadd.f32 %v1381, %v1424
      %v1452 = vadd.f32 %v1382, %v1424
      %v1453 = vadd.f32 %v1383, %v1424
      %v1454 = vadd.f32 %v1384, %v1424
      %v1455 = vadd.f32 %v1385, %v1424
      %v1456 = vadd.f32 %v1386, %v1424
      %v1457 = vadd.f32 %v1387, %v1424
      %v1458 = vadd.f32 %v1388, %v1424
      %v1459 = vadd.f32 %v1389, %v1424
      %v1460 = vadd.f32 %v1390, %v1424
      %v1461 = vadd.f32 %v1391, %v1424
      %v1462 = vadd.f32 %v1392, %v1424
      %v1463 = vadd.f32 %v1393, %v1424
      %v1464 = vadd.f32 %v1394, %v1424
      %v1465 = vadd.f32 %v1395, %v1424
      %v1466 = vadd.f32 %v1396, %v1424
      %v1467 = vadd.f32 %v1397, %v1424
      %v1468 = vadd.f32 %v1398, %v1424
      %v1469 = vadd.f32 %v1399, %v1424
      %v1470 = vadd.f32 %v1400, %v1424
      %v1471 = vadd.f32 %v1401, %v1424
      %v1472 = vadd.f32 %v1402, %v1424
      %v1473 = vadd.f32 %v1403, %v1424
      %v1474 = vadd.f32 %v1404, %v1424
      %v1475 = vadd.f32 %v1405, %v1424
      %v1476 = vadd.f32 %v1406, %v1424
      %v1477 = vadd.f32 %v1407, %v1424
      %v1478 = vadd.f32 %v1408, %v1424
      %v1479 = vadd.f32 %v1409, %v1424
      %v1480 = vadd.f32 %v1410, %v1424
      %v1481 = vadd.f32 %v1411, %v1424
      %v1482 = vadd.f32 %v1412, %v1424
      %v1483 = vadd.f32 %v1413, %v1424
      %v1484 = vadd.f32 %v1414, %v1424
      %v1485 = vadd.f32 %v1415, %v1424
      %v1486 = vadd.f32 %v1416, %v1424
      %v1487 = vadd.f32 %v1417, %v1424
      %v1488 = vadd.f32 %v1418, %v1424
      %v1489 = vadd.f32 %v1419, %v1424
      %v1490 = vadd.f32 %v450, %v1426
      %v1491 = vadd.f32 %v451, %v1427
      %v1492 = vadd.f32 %v452, %v1428
      %v1493 = vadd.f32 %v453, %v1429
      %v1494 = vadd.f32 %v454, %v1430
      %v1495 = vadd.f32 %v455, %v1431
      %v1496 = vadd.f32 %v456, %v1432
      %v1497 = vadd.f32 %v457, %v1433
      %v1498 = vadd.f32 %v458, %v1434
      %v1499 = vadd.f32 %v459, %v1435
      %v1500 = vadd.f32 %v460, %v1436
      %v1501 = vadd.f32 %v461, %v1437
      %v1502 = vadd.f32 %v462, %v1438
      %v1503 = vadd.f32 %v463, %v1439
      %v1504 = vadd.f32 %v464, %v1440
      %v1505 = vadd.f32 %v465, %v1441
      %v1506 = vadd.f32 %v466, %v1442
      %v1507 = vadd.f32 %v467, %v1443
      %v1508 = vadd.f32 %v468, %v1444
      %v1509 = vadd.f32 %v469, %v1445
      %v1510 = vadd.f32 %v470, %v1446
      %v1511 = vadd.f32 %v471, %v1447
      %v1512 = vadd.f32 %v472, %v1448
      %v1513 = vadd.f32 %v473, %v1449
      %v1514 = vadd.f32 %v474, %v1450
      %v1515 = vadd.f32 %v475, %v1451
      %v1516 = vadd.f32 %v476, %v1452
      %v1517 = vadd.f32 %v477, %v1453
      %v1518 = vadd.f32 %v478, %v1454
      %v1519 = vadd.f32 %v479, %v1455
      %v1520 = vadd.f32 %v480, %v1456
      %v1521 = vadd.f32 %v481, %v1457
      %v1522 = vadd.f32 %v482, %v1458
      %v1523 = vadd.f32 %v483, %v1459
      %v1524 = vadd.f32 %v484, %v1460
      %v1525 = vadd.f32 %v485, %v1461
      %v1526 = vadd.f32 %v486, %v1462
      %v1527 = vadd.f32 %v487, %v1463
      %v1528 = vadd.f32 %v488, %v1464
      %v1529 = vadd.f32 %v489, %v1465
      %v1530 = vadd.f32 %v490, %v1466
      %v1531 = vadd.f32 %v491, %v1467
      %v1532 = vadd.f32 %v492, %v1468
      %v1533 = vadd.f32 %v493, %v1469
      %v1534 = vadd.f32 %v494, %v1470
      %v1535 = vadd.f32 %v495, %v1471
      %v1536 = vadd.f32 %v496, %v1472
      %v1537 = vadd.f32 %v497, %v1473
      %v1538 = vadd.f32 %v498, %v1474
      %v1539 = vadd.f32 %v499, %v1475
      %v1540 = vadd.f32 %v500, %v1476
      %v1541 = vadd.f32 %v501, %v1477
      %v1542 = vadd.f32 %v502, %v1478
      %v1543 = vadd.f32 %v503, %v1479
      %v1544 = vadd.f32 %v504, %v1480
      %v1545 = vadd.f32 %v505, %v1481
      %v1546 = vadd.f32 %v506, %v1482
      %v1547 = vadd.f32 %v507, %v1483
      %v1548 = vadd.f32 %v508, %v1484
      %v1549 = vadd.f32 %v509, %v1485
      %v1550 = vadd.f32 %v510, %v1486
      %v1551 = vadd.f32 %v511, %v1487
      %v1552 = vadd.f32 %v512, %v1488
      %v1553 = vadd.f32 %v513, %v1489
      %v1554 = vpack.c.bf16 %v1491, %v1490
      %v1555 = vpack.c.bf16 %v1493, %v1492
      %v1556 = vpack.c.bf16 %v1495, %v1494
      %v1557 = vpack.c.bf16 %v1497, %v1496
      %v1558 = vpack.c.bf16 %v1499, %v1498
      %v1559 = vpack.c.bf16 %v1501, %v1500
      %v1560 = vpack.c.bf16 %v1503, %v1502
      %v1561 = vpack.c.bf16 %v1505, %v1504
      %v1562 = vpack.c.bf16 %v1507, %v1506
      %v1563 = vpack.c.bf16 %v1509, %v1508
      %v1564 = vpack.c.bf16 %v1511, %v1510
      %v1565 = vpack.c.bf16 %v1513, %v1512
      %v1566 = vpack.c.bf16 %v1515, %v1514
      %v1567 = vpack.c.bf16 %v1517, %v1516
      %v1568 = vpack.c.bf16 %v1519, %v1518
      %v1569 = vpack.c.bf16 %v1521, %v1520
      %v1570 = vpack.c.bf16 %v1523, %v1522
      %v1571 = vpack.c.bf16 %v1525, %v1524
      %v1572 = vpack.c.bf16 %v1527, %v1526
      %v1573 = vpack.c.bf16 %v1529, %v1528
      %v1574 = vpack.c.bf16 %v1531, %v1530
      %v1575 = vpack.c.bf16 %v1533, %v1532
      %v1576 = vpack.c.bf16 %v1535, %v1534
      %v1577 = vpack.c.bf16 %v1537, %v1536
      %v1578 = vpack.c.bf16 %v1539, %v1538
      %v1579 = vpack.c.bf16 %v1541, %v1540
      %v1580 = vpack.c.bf16 %v1543, %v1542
      %v1581 = vpack.c.bf16 %v1545, %v1544
      %v1582 = vpack.c.bf16 %v1547, %v1546
      %v1583 = vpack.c.bf16 %v1549, %v1548
      %v1584 = vpack.c.bf16 %v1551, %v1550
      %v1585 = vpack.c.bf16 %v1553, %v1552
      %v1586 = vld [vmem:[%s6] sm:$0xf]
      %v1587 = vld [vmem:[%s6 + $0x4] sm:$0xf]
      %v1588 = vld [vmem:[%s6 + $0x8] sm:$0xf]
      %v1589 = vld [vmem:[%s6 + $0xc] sm:$0xf]
      %v1590 = vld [vmem:[%s7] sm:$0x1]
      %v1592 = vlaneseq
      %v1593 = vshrl.u32 %v1592, 7
      %v1594 = vsub.s32 0, %v1593
      %v1595 = vrot.slane %v1590, %v1594
      %v1601 = vunpack.c.l.b16 %v1586
      %v1602 = vunpack.c.l.b16 %v1587
      %v1603 = vunpack.c.l.b16 %v1588
      %v1604 = vunpack.c.l.b16 %v1589
      %v1605 = vpack.c.b16 %v1602, %v1601
      %v1606 = vpack.c.b16 %v1604, %v1603
      %v1610 = vsel %vm516, %v1554, 0
      %v1613 = vsel %vm516, %v1555, 0
      %v1616 = vsel %vm516, %v1556, 0
      %v1619 = vsel %vm516, %v1557, 0
      %v1622 = vsel %vm516, %v1558, 0
      %v1625 = vsel %vm516, %v1559, 0
      %v1628 = vsel %vm516, %v1560, 0
      %v1631 = vsel %vm516, %v1561, 0
      %v1634 = vsel %vm516, %v1562, 0
      %v1637 = vsel %vm516, %v1563, 0
      %v1640 = vsel %vm516, %v1564, 0
      %v1643 = vsel %vm516, %v1565, 0
      %v1646 = vsel %vm516, %v1566, 0
      %v1649 = vsel %vm516, %v1567, 0
      %v1652 = vsel %vm516, %v1568, 0
      %v1655 = vsel %vm516, %v1569, 0
      %v1658 = vsel %vm516, %v1570, 0
      %v1661 = vsel %vm516, %v1571, 0
      %v1664 = vsel %vm516, %v1572, 0
      %v1667 = vsel %vm516, %v1573, 0
      %v1670 = vsel %vm516, %v1574, 0
      %v1673 = vsel %vm516, %v1575, 0
      %v1676 = vsel %vm516, %v1576, 0
      %v1679 = vsel %vm516, %v1577, 0
      %v1682 = vsel %vm516, %v1578, 0
      %v1685 = vsel %vm516, %v1579, 0
      %v1688 = vsel %vm516, %v1580, 0
      %v1691 = vsel %vm516, %v1581, 0
      %v1694 = vsel %vm516, %v1582, 0
      %v1697 = vsel %vm516, %v1583, 0
      %v1700 = vsel %vm516, %v1584, 0
      %v1703 = vsel %vm516, %v1585, 0
      %1705 = vmatprep.subr.bf16.mxu0 0
      %1706 = vmatpush1.bf16.msra.mxu0 %v1605
      %1707 = vmatprep.subr.bf16.mxu0 0
      %1708 = vmatpush1.bf16.msra.mxu0 %v1606
      %1709 = vmatprep.subr.bf16.mxu0 0
      %1710 = vmatpush1.bf16.msra.mxu0 0
      %1711 = vmatprep.subr.bf16.mxu0 0
      %1712 = vmatpush1.bf16.msra.mxu0 0
      %1713 = vmatprep.subr.bf16.mxu0 0
      %1714 = vmatpush1.bf16.msra.mxu0 0
      %1715 = vmatprep.subr.bf16.mxu0 0
      %1716 = vmatpush1.bf16.msra.mxu0 0
      %1717 = vmatprep.subr.bf16.mxu0 0
      %1718 = vmatpush1.bf16.msra.mxu0 0
      %1719 = vmatprep.subr.bf16.mxu0 0
      %1720 = vmatpush1.bf16.msra.mxu0 0
      %1721 = vmatprep.subr.bf16.mxu0 0
      %1722 = vmatpush1.bf16.msra.mxu0 0
      %1723 = vmatprep.subr.bf16.mxu0 0
      %1724 = vmatpush1.bf16.msra.mxu0 0
      %1725 = vmatprep.subr.bf16.mxu0 0
      %1726 = vmatpush1.bf16.msra.mxu0 0
      %1727 = vmatprep.subr.bf16.mxu0 0
      %1728 = vmatpush1.bf16.msra.mxu0 0
      %1729 = vmatprep.subr.bf16.mxu0 0
      %1730 = vmatpush1.bf16.msra.mxu0 0
      %1731 = vmatprep.subr.bf16.mxu0 0
      %1732 = vmatpush1.bf16.msra.mxu0 0
      %1733 = vmatprep.subr.bf16.mxu0 0
      %1734 = vmatpush1.bf16.msra.mxu0 0
      %1735 = vmatprep.subr.bf16.mxu0 0
      %1736 = vmatpush1.bf16.msra.mxu0 0
      %1737 = vmatprep.mubr.bf16.mxu0 0
      %1738 = vmatmul.mubr.bf16.gmra.mrb[0].mxu0 %v1610
      %v1739 = vpop.f32.mrb[0].mxu0
      %v1740 = vadd.f32 %v1595, %v1739
      %v1741 = vpop.f32.mrb[0].mxu0
      %v1742 = vpop.f32.mrb[0].mxu0
      %v1743 = vadd.f32 %v1595, %v1742
      %v1744 = vpop.f32.mrb[0].mxu0
      %1745 = vmatprep.mubr.bf16.mxu0 0
      %1746 = vmatmul.mubr.bf16.gmra.mrb[0].mxu0 %v1613
      %v1747 = vpop.f32.mrb[0].mxu0
      %v1748 = vadd.f32 %v1595, %v1747
      %v1749 = vpop.f32.mrb[0].mxu0
      %v1750 = vpop.f32.mrb[0].mxu0
      %v1751 = vadd.f32 %v1595, %v1750
      %v1752 = vpop.f32.mrb[0].mxu0
      %1753 = vmatprep.mubr.bf16.mxu0 0
      %1754 = vmatmul.mubr.bf16.gmra.mrb[0].mxu0 %v1616
      %v1755 = vpop.f32.mrb[0].mxu0
      %v1756 = vadd.f32 %v1595, %v1755
      %v1757 = vpop.f32.mrb[0].mxu0
      %v1758 = vpop.f32.mrb[0].mxu0
      %v1759 = vadd.f32 %v1595, %v1758
      %v1760 = vpop.f32.mrb[0].mxu0
      %1761 = vmatprep.mubr.bf16.mxu0 0
      %1762 = vmatmul.mubr.bf16.gmra.mrb[0].mxu0 %v1619
      %v1763 = vpop.f32.mrb[0].mxu0
      %v1764 = vadd.f32 %v1595, %v1763
      %v1765 = vpop.f32.mrb[0].mxu0
      %v1766 = vpop.f32.mrb[0].mxu0
      %v1767 = vadd.f32 %v1595, %v1766
      %v1768 = vpop.f32.mrb[0].mxu0
      %1769 = vmatprep.mubr.bf16.mxu0 0
      %1770 = vmatmul.mubr.bf16.gmra.mrb[0].mxu0 %v1622
      %v1771 = vpop.f32.mrb[0].mxu0
      %v1772 = vadd.f32 %v1595, %v1771
      %v1773 = vpop.f32.mrb[0].mxu0
      %v1774 = vpop.f32.mrb[0].mxu0
      %v1775 = vadd.f32 %v1595, %v1774
      %v1776 = vpop.f32.mrb[0].mxu0
      %1777 = vmatprep.mubr.bf16.mxu0 0
      %1778 = vmatmul.mubr.bf16.gmra.mrb[0].mxu0 %v1625
      %v1779 = vpop.f32.mrb[0].mxu0
      %v1780 = vadd.f32 %v1595, %v1779
      %v1781 = vpop.f32.mrb[0].mxu0
      %v1782 = vpop.f32.mrb[0].mxu0
      %v1783 = vadd.f32 %v1595, %v1782
      %v1784 = vpop.f32.mrb[0].mxu0
      %1785 = vmatprep.mubr.bf16.mxu0 0
      %1786 = vmatmul.mubr.bf16.gmra.mrb[0].mxu0 %v1628
      %v1787 = vpop.f32.mrb[0].mxu0
      %v1788 = vadd.f32 %v1595, %v1787
      %v1789 = vpop.f32.mrb[0].mxu0
      %v1790 = vpop.f32.mrb[0].mxu0
      %v1791 = vadd.f32 %v1595, %v1790
      %v1792 = vpop.f32.mrb[0].mxu0
      %1793 = vmatprep.mubr.bf16.mxu0 0
      %1794 = vmatmul.mubr.bf16.gmra.mrb[0].mxu0 %v1631
      %v1795 = vpop.f32.mrb[0].mxu0
      %v1796 = vadd.f32 %v1595, %v1795
      %v1797 = vpop.f32.mrb[0].mxu0
      %v1798 = vpop.f32.mrb[0].mxu0
      %v1799 = vadd.f32 %v1595, %v1798
      %v1800 = vpop.f32.mrb[0].mxu0
      %1801 = vmatprep.mubr.bf16.mxu0 0
      %1802 = vmatmul.mubr.bf16.gmra.mrb[0].mxu0 %v1634
      %v1803 = vpop.f32.mrb[0].mxu0
      %v1804 = vadd.f32 %v1595, %v1803
      %v1805 = vpop.f32.mrb[0].mxu0
      %v1806 = vpop.f32.mrb[0].mxu0
      %v1807 = vadd.f32 %v1595, %v1806
      %v1808 = vpop.f32.mrb[0].mxu0
      %1809 = vmatprep.mubr.bf16.mxu0 0
      %1810 = vmatmul.mubr.bf16.gmra.mrb[0].mxu0 %v1637
      %v1811 = vpop.f32.mrb[0].mxu0
      %v1812 = vadd.f32 %v1595, %v1811
      %v1813 = vpop.f32.mrb[0].mxu0
      %v1814 = vpop.f32.mrb[0].mxu0
      %v1815 = vadd.f32 %v1595, %v1814
      %v1816 = vpop.f32.mrb[0].mxu0
      %1817 = vmatprep.mubr.bf16.mxu0 0
      %1818 = vmatmul.mubr.bf16.gmra.mrb[0].mxu0 %v1640
      %v1819 = vpop.f32.mrb[0].mxu0
      %v1820 = vadd.f32 %v1595, %v1819
      %v1821 = vpop.f32.mrb[0].mxu0
      %v1822 = vpop.f32.mrb[0].mxu0
      %v1823 = vadd.f32 %v1595, %v1822
      %v1824 = vpop.f32.mrb[0].mxu0
      %1825 = vmatprep.mubr.bf16.mxu0 0
      %1826 = vmatmul.mubr.bf16.gmra.mrb[0].mxu0 %v1643
      %v1827 = vpop.f32.mrb[0].mxu0
      %v1828 = vadd.f32 %v1595, %v1827
      %v1829 = vpop.f32.mrb[0].mxu0
      %v1830 = vpop.f32.mrb[0].mxu0
      %v1831 = vadd.f32 %v1595, %v1830
      %v1832 = vpop.f32.mrb[0].mxu0
      %1833 = vmatprep.mubr.bf16.mxu0 0
      %1834 = vmatmul.mubr.bf16.gmra.mrb[0].mxu0 %v1646
      %v1835 = vpop.f32.mrb[0].mxu0
      %v1836 = vadd.f32 %v1595, %v1835
      %v1837 = vpop.f32.mrb[0].mxu0
      %v1838 = vpop.f32.mrb[0].mxu0
      %v1839 = vadd.f32 %v1595, %v1838
      %v1840 = vpop.f32.mrb[0].mxu0
      %1841 = vmatprep.mubr.bf16.mxu0 0
      %1842 = vmatmul.mubr.bf16.gmra.mrb[0].mxu0 %v1649
      %v1843 = vpop.f32.mrb[0].mxu0
      %v1844 = vadd.f32 %v1595, %v1843
      %v1845 = vpop.f32.mrb[0].mxu0
      %v1846 = vpop.f32.mrb[0].mxu0
      %v1847 = vadd.f32 %v1595, %v1846
      %v1848 = vpop.f32.mrb[0].mxu0
      %1849 = vmatprep.mubr.bf16.mxu0 0
      %1850 = vmatmul.mubr.bf16.gmra.mrb[0].mxu0 %v1652
      %v1851 = vpop.f32.mrb[0].mxu0
      %v1852 = vadd.f32 %v1595, %v1851
      %v1853 = vpop.f32.mrb[0].mxu0
      %v1854 = vpop.f32.mrb[0].mxu0
      %v1855 = vadd.f32 %v1595, %v1854
      %v1856 = vpop.f32.mrb[0].mxu0
      %1857 = vmatprep.mubr.bf16.mxu0 0
      %1858 = vmatmul.mubr.bf16.gmra.mrb[0].mxu0 %v1655
      %v1859 = vpop.f32.mrb[0].mxu0
      %v1860 = vadd.f32 %v1595, %v1859
      %v1861 = vpop.f32.mrb[0].mxu0
      %v1862 = vpop.f32.mrb[0].mxu0
      %v1863 = vadd.f32 %v1595, %v1862
      %v1864 = vpop.f32.mrb[0].mxu0
      %1865 = vmatprep.mubr.bf16.mxu0 0
      %1866 = vmatmul.mubr.bf16.gmra.mrb[0].mxu0 %v1658
      %v1867 = vpop.f32.mrb[0].mxu0
      %v1868 = vadd.f32 %v1595, %v1867
      %v1869 = vpop.f32.mrb[0].mxu0
      %v1870 = vpop.f32.mrb[0].mxu0
      %v1871 = vadd.f32 %v1595, %v1870
      %v1872 = vpop.f32.mrb[0].mxu0
      %1873 = vmatprep.mubr.bf16.mxu0 0
      %1874 = vmatmul.mubr.bf16.gmra.mrb[0].mxu0 %v1661
      %v1875 = vpop.f32.mrb[0].mxu0
      %v1876 = vadd.f32 %v1595, %v1875
      %v1877 = vpop.f32.mrb[0].mxu0
      %v1878 = vpop.f32.mrb[0].mxu0
      %v1879 = vadd.f32 %v1595, %v1878
      %v1880 = vpop.f32.mrb[0].mxu0
      %1881 = vmatprep.mubr.bf16.mxu0 0
      %1882 = vmatmul.mubr.bf16.gmra.mrb[0].mxu0 %v1664
      %v1883 = vpop.f32.mrb[0].mxu0
      %v1884 = vadd.f32 %v1595, %v1883
      %v1885 = vpop.f32.mrb[0].mxu0
      %v1886 = vpop.f32.mrb[0].mxu0
      %v1887 = vadd.f32 %v1595, %v1886
      %v1888 = vpop.f32.mrb[0].mxu0
      %1889 = vmatprep.mubr.bf16.mxu0 0
      %1890 = vmatmul.mubr.bf16.gmra.mrb[0].mxu0 %v1667
      %v1891 = vpop.f32.mrb[0].mxu0
      %v1892 = vadd.f32 %v1595, %v1891
      %v1893 = vpop.f32.mrb[0].mxu0
      %v1894 = vpop.f32.mrb[0].mxu0
      %v1895 = vadd.f32 %v1595, %v1894
      %v1896 = vpop.f32.mrb[0].mxu0
      %1897 = vmatprep.mubr.bf16.mxu0 0
      %1898 = vmatmul.mubr.bf16.gmra.mrb[0].mxu0 %v1670
      %v1899 = vpop.f32.mrb[0].mxu0
      %v1900 = vadd.f32 %v1595, %v1899
      %v1901 = vpop.f32.mrb[0].mxu0
      %v1902 = vpop.f32.mrb[0].mxu0
      %v1903 = vadd.f32 %v1595, %v1902
      %v1904 = vpop.f32.mrb[0].mxu0
      %1905 = vmatprep.mubr.bf16.mxu0 0
      %1906 = vmatmul.mubr.bf16.gmra.mrb[0].mxu0 %v1673
      %v1907 = vpop.f32.mrb[0].mxu0
      %v1908 = vadd.f32 %v1595, %v1907
      %v1909 = vpop.f32.mrb[0].mxu0
      %v1910 = vpop.f32.mrb[0].mxu0
      %v1911 = vadd.f32 %v1595, %v1910
      %v1912 = vpop.f32.mrb[0].mxu0
      %1913 = vmatprep.mubr.bf16.mxu0 0
      %1914 = vmatmul.mubr.bf16.gmra.mrb[0].mxu0 %v1676
      %v1915 = vpop.f32.mrb[0].mxu0
      %v1916 = vadd.f32 %v1595, %v1915
      %v1917 = vpop.f32.mrb[0].mxu0
      %v1918 = vpop.f32.mrb[0].mxu0
      %v1919 = vadd.f32 %v1595, %v1918
      %v1920 = vpop.f32.mrb[0].mxu0
      %1921 = vmatprep.mubr.bf16.mxu0 0
      %1922 = vmatmul.mubr.bf16.gmra.mrb[0].mxu0 %v1679
      %v1923 = vpop.f32.mrb[0].mxu0
      %v1924 = vadd.f32 %v1595, %v1923
      %v1925 = vpop.f32.mrb[0].mxu0
      %v1926 = vpop.f32.mrb[0].mxu0
      %v1927 = vadd.f32 %v1595, %v1926
      %v1928 = vpop.f32.mrb[0].mxu0
      %1929 = vmatprep.mubr.bf16.mxu0 0
      %1930 = vmatmul.mubr.bf16.gmra.mrb[0].mxu0 %v1682
      %v1931 = vpop.f32.mrb[0].mxu0
      %v1932 = vadd.f32 %v1595, %v1931
      %v1933 = vpop.f32.mrb[0].mxu0
      %v1934 = vpop.f32.mrb[0].mxu0
      %v1935 = vadd.f32 %v1595, %v1934
      %v1936 = vpop.f32.mrb[0].mxu0
      %1937 = vmatprep.mubr.bf16.mxu0 0
      %1938 = vmatmul.mubr.bf16.gmra.mrb[0].mxu0 %v1685
      %v1939 = vpop.f32.mrb[0].mxu0
      %v1940 = vadd.f32 %v1595, %v1939
      %v1941 = vpop.f32.mrb[0].mxu0
      %v1942 = vpop.f32.mrb[0].mxu0
      %v1943 = vadd.f32 %v1595, %v1942
      %v1944 = vpop.f32.mrb[0].mxu0
      %1945 = vmatprep.mubr.bf16.mxu0 0
      %1946 = vmatmul.mubr.bf16.gmra.mrb[0].mxu0 %v1688
      %v1947 = vpop.f32.mrb[0].mxu0
      %v1948 = vadd.f32 %v1595, %v1947
      %v1949 = vpop.f32.mrb[0].mxu0
      %v1950 = vpop.f32.mrb[0].mxu0
      %v1951 = vadd.f32 %v1595, %v1950
      %v1952 = vpop.f32.mrb[0].mxu0
      %1953 = vmatprep.mubr.bf16.mxu0 0
      %1954 = vmatmul.mubr.bf16.gmra.mrb[0].mxu0 %v1691
      %v1955 = vpop.f32.mrb[0].mxu0
      %v1956 = vadd.f32 %v1595, %v1955
      %v1957 = vpop.f32.mrb[0].mxu0
      %v1958 = vpop.f32.mrb[0].mxu0
      %v1959 = vadd.f32 %v1595, %v1958
      %v1960 = vpop.f32.mrb[0].mxu0
      %1961 = vmatprep.mubr.bf16.mxu0 0
      %1962 = vmatmul.mubr.bf16.gmra.mrb[0].mxu0 %v1694
      %v1963 = vpop.f32.mrb[0].mxu0
      %v1964 = vadd.f32 %v1595, %v1963
      %v1965 = vpop.f32.mrb[0].mxu0
      %v1966 = vpop.f32.mrb[0].mxu0
      %v1967 = vadd.f32 %v1595, %v1966
      %v1968 = vpop.f32.mrb[0].mxu0
      %1969 = vmatprep.mubr.bf16.mxu0 0
      %1970 = vmatmul.mubr.bf16.gmra.mrb[0].mxu0 %v1697
      %v1971 = vpop.f32.mrb[0].mxu0
      %v1972 = vadd.f32 %v1595, %v1971
      %v1973 = vpop.f32.mrb[0].mxu0
      %v1974 = vpop.f32.mrb[0].mxu0
      %v1975 = vadd.f32 %v1595, %v1974
      %v1976 = vpop.f32.mrb[0].mxu0
      %1977 = vmatprep.mubr.bf16.mxu0 0
      %1978 = vmatmul.mubr.bf16.gmra.mrb[0].mxu0 %v1700
      %v1979 = vpop.f32.mrb[0].mxu0
      %v1980 = vadd.f32 %v1595, %v1979
      %v1981 = vpop.f32.mrb[0].mxu0
      %v1982 = vpop.f32.mrb[0].mxu0
      %v1983 = vadd.f32 %v1595, %v1982
      %v1984 = vpop.f32.mrb[0].mxu0
      %1985 = vmatprep.mubr.bf16.mxu0 0
      %1986 = vmatmul.mubr.bf16.gmra.mrb[0].mxu0 %v1703
      %v1987 = vpop.f32.mrb[0].mxu0
      %v1988 = vadd.f32 %v1595, %v1987
      %v1989 = vpop.f32.mrb[0].mxu0
      %v1990 = vpop.f32.mrb[0].mxu0
      %v1991 = vadd.f32 %v1595, %v1990
      %v1992 = vpop.f32.mrb[0].mxu0
      %1993 = vdwg.mxu0
      %v1994 = vmul.f32 %v1740, 0.5
      %v1995 = vmul.f32 %v1743, 0.5
      %v1996 = vmul.f32 %v1748, 0.5
      %v1997 = vmul.f32 %v1751, 0.5
      %v1998 = vmul.f32 %v1756, 0.5
      %v1999 = vmul.f32 %v1759, 0.5
      %v2000 = vmul.f32 %v1764, 0.5
      %v2001 = vmul.f32 %v1767, 0.5
      %v2002 = vmul.f32 %v1772, 0.5
      %v2003 = vmul.f32 %v1775, 0.5
      %v2004 = vmul.f32 %v1780, 0.5
      %v2005 = vmul.f32 %v1783, 0.5
      %v2006 = vmul.f32 %v1788, 0.5
      %v2007 = vmul.f32 %v1791, 0.5
      %v2008 = vmul.f32 %v1796, 0.5
      %v2009 = vmul.f32 %v1799, 0.5
      %v2010 = vmul.f32 %v1804, 0.5
      %v2011 = vmul.f32 %v1807, 0.5
      %v2012 = vmul.f32 %v1812, 0.5
      %v2013 = vmul.f32 %v1815, 0.5
      %v2014 = vmul.f32 %v1820, 0.5
      %v2015 = vmul.f32 %v1823, 0.5
      %v2016 = vmul.f32 %v1828, 0.5
      %v2017 = vmul.f32 %v1831, 0.5
      %v2018 = vmul.f32 %v1836, 0.5
      %v2019 = vmul.f32 %v1839, 0.5
      %v2020 = vmul.f32 %v1844, 0.5
      %v2021 = vmul.f32 %v1847, 0.5
      %v2022 = vmul.f32 %v1852, 0.5
      %v2023 = vmul.f32 %v1855, 0.5
      %v2024 = vmul.f32 %v1860, 0.5
      %v2025 = vmul.f32 %v1863, 0.5
      %v2026 = vmul.f32 %v1868, 0.5
      %v2027 = vmul.f32 %v1871, 0.5
      %v2028 = vmul.f32 %v1876, 0.5
      %v2029 = vmul.f32 %v1879, 0.5
      %v2030 = vmul.f32 %v1884, 0.5
      %v2031 = vmul.f32 %v1887, 0.5
      %v2032 = vmul.f32 %v1892, 0.5
      %v2033 = vmul.f32 %v1895, 0.5
      %v2034 = vmul.f32 %v1900, 0.5
      %v2035 = vmul.f32 %v1903, 0.5
      %v2036 = vmul.f32 %v1908, 0.5
      %v2037 = vmul.f32 %v1911, 0.5
      %v2038 = vmul.f32 %v1916, 0.5
      %v2039 = vmul.f32 %v1919, 0.5
      %v2040 = vmul.f32 %v1924, 0.5
      %v2041 = vmul.f32 %v1927, 0.5
      %v2042 = vmul.f32 %v1932, 0.5
      %v2043 = vmul.f32 %v1935, 0.5
      %v2044 = vmul.f32 %v1940, 0.5
      %v2045 = vmul.f32 %v1943, 0.5
      %v2046 = vmul.f32 %v1948, 0.5
      %v2047 = vmul.f32 %v1951, 0.5
      %v2048 = vmul.f32 %v1956, 0.5
      %v2049 = vmul.f32 %v1959, 0.5
      %v2050 = vmul.f32 %v1964, 0.5
      %v2051 = vmul.f32 %v1967, 0.5
      %v2052 = vmul.f32 %v1972, 0.5
      %v2053 = vmul.f32 %v1975, 0.5
      %v2054 = vmul.f32 %v1980, 0.5
      %v2055 = vmul.f32 %v1983, 0.5
      %v2056 = vmul.f32 %v1988, 0.5
      %v2057 = vmul.f32 %v1991, 0.5
      %v2058 = vmul.f32 %v1740, 0.70710677
      %v2059 = vmul.f32 %v1743, 0.70710677
      %v2060 = vmul.f32 %v1748, 0.70710677
      %v2061 = vmul.f32 %v1751, 0.70710677
      %v2062 = vmul.f32 %v1756, 0.70710677
      %v2063 = vmul.f32 %v1759, 0.70710677
      %v2064 = vmul.f32 %v1764, 0.70710677
      %v2065 = vmul.f32 %v1767, 0.70710677
      %v2066 = vmul.f32 %v1772, 0.70710677
      %v2067 = vmul.f32 %v1775, 0.70710677
      %v2068 = vmul.f32 %v1780, 0.70710677
      %v2069 = vmul.f32 %v1783, 0.70710677
      %v2070 = vmul.f32 %v1788, 0.70710677
      %v2071 = vmul.f32 %v1791, 0.70710677
      %v2072 = vmul.f32 %v1796, 0.70710677
      %v2073 = vmul.f32 %v1799, 0.70710677
      %v2074 = vmul.f32 %v1804, 0.70710677
      %v2075 = vmul.f32 %v1807, 0.70710677
      %v2076 = vmul.f32 %v1812, 0.70710677
      %v2077 = vmul.f32 %v1815, 0.70710677
      %v2078 = vmul.f32 %v1820, 0.70710677
      %v2079 = vmul.f32 %v1823, 0.70710677
      %v2080 = vmul.f32 %v1828, 0.70710677
      %v2081 = vmul.f32 %v1831, 0.70710677
      %v2082 = vmul.f32 %v1836, 0.70710677
      %v2083 = vmul.f32 %v1839, 0.70710677
      %v2084 = vmul.f32 %v1844, 0.70710677
      %v2085 = vmul.f32 %v1847, 0.70710677
      %v2086 = vmul.f32 %v1852, 0.70710677
      %v2087 = vmul.f32 %v1855, 0.70710677
      %v2088 = vmul.f32 %v1860, 0.70710677
      %v2089 = vmul.f32 %v1863, 0.70710677
      %v2090 = vmul.f32 %v1868, 0.70710677
      %v2091 = vmul.f32 %v1871, 0.70710677
      %v2092 = vmul.f32 %v1876, 0.70710677
      %v2093 = vmul.f32 %v1879, 0.70710677
      %v2094 = vmul.f32 %v1884, 0.70710677
      %v2095 = vmul.f32 %v1887, 0.70710677
      %v2096 = vmul.f32 %v1892, 0.70710677
      %v2097 = vmul.f32 %v1895, 0.70710677
      %v2098 = vmul.f32 %v1900, 0.70710677
      %v2099 = vmul.f32 %v1903, 0.70710677
      %v2100 = vmul.f32 %v1908, 0.70710677
      %v2101 = vmul.f32 %v1911, 0.70710677
      %v2102 = vmul.f32 %v1916, 0.70710677
      %v2103 = vmul.f32 %v1919, 0.70710677
      %v2104 = vmul.f32 %v1924, 0.70710677
      %v2105 = vmul.f32 %v1927, 0.70710677
      %v2106 = vmul.f32 %v1932, 0.70710677
      %v2107 = vmul.f32 %v1935, 0.70710677
      %v2108 = vmul.f32 %v1940, 0.70710677
      %v2109 = vmul.f32 %v1943, 0.70710677
      %v2110 = vmul.f32 %v1948, 0.70710677
      %v2111 = vmul.f32 %v1951, 0.70710677
      %v2112 = vmul.f32 %v1956, 0.70710677
      %v2113 = vmul.f32 %v1959, 0.70710677
      %v2114 = vmul.f32 %v1964, 0.70710677
      %v2115 = vmul.f32 %v1967, 0.70710677
      %v2116 = vmul.f32 %v1972, 0.70710677
      %v2117 = vmul.f32 %v1975, 0.70710677
      %v2118 = vmul.f32 %v1980, 0.70710677
      %v2119 = vmul.f32 %v1983, 0.70710677
      %v2120 = vmul.f32 %v1988, 0.70710677
      %v2121 = vmul.f32 %v1991, 0.70710677
      %v2122 = verf.f32.pop %v2058
      %v2123 = verf.f32.pop %v2059
      %v2124 = verf.f32.pop %v2060
      %v2125 = verf.f32.pop %v2061
      %v2126 = verf.f32.pop %v2062
      %v2127 = verf.f32.pop %v2063
      %v2128 = verf.f32.pop %v2064
      %v2129 = verf.f32.pop %v2065
      %v2130 = verf.f32.pop %v2066
      %v2131 = verf.f32.pop %v2067
      %v2132 = verf.f32.pop %v2068
      %v2133 = verf.f32.pop %v2069
      %v2134 = verf.f32.pop %v2070
      %v2135 = verf.f32.pop %v2071
      %v2136 = verf.f32.pop %v2072
      %v2137 = verf.f32.pop %v2073
      %v2138 = verf.f32.pop %v2074
      %v2139 = verf.f32.pop %v2075
      %v2140 = verf.f32.pop %v2076
      %v2141 = verf.f32.pop %v2077
      %v2142 = verf.f32.pop %v2078
      %v2143 = verf.f32.pop %v2079
      %v2144 = verf.f32.pop %v2080
      %v2145 = verf.f32.pop %v2081
      %v2146 = verf.f32.pop %v2082
      %v2147 = verf.f32.pop %v2083
      %v2148 = verf.f32.pop %v2084
      %v2149 = verf.f32.pop %v2085
      %v2150 = verf.f32.pop %v2086
      %v2151 = verf.f32.pop %v2087
      %v2152 = verf.f32.pop %v2088
      %v2153 = verf.f32.pop %v2089
      %v2154 = verf.f32.pop %v2090
      %v2155 = verf.f32.pop %v2091
      %v2156 = verf.f32.pop %v2092
      %v2157 = verf.f32.pop %v2093
      %v2158 = verf.f32.pop %v2094
      %v2159 = verf.f32.pop %v2095
      %v2160 = verf.f32.pop %v2096
      %v2161 = verf.f32.pop %v2097
      %v2162 = verf.f32.pop %v2098
      %v2163 = verf.f32.pop %v2099
      %v2164 = verf.f32.pop %v2100
      %v2165 = verf.f32.pop %v2101
      %v2166 = verf.f32.pop %v2102
      %v2167 = verf.f32.pop %v2103
      %v2168 = verf.f32.pop %v2104
      %v2169 = verf.f32.pop %v2105
      %v2170 = verf.f32.pop %v2106
      %v2171 = verf.f32.pop %v2107
      %v2172 = verf.f32.pop %v2108
      %v2173 = verf.f32.pop %v2109
      %v2174 = verf.f32.pop %v2110
      %v2175 = verf.f32.pop %v2111
      %v2176 = verf.f32.pop %v2112
      %v2177 = verf.f32.pop %v2113
      %v2178 = verf.f32.pop %v2114
      %v2179 = verf.f32.pop %v2115
      %v2180 = verf.f32.pop %v2116
      %v2181 = verf.f32.pop %v2117
      %v2182 = verf.f32.pop %v2118
      %v2183 = verf.f32.pop %v2119
      %v2184 = verf.f32.pop %v2120
      %v2185 = verf.f32.pop %v2121
      %v2186 = vadd.f32 %v2122, 1.0
      %v2187 = vadd.f32 %v2123, 1.0
      %v2188 = vadd.f32 %v2124, 1.0
      %v2189 = vadd.f32 %v2125, 1.0
      %v2190 = vadd.f32 %v2126, 1.0
      %v2191 = vadd.f32 %v2127, 1.0
      %v2192 = vadd.f32 %v2128, 1.0
      %v2193 = vadd.f32 %v2129, 1.0
      %v2194 = vadd.f32 %v2130, 1.0
      %v2195 = vadd.f32 %v2131, 1.0
      %v2196 = vadd.f32 %v2132, 1.0
      %v2197 = vadd.f32 %v2133, 1.0
      %v2198 = vadd.f32 %v2134, 1.0
      %v2199 = vadd.f32 %v2135, 1.0
      %v2200 = vadd.f32 %v2136, 1.0
      %v2201 = vadd.f32 %v2137, 1.0
      %v2202 = vadd.f32 %v2138, 1.0
      %v2203 = vadd.f32 %v2139, 1.0
      %v2204 = vadd.f32 %v2140, 1.0
      %v2205 = vadd.f32 %v2141, 1.0
      %v2206 = vadd.f32 %v2142, 1.0
      %v2207 = vadd.f32 %v2143, 1.0
      %v2208 = vadd.f32 %v2144, 1.0
      %v2209 = vadd.f32 %v2145, 1.0
      %v2210 = vadd.f32 %v2146, 1.0
      %v2211 = vadd.f32 %v2147, 1.0
      %v2212 = vadd.f32 %v2148, 1.0
      %v2213 = vadd.f32 %v2149, 1.0
      %v2214 = vadd.f32 %v2150, 1.0
      %v2215 = vadd.f32 %v2151, 1.0
      %v2216 = vadd.f32 %v2152, 1.0
      %v2217 = vadd.f32 %v2153, 1.0
      %v2218 = vadd.f32 %v2154, 1.0
      %v2219 = vadd.f32 %v2155, 1.0
      %v2220 = vadd.f32 %v2156, 1.0
      %v2221 = vadd.f32 %v2157, 1.0
      %v2222 = vadd.f32 %v2158, 1.0
      %v2223 = vadd.f32 %v2159, 1.0
      %v2224 = vadd.f32 %v2160, 1.0
      %v2225 = vadd.f32 %v2161, 1.0
      %v2226 = vadd.f32 %v2162, 1.0
      %v2227 = vadd.f32 %v2163, 1.0
      %v2228 = vadd.f32 %v2164, 1.0
      %v2229 = vadd.f32 %v2165, 1.0
      %v2230 = vadd.f32 %v2166, 1.0
      %v2231 = vadd.f32 %v2167, 1.0
      %v2232 = vadd.f32 %v2168, 1.0
      %v2233 = vadd.f32 %v2169, 1.0
      %v2234 = vadd.f32 %v2170, 1.0
      %v2235 = vadd.f32 %v2171, 1.0
      %v2236 = vadd.f32 %v2172, 1.0
      %v2237 = vadd.f32 %v2173, 1.0
      %v2238 = vadd.f32 %v2174, 1.0
      %v2239 = vadd.f32 %v2175, 1.0
      %v2240 = vadd.f32 %v2176, 1.0
      %v2241 = vadd.f32 %v2177, 1.0
      %v2242 = vadd.f32 %v2178, 1.0
      %v2243 = vadd.f32 %v2179, 1.0
      %v2244 = vadd.f32 %v2180, 1.0
      %v2245 = vadd.f32 %v2181, 1.0
      %v2246 = vadd.f32 %v2182, 1.0
      %v2247 = vadd.f32 %v2183, 1.0
      %v2248 = vadd.f32 %v2184, 1.0
      %v2249 = vadd.f32 %v2185, 1.0
      %v2250 = vmul.f32 %v1994, %v2186
      %v2251 = vmul.f32 %v1995, %v2187
      %v2252 = vmul.f32 %v1996, %v2188
      %v2253 = vmul.f32 %v1997, %v2189
      %v2254 = vmul.f32 %v1998, %v2190
      %v2255 = vmul.f32 %v1999, %v2191
      %v2256 = vmul.f32 %v2000, %v2192
      %v2257 = vmul.f32 %v2001, %v2193
      %v2258 = vmul.f32 %v2002, %v2194
      %v2259 = vmul.f32 %v2003, %v2195
      %v2260 = vmul.f32 %v2004, %v2196
      %v2261 = vmul.f32 %v2005, %v2197
      %v2262 = vmul.f32 %v2006, %v2198
      %v2263 = vmul.f32 %v2007, %v2199
      %v2264 = vmul.f32 %v2008, %v2200
      %v2265 = vmul.f32 %v2009, %v2201
      %v2266 = vmul.f32 %v2010, %v2202
      %v2267 = vmul.f32 %v2011, %v2203
      %v2268 = vmul.f32 %v2012, %v2204
      %v2269 = vmul.f32 %v2013, %v2205
      %v2270 = vmul.f32 %v2014, %v2206
      %v2271 = vmul.f32 %v2015, %v2207
      %v2272 = vmul.f32 %v2016, %v2208
      %v2273 = vmul.f32 %v2017, %v2209
      %v2274 = vmul.f32 %v2018, %v2210
      %v2275 = vmul.f32 %v2019, %v2211
      %v2276 = vmul.f32 %v2020, %v2212
      %v2277 = vmul.f32 %v2021, %v2213
      %v2278 = vmul.f32 %v2022, %v2214
      %v2279 = vmul.f32 %v2023, %v2215
      %v2280 = vmul.f32 %v2024, %v2216
      %v2281 = vmul.f32 %v2025, %v2217
      %v2282 = vmul.f32 %v2026, %v2218
      %v2283 = vmul.f32 %v2027, %v2219
      %v2284 = vmul.f32 %v2028, %v2220
      %v2285 = vmul.f32 %v2029, %v2221
      %v2286 = vmul.f32 %v2030, %v2222
      %v2287 = vmul.f32 %v2031, %v2223
      %v2288 = vmul.f32 %v2032, %v2224
      %v2289 = vmul.f32 %v2033, %v2225
      %v2290 = vmul.f32 %v2034, %v2226
      %v2291 = vmul.f32 %v2035, %v2227
      %v2292 = vmul.f32 %v2036, %v2228
      %v2293 = vmul.f32 %v2037, %v2229
      %v2294 = vmul.f32 %v2038, %v2230
      %v2295 = vmul.f32 %v2039, %v2231
      %v2296 = vmul.f32 %v2040, %v2232
      %v2297 = vmul.f32 %v2041, %v2233
      %v2298 = vmul.f32 %v2042, %v2234
      %v2299 = vmul.f32 %v2043, %v2235
      %v2300 = vmul.f32 %v2044, %v2236
      %v2301 = vmul.f32 %v2045, %v2237
      %v2302 = vmul.f32 %v2046, %v2238
      %v2303 = vmul.f32 %v2047, %v2239
      %v2304 = vmul.f32 %v2048, %v2240
      %v2305 = vmul.f32 %v2049, %v2241
      %v2306 = vmul.f32 %v2050, %v2242
      %v2307 = vmul.f32 %v2051, %v2243
      %v2308 = vmul.f32 %v2052, %v2244
      %v2309 = vmul.f32 %v2053, %v2245
      %v2310 = vmul.f32 %v2054, %v2246
      %v2311 = vmul.f32 %v2055, %v2247
      %v2312 = vmul.f32 %v2056, %v2248
      %v2313 = vmul.f32 %v2057, %v2249
      %v2314 = vpack.c.bf16 %v2251, %v2250
      %v2315 = vpack.c.bf16 %v2253, %v2252
      %v2316 = vpack.c.bf16 %v2255, %v2254
      %v2317 = vpack.c.bf16 %v2257, %v2256
      %v2318 = vpack.c.bf16 %v2259, %v2258
      %v2319 = vpack.c.bf16 %v2261, %v2260
      %v2320 = vpack.c.bf16 %v2263, %v2262
      %v2321 = vpack.c.bf16 %v2265, %v2264
      %v2322 = vpack.c.bf16 %v2267, %v2266
      %v2323 = vpack.c.bf16 %v2269, %v2268
      %v2324 = vpack.c.bf16 %v2271, %v2270
      %v2325 = vpack.c.bf16 %v2273, %v2272
      %v2326 = vpack.c.bf16 %v2275, %v2274
      %v2327 = vpack.c.bf16 %v2277, %v2276
      %v2328 = vpack.c.bf16 %v2279, %v2278
      %v2329 = vpack.c.bf16 %v2281, %v2280
      %v2330 = vpack.c.bf16 %v2283, %v2282
      %v2331 = vpack.c.bf16 %v2285, %v2284
      %v2332 = vpack.c.bf16 %v2287, %v2286
      %v2333 = vpack.c.bf16 %v2289, %v2288
      %v2334 = vpack.c.bf16 %v2291, %v2290
      %v2335 = vpack.c.bf16 %v2293, %v2292
      %v2336 = vpack.c.bf16 %v2295, %v2294
      %v2337 = vpack.c.bf16 %v2297, %v2296
      %v2338 = vpack.c.bf16 %v2299, %v2298
      %v2339 = vpack.c.bf16 %v2301, %v2300
      %v2340 = vpack.c.bf16 %v2303, %v2302
      %v2341 = vpack.c.bf16 %v2305, %v2304
      %v2342 = vpack.c.bf16 %v2307, %v2306
      %v2343 = vpack.c.bf16 %v2309, %v2308
      %v2344 = vpack.c.bf16 %v2311, %v2310
      %v2345 = vpack.c.bf16 %v2313, %v2312
      %v2346 = vld [vmem:[%s8] sm:$0xf]
      %v2347 = vld [vmem:[%s8 + $0x4] sm:$0xf]
      %v2348 = vld [vmem:[%s8 + $0x8] sm:$0xf]
      %v2349 = vld [vmem:[%s8 + $0xc] sm:$0xf]
      %v2350 = vld [vmem:[%s8 + $0x10] sm:$0xf]
      %v2351 = vld [vmem:[%s8 + $0x14] sm:$0xf]
      %v2352 = vld [vmem:[%s8 + $0x18] sm:$0xf]
      %v2353 = vld [vmem:[%s8 + $0x1c] sm:$0xf]
      %v2354 = vld [vmem:[%s8 + $0x20] sm:$0xf]
      %v2355 = vld [vmem:[%s8 + $0x24] sm:$0xf]
      %v2356 = vld [vmem:[%s8 + $0x28] sm:$0xf]
      %v2357 = vld [vmem:[%s8 + $0x2c] sm:$0xf]
      %v2358 = vld [vmem:[%s8 + $0x30] sm:$0xf]
      %v2359 = vld [vmem:[%s8 + $0x34] sm:$0xf]
      %v2360 = vld [vmem:[%s8 + $0x38] sm:$0xf]
      %v2361 = vld [vmem:[%s8 + $0x3c] sm:$0xf]
      %v2362 = vld [vmem:[%s9] sm:$0x1]
      %v2364 = vlaneseq
      %v2365 = vshrl.u32 %v2364, 7
      %v2366 = vsub.s32 0, %v2365
      %v2367 = vrot.slane %v2362, %v2366
      %v2385 = vunpack.c.l.b16 %v2346
      %v2386 = vunpack.c.l.b16 %v2347
      %v2387 = vunpack.c.l.b16 %v2348
      %v2388 = vunpack.c.l.b16 %v2349
      %v2389 = vunpack.c.l.b16 %v2350
      %v2390 = vunpack.c.l.b16 %v2351
      %v2391 = vunpack.c.l.b16 %v2352
      %v2392 = vunpack.c.l.b16 %v2353
      %v2393 = vunpack.c.l.b16 %v2354
      %v2394 = vunpack.c.l.b16 %v2355
      %v2395 = vunpack.c.l.b16 %v2356
      %v2396 = vunpack.c.l.b16 %v2357
      %v2397 = vunpack.c.l.b16 %v2358
      %v2398 = vunpack.c.l.b16 %v2359
      %v2399 = vunpack.c.l.b16 %v2360
      %v2400 = vunpack.c.l.b16 %v2361
      %v2401 = vpack.c.b16 %v2386, %v2385
      %v2402 = vpack.c.b16 %v2388, %v2387
      %v2403 = vpack.c.b16 %v2390, %v2389
      %v2404 = vpack.c.b16 %v2392, %v2391
      %v2405 = vpack.c.b16 %v2394, %v2393
      %v2406 = vpack.c.b16 %v2396, %v2395
      %v2407 = vpack.c.b16 %v2398, %v2397
      %v2408 = vpack.c.b16 %v2400, %v2399
      %2417 = vmatprep.subr.bf16.mxu0 0
      %2418 = vmatpush1.bf16.msra.mxu0 %v2401
      %2419 = vmatprep.subr.bf16.mxu0 0
      %2420 = vmatpush1.bf16.msra.mxu0 %v2402
      %2421 = vmatprep.subr.bf16.mxu0 0
      %2422 = vmatpush1.bf16.msra.mxu0 %v2403
      %2423 = vmatprep.subr.bf16.mxu0 0
      %2424 = vmatpush1.bf16.msra.mxu0 %v2404
      %2425 = vmatprep.subr.bf16.mxu0 0
      %2426 = vmatpush1.bf16.msra.mxu0 %v2405
      %2427 = vmatprep.subr.bf16.mxu0 0
      %2428 = vmatpush1.bf16.msra.mxu0 %v2406
      %2429 = vmatprep.subr.bf16.mxu0 0
      %2430 = vmatpush1.bf16.msra.mxu0 %v2407
      %2431 = vmatprep.subr.bf16.mxu0 0
      %2432 = vmatpush1.bf16.msra.mxu0 %v2408
      %2433 = vmatprep.subr.bf16.mxu0 0
      %2434 = vmatpush1.bf16.msra.mxu0 0
      %2435 = vmatprep.subr.bf16.mxu0 0
      %2436 = vmatpush1.bf16.msra.mxu0 0
      %2437 = vmatprep.subr.bf16.mxu0 0
      %2438 = vmatpush1.bf16.msra.mxu0 0
      %2439 = vmatprep.subr.bf16.mxu0 0
      %2440 = vmatpush1.bf16.msra.mxu0 0
      %2441 = vmatprep.subr.bf16.mxu0 0
      %2442 = vmatpush1.bf16.msra.mxu0 0
      %2443 = vmatprep.subr.bf16.mxu0 0
      %2444 = vmatpush1.bf16.msra.mxu0 0
      %2445 = vmatprep.subr.bf16.mxu0 0
      %2446 = vmatpush1.bf16.msra.mxu0 0
      %2447 = vmatprep.subr.bf16.mxu0 0
      %2448 = vmatpush1.bf16.msra.mxu0 0
      %2449 = vmatprep.mubr.bf16.mxu0 0
      %2450 = vmatmul.mubr.bf16.gmra.mrb[0].mxu0 %v2314
      %v2451 = vpop.f32.mrb[0].mxu0
      %v2452 = vadd.f32 %v2367, %v2451
      %v2453 = vpop.f32.mrb[0].mxu0
      %v2454 = vpop.f32.mrb[0].mxu0
      %v2455 = vadd.f32 %v2367, %v2454
      %v2456 = vpop.f32.mrb[0].mxu0
      %2457 = vmatprep.mubr.bf16.mxu0 0
      %2458 = vmatmul.mubr.bf16.gmra.mrb[0].mxu0 %v2315
      %v2459 = vpop.f32.mrb[0].mxu0
      %v2460 = vadd.f32 %v2367, %v2459
      %v2461 = vpop.f32.mrb[0].mxu0
      %v2462 = vpop.f32.mrb[0].mxu0
      %v2463 = vadd.f32 %v2367, %v2462
      %v2464 = vpop.f32.mrb[0].mxu0
      %2465 = vmatprep.mubr.bf16.mxu0 0
      %2466 = vmatmul.mubr.bf16.gmra.mrb[0].mxu0 %v2316
      %v2467 = vpop.f32.mrb[0].mxu0
      %v2468 = vadd.f32 %v2367, %v2467
      %v2469 = vpop.f32.mrb[0].mxu0
      %v2470 = vpop.f32.mrb[0].mxu0
      %v2471 = vadd.f32 %v2367, %v2470
      %v2472 = vpop.f32.mrb[0].mxu0
      %2473 = vmatprep.mubr.bf16.mxu0 0
      %2474 = vmatmul.mubr.bf16.gmra.mrb[0].mxu0 %v2317
      %v2475 = vpop.f32.mrb[0].mxu0
      %v2476 = vadd.f32 %v2367, %v2475
      %v2477 = vpop.f32.mrb[0].mxu0
      %v2478 = vpop.f32.mrb[0].mxu0
      %v2479 = vadd.f32 %v2367, %v2478
      %v2480 = vpop.f32.mrb[0].mxu0
      %2481 = vmatprep.mubr.bf16.mxu0 0
      %2482 = vmatmul.mubr.bf16.gmra.mrb[0].mxu0 %v2318
      %v2483 = vpop.f32.mrb[0].mxu0
      %v2484 = vadd.f32 %v2367, %v2483
      %v2485 = vpop.f32.mrb[0].mxu0
      %v2486 = vpop.f32.mrb[0].mxu0
      %v2487 = vadd.f32 %v2367, %v2486
      %v2488 = vpop.f32.mrb[0].mxu0
      %2489 = vmatprep.mubr.bf16.mxu0 0
      %2490 = vmatmul.mubr.bf16.gmra.mrb[0].mxu0 %v2319
      %v2491 = vpop.f32.mrb[0].mxu0
      %v2492 = vadd.f32 %v2367, %v2491
      %v2493 = vpop.f32.mrb[0].mxu0
      %v2494 = vpop.f32.mrb[0].mxu0
      %v2495 = vadd.f32 %v2367, %v2494
      %v2496 = vpop.f32.mrb[0].mxu0
      %2497 = vmatprep.mubr.bf16.mxu0 0
      %2498 = vmatmul.mubr.bf16.gmra.mrb[0].mxu0 %v2320
      %v2499 = vpop.f32.mrb[0].mxu0
      %v2500 = vadd.f32 %v2367, %v2499
      %v2501 = vpop.f32.mrb[0].mxu0
      %v2502 = vpop.f32.mrb[0].mxu0
      %v2503 = vadd.f32 %v2367, %v2502
      %v2504 = vpop.f32.mrb[0].mxu0
      %2505 = vmatprep.mubr.bf16.mxu0 0
      %2506 = vmatmul.mubr.bf16.gmra.mrb[0].mxu0 %v2321
      %v2507 = vpop.f32.mrb[0].mxu0
      %v2508 = vadd.f32 %v2367, %v2507
      %v2509 = vpop.f32.mrb[0].mxu0
      %v2510 = vpop.f32.mrb[0].mxu0
      %v2511 = vadd.f32 %v2367, %v2510
      %v2512 = vpop.f32.mrb[0].mxu0
      %2513 = vmatprep.mubr.bf16.mxu0 0
      %2514 = vmatmul.mubr.bf16.gmra.mrb[0].mxu0 %v2322
      %v2515 = vpop.f32.mrb[0].mxu0
      %v2516 = vadd.f32 %v2367, %v2515
      %v2517 = vpop.f32.mrb[0].mxu0
      %v2518 = vpop.f32.mrb[0].mxu0
      %v2519 = vadd.f32 %v2367, %v2518
      %v2520 = vpop.f32.mrb[0].mxu0
      %2521 = vmatprep.mubr.bf16.mxu0 0
      %2522 = vmatmul.mubr.bf16.gmra.mrb[0].mxu0 %v2323
      %v2523 = vpop.f32.mrb[0].mxu0
      %v2524 = vadd.f32 %v2367, %v2523
      %v2525 = vpop.f32.mrb[0].mxu0
      %v2526 = vpop.f32.mrb[0].mxu0
      %v2527 = vadd.f32 %v2367, %v2526
      %v2528 = vpop.f32.mrb[0].mxu0
      %2529 = vmatprep.mubr.bf16.mxu0 0
      %2530 = vmatmul.mubr.bf16.gmra.mrb[0].mxu0 %v2324
      %v2531 = vpop.f32.mrb[0].mxu0
      %v2532 = vadd.f32 %v2367, %v2531
      %v2533 = vpop.f32.mrb[0].mxu0
      %v2534 = vpop.f32.mrb[0].mxu0
      %v2535 = vadd.f32 %v2367, %v2534
      %v2536 = vpop.f32.mrb[0].mxu0
      %2537 = vmatprep.mubr.bf16.mxu0 0
      %2538 = vmatmul.mubr.bf16.gmra.mrb[0].mxu0 %v2325
      %v2539 = vpop.f32.mrb[0].mxu0
      %v2540 = vadd.f32 %v2367, %v2539
      %v2541 = vpop.f32.mrb[0].mxu0
      %v2542 = vpop.f32.mrb[0].mxu0
      %v2543 = vadd.f32 %v2367, %v2542
      %v2544 = vpop.f32.mrb[0].mxu0
      %2545 = vmatprep.mubr.bf16.mxu0 0
      %2546 = vmatmul.mubr.bf16.gmra.mrb[0].mxu0 %v2326
      %v2547 = vpop.f32.mrb[0].mxu0
      %v2548 = vadd.f32 %v2367, %v2547
      %v2549 = vpop.f32.mrb[0].mxu0
      %v2550 = vpop.f32.mrb[0].mxu0
      %v2551 = vadd.f32 %v2367, %v2550
      %v2552 = vpop.f32.mrb[0].mxu0
      %2553 = vmatprep.mubr.bf16.mxu0 0
      %2554 = vmatmul.mubr.bf16.gmra.mrb[0].mxu0 %v2327
      %v2555 = vpop.f32.mrb[0].mxu0
      %v2556 = vadd.f32 %v2367, %v2555
      %v2557 = vpop.f32.mrb[0].mxu0
      %v2558 = vpop.f32.mrb[0].mxu0
      %v2559 = vadd.f32 %v2367, %v2558
      %v2560 = vpop.f32.mrb[0].mxu0
      %2561 = vmatprep.mubr.bf16.mxu0 0
      %2562 = vmatmul.mubr.bf16.gmra.mrb[0].mxu0 %v2328
      %v2563 = vpop.f32.mrb[0].mxu0
      %v2564 = vadd.f32 %v2367, %v2563
      %v2565 = vpop.f32.mrb[0].mxu0
      %v2566 = vpop.f32.mrb[0].mxu0
      %v2567 = vadd.f32 %v2367, %v2566
      %v2568 = vpop.f32.mrb[0].mxu0
      %2569 = vmatprep.mubr.bf16.mxu0 0
      %2570 = vmatmul.mubr.bf16.gmra.mrb[0].mxu0 %v2329
      %v2571 = vpop.f32.mrb[0].mxu0
      %v2572 = vadd.f32 %v2367, %v2571
      %v2573 = vpop.f32.mrb[0].mxu0
      %v2574 = vpop.f32.mrb[0].mxu0
      %v2575 = vadd.f32 %v2367, %v2574
      %v2576 = vpop.f32.mrb[0].mxu0
      %2577 = vmatprep.mubr.bf16.mxu0 0
      %2578 = vmatmul.mubr.bf16.gmra.mrb[0].mxu0 %v2330
      %v2579 = vpop.f32.mrb[0].mxu0
      %v2580 = vadd.f32 %v2367, %v2579
      %v2581 = vpop.f32.mrb[0].mxu0
      %v2582 = vpop.f32.mrb[0].mxu0
      %v2583 = vadd.f32 %v2367, %v2582
      %v2584 = vpop.f32.mrb[0].mxu0
      %2585 = vmatprep.mubr.bf16.mxu0 0
      %2586 = vmatmul.mubr.bf16.gmra.mrb[0].mxu0 %v2331
      %v2587 = vpop.f32.mrb[0].mxu0
      %v2588 = vadd.f32 %v2367, %v2587
      %v2589 = vpop.f32.mrb[0].mxu0
      %v2590 = vpop.f32.mrb[0].mxu0
      %v2591 = vadd.f32 %v2367, %v2590
      %v2592 = vpop.f32.mrb[0].mxu0
      %2593 = vmatprep.mubr.bf16.mxu0 0
      %2594 = vmatmul.mubr.bf16.gmra.mrb[0].mxu0 %v2332
      %v2595 = vpop.f32.mrb[0].mxu0
      %v2596 = vadd.f32 %v2367, %v2595
      %v2597 = vpop.f32.mrb[0].mxu0
      %v2598 = vpop.f32.mrb[0].mxu0
      %v2599 = vadd.f32 %v2367, %v2598
      %v2600 = vpop.f32.mrb[0].mxu0
      %2601 = vmatprep.mubr.bf16.mxu0 0
      %2602 = vmatmul.mubr.bf16.gmra.mrb[0].mxu0 %v2333
      %v2603 = vpop.f32.mrb[0].mxu0
      %v2604 = vadd.f32 %v2367, %v2603
      %v2605 = vpop.f32.mrb[0].mxu0
      %v2606 = vpop.f32.mrb[0].mxu0
      %v2607 = vadd.f32 %v2367, %v2606
      %v2608 = vpop.f32.mrb[0].mxu0
      %2609 = vmatprep.mubr.bf16.mxu0 0
      %2610 = vmatmul.mubr.bf16.gmra.mrb[0].mxu0 %v2334
      %v2611 = vpop.f32.mrb[0].mxu0
      %v2612 = vadd.f32 %v2367, %v2611
      %v2613 = vpop.f32.mrb[0].mxu0
      %v2614 = vpop.f32.mrb[0].mxu0
      %v2615 = vadd.f32 %v2367, %v2614
      %v2616 = vpop.f32.mrb[0].mxu0
      %2617 = vmatprep.mubr.bf16.mxu0 0
      %2618 = vmatmul.mubr.bf16.gmra.mrb[0].mxu0 %v2335
      %v2619 = vpop.f32.mrb[0].mxu0
      %v2620 = vadd.f32 %v2367, %v2619
      %v2621 = vpop.f32.mrb[0].mxu0
      %v2622 = vpop.f32.mrb[0].mxu0
      %v2623 = vadd.f32 %v2367, %v2622
      %v2624 = vpop.f32.mrb[0].mxu0
      %2625 = vmatprep.mubr.bf16.mxu0 0
      %2626 = vmatmul.mubr.bf16.gmra.mrb[0].mxu0 %v2336
      %v2627 = vpop.f32.mrb[0].mxu0
      %v2628 = vadd.f32 %v2367, %v2627
      %v2629 = vpop.f32.mrb[0].mxu0
      %v2630 = vpop.f32.mrb[0].mxu0
      %v2631 = vadd.f32 %v2367, %v2630
      %v2632 = vpop.f32.mrb[0].mxu0
      %2633 = vmatprep.mubr.bf16.mxu0 0
      %2634 = vmatmul.mubr.bf16.gmra.mrb[0].mxu0 %v2337
      %v2635 = vpop.f32.mrb[0].mxu0
      %v2636 = vadd.f32 %v2367, %v2635
      %v2637 = vpop.f32.mrb[0].mxu0
      %v2638 = vpop.f32.mrb[0].mxu0
      %v2639 = vadd.f32 %v2367, %v2638
      %v2640 = vpop.f32.mrb[0].mxu0
      %2641 = vmatprep.mubr.bf16.mxu0 0
      %2642 = vmatmul.mubr.bf16.gmra.mrb[0].mxu0 %v2338
      %v2643 = vpop.f32.mrb[0].mxu0
      %v2644 = vadd.f32 %v2367, %v2643
      %v2645 = vpop.f32.mrb[0].mxu0
      %v2646 = vpop.f32.mrb[0].mxu0
      %v2647 = vadd.f32 %v2367, %v2646
      %v2648 = vpop.f32.mrb[0].mxu0
      %2649 = vmatprep.mubr.bf16.mxu0 0
      %2650 = vmatmul.mubr.bf16.gmra.mrb[0].mxu0 %v2339
      %v2651 = vpop.f32.mrb[0].mxu0
      %v2652 = vadd.f32 %v2367, %v2651
      %v2653 = vpop.f32.mrb[0].mxu0
      %v2654 = vpop.f32.mrb[0].mxu0
      %v2655 = vadd.f32 %v2367, %v2654
      %v2656 = vpop.f32.mrb[0].mxu0
      %2657 = vmatprep.mubr.bf16.mxu0 0
      %2658 = vmatmul.mubr.bf16.gmra.mrb[0].mxu0 %v2340
      %v2659 = vpop.f32.mrb[0].mxu0
      %v2660 = vadd.f32 %v2367, %v2659
      %v2661 = vpop.f32.mrb[0].mxu0
      %v2662 = vpop.f32.mrb[0].mxu0
      %v2663 = vadd.f32 %v2367, %v2662
      %v2664 = vpop.f32.mrb[0].mxu0
      %2665 = vmatprep.mubr.bf16.mxu0 0
      %2666 = vmatmul.mubr.bf16.gmra.mrb[0].mxu0 %v2341
      %v2667 = vpop.f32.mrb[0].mxu0
      %v2668 = vadd.f32 %v2367, %v2667
      %v2669 = vpop.f32.mrb[0].mxu0
      %v2670 = vpop.f32.mrb[0].mxu0
      %v2671 = vadd.f32 %v2367, %v2670
      %v2672 = vpop.f32.mrb[0].mxu0
      %2673 = vmatprep.mubr.bf16.mxu0 0
      %2674 = vmatmul.mubr.bf16.gmra.mrb[0].mxu0 %v2342
      %v2675 = vpop.f32.mrb[0].mxu0
      %v2676 = vadd.f32 %v2367, %v2675
      %v2677 = vpop.f32.mrb[0].mxu0
      %v2678 = vpop.f32.mrb[0].mxu0
      %v2679 = vadd.f32 %v2367, %v2678
      %v2680 = vpop.f32.mrb[0].mxu0
      %2681 = vmatprep.mubr.bf16.mxu0 0
      %2682 = vmatmul.mubr.bf16.gmra.mrb[0].mxu0 %v2343
      %v2683 = vpop.f32.mrb[0].mxu0
      %v2684 = vadd.f32 %v2367, %v2683
      %v2685 = vpop.f32.mrb[0].mxu0
      %v2686 = vpop.f32.mrb[0].mxu0
      %v2687 = vadd.f32 %v2367, %v2686
      %v2688 = vpop.f32.mrb[0].mxu0
      %2689 = vmatprep.mubr.bf16.mxu0 0
      %2690 = vmatmul.mubr.bf16.gmra.mrb[0].mxu0 %v2344
      %v2691 = vpop.f32.mrb[0].mxu0
      %v2692 = vadd.f32 %v2367, %v2691
      %v2693 = vpop.f32.mrb[0].mxu0
      %v2694 = vpop.f32.mrb[0].mxu0
      %v2695 = vadd.f32 %v2367, %v2694
      %v2696 = vpop.f32.mrb[0].mxu0
      %2697 = vmatprep.mubr.bf16.mxu0 0
      %2698 = vmatmul.mubr.bf16.gmra.mrb[0].mxu0 %v2345
      %v2699 = vpop.f32.mrb[0].mxu0
      %v2700 = vadd.f32 %v2367, %v2699
      %v2701 = vpop.f32.mrb[0].mxu0
      %v2702 = vpop.f32.mrb[0].mxu0
      %v2703 = vadd.f32 %v2367, %v2702
      %v2704 = vpop.f32.mrb[0].mxu0
      %2705 = vdwg.mxu0
      %v2706 = vld [vmem:[%s4] sm:$0x1]
      %v2707 = vld [vmem:[%s5] sm:$0x1]
      %v2708 = vsel %vm516, %v2452, 0.0
      %2709 = vadd.xlane.f32.xlu0 %v2708
      %v2710 = vpop.xlane.xlu0 %2709
      %v2711 = vsel %vm516, %v2455, 0.0
      %2712 = vadd.xlane.f32.xlu0 %v2711
      %v2713 = vpop.xlane.xlu0 %2712
      %v2714 = vsel %vm516, %v2460, 0.0
      %2715 = vadd.xlane.f32.xlu0 %v2714
      %v2716 = vpop.xlane.xlu0 %2715
      %v2717 = vsel %vm516, %v2463, 0.0
      %2718 = vadd.xlane.f32.xlu0 %v2717
      %v2719 = vpop.xlane.xlu0 %2718
      %v2720 = vsel %vm516, %v2468, 0.0
      %2721 = vadd.xlane.f32.xlu0 %v2720
      %v2722 = vpop.xlane.xlu0 %2721
      %v2723 = vsel %vm516, %v2471, 0.0
      %2724 = vadd.xlane.f32.xlu0 %v2723
      %v2725 = vpop.xlane.xlu0 %2724
      %v2726 = vsel %vm516, %v2476, 0.0
      %2727 = vadd.xlane.f32.xlu0 %v2726
      %v2728 = vpop.xlane.xlu0 %2727
      %v2729 = vsel %vm516, %v2479, 0.0
      %2730 = vadd.xlane.f32.xlu0 %v2729
      %v2731 = vpop.xlane.xlu0 %2730
      %v2732 = vsel %vm516, %v2484, 0.0
      %2733 = vadd.xlane.f32.xlu0 %v2732
      %v2734 = vpop.xlane.xlu0 %2733
      %v2735 = vsel %vm516, %v2487, 0.0
      %2736 = vadd.xlane.f32.xlu0 %v2735
      %v2737 = vpop.xlane.xlu0 %2736
      %v2738 = vsel %vm516, %v2492, 0.0
      %2739 = vadd.xlane.f32.xlu0 %v2738
      %v2740 = vpop.xlane.xlu0 %2739
      %v2741 = vsel %vm516, %v2495, 0.0
      %2742 = vadd.xlane.f32.xlu0 %v2741
      %v2743 = vpop.xlane.xlu0 %2742
      %v2744 = vsel %vm516, %v2500, 0.0
      %2745 = vadd.xlane.f32.xlu0 %v2744
      %v2746 = vpop.xlane.xlu0 %2745
      %v2747 = vsel %vm516, %v2503, 0.0
      %2748 = vadd.xlane.f32.xlu0 %v2747
      %v2749 = vpop.xlane.xlu0 %2748
      %v2750 = vsel %vm516, %v2508, 0.0
      %2751 = vadd.xlane.f32.xlu0 %v2750
      %v2752 = vpop.xlane.xlu0 %2751
      %v2753 = vsel %vm516, %v2511, 0.0
      %2754 = vadd.xlane.f32.xlu0 %v2753
      %v2755 = vpop.xlane.xlu0 %2754
      %v2756 = vsel %vm516, %v2516, 0.0
      %2757 = vadd.xlane.f32.xlu0 %v2756
      %v2758 = vpop.xlane.xlu0 %2757
      %v2759 = vsel %vm516, %v2519, 0.0
      %2760 = vadd.xlane.f32.xlu0 %v2759
      %v2761 = vpop.xlane.xlu0 %2760
      %v2762 = vsel %vm516, %v2524, 0.0
      %2763 = vadd.xlane.f32.xlu0 %v2762
      %v2764 = vpop.xlane.xlu0 %2763
      %v2765 = vsel %vm516, %v2527, 0.0
      %2766 = vadd.xlane.f32.xlu0 %v2765
      %v2767 = vpop.xlane.xlu0 %2766
      %v2768 = vsel %vm516, %v2532, 0.0
      %2769 = vadd.xlane.f32.xlu0 %v2768
      %v2770 = vpop.xlane.xlu0 %2769
      %v2771 = vsel %vm516, %v2535, 0.0
      %2772 = vadd.xlane.f32.xlu0 %v2771
      %v2773 = vpop.xlane.xlu0 %2772
      %v2774 = vsel %vm516, %v2540, 0.0
      %2775 = vadd.xlane.f32.xlu0 %v2774
      %v2776 = vpop.xlane.xlu0 %2775
      %v2777 = vsel %vm516, %v2543, 0.0
      %2778 = vadd.xlane.f32.xlu0 %v2777
      %v2779 = vpop.xlane.xlu0 %2778
      %v2780 = vsel %vm516, %v2548, 0.0
      %2781 = vadd.xlane.f32.xlu0 %v2780
      %v2782 = vpop.xlane.xlu0 %2781
      %v2783 = vsel %vm516, %v2551, 0.0
      %2784 = vadd.xlane.f32.xlu0 %v2783
      %v2785 = vpop.xlane.xlu0 %2784
      %v2786 = vsel %vm516, %v2556, 0.0
      %2787 = vadd.xlane.f32.xlu0 %v2786
      %v2788 = vpop.xlane.xlu0 %2787
      %v2789 = vsel %vm516, %v2559, 0.0
      %2790 = vadd.xlane.f32.xlu0 %v2789
      %v2791 = vpop.xlane.xlu0 %2790
      %v2792 = vsel %vm516, %v2564, 0.0
      %2793 = vadd.xlane.f32.xlu0 %v2792
      %v2794 = vpop.xlane.xlu0 %2793
      %v2795 = vsel %vm516, %v2567, 0.0
      %2796 = vadd.xlane.f32.xlu0 %v2795
      %v2797 = vpop.xlane.xlu0 %2796
      %v2798 = vsel %vm516, %v2572, 0.0
      %2799 = vadd.xlane.f32.xlu0 %v2798
      %v2800 = vpop.xlane.xlu0 %2799
      %v2801 = vsel %vm516, %v2575, 0.0
      %2802 = vadd.xlane.f32.xlu0 %v2801
      %v2803 = vpop.xlane.xlu0 %2802
      %v2804 = vsel %vm516, %v2580, 0.0
      %2805 = vadd.xlane.f32.xlu0 %v2804
      %v2806 = vpop.xlane.xlu0 %2805
      %v2807 = vsel %vm516, %v2583, 0.0
      %2808 = vadd.xlane.f32.xlu0 %v2807
      %v2809 = vpop.xlane.xlu0 %2808
      %v2810 = vsel %vm516, %v2588, 0.0
      %2811 = vadd.xlane.f32.xlu0 %v2810
      %v2812 = vpop.xlane.xlu0 %2811
      %v2813 = vsel %vm516, %v2591, 0.0
      %2814 = vadd.xlane.f32.xlu0 %v2813
      %v2815 = vpop.xlane.xlu0 %2814
      %v2816 = vsel %vm516, %v2596, 0.0
      %2817 = vadd.xlane.f32.xlu0 %v2816
      %v2818 = vpop.xlane.xlu0 %2817
      %v2819 = vsel %vm516, %v2599, 0.0
      %2820 = vadd.xlane.f32.xlu0 %v2819
      %v2821 = vpop.xlane.xlu0 %2820
      %v2822 = vsel %vm516, %v2604, 0.0
      %2823 = vadd.xlane.f32.xlu0 %v2822
      %v2824 = vpop.xlane.xlu0 %2823
      %v2825 = vsel %vm516, %v2607, 0.0
      %2826 = vadd.xlane.f32.xlu0 %v2825
      %v2827 = vpop.xlane.xlu0 %2826
      %v2828 = vsel %vm516, %v2612, 0.0
      %2829 = vadd.xlane.f32.xlu0 %v2828
      %v2830 = vpop.xlane.xlu0 %2829
      %v2831 = vsel %vm516, %v2615, 0.0
      %2832 = vadd.xlane.f32.xlu0 %v2831
      %v2833 = vpop.xlane.xlu0 %2832
      %v2834 = vsel %vm516, %v2620, 0.0
      %2835 = vadd.xlane.f32.xlu0 %v2834
      %v2836 = vpop.xlane.xlu0 %2835
      %v2837 = vsel %vm516, %v2623, 0.0
      %2838 = vadd.xlane.f32.xlu0 %v2837
      %v2839 = vpop.xlane.xlu0 %2838
      %v2840 = vsel %vm516, %v2628, 0.0
      %2841 = vadd.xlane.f32.xlu0 %v2840
      %v2842 = vpop.xlane.xlu0 %2841
      %v2843 = vsel %vm516, %v2631, 0.0
      %2844 = vadd.xlane.f32.xlu0 %v2843
      %v2845 = vpop.xlane.xlu0 %2844
      %v2846 = vsel %vm516, %v2636, 0.0
      %2847 = vadd.xlane.f32.xlu0 %v2846
      %v2848 = vpop.xlane.xlu0 %2847
      %v2849 = vsel %vm516, %v2639, 0.0
      %2850 = vadd.xlane.f32.xlu0 %v2849
      %v2851 = vpop.xlane.xlu0 %2850
      %v2852 = vsel %vm516, %v2644, 0.0
      %2853 = vadd.xlane.f32.xlu0 %v2852
      %v2854 = vpop.xlane.xlu0 %2853
      %v2855 = vsel %vm516, %v2647, 0.0
      %2856 = vadd.xlane.f32.xlu0 %v2855
      %v2857 = vpop.xlane.xlu0 %2856
      %v2858 = vsel %vm516, %v2652, 0.0
      %2859 = vadd.xlane.f32.xlu0 %v2858
      %v2860 = vpop.xlane.xlu0 %2859
      %v2861 = vsel %vm516, %v2655, 0.0
      %2862 = vadd.xlane.f32.xlu0 %v2861
      %v2863 = vpop.xlane.xlu0 %2862
      %v2864 = vsel %vm516, %v2660, 0.0
      %2865 = vadd.xlane.f32.xlu0 %v2864
      %v2866 = vpop.xlane.xlu0 %2865
      %v2867 = vsel %vm516, %v2663, 0.0
      %2868 = vadd.xlane.f32.xlu0 %v2867
      %v2869 = vpop.xlane.xlu0 %2868
      %v2870 = vsel %vm516, %v2668, 0.0
      %2871 = vadd.xlane.f32.xlu0 %v2870
      %v2872 = vpop.xlane.xlu0 %2871
      %v2873 = vsel %vm516, %v2671, 0.0
      %2874 = vadd.xlane.f32.xlu0 %v2873
      %v2875 = vpop.xlane.xlu0 %2874
      %v2876 = vsel %vm516, %v2676, 0.0
      %2877 = vadd.xlane.f32.xlu0 %v2876
      %v2878 = vpop.xlane.xlu0 %2877
      %v2879 = vsel %vm516, %v2679, 0.0
      %2880 = vadd.xlane.f32.xlu0 %v2879
      %v2881 = vpop.xlane.xlu0 %2880
      %v2882 = vsel %vm516, %v2684, 0.0
      %2883 = vadd.xlane.f32.xlu0 %v2882
      %v2884 = vpop.xlane.xlu0 %2883
      %v2885 = vsel %vm516, %v2687, 0.0
      %2886 = vadd.xlane.f32.xlu0 %v2885
      %v2887 = vpop.xlane.xlu0 %2886
      %v2888 = vsel %vm516, %v2692, 0.0
      %2889 = vadd.xlane.f32.xlu0 %v2888
      %v2890 = vpop.xlane.xlu0 %2889
      %v2891 = vsel %vm516, %v2695, 0.0
      %2892 = vadd.xlane.f32.xlu0 %v2891
      %v2893 = vpop.xlane.xlu0 %2892
      %v2894 = vsel %vm516, %v2700, 0.0
      %2895 = vadd.xlane.f32.xlu0 %v2894
      %v2896 = vpop.xlane.xlu0 %2895
      %v2897 = vsel %vm516, %v2703, 0.0
      %2898 = vadd.xlane.f32.xlu0 %v2897
      %v2899 = vpop.xlane.xlu0 %2898
      %v2900 = vmul.f32 %v2710, %v709
      %v2901 = vmul.f32 %v2713, %v709
      %v2902 = vmul.f32 %v2716, %v709
      %v2903 = vmul.f32 %v2719, %v709
      %v2904 = vmul.f32 %v2722, %v709
      %v2905 = vmul.f32 %v2725, %v709
      %v2906 = vmul.f32 %v2728, %v709
      %v2907 = vmul.f32 %v2731, %v709
      %v2908 = vmul.f32 %v2734, %v709
      %v2909 = vmul.f32 %v2737, %v709
      %v2910 = vmul.f32 %v2740, %v709
      %v2911 = vmul.f32 %v2743, %v709
      %v2912 = vmul.f32 %v2746, %v709
      %v2913 = vmul.f32 %v2749, %v709
      %v2914 = vmul.f32 %v2752, %v709
      %v2915 = vmul.f32 %v2755, %v709
      %v2916 = vmul.f32 %v2758, %v709
      %v2917 = vmul.f32 %v2761, %v709
      %v2918 = vmul.f32 %v2764, %v709
      %v2919 = vmul.f32 %v2767, %v709
      %v2920 = vmul.f32 %v2770, %v709
      %v2921 = vmul.f32 %v2773, %v709
      %v2922 = vmul.f32 %v2776, %v709
      %v2923 = vmul.f32 %v2779, %v709
      %v2924 = vmul.f32 %v2782, %v709
      %v2925 = vmul.f32 %v2785, %v709
      %v2926 = vmul.f32 %v2788, %v709
      %v2927 = vmul.f32 %v2791, %v709
      %v2928 = vmul.f32 %v2794, %v709
      %v2929 = vmul.f32 %v2797, %v709
      %v2930 = vmul.f32 %v2800, %v709
      %v2931 = vmul.f32 %v2803, %v709
      %v2932 = vmul.f32 %v2806, %v709
      %v2933 = vmul.f32 %v2809, %v709
      %v2934 = vmul.f32 %v2812, %v709
      %v2935 = vmul.f32 %v2815, %v709
      %v2936 = vmul.f32 %v2818, %v709
      %v2937 = vmul.f32 %v2821, %v709
      %v2938 = vmul.f32 %v2824, %v709
      %v2939 = vmul.f32 %v2827, %v709
      %v2940 = vmul.f32 %v2830, %v709
      %v2941 = vmul.f32 %v2833, %v709
      %v2942 = vmul.f32 %v2836, %v709
      %v2943 = vmul.f32 %v2839, %v709
      %v2944 = vmul.f32 %v2842, %v709
      %v2945 = vmul.f32 %v2845, %v709
      %v2946 = vmul.f32 %v2848, %v709
      %v2947 = vmul.f32 %v2851, %v709
      %v2948 = vmul.f32 %v2854, %v709
      %v2949 = vmul.f32 %v2857, %v709
      %v2950 = vmul.f32 %v2860, %v709
      %v2951 = vmul.f32 %v2863, %v709
      %v2952 = vmul.f32 %v2866, %v709
      %v2953 = vmul.f32 %v2869, %v709
      %v2954 = vmul.f32 %v2872, %v709
      %v2955 = vmul.f32 %v2875, %v709
      %v2956 = vmul.f32 %v2878, %v709
      %v2957 = vmul.f32 %v2881, %v709
      %v2958 = vmul.f32 %v2884, %v709
      %v2959 = vmul.f32 %v2887, %v709
      %v2960 = vmul.f32 %v2890, %v709
      %v2961 = vmul.f32 %v2893, %v709
      %v2962 = vmul.f32 %v2896, %v709
      %v2963 = vmul.f32 %v2899, %v709
      %v2964 = vsub.f32 %v2452, %v2900
      %v2965 = vsub.f32 %v2455, %v2901
      %v2966 = vsub.f32 %v2460, %v2902
      %v2967 = vsub.f32 %v2463, %v2903
      %v2968 = vsub.f32 %v2468, %v2904
      %v2969 = vsub.f32 %v2471, %v2905
      %v2970 = vsub.f32 %v2476, %v2906
      %v2971 = vsub.f32 %v2479, %v2907
      %v2972 = vsub.f32 %v2484, %v2908
      %v2973 = vsub.f32 %v2487, %v2909
      %v2974 = vsub.f32 %v2492, %v2910
      %v2975 = vsub.f32 %v2495, %v2911
      %v2976 = vsub.f32 %v2500, %v2912
      %v2977 = vsub.f32 %v2503, %v2913
      %v2978 = vsub.f32 %v2508, %v2914
      %v2979 = vsub.f32 %v2511, %v2915
      %v2980 = vsub.f32 %v2516, %v2916
      %v2981 = vsub.f32 %v2519, %v2917
      %v2982 = vsub.f32 %v2524, %v2918
      %v2983 = vsub.f32 %v2527, %v2919
      %v2984 = vsub.f32 %v2532, %v2920
      %v2985 = vsub.f32 %v2535, %v2921
      %v2986 = vsub.f32 %v2540, %v2922
      %v2987 = vsub.f32 %v2543, %v2923
      %v2988 = vsub.f32 %v2548, %v2924
      %v2989 = vsub.f32 %v2551, %v2925
      %v2990 = vsub.f32 %v2556, %v2926
      %v2991 = vsub.f32 %v2559, %v2927
      %v2992 = vsub.f32 %v2564, %v2928
      %v2993 = vsub.f32 %v2567, %v2929
      %v2994 = vsub.f32 %v2572, %v2930
      %v2995 = vsub.f32 %v2575, %v2931
      %v2996 = vsub.f32 %v2580, %v2932
      %v2997 = vsub.f32 %v2583, %v2933
      %v2998 = vsub.f32 %v2588, %v2934
      %v2999 = vsub.f32 %v2591, %v2935
      %v3000 = vsub.f32 %v2596, %v2936
      %v3001 = vsub.f32 %v2599, %v2937
      %v3002 = vsub.f32 %v2604, %v2938
      %v3003 = vsub.f32 %v2607, %v2939
      %v3004 = vsub.f32 %v2612, %v2940
      %v3005 = vsub.f32 %v2615, %v2941
      %v3006 = vsub.f32 %v2620, %v2942
      %v3007 = vsub.f32 %v2623, %v2943
      %v3008 = vsub.f32 %v2628, %v2944
      %v3009 = vsub.f32 %v2631, %v2945
      %v3010 = vsub.f32 %v2636, %v2946
      %v3011 = vsub.f32 %v2639, %v2947
      %v3012 = vsub.f32 %v2644, %v2948
      %v3013 = vsub.f32 %v2647, %v2949
      %v3014 = vsub.f32 %v2652, %v2950
      %v3015 = vsub.f32 %v2655, %v2951
      %v3016 = vsub.f32 %v2660, %v2952
      %v3017 = vsub.f32 %v2663, %v2953
      %v3018 = vsub.f32 %v2668, %v2954
      %v3019 = vsub.f32 %v2671, %v2955
      %v3020 = vsub.f32 %v2676, %v2956
      %v3021 = vsub.f32 %v2679, %v2957
      %v3022 = vsub.f32 %v2684, %v2958
      %v3023 = vsub.f32 %v2687, %v2959
      %v3024 = vsub.f32 %v2692, %v2960
      %v3025 = vsub.f32 %v2695, %v2961
      %v3026 = vsub.f32 %v2700, %v2962
      %v3027 = vsub.f32 %v2703, %v2963
      %v3028 = vmul.f32 %v2964, %v2964
      %v3029 = vmul.f32 %v2965, %v2965
      %v3030 = vmul.f32 %v2966, %v2966
      %v3031 = vmul.f32 %v2967, %v2967
      %v3032 = vmul.f32 %v2968, %v2968
      %v3033 = vmul.f32 %v2969, %v2969
      %v3034 = vmul.f32 %v2970, %v2970
      %v3035 = vmul.f32 %v2971, %v2971
      %v3036 = vmul.f32 %v2972, %v2972
      %v3037 = vmul.f32 %v2973, %v2973
      %v3038 = vmul.f32 %v2974, %v2974
      %v3039 = vmul.f32 %v2975, %v2975
      %v3040 = vmul.f32 %v2976, %v2976
      %v3041 = vmul.f32 %v2977, %v2977
      %v3042 = vmul.f32 %v2978, %v2978
      %v3043 = vmul.f32 %v2979, %v2979
      %v3044 = vmul.f32 %v2980, %v2980
      %v3045 = vmul.f32 %v2981, %v2981
      %v3046 = vmul.f32 %v2982, %v2982
      %v3047 = vmul.f32 %v2983, %v2983
      %v3048 = vmul.f32 %v2984, %v2984
      %v3049 = vmul.f32 %v2985, %v2985
      %v3050 = vmul.f32 %v2986, %v2986
      %v3051 = vmul.f32 %v2987, %v2987
      %v3052 = vmul.f32 %v2988, %v2988
      %v3053 = vmul.f32 %v2989, %v2989
      %v3054 = vmul.f32 %v2990, %v2990
      %v3055 = vmul.f32 %v2991, %v2991
      %v3056 = vmul.f32 %v2992, %v2992
      %v3057 = vmul.f32 %v2993, %v2993
      %v3058 = vmul.f32 %v2994, %v2994
      %v3059 = vmul.f32 %v2995, %v2995
      %v3060 = vmul.f32 %v2996, %v2996
      %v3061 = vmul.f32 %v2997, %v2997
      %v3062 = vmul.f32 %v2998, %v2998
      %v3063 = vmul.f32 %v2999, %v2999
      %v3064 = vmul.f32 %v3000, %v3000
      %v3065 = vmul.f32 %v3001, %v3001
      %v3066 = vmul.f32 %v3002, %v3002
      %v3067 = vmul.f32 %v3003, %v3003
      %v3068 = vmul.f32 %v3004, %v3004
      %v3069 = vmul.f32 %v3005, %v3005
      %v3070 = vmul.f32 %v3006, %v3006
      %v3071 = vmul.f32 %v3007, %v3007
      %v3072 = vmul.f32 %v3008, %v3008
      %v3073 = vmul.f32 %v3009, %v3009
      %v3074 = vmul.f32 %v3010, %v3010
      %v3075 = vmul.f32 %v3011, %v3011
      %v3076 = vmul.f32 %v3012, %v3012
      %v3077 = vmul.f32 %v3013, %v3013
      %v3078 = vmul.f32 %v3014, %v3014
      %v3079 = vmul.f32 %v3015, %v3015
      %v3080 = vmul.f32 %v3016, %v3016
      %v3081 = vmul.f32 %v3017, %v3017
      %v3082 = vmul.f32 %v3018, %v3018
      %v3083 = vmul.f32 %v3019, %v3019
      %v3084 = vmul.f32 %v3020, %v3020
      %v3085 = vmul.f32 %v3021, %v3021
      %v3086 = vmul.f32 %v3022, %v3022
      %v3087 = vmul.f32 %v3023, %v3023
      %v3088 = vmul.f32 %v3024, %v3024
      %v3089 = vmul.f32 %v3025, %v3025
      %v3090 = vmul.f32 %v3026, %v3026
      %v3091 = vmul.f32 %v3027, %v3027
      %v3092 = vsel %vm516, %v3028, 0.0
      %3093 = vadd.xlane.f32.xlu0 %v3092
      %v3094 = vpop.xlane.xlu0 %3093
      %v3095 = vsel %vm516, %v3029, 0.0
      %3096 = vadd.xlane.f32.xlu0 %v3095
      %v3097 = vpop.xlane.xlu0 %3096
      %v3098 = vsel %vm516, %v3030, 0.0
      %3099 = vadd.xlane.f32.xlu0 %v3098
      %v3100 = vpop.xlane.xlu0 %3099
      %v3101 = vsel %vm516, %v3031, 0.0
      %3102 = vadd.xlane.f32.xlu0 %v3101
      %v3103 = vpop.xlane.xlu0 %3102
      %v3104 = vsel %vm516, %v3032, 0.0
      %3105 = vadd.xlane.f32.xlu0 %v3104
      %v3106 = vpop.xlane.xlu0 %3105
      %v3107 = vsel %vm516, %v3033, 0.0
      %3108 = vadd.xlane.f32.xlu0 %v3107
      %v3109 = vpop.xlane.xlu0 %3108
      %v3110 = vsel %vm516, %v3034, 0.0
      %3111 = vadd.xlane.f32.xlu0 %v3110
      %v3112 = vpop.xlane.xlu0 %3111
      %v3113 = vsel %vm516, %v3035, 0.0
      %3114 = vadd.xlane.f32.xlu0 %v3113
      %v3115 = vpop.xlane.xlu0 %3114
      %v3116 = vsel %vm516, %v3036, 0.0
      %3117 = vadd.xlane.f32.xlu0 %v3116
      %v3118 = vpop.xlane.xlu0 %3117
      %v3119 = vsel %vm516, %v3037, 0.0
      %3120 = vadd.xlane.f32.xlu0 %v3119
      %v3121 = vpop.xlane.xlu0 %3120
      %v3122 = vsel %vm516, %v3038, 0.0
      %3123 = vadd.xlane.f32.xlu0 %v3122
      %v3124 = vpop.xlane.xlu0 %3123
      %v3125 = vsel %vm516, %v3039, 0.0
      %3126 = vadd.xlane.f32.xlu0 %v3125
      %v3127 = vpop.xlane.xlu0 %3126
      %v3128 = vsel %vm516, %v3040, 0.0
      %3129 = vadd.xlane.f32.xlu0 %v3128
      %v3130 = vpop.xlane.xlu0 %3129
      %v3131 = vsel %vm516, %v3041, 0.0
      %3132 = vadd.xlane.f32.xlu0 %v3131
      %v3133 = vpop.xlane.xlu0 %3132
      %v3134 = vsel %vm516, %v3042, 0.0
      %3135 = vadd.xlane.f32.xlu0 %v3134
      %v3136 = vpop.xlane.xlu0 %3135
      %v3137 = vsel %vm516, %v3043, 0.0
      %3138 = vadd.xlane.f32.xlu0 %v3137
      %v3139 = vpop.xlane.xlu0 %3138
      %v3140 = vsel %vm516, %v3044, 0.0
      %3141 = vadd.xlane.f32.xlu0 %v3140
      %v3142 = vpop.xlane.xlu0 %3141
      %v3143 = vsel %vm516, %v3045, 0.0
      %3144 = vadd.xlane.f32.xlu0 %v3143
      %v3145 = vpop.xlane.xlu0 %3144
      %v3146 = vsel %vm516, %v3046, 0.0
      %3147 = vadd.xlane.f32.xlu0 %v3146
      %v3148 = vpop.xlane.xlu0 %3147
      %v3149 = vsel %vm516, %v3047, 0.0
      %3150 = vadd.xlane.f32.xlu0 %v3149
      %v3151 = vpop.xlane.xlu0 %3150
      %v3152 = vsel %vm516, %v3048, 0.0
      %3153 = vadd.xlane.f32.xlu0 %v3152
      %v3154 = vpop.xlane.xlu0 %3153
      %v3155 = vsel %vm516, %v3049, 0.0
      %3156 = vadd.xlane.f32.xlu0 %v3155
      %v3157 = vpop.xlane.xlu0 %3156
      %v3158 = vsel %vm516, %v3050, 0.0
      %3159 = vadd.xlane.f32.xlu0 %v3158
      %v3160 = vpop.xlane.xlu0 %3159
      %v3161 = vsel %vm516, %v3051, 0.0
      %3162 = vadd.xlane.f32.xlu0 %v3161
      %v3163 = vpop.xlane.xlu0 %3162
      %v3164 = vsel %vm516, %v3052, 0.0
      %3165 = vadd.xlane.f32.xlu0 %v3164
      %v3166 = vpop.xlane.xlu0 %3165
      %v3167 = vsel %vm516, %v3053, 0.0
      %3168 = vadd.xlane.f32.xlu0 %v3167
      %v3169 = vpop.xlane.xlu0 %3168
      %v3170 = vsel %vm516, %v3054, 0.0
      %3171 = vadd.xlane.f32.xlu0 %v3170
      %v3172 = vpop.xlane.xlu0 %3171
      %v3173 = vsel %vm516, %v3055, 0.0
      %3174 = vadd.xlane.f32.xlu0 %v3173
      %v3175 = vpop.xlane.xlu0 %3174
      %v3176 = vsel %vm516, %v3056, 0.0
      %3177 = vadd.xlane.f32.xlu0 %v3176
      %v3178 = vpop.xlane.xlu0 %3177
      %v3179 = vsel %vm516, %v3057, 0.0
      %3180 = vadd.xlane.f32.xlu0 %v3179
      %v3181 = vpop.xlane.xlu0 %3180
      %v3182 = vsel %vm516, %v3058, 0.0
      %3183 = vadd.xlane.f32.xlu0 %v3182
      %v3184 = vpop.xlane.xlu0 %3183
      %v3185 = vsel %vm516, %v3059, 0.0
      %3186 = vadd.xlane.f32.xlu0 %v3185
      %v3187 = vpop.xlane.xlu0 %3186
      %v3188 = vsel %vm516, %v3060, 0.0
      %3189 = vadd.xlane.f32.xlu0 %v3188
      %v3190 = vpop.xlane.xlu0 %3189
      %v3191 = vsel %vm516, %v3061, 0.0
      %3192 = vadd.xlane.f32.xlu0 %v3191
      %v3193 = vpop.xlane.xlu0 %3192
      %v3194 = vsel %vm516, %v3062, 0.0
      %3195 = vadd.xlane.f32.xlu0 %v3194
      %v3196 = vpop.xlane.xlu0 %3195
      %v3197 = vsel %vm516, %v3063, 0.0
      %3198 = vadd.xlane.f32.xlu0 %v3197
      %v3199 = vpop.xlane.xlu0 %3198
      %v3200 = vsel %vm516, %v3064, 0.0
      %3201 = vadd.xlane.f32.xlu0 %v3200
      %v3202 = vpop.xlane.xlu0 %3201
      %v3203 = vsel %vm516, %v3065, 0.0
      %3204 = vadd.xlane.f32.xlu0 %v3203
      %v3205 = vpop.xlane.xlu0 %3204
      %v3206 = vsel %vm516, %v3066, 0.0
      %3207 = vadd.xlane.f32.xlu0 %v3206
      %v3208 = vpop.xlane.xlu0 %3207
      %v3209 = vsel %vm516, %v3067, 0.0
      %3210 = vadd.xlane.f32.xlu0 %v3209
      %v3211 = vpop.xlane.xlu0 %3210
      %v3212 = vsel %vm516, %v3068, 0.0
      %3213 = vadd.xlane.f32.xlu0 %v3212
      %v3214 = vpop.xlane.xlu0 %3213
      %v3215 = vsel %vm516, %v3069, 0.0
      %3216 = vadd.xlane.f32.xlu0 %v3215
      %v3217 = vpop.xlane.xlu0 %3216
      %v3218 = vsel %vm516, %v3070, 0.0
      %3219 = vadd.xlane.f32.xlu0 %v3218
      %v3220 = vpop.xlane.xlu0 %3219
      %v3221 = vsel %vm516, %v3071, 0.0
      %3222 = vadd.xlane.f32.xlu0 %v3221
      %v3223 = vpop.xlane.xlu0 %3222
      %v3224 = vsel %vm516, %v3072, 0.0
      %3225 = vadd.xlane.f32.xlu0 %v3224
      %v3226 = vpop.xlane.xlu0 %3225
      %v3227 = vsel %vm516, %v3073, 0.0
      %3228 = vadd.xlane.f32.xlu0 %v3227
      %v3229 = vpop.xlane.xlu0 %3228
      %v3230 = vsel %vm516, %v3074, 0.0
      %3231 = vadd.xlane.f32.xlu0 %v3230
      %v3232 = vpop.xlane.xlu0 %3231
      %v3233 = vsel %vm516, %v3075, 0.0
      %3234 = vadd.xlane.f32.xlu0 %v3233
      %v3235 = vpop.xlane.xlu0 %3234
      %v3236 = vsel %vm516, %v3076, 0.0
      %3237 = vadd.xlane.f32.xlu0 %v3236
      %v3238 = vpop.xlane.xlu0 %3237
      %v3239 = vsel %vm516, %v3077, 0.0
      %3240 = vadd.xlane.f32.xlu0 %v3239
      %v3241 = vpop.xlane.xlu0 %3240
      %v3242 = vsel %vm516, %v3078, 0.0
      %3243 = vadd.xlane.f32.xlu0 %v3242
      %v3244 = vpop.xlane.xlu0 %3243
      %v3245 = vsel %vm516, %v3079, 0.0
      %3246 = vadd.xlane.f32.xlu0 %v3245
      %v3247 = vpop.xlane.xlu0 %3246
      %v3248 = vsel %vm516, %v3080, 0.0
      %3249 = vadd.xlane.f32.xlu0 %v3248
      %v3250 = vpop.xlane.xlu0 %3249
      %v3251 = vsel %vm516, %v3081, 0.0
      %3252 = vadd.xlane.f32.xlu0 %v3251
      %v3253 = vpop.xlane.xlu0 %3252
      %v3254 = vsel %vm516, %v3082, 0.0
      %3255 = vadd.xlane.f32.xlu0 %v3254
      %v3256 = vpop.xlane.xlu0 %3255
      %v3257 = vsel %vm516, %v3083, 0.0
      %3258 = vadd.xlane.f32.xlu0 %v3257
      %v3259 = vpop.xlane.xlu0 %3258
      %v3260 = vsel %vm516, %v3084, 0.0
      %3261 = vadd.xlane.f32.xlu0 %v3260
      %v3262 = vpop.xlane.xlu0 %3261
      %v3263 = vsel %vm516, %v3085, 0.0
      %3264 = vadd.xlane.f32.xlu0 %v3263
      %v3265 = vpop.xlane.xlu0 %3264
      %v3266 = vsel %vm516, %v3086, 0.0
      %3267 = vadd.xlane.f32.xlu0 %v3266
      %v3268 = vpop.xlane.xlu0 %3267
      %v3269 = vsel %vm516, %v3087, 0.0
      %3270 = vadd.xlane.f32.xlu0 %v3269
      %v3271 = vpop.xlane.xlu0 %3270
      %v3272 = vsel %vm516, %v3088, 0.0
      %3273 = vadd.xlane.f32.xlu0 %v3272
      %v3274 = vpop.xlane.xlu0 %3273
      %v3275 = vsel %vm516, %v3089, 0.0
      %3276 = vadd.xlane.f32.xlu0 %v3275
      %v3277 = vpop.xlane.xlu0 %3276
      %v3278 = vsel %vm516, %v3090, 0.0
      %3279 = vadd.xlane.f32.xlu0 %v3278
      %v3280 = vpop.xlane.xlu0 %3279
      %v3281 = vsel %vm516, %v3091, 0.0
      %3282 = vadd.xlane.f32.xlu0 %v3281
      %v3283 = vpop.xlane.xlu0 %3282
      %v3284 = vmul.f32 %v3094, %v709
      %v3285 = vmul.f32 %v3097, %v709
      %v3286 = vmul.f32 %v3100, %v709
      %v3287 = vmul.f32 %v3103, %v709
      %v3288 = vmul.f32 %v3106, %v709
      %v3289 = vmul.f32 %v3109, %v709
      %v3290 = vmul.f32 %v3112, %v709
      %v3291 = vmul.f32 %v3115, %v709
      %v3292 = vmul.f32 %v3118, %v709
      %v3293 = vmul.f32 %v3121, %v709
      %v3294 = vmul.f32 %v3124, %v709
      %v3295 = vmul.f32 %v3127, %v709
      %v3296 = vmul.f32 %v3130, %v709
      %v3297 = vmul.f32 %v3133, %v709
      %v3298 = vmul.f32 %v3136, %v709
      %v3299 = vmul.f32 %v3139, %v709
      %v3300 = vmul.f32 %v3142, %v709
      %v3301 = vmul.f32 %v3145, %v709
      %v3302 = vmul.f32 %v3148, %v709
      %v3303 = vmul.f32 %v3151, %v709
      %v3304 = vmul.f32 %v3154, %v709
      %v3305 = vmul.f32 %v3157, %v709
      %v3306 = vmul.f32 %v3160, %v709
      %v3307 = vmul.f32 %v3163, %v709
      %v3308 = vmul.f32 %v3166, %v709
      %v3309 = vmul.f32 %v3169, %v709
      %v3310 = vmul.f32 %v3172, %v709
      %v3311 = vmul.f32 %v3175, %v709
      %v3312 = vmul.f32 %v3178, %v709
      %v3313 = vmul.f32 %v3181, %v709
      %v3314 = vmul.f32 %v3184, %v709
      %v3315 = vmul.f32 %v3187, %v709
      %v3316 = vmul.f32 %v3190, %v709
      %v3317 = vmul.f32 %v3193, %v709
      %v3318 = vmul.f32 %v3196, %v709
      %v3319 = vmul.f32 %v3199, %v709
      %v3320 = vmul.f32 %v3202, %v709
      %v3321 = vmul.f32 %v3205, %v709
      %v3322 = vmul.f32 %v3208, %v709
      %v3323 = vmul.f32 %v3211, %v709
      %v3324 = vmul.f32 %v3214, %v709
      %v3325 = vmul.f32 %v3217, %v709
      %v3326 = vmul.f32 %v3220, %v709
      %v3327 = vmul.f32 %v3223, %v709
      %v3328 = vmul.f32 %v3226, %v709
      %v3329 = vmul.f32 %v3229, %v709
      %v3330 = vmul.f32 %v3232, %v709
      %v3331 = vmul.f32 %v3235, %v709
      %v3332 = vmul.f32 %v3238, %v709
      %v3333 = vmul.f32 %v3241, %v709
      %v3334 = vmul.f32 %v3244, %v709
      %v3335 = vmul.f32 %v3247, %v709
      %v3336 = vmul.f32 %v3250, %v709
      %v3337 = vmul.f32 %v3253, %v709
      %v3338 = vmul.f32 %v3256, %v709
      %v3339 = vmul.f32 %v3259, %v709
      %v3340 = vmul.f32 %v3262, %v709
      %v3341 = vmul.f32 %v3265, %v709
      %v3342 = vmul.f32 %v3268, %v709
      %v3343 = vmul.f32 %v3271, %v709
      %v3344 = vmul.f32 %v3274, %v709
      %v3345 = vmul.f32 %v3277, %v709
      %v3346 = vmul.f32 %v3280, %v709
      %v3347 = vmul.f32 %v3283, %v709
      %v3348 = vadd.f32 %v3284, 1e-05
      %v3349 = vadd.f32 %v3285, 1e-05
      %v3350 = vadd.f32 %v3286, 1e-05
      %v3351 = vadd.f32 %v3287, 1e-05
      %v3352 = vadd.f32 %v3288, 1e-05
      %v3353 = vadd.f32 %v3289, 1e-05
      %v3354 = vadd.f32 %v3290, 1e-05
      %v3355 = vadd.f32 %v3291, 1e-05
      %v3356 = vadd.f32 %v3292, 1e-05
      %v3357 = vadd.f32 %v3293, 1e-05
      %v3358 = vadd.f32 %v3294, 1e-05
      %v3359 = vadd.f32 %v3295, 1e-05
      %v3360 = vadd.f32 %v3296, 1e-05
      %v3361 = vadd.f32 %v3297, 1e-05
      %v3362 = vadd.f32 %v3298, 1e-05
      %v3363 = vadd.f32 %v3299, 1e-05
      %v3364 = vadd.f32 %v3300, 1e-05
      %v3365 = vadd.f32 %v3301, 1e-05
      %v3366 = vadd.f32 %v3302, 1e-05
      %v3367 = vadd.f32 %v3303, 1e-05
      %v3368 = vadd.f32 %v3304, 1e-05
      %v3369 = vadd.f32 %v3305, 1e-05
      %v3370 = vadd.f32 %v3306, 1e-05
      %v3371 = vadd.f32 %v3307, 1e-05
      %v3372 = vadd.f32 %v3308, 1e-05
      %v3373 = vadd.f32 %v3309, 1e-05
      %v3374 = vadd.f32 %v3310, 1e-05
      %v3375 = vadd.f32 %v3311, 1e-05
      %v3376 = vadd.f32 %v3312, 1e-05
      %v3377 = vadd.f32 %v3313, 1e-05
      %v3378 = vadd.f32 %v3314, 1e-05
      %v3379 = vadd.f32 %v3315, 1e-05
      %v3380 = vadd.f32 %v3316, 1e-05
      %v3381 = vadd.f32 %v3317, 1e-05
      %v3382 = vadd.f32 %v3318, 1e-05
      %v3383 = vadd.f32 %v3319, 1e-05
      %v3384 = vadd.f32 %v3320, 1e-05
      %v3385 = vadd.f32 %v3321, 1e-05
      %v3386 = vadd.f32 %v3322, 1e-05
      %v3387 = vadd.f32 %v3323, 1e-05
      %v3388 = vadd.f32 %v3324, 1e-05
      %v3389 = vadd.f32 %v3325, 1e-05
      %v3390 = vadd.f32 %v3326, 1e-05
      %v3391 = vadd.f32 %v3327, 1e-05
      %v3392 = vadd.f32 %v3328, 1e-05
      %v3393 = vadd.f32 %v3329, 1e-05
      %v3394 = vadd.f32 %v3330, 1e-05
      %v3395 = vadd.f32 %v3331, 1e-05
      %v3396 = vadd.f32 %v3332, 1e-05
      %v3397 = vadd.f32 %v3333, 1e-05
      %v3398 = vadd.f32 %v3334, 1e-05
      %v3399 = vadd.f32 %v3335, 1e-05
      %v3400 = vadd.f32 %v3336, 1e-05
      %v3401 = vadd.f32 %v3337, 1e-05
      %v3402 = vadd.f32 %v3338, 1e-05
      %v3403 = vadd.f32 %v3339, 1e-05
      %v3404 = vadd.f32 %v3340, 1e-05
      %v3405 = vadd.f32 %v3341, 1e-05
      %v3406 = vadd.f32 %v3342, 1e-05
      %v3407 = vadd.f32 %v3343, 1e-05
      %v3408 = vadd.f32 %v3344, 1e-05
      %v3409 = vadd.f32 %v3345, 1e-05
      %v3410 = vadd.f32 %v3346, 1e-05
      %v3411 = vadd.f32 %v3347, 1e-05
      %v3412 = vrsqrt.pop %v3348
      %v3413 = vrsqrt.pop %v3349
      %v3414 = vrsqrt.pop %v3350
      %v3415 = vrsqrt.pop %v3351
      %v3416 = vrsqrt.pop %v3352
      %v3417 = vrsqrt.pop %v3353
      %v3418 = vrsqrt.pop %v3354
      %v3419 = vrsqrt.pop %v3355
      %v3420 = vrsqrt.pop %v3356
      %v3421 = vrsqrt.pop %v3357
      %v3422 = vrsqrt.pop %v3358
      %v3423 = vrsqrt.pop %v3359
      %v3424 = vrsqrt.pop %v3360
      %v3425 = vrsqrt.pop %v3361
      %v3426 = vrsqrt.pop %v3362
      %v3427 = vrsqrt.pop %v3363
      %v3428 = vrsqrt.pop %v3364
      %v3429 = vrsqrt.pop %v3365
      %v3430 = vrsqrt.pop %v3366
      %v3431 = vrsqrt.pop %v3367
      %v3432 = vrsqrt.pop %v3368
      %v3433 = vrsqrt.pop %v3369
      %v3434 = vrsqrt.pop %v3370
      %v3435 = vrsqrt.pop %v3371
      %v3436 = vrsqrt.pop %v3372
      %v3437 = vrsqrt.pop %v3373
      %v3438 = vrsqrt.pop %v3374
      %v3439 = vrsqrt.pop %v3375
      %v3440 = vrsqrt.pop %v3376
      %v3441 = vrsqrt.pop %v3377
      %v3442 = vrsqrt.pop %v3378
      %v3443 = vrsqrt.pop %v3379
      %v3444 = vrsqrt.pop %v3380
      %v3445 = vrsqrt.pop %v3381
      %v3446 = vrsqrt.pop %v3382
      %v3447 = vrsqrt.pop %v3383
      %v3448 = vrsqrt.pop %v3384
      %v3449 = vrsqrt.pop %v3385
      %v3450 = vrsqrt.pop %v3386
      %v3451 = vrsqrt.pop %v3387
      %v3452 = vrsqrt.pop %v3388
      %v3453 = vrsqrt.pop %v3389
      %v3454 = vrsqrt.pop %v3390
      %v3455 = vrsqrt.pop %v3391
      %v3456 = vrsqrt.pop %v3392
      %v3457 = vrsqrt.pop %v3393
      %v3458 = vrsqrt.pop %v3394
      %v3459 = vrsqrt.pop %v3395
      %v3460 = vrsqrt.pop %v3396
      %v3461 = vrsqrt.pop %v3397
      %v3462 = vrsqrt.pop %v3398
      %v3463 = vrsqrt.pop %v3399
      %v3464 = vrsqrt.pop %v3400
      %v3465 = vrsqrt.pop %v3401
      %v3466 = vrsqrt.pop %v3402
      %v3467 = vrsqrt.pop %v3403
      %v3468 = vrsqrt.pop %v3404
      %v3469 = vrsqrt.pop %v3405
      %v3470 = vrsqrt.pop %v3406
      %v3471 = vrsqrt.pop %v3407
      %v3472 = vrsqrt.pop %v3408
      %v3473 = vrsqrt.pop %v3409
      %v3474 = vrsqrt.pop %v3410
      %v3475 = vrsqrt.pop %v3411
      %v3476 = vmul.f32 %v2964, %v3412
      %v3477 = vmul.f32 %v2965, %v3413
      %v3478 = vmul.f32 %v2966, %v3414
      %v3479 = vmul.f32 %v2967, %v3415
      %v3480 = vmul.f32 %v2968, %v3416
      %v3481 = vmul.f32 %v2969, %v3417
      %v3482 = vmul.f32 %v2970, %v3418
      %v3483 = vmul.f32 %v2971, %v3419
      %v3484 = vmul.f32 %v2972, %v3420
      %v3485 = vmul.f32 %v2973, %v3421
      %v3486 = vmul.f32 %v2974, %v3422
      %v3487 = vmul.f32 %v2975, %v3423
      %v3488 = vmul.f32 %v2976, %v3424
      %v3489 = vmul.f32 %v2977, %v3425
      %v3490 = vmul.f32 %v2978, %v3426
      %v3491 = vmul.f32 %v2979, %v3427
      %v3492 = vmul.f32 %v2980, %v3428
      %v3493 = vmul.f32 %v2981, %v3429
      %v3494 = vmul.f32 %v2982, %v3430
      %v3495 = vmul.f32 %v2983, %v3431
      %v3496 = vmul.f32 %v2984, %v3432
      %v3497 = vmul.f32 %v2985, %v3433
      %v3498 = vmul.f32 %v2986, %v3434
      %v3499 = vmul.f32 %v2987, %v3435
      %v3500 = vmul.f32 %v2988, %v3436
      %v3501 = vmul.f32 %v2989, %v3437
      %v3502 = vmul.f32 %v2990, %v3438
      %v3503 = vmul.f32 %v2991, %v3439
      %v3504 = vmul.f32 %v2992, %v3440
      %v3505 = vmul.f32 %v2993, %v3441
      %v3506 = vmul.f32 %v2994, %v3442
      %v3507 = vmul.f32 %v2995, %v3443
      %v3508 = vmul.f32 %v2996, %v3444
      %v3509 = vmul.f32 %v2997, %v3445
      %v3510 = vmul.f32 %v2998, %v3446
      %v3511 = vmul.f32 %v2999, %v3447
      %v3512 = vmul.f32 %v3000, %v3448
      %v3513 = vmul.f32 %v3001, %v3449
      %v3514 = vmul.f32 %v3002, %v3450
      %v3515 = vmul.f32 %v3003, %v3451
      %v3516 = vmul.f32 %v3004, %v3452
      %v3517 = vmul.f32 %v3005, %v3453
      %v3518 = vmul.f32 %v3006, %v3454
      %v3519 = vmul.f32 %v3007, %v3455
      %v3520 = vmul.f32 %v3008, %v3456
      %v3521 = vmul.f32 %v3009, %v3457
      %v3522 = vmul.f32 %v3010, %v3458
      %v3523 = vmul.f32 %v3011, %v3459
      %v3524 = vmul.f32 %v3012, %v3460
      %v3525 = vmul.f32 %v3013, %v3461
      %v3526 = vmul.f32 %v3014, %v3462
      %v3527 = vmul.f32 %v3015, %v3463
      %v3528 = vmul.f32 %v3016, %v3464
      %v3529 = vmul.f32 %v3017, %v3465
      %v3530 = vmul.f32 %v3018, %v3466
      %v3531 = vmul.f32 %v3019, %v3467
      %v3532 = vmul.f32 %v3020, %v3468
      %v3533 = vmul.f32 %v3021, %v3469
      %v3534 = vmul.f32 %v3022, %v3470
      %v3535 = vmul.f32 %v3023, %v3471
      %v3536 = vmul.f32 %v3024, %v3472
      %v3537 = vmul.f32 %v3025, %v3473
      %v3538 = vmul.f32 %v3026, %v3474
      %v3539 = vmul.f32 %v3027, %v3475
      %v3541 = vlaneseq
      %v3542 = vshrl.u32 %v3541, 7
      %v3543 = vsub.s32 0, %v3542
      %v3544 = vrot.slane %v2706, %v3543
      %v3546 = vmul.f32 %v3476, %v3544
      %v3547 = vmul.f32 %v3477, %v3544
      %v3548 = vmul.f32 %v3478, %v3544
      %v3549 = vmul.f32 %v3479, %v3544
      %v3550 = vmul.f32 %v3480, %v3544
      %v3551 = vmul.f32 %v3481, %v3544
      %v3552 = vmul.f32 %v3482, %v3544
      %v3553 = vmul.f32 %v3483, %v3544
      %v3554 = vmul.f32 %v3484, %v3544
      %v3555 = vmul.f32 %v3485, %v3544
      %v3556 = vmul.f32 %v3486, %v3544
      %v3557 = vmul.f32 %v3487, %v3544
      %v3558 = vmul.f32 %v3488, %v3544
      %v3559 = vmul.f32 %v3489, %v3544
      %v3560 = vmul.f32 %v3490, %v3544
      %v3561 = vmul.f32 %v3491, %v3544
      %v3562 = vmul.f32 %v3492, %v3544
      %v3563 = vmul.f32 %v3493, %v3544
      %v3564 = vmul.f32 %v3494, %v3544
      %v3565 = vmul.f32 %v3495, %v3544
      %v3566 = vmul.f32 %v3496, %v3544
      %v3567 = vmul.f32 %v3497, %v3544
      %v3568 = vmul.f32 %v3498, %v3544
      %v3569 = vmul.f32 %v3499, %v3544
      %v3570 = vmul.f32 %v3500, %v3544
      %v3571 = vmul.f32 %v3501, %v3544
      %v3572 = vmul.f32 %v3502, %v3544
      %v3573 = vmul.f32 %v3503, %v3544
      %v3574 = vmul.f32 %v3504, %v3544
      %v3575 = vmul.f32 %v3505, %v3544
      %v3576 = vmul.f32 %v3506, %v3544
      %v3577 = vmul.f32 %v3507, %v3544
      %v3578 = vmul.f32 %v3508, %v3544
      %v3579 = vmul.f32 %v3509, %v3544
      %v3580 = vmul.f32 %v3510, %v3544
      %v3581 = vmul.f32 %v3511, %v3544
      %v3582 = vmul.f32 %v3512, %v3544
      %v3583 = vmul.f32 %v3513, %v3544
      %v3584 = vmul.f32 %v3514, %v3544
      %v3585 = vmul.f32 %v3515, %v3544
      %v3586 = vmul.f32 %v3516, %v3544
      %v3587 = vmul.f32 %v3517, %v3544
      %v3588 = vmul.f32 %v3518, %v3544
      %v3589 = vmul.f32 %v3519, %v3544
      %v3590 = vmul.f32 %v3520, %v3544
      %v3591 = vmul.f32 %v3521, %v3544
      %v3592 = vmul.f32 %v3522, %v3544
      %v3593 = vmul.f32 %v3523, %v3544
      %v3594 = vmul.f32 %v3524, %v3544
      %v3595 = vmul.f32 %v3525, %v3544
      %v3596 = vmul.f32 %v3526, %v3544
      %v3597 = vmul.f32 %v3527, %v3544
      %v3598 = vmul.f32 %v3528, %v3544
      %v3599 = vmul.f32 %v3529, %v3544
      %v3600 = vmul.f32 %v3530, %v3544
      %v3601 = vmul.f32 %v3531, %v3544
      %v3602 = vmul.f32 %v3532, %v3544
      %v3603 = vmul.f32 %v3533, %v3544
      %v3604 = vmul.f32 %v3534, %v3544
      %v3605 = vmul.f32 %v3535, %v3544
      %v3606 = vmul.f32 %v3536, %v3544
      %v3607 = vmul.f32 %v3537, %v3544
      %v3608 = vmul.f32 %v3538, %v3544
      %v3609 = vmul.f32 %v3539, %v3544
      %v3611 = vlaneseq
      %v3612 = vshrl.u32 %v3611, 7
      %v3613 = vsub.s32 0, %v3612
      %v3614 = vrot.slane %v2707, %v3613
      %v3616 = vadd.f32 %v3546, %v3614
      %v3617 = vadd.f32 %v3547, %v3614
      %v3618 = vadd.f32 %v3548, %v3614
      %v3619 = vadd.f32 %v3549, %v3614
      %v3620 = vadd.f32 %v3550, %v3614
      %v3621 = vadd.f32 %v3551, %v3614
      %v3622 = vadd.f32 %v3552, %v3614
      %v3623 = vadd.f32 %v3553, %v3614
      %v3624 = vadd.f32 %v3554, %v3614
      %v3625 = vadd.f32 %v3555, %v3614
      %v3626 = vadd.f32 %v3556, %v3614
      %v3627 = vadd.f32 %v3557, %v3614
      %v3628 = vadd.f32 %v3558, %v3614
      %v3629 = vadd.f32 %v3559, %v3614
      %v3630 = vadd.f32 %v3560, %v3614
      %v3631 = vadd.f32 %v3561, %v3614
      %v3632 = vadd.f32 %v3562, %v3614
      %v3633 = vadd.f32 %v3563, %v3614
      %v3634 = vadd.f32 %v3564, %v3614
      %v3635 = vadd.f32 %v3565, %v3614
      %v3636 = vadd.f32 %v3566, %v3614
      %v3637 = vadd.f32 %v3567, %v3614
      %v3638 = vadd.f32 %v3568, %v3614
      %v3639 = vadd.f32 %v3569, %v3614
      %v3640 = vadd.f32 %v3570, %v3614
      %v3641 = vadd.f32 %v3571, %v3614
      %v3642 = vadd.f32 %v3572, %v3614
      %v3643 = vadd.f32 %v3573, %v3614
      %v3644 = vadd.f32 %v3574, %v3614
      %v3645 = vadd.f32 %v3575, %v3614
      %v3646 = vadd.f32 %v3576, %v3614
      %v3647 = vadd.f32 %v3577, %v3614
      %v3648 = vadd.f32 %v3578, %v3614
      %v3649 = vadd.f32 %v3579, %v3614
      %v3650 = vadd.f32 %v3580, %v3614
      %v3651 = vadd.f32 %v3581, %v3614
      %v3652 = vadd.f32 %v3582, %v3614
      %v3653 = vadd.f32 %v3583, %v3614
      %v3654 = vadd.f32 %v3584, %v3614
      %v3655 = vadd.f32 %v3585, %v3614
      %v3656 = vadd.f32 %v3586, %v3614
      %v3657 = vadd.f32 %v3587, %v3614
      %v3658 = vadd.f32 %v3588, %v3614
      %v3659 = vadd.f32 %v3589, %v3614
      %v3660 = vadd.f32 %v3590, %v3614
      %v3661 = vadd.f32 %v3591, %v3614
      %v3662 = vadd.f32 %v3592, %v3614
      %v3663 = vadd.f32 %v3593, %v3614
      %v3664 = vadd.f32 %v3594, %v3614
      %v3665 = vadd.f32 %v3595, %v3614
      %v3666 = vadd.f32 %v3596, %v3614
      %v3667 = vadd.f32 %v3597, %v3614
      %v3668 = vadd.f32 %v3598, %v3614
      %v3669 = vadd.f32 %v3599, %v3614
      %v3670 = vadd.f32 %v3600, %v3614
      %v3671 = vadd.f32 %v3601, %v3614
      %v3672 = vadd.f32 %v3602, %v3614
      %v3673 = vadd.f32 %v3603, %v3614
      %v3674 = vadd.f32 %v3604, %v3614
      %v3675 = vadd.f32 %v3605, %v3614
      %v3676 = vadd.f32 %v3606, %v3614
      %v3677 = vadd.f32 %v3607, %v3614
      %v3678 = vadd.f32 %v3608, %v3614
      %v3679 = vadd.f32 %v3609, %v3614
      %v3680 = vadd.f32 %v1490, %v3616
      %v3681 = vadd.f32 %v1491, %v3617
      %v3682 = vadd.f32 %v1492, %v3618
      %v3683 = vadd.f32 %v1493, %v3619
      %v3684 = vadd.f32 %v1494, %v3620
      %v3685 = vadd.f32 %v1495, %v3621
      %v3686 = vadd.f32 %v1496, %v3622
      %v3687 = vadd.f32 %v1497, %v3623
      %v3688 = vadd.f32 %v1498, %v3624
      %v3689 = vadd.f32 %v1499, %v3625
      %v3690 = vadd.f32 %v1500, %v3626
      %v3691 = vadd.f32 %v1501, %v3627
      %v3692 = vadd.f32 %v1502, %v3628
      %v3693 = vadd.f32 %v1503, %v3629
      %v3694 = vadd.f32 %v1504, %v3630
      %v3695 = vadd.f32 %v1505, %v3631
      %v3696 = vadd.f32 %v1506, %v3632
      %v3697 = vadd.f32 %v1507, %v3633
      %v3698 = vadd.f32 %v1508, %v3634
      %v3699 = vadd.f32 %v1509, %v3635
      %v3700 = vadd.f32 %v1510, %v3636
      %v3701 = vadd.f32 %v1511, %v3637
      %v3702 = vadd.f32 %v1512, %v3638
      %v3703 = vadd.f32 %v1513, %v3639
      %v3704 = vadd.f32 %v1514, %v3640
      %v3705 = vadd.f32 %v1515, %v3641
      %v3706 = vadd.f32 %v1516, %v3642
      %v3707 = vadd.f32 %v1517, %v3643
      %v3708 = vadd.f32 %v1518, %v3644
      %v3709 = vadd.f32 %v1519, %v3645
      %v3710 = vadd.f32 %v1520, %v3646
      %v3711 = vadd.f32 %v1521, %v3647
      %v3712 = vadd.f32 %v1522, %v3648
      %v3713 = vadd.f32 %v1523, %v3649
      %v3714 = vadd.f32 %v1524, %v3650
      %v3715 = vadd.f32 %v1525, %v3651
      %v3716 = vadd.f32 %v1526, %v3652
      %v3717 = vadd.f32 %v1527, %v3653
      %v3718 = vadd.f32 %v1528, %v3654
      %v3719 = vadd.f32 %v1529, %v3655
      %v3720 = vadd.f32 %v1530, %v3656
      %v3721 = vadd.f32 %v1531, %v3657
      %v3722 = vadd.f32 %v1532, %v3658
      %v3723 = vadd.f32 %v1533, %v3659
      %v3724 = vadd.f32 %v1534, %v3660
      %v3725 = vadd.f32 %v1535, %v3661
      %v3726 = vadd.f32 %v1536, %v3662
      %v3727 = vadd.f32 %v1537, %v3663
      %v3728 = vadd.f32 %v1538, %v3664
      %v3729 = vadd.f32 %v1539, %v3665
      %v3730 = vadd.f32 %v1540, %v3666
      %v3731 = vadd.f32 %v1541, %v3667
      %v3732 = vadd.f32 %v1542, %v3668
      %v3733 = vadd.f32 %v1543, %v3669
      %v3734 = vadd.f32 %v1544, %v3670
      %v3735 = vadd.f32 %v1545, %v3671
      %v3736 = vadd.f32 %v1546, %v3672
      %v3737 = vadd.f32 %v1547, %v3673
      %v3738 = vadd.f32 %v1548, %v3674
      %v3739 = vadd.f32 %v1549, %v3675
      %v3740 = vadd.f32 %v1550, %v3676
      %v3741 = vadd.f32 %v1551, %v3677
      %v3742 = vadd.f32 %v1552, %v3678
      %v3743 = vadd.f32 %v1553, %v3679
      %3744 = vst.msk [vmem:[%s383] sm:$0xff] %vm516, %v3680
      %3745 = vst.msk [vmem:[%s383 + $0x8] sm:$0xff] %vm516, %v3681
      %3746 = vst.msk [vmem:[%s383 + $0x10] sm:$0xff] %vm516, %v3682
      %3747 = vst.msk [vmem:[%s383 + $0x18] sm:$0xff] %vm516, %v3683
      %3748 = vst.msk [vmem:[%s383 + $0x20] sm:$0xff] %vm516, %v3684
      %3749 = vst.msk [vmem:[%s383 + $0x28] sm:$0xff] %vm516, %v3685
      %3750 = vst.msk [vmem:[%s383 + $0x30] sm:$0xff] %vm516, %v3686
      %3751 = vst.msk [vmem:[%s383 + $0x38] sm:$0xff] %vm516, %v3687
      %3752 = vst.msk [vmem:[%s383 + $0x40] sm:$0xff] %vm516, %v3688
      %3753 = vst.msk [vmem:[%s383 + $0x48] sm:$0xff] %vm516, %v3689
      %3754 = vst.msk [vmem:[%s383 + $0x50] sm:$0xff] %vm516, %v3690
      %3755 = vst.msk [vmem:[%s383 + $0x58] sm:$0xff] %vm516, %v3691
      %3756 = vst.msk [vmem:[%s383 + $0x60] sm:$0xff] %vm516, %v3692
      %3757 = vst.msk [vmem:[%s383 + $0x68] sm:$0xff] %vm516, %v3693
      %3758 = vst.msk [vmem:[%s383 + $0x70] sm:$0xff] %vm516, %v3694
      %3759 = vst.msk [vmem:[%s383 + $0x78] sm:$0xff] %vm516, %v3695
      %3760 = vst.msk [vmem:[%s383 + $0x80] sm:$0xff] %vm516, %v3696
      %3761 = vst.msk [vmem:[%s383 + $0x88] sm:$0xff] %vm516, %v3697
      %3762 = vst.msk [vmem:[%s383 + $0x90] sm:$0xff] %vm516, %v3698
      %3763 = vst.msk [vmem:[%s383 + $0x98] sm:$0xff] %vm516, %v3699
      %3764 = vst.msk [vmem:[%s383 + $0xa0] sm:$0xff] %vm516, %v3700
      %3765 = vst.msk [vmem:[%s383 + $0xa8] sm:$0xff] %vm516, %v3701
      %3766 = vst.msk [vmem:[%s383 + $0xb0] sm:$0xff] %vm516, %v3702
      %3767 = vst.msk [vmem:[%s383 + $0xb8] sm:$0xff] %vm516, %v3703
      %3768 = vst.msk [vmem:[%s383 + $0xc0] sm:$0xff] %vm516, %v3704
      %3769 = vst.msk [vmem:[%s383 + $0xc8] sm:$0xff] %vm516, %v3705
      %3770 = vst.msk [vmem:[%s383 + $0xd0] sm:$0xff] %vm516, %v3706
      %3771 = vst.msk [vmem:[%s383 + $0xd8] sm:$0xff] %vm516, %v3707
      %3772 = vst.msk [vmem:[%s383 + $0xe0] sm:$0xff] %vm516, %v3708
      %3773 = vst.msk [vmem:[%s383 + $0xe8] sm:$0xff] %vm516, %v3709
      %3774 = vst.msk [vmem:[%s383 + $0xf0] sm:$0xff] %vm516, %v3710
      %3775 = vst.msk [vmem:[%s383 + $0xf8] sm:$0xff] %vm516, %v3711
      %3776 = vst.msk [vmem:[%s383 + $0x100] sm:$0xff] %vm516, %v3712
      %3777 = vst.msk [vmem:[%s383 + $0x108] sm:$0xff] %vm516, %v3713
      %3778 = vst.msk [vmem:[%s383 + $0x110] sm:$0xff] %vm516, %v3714
      %3779 = vst.msk [vmem:[%s383 + $0x118] sm:$0xff] %vm516, %v3715
      %3780 = vst.msk [vmem:[%s383 + $0x120] sm:$0xff] %vm516, %v3716
      %3781 = vst.msk [vmem:[%s383 + $0x128] sm:$0xff] %vm516, %v3717
      %3782 = vst.msk [vmem:[%s383 + $0x130] sm:$0xff] %vm516, %v3718
      %3783 = vst.msk [vmem:[%s383 + $0x138] sm:$0xff] %vm516, %v3719
      %3784 = vst.msk [vmem:[%s383 + $0x140] sm:$0xff] %vm516, %v3720
      %3785 = vst.msk [vmem:[%s383 + $0x148] sm:$0xff] %vm516, %v3721
      %3786 = vst.msk [vmem:[%s383 + $0x150] sm:$0xff] %vm516, %v3722
      %3787 = vst.msk [vmem:[%s383 + $0x158] sm:$0xff] %vm516, %v3723
      %3788 = vst.msk [vmem:[%s383 + $0x160] sm:$0xff] %vm516, %v3724
      %3789 = vst.msk [vmem:[%s383 + $0x168] sm:$0xff] %vm516, %v3725
      %3790 = vst.msk [vmem:[%s383 + $0x170] sm:$0xff] %vm516, %v3726
      %3791 = vst.msk [vmem:[%s383 + $0x178] sm:$0xff] %vm516, %v3727
      %3792 = vst.msk [vmem:[%s383 + $0x180] sm:$0xff] %vm516, %v3728
      %3793 = vst.msk [vmem:[%s383 + $0x188] sm:$0xff] %vm516, %v3729
      %3794 = vst.msk [vmem:[%s383 + $0x190] sm:$0xff] %vm516, %v3730
      %3795 = vst.msk [vmem:[%s383 + $0x198] sm:$0xff] %vm516, %v3731
      %3796 = vst.msk [vmem:[%s383 + $0x1a0] sm:$0xff] %vm516, %v3732
      %3797 = vst.msk [vmem:[%s383 + $0x1a8] sm:$0xff] %vm516, %v3733
      %3798 = vst.msk [vmem:[%s383 + $0x1b0] sm:$0xff] %vm516, %v3734
      %3799 = vst.msk [vmem:[%s383 + $0x1b8] sm:$0xff] %vm516, %v3735
      %3800 = vst.msk [vmem:[%s383 + $0x1c0] sm:$0xff] %vm516, %v3736
      %3801 = vst.msk [vmem:[%s383 + $0x1c8] sm:$0xff] %vm516, %v3737
      %3802 = vst.msk [vmem:[%s383 + $0x1d0] sm:$0xff] %vm516, %v3738
      %3803 = vst.msk [vmem:[%s383 + $0x1d8] sm:$0xff] %vm516, %v3739
      %3804 = vst.msk [vmem:[%s383 + $0x1e0] sm:$0xff] %vm516, %v3740
      %3805 = vst.msk [vmem:[%s383 + $0x1e8] sm:$0xff] %vm516, %v3741
      %3806 = vst.msk [vmem:[%s383 + $0x1f0] sm:$0xff] %vm516, %v3742
      %3807 = vst.msk [vmem:[%s383 + $0x1f8] sm:$0xff] %vm516, %v3743
      %s3808 = smul.u32 64, %s21
      %p3809 = scmp.lt.s32.totalorder %s3808, 319
      %s3810 = scalar_select %p3809, %s3808, 319
      %s3811 = smul.addr %s3810, 8
      %s3812 = scalar_lea.vmem %s10, %s3811
      // Predicated region
      $region61: #{earth_specific_block.3} parent=59 // pred_check
        %p3813 = pneg %p259
      $region62: #{earth_specific_block.3} parent=59 // pred_check_branch
        %3815 = sbr.rel (%p3813) target = $region64
      $region63: #{earth_specific_block.3} parent=59 // pred_region
        %s3816 = smul.u32 64, %s21
      $region64: #{earth_specific_block.3} parent=59 // pred_fallthru
        _
    $region60: #{earth_specific_block.3} parent=5 // pred_fallthru
      _
    %p3817 = scmp.le.s32.totalorder 2, %s16
    // Predicated region
    $region65: #{earth_specific_block.3} parent=5 // pred_check
      %p3818 = pneg %p3817
    $region66: #{earth_specific_block.3} parent=5 // pred_check_branch
      %3820 = sbr.rel (%p3818) target = $region68
    $region67: #{earth_specific_block.3} parent=5 // pred_region
      %s3821 = ssub.s32 %s16, 2
      // Predicated region
      $region69: #{earth_specific_block.3} parent=67 // pred_check
        %p3822 = pneg %p265
      $region70: #{earth_specific_block.3} parent=67 // pred_check_branch
        %3824 = sbr.rel (%p3822) target = $region72
      $region71: #{earth_specific_block.3} parent=67 // pred_region
        %s3825 = smul.u32 64, %s22
        %p3826 = scmp.lt.s32.totalorder %s3825, 319
        %s3827 = scalar_select %p3826, %s3825, 319
        %s3828 = smul.addr %s3827, 8
        %s3829 = scalar_lea.vmem %s10, %s3828
      $region72: #{earth_specific_block.3} parent=67 // pred_fallthru
        _
    $region68: #{earth_specific_block.3} parent=5 // pred_fallthru
      _
  $region6: #{earth_specific_block.3} parent=0 // loop_footer
    %s20 = sadd.s32 1, %s16
  $region7: #{earth_specific_block.3} parent=0 // loop_footer_branch
    %15 = sbr.rel target = $region3
  $region8: #{earth_specific_block.3} parent=0 // loop_exit
    _

</llo_original>
